<compile_context>
chip_gen: v6e
topology: v6e:2x2x1
jax: 0.10.0
libtpu: 0.0.40
codegen_flags: <defaults>
</compile_context>

<pallas_src>
import functools

import jax
import jax.numpy as jnp
from jax import lax
from jax.experimental import pallas as pl
from jax.experimental.pallas import tpu as pltpu


def _acc_conv3x3(w_ref, src_f32, masks_ref, acc, W2):
    """acc += 3x3 'same' conv of src (C, H2*W2) with tap-major weights.

    w_ref:     (9, Cout, C) bf16 ref, tap t = ky*3 + kx.
    src_f32:   (C, H2*W2) f32 value (spatial flattened on the lane axis).
    masks_ref: (9, H2*W2) f32 ref of 0/1 boundary masks (one per tap).
    """
    n = src_f32.shape[-1]
    for t in range(9):
        dy, dx = t // 3 - 1, t % 3 - 1
        d = dy * W2 + dx
        if d == 0:
            sh = src_f32
        else:
            # rolled[q] = src[q + d]  (np.roll semantics), boundary masked
            sh = pltpu.roll(src_f32, shift=(-d) % n, axis=1)
            sh = sh * masks_ref[t:t + 1, :]
        acc = acc + jnp.dot(w_ref[t], sh.astype(jnp.bfloat16),
                            preferred_element_type=jnp.float32)
    return acc


def upstep_kernel(xw_ref, xd_ref, masks_ref, wu_ref, bu_ref,
                  w1u_ref, w1d_ref, b1_ref, w2_ref, b2_ref, o_ref,
                  *, with_relu, W2):
    outC = o_ref.shape[1]
    HW2 = o_ref.shape[2]              # H2 * W2
    H = xw_ref.shape[2] // W2         # input height (output is 2H x W2)

    # ---- ConvTranspose2d(k=2, s=2): ONE deep-K matmul on the dx-dilated
    #      input.  rows[dy*outC + o, y*W2 + X] = up[o, 2y + dy, X]
    rows = jnp.dot(wu_ref[...], xw_ref[0],
                   preferred_element_type=jnp.float32) + bu_ref[...]

    # dy (row) interleave -> flat, lane-dense (outC, H2*W2)
    up = jnp.concatenate(
        [rows[:outC].reshape(outC, H, W2),
         rows[outC:].reshape(outC, H, W2)],
        axis=-1).reshape(outC, HW2)

    # ---- conv1 (+ReLU): 3x3 over concat([up, x_down]) without materializing
    #      the concat or any padded buffer; skip read straight from its block.
    acc = jnp.zeros((outC, HW2), jnp.float32)
    acc = _acc_conv3x3(w1u_ref, up, masks_ref, acc, W2)
    acc = _acc_conv3x3(w1d_ref, xd_ref[0], masks_ref, acc, W2)
    h1 = acc + b1_ref[...]
    if with_relu:
        h1 = jnp.maximum(h1, 0.0)

    # ---- conv2 (+ReLU); lane-dense store
    acc2 = jnp.zeros((outC, HW2), jnp.float32)
    acc2 = _acc_conv3x3(w2_ref, h1, masks_ref, acc2, W2)
    y = acc2 + b2_ref[...]
    if with_relu:
        y = jnp.maximum(y, 0.0)
    o_ref[0] = y.astype(o_ref.dtype)


def up_step(x, x_down, params, with_relu=True):
    """upStep forward. x: (N, inC, H, W), x_down: (N, inC-outC, 2H, 2W)."""
    (wu, bu), (w1, b1), (w2, b2) = params
    N, inC, H, W = x.shape
    Cd = x_down.shape[1]
    outC = wu.shape[1]
    H2, W2 = 2 * H, 2 * W
    HW2 = H2 * W2
    assert x_down.shape == (N, Cd, H2, W2) and Cd + outC == inC

    # ---- host-side (cheap, once per call) layout / constant prep ----------
    # dx-dilated input so the ConvTranspose is one (2outC,2inC)@(2inC,H*W2):
    #   xw[n, dx*inC + c, y*W2 + 2x + dx] = x[n, c, y, x]
    xw = jnp.zeros((N, 2, inC, H, W2), x.dtype)
    xw = xw.at[:, 0, :, :, 0::2].set(x)
    xw = xw.at[:, 1, :, :, 1::2].set(x)
    xw = xw.reshape(N, 2 * inC, H * W2).astype(jnp.bfloat16)

    xd_flat = x_down.reshape(N, Cd, HW2)

    # ConvTranspose weight (inC,outC,2,2) -> (2*outC, 2*inC):
    #   row = dy*outC + o, col = dx*inC + c
    wu_mat = jnp.transpose(wu, (2, 1, 3, 0)).reshape(
        2 * outC, 2 * inC).astype(jnp.bfloat16)
    bu2 = jnp.concatenate([bu, bu]).reshape(2 * outC, 1).astype(jnp.float32)

    # Conv weights, tap-major (t = ky*3+kx), split into up / skip blocks
    w1t = jnp.transpose(w1, (2, 3, 0, 1)).reshape(
        9, outC, inC).astype(jnp.bfloat16)
    w1u = w1t[:, :, :outC]
    w1d = w1t[:, :, outC:]
    w2t = jnp.transpose(w2, (2, 3, 0, 1)).reshape(
        9, outC, outC).astype(jnp.bfloat16)
    b1c = b1.reshape(outC, 1).astype(jnp.float32)
    b2c = b2.reshape(outC, 1).astype(jnp.float32)

    # 3x3 'same' boundary masks (0/1), one per tap, shared by both convs
    Y = jnp.arange(H2)[:, None]
    X = jnp.arange(W2)[None, :]
    mrows = []
    for dy in (-1, 0, 1):
        for dx in (-1, 0, 1):
            m = ((Y + dy >= 0) & (Y + dy < H2) &
                 (X + dx >= 0) & (X + dx < W2))
            mrows.append(m.reshape(-1))
    masks = jnp.stack(mrows).astype(jnp.float32)          # (9, H2*W2)

    kernel = functools.partial(upstep_kernel, with_relu=with_relu, W2=W2)
    out_flat = pl.pallas_call(
        kernel,
        out_shape=jax.ShapeDtypeStruct((N, outC, HW2), x.dtype),
        grid=(N,),
        in_specs=[
            pl.BlockSpec((1, 2 * inC, H * W2), lambda n: (n, 0, 0)),  # xw
            pl.BlockSpec((1, Cd, HW2), lambda n: (n, 0, 0)),          # x_down
            pl.BlockSpec((9, HW2), lambda n: (0, 0)),                 # masks
            pl.BlockSpec((2 * outC, 2 * inC), lambda n: (0, 0)),      # wu
            pl.BlockSpec((2 * outC, 1), lambda n: (0, 0)),            # bu
            pl.BlockSpec((9, outC, outC), lambda n: (0, 0, 0)),       # w1 (up)
            pl.BlockSpec((9, outC, Cd), lambda n: (0, 0, 0)),         # w1 (skip)
            pl.BlockSpec((outC, 1), lambda n: (0, 0)),                # b1
            pl.BlockSpec((9, outC, outC), lambda n: (0, 0, 0)),       # w2
            pl.BlockSpec((outC, 1), lambda n: (0, 0)),                # b2
        ],
        out_specs=pl.BlockSpec((1, outC, HW2), lambda n: (n, 0, 0)),
        compiler_params=pltpu.CompilerParams(
            dimension_semantics=("parallel",),
            vmem_limit_bytes=64 * 1024 * 1024),
    )(xw, xd_flat, masks, wu_mat, bu2, w1u, w1d, b1c, w2t, b2c)
    return out_flat.reshape(N, outC, H2, W2)


def init_params(key, inC, outC):
    """Deterministic init mimicking PyTorch's default uniform bounds."""
    ks = jax.random.split(key, 6)

    def u(k, shape, fan_in):
        bound = 1.0 / jnp.sqrt(fan_in)
        return jax.random.uniform(k, shape, jnp.float32, -bound, bound)

    wu = u(ks[0], (inC, outC, 2, 2), inC * 4)      # ConvTranspose2d weight
    bu = u(ks[1], (outC,), inC * 4)
    w1 = u(ks[2], (outC, inC, 3, 3), inC * 9)      # Conv2d OIHW
    b1 = u(ks[3], (outC,), inC * 9)
    w2 = u(ks[4], (outC, outC, 3, 3), outC * 9)
    b2 = u(ks[5], (outC,), outC * 9)
    return (wu, bu), (w1, b1), (w2, b2)


def ref_upstep(x, x_down, params, with_relu=True):
    """Pure-JAX f32 reference matching the PyTorch module."""
    (wu, bu), (w1, b1), (w2, b2) = params
    N, inC, H, W = x.shape
    outC = wu.shape[1]
    # ConvTranspose2d(k=2,s=2): out[n,o,2i+d,2j+k] = sum_c x[n,c,i,j]*wu[c,o,d,k]
    t = jnp.einsum('ncij,codk->noidjk', x, wu, precision=lax.Precision.HIGHEST)
    up = t.reshape(N, outC, 2 * H, 2 * W) + bu[None, :, None, None]
    z = jnp.concatenate([up, x_down], axis=1)

    def conv(v, w, b):
        y = lax.conv_general_dilated(
            v, w, window_strides=(1, 1), padding='SAME',
            dimension_numbers=('NCHW', 'OIHW', 'NCHW'),
            precision=lax.Precision.HIGHEST)
        return y + b[None, :, None, None]

    y = conv(z, w1, b1)
    if with_relu:
        y = jax.nn.relu(y)
    y = conv(y, w2, b2)
    if with_relu:
        y = jax.nn.relu(y)
    return y


if __name__ == "__main__":
    key = jax.random.PRNGKey(0)
    k_x, k_d, k_p = jax.random.split(key, 3)

    N, inC, outC, H, W = 2, 8, 4, 16, 16          # x_down has inC-outC channels
    x = jax.random.normal(k_x, (N, inC, H, W), jnp.float32)
    x_down = jax.random.normal(k_d, (N, inC - outC, 2 * H, 2 * W), jnp.float32)
    params = init_params(k_p, inC, outC)

    out = jax.jit(up_step)(x, x_down, params)
    out = jax.block_until_ready(out)

    # sanity: shape and ReLU non-negativity
    assert out.shape == (N, outC, 2 * H, 2 * W), out.shape
    assert bool(jnp.all(out >= 0.0))

    # cross-check against the f32 reference (bf16 MXU operands -> looser tol)
    ref = ref_upstep(x, x_down, params)
    err = float(jnp.max(jnp.abs(out - ref)))
    assert bool(jnp.allclose(out, ref, atol=5e-2, rtol=5e-2)), err

    print("KERNEL_OK")
</pallas_src>

<mosaic_0001>
module attributes {stable_mosaic.version = 11 : i64} {
  func.func @upstep_kernel(%arg0: i32, %arg1: memref<1x16x512xbf16, #tpu.memory_space<vmem>>, %arg2: memref<1x4x1024xf32, #tpu.memory_space<vmem>>, %arg3: memref<9x1024xf32, #tpu.memory_space<vmem>>, %arg4: memref<8x16xbf16, #tpu.memory_space<vmem>>, %arg5: memref<8x1xf32, #tpu.memory_space<vmem>>, %arg6: memref<9x4x4xbf16, #tpu.memory_space<vmem>>, %arg7: memref<9x4x4xbf16, #tpu.memory_space<vmem>>, %arg8: memref<4x1xf32, #tpu.memory_space<vmem>>, %arg9: memref<9x4x4xbf16, #tpu.memory_space<vmem>>, %arg10: memref<4x1xf32, #tpu.memory_space<vmem>>, %arg11: memref<1x4x1024xf32, #tpu.memory_space<vmem>>) attributes {dimension_semantics = [#tpu.dimension_semantics<parallel>], iteration_bounds = array<i64: 2>, scalar_prefetch = 0 : i64, scratch_operands = 0 : i64, tpu.core_type = #tpu.core_type<tc>, window_params = [{transform_indices = @transform_0, window_bounds = array<i64: 1, 16, 512>}, {transform_indices = @transform_1, window_bounds = array<i64: 1, 4, 1024>}, {pipeline_mode = #tpu.pipeline_mode<synchronous>, transform_indices = @transform_2, window_bounds = array<i64: 9, 1024>}, {pipeline_mode = #tpu.pipeline_mode<synchronous>, transform_indices = @transform_3, window_bounds = array<i64: 8, 16>}, {pipeline_mode = #tpu.pipeline_mode<synchronous>, transform_indices = @transform_4, window_bounds = array<i64: 8, 1>}, {pipeline_mode = #tpu.pipeline_mode<synchronous>, transform_indices = @transform_5, window_bounds = array<i64: 9, 4, 4>}, {pipeline_mode = #tpu.pipeline_mode<synchronous>, transform_indices = @transform_6, window_bounds = array<i64: 9, 4, 4>}, {pipeline_mode = #tpu.pipeline_mode<synchronous>, transform_indices = @transform_7, window_bounds = array<i64: 4, 1>}, {pipeline_mode = #tpu.pipeline_mode<synchronous>, transform_indices = @transform_8, window_bounds = array<i64: 9, 4, 4>}, {pipeline_mode = #tpu.pipeline_mode<synchronous>, transform_indices = @transform_9, window_bounds = array<i64: 4, 1>}, {transform_indices = @transform_10, window_bounds = array<i64: 1, 4, 1024>}]} {
    %c0 = arith.constant 0 : index
    %c0_0 = arith.constant 0 : index
    %0 = vector.load %arg4[%c0, %c0_0] : memref<8x16xbf16, #tpu.memory_space<vmem>>, vector<8x16xbf16>
    %c0_1 = arith.constant 0 : index
    %c0_2 = arith.constant 0 : index
    %c0_3 = arith.constant 0 : index
    %1 = vector.load %arg1[%c0_1, %c0_2, %c0_3] : memref<1x16x512xbf16, #tpu.memory_space<vmem>>, vector<1x16x512xbf16>
    %2 = vector.shape_cast %1 : vector<1x16x512xbf16> to vector<16x512xbf16>
    %cst = arith.constant dense<0.000000e+00> : vector<8x512xf32>
    %3 = tpu.matmul %0, %2, %cst {dimension_numbers = #tpu.dot_dimension_numbers<[1], [0], [0], [1], [0, 0, 1, 1], [], []>} : vector<8x16xbf16>, vector<16x512xbf16>, vector<8x512xf32> -> vector<8x512xf32>
    %c0_4 = arith.constant 0 : index
    %c0_5 = arith.constant 0 : index
    %4 = vector.load %arg5[%c0_4, %c0_5] : memref<8x1xf32, #tpu.memory_space<vmem>>, vector<8x1xf32>
    %5 = vector.broadcast %4 : vector<8x1xf32> to vector<8x512xf32>
    %6 = arith.addf %3, %5 : vector<8x512xf32>
    %7 = vector.extract_strided_slice %6 {offsets = [0, 0], sizes = [4, 512], strides = [1, 1]} : vector<8x512xf32> to vector<4x512xf32>
    %8 = vector.shape_cast %7 : vector<4x512xf32> to vector<4x16x32xf32>
    %9 = vector.extract_strided_slice %6 {offsets = [4, 0], sizes = [4, 512], strides = [1, 1]} : vector<8x512xf32> to vector<4x512xf32>
    %10 = vector.shape_cast %9 : vector<4x512xf32> to vector<4x16x32xf32>
    %11 = tpu.concatenate %8, %10 in 2 : vector<4x16x32xf32>, vector<4x16x32xf32> -> vector<4x16x64xf32>
    %12 = vector.shape_cast %11 : vector<4x16x64xf32> to vector<4x1024xf32>
    %cst_6 = arith.constant 0.000000e+00 : f32
    %13 = vector.broadcast %cst_6 : f32 to vector<4x1024xf32>
    %c33_i32 = arith.constant 33 : i32
    %14 = tpu.dynamic_rotate %12 by %c33_i32 dim 1 : vector<4x1024xf32>, i32 -> vector<4x1024xf32>
    %c0_7 = arith.constant 0 : index
    %c0_8 = arith.constant 0 : index
    %15 = vector.load %arg3[%c0_7, %c0_8] : memref<9x1024xf32, #tpu.memory_space<vmem>>, vector<1x1024xf32>
    %16 = vector.broadcast %15 : vector<1x1024xf32> to vector<4x1024xf32>
    %17 = arith.mulf %14, %16 : vector<4x1024xf32>
    %c0_9 = arith.constant 0 : index
    %c0_10 = arith.constant 0 : index
    %c0_11 = arith.constant 0 : index
    %18 = vector.load %arg6[%c0_9, %c0_10, %c0_11] : memref<9x4x4xbf16, #tpu.memory_space<vmem>>, vector<1x4x4xbf16>
    %19 = vector.shape_cast %18 : vector<1x4x4xbf16> to vector<4x4xbf16>
    %20 = arith.truncf %17 : vector<4x1024xf32> to vector<4x1024xbf16>
    %cst_12 = arith.constant dense<0.000000e+00> : vector<4x1024xf32>
    %21 = tpu.matmul %19, %20, %cst_12 {dimension_numbers = #tpu.dot_dimension_numbers<[1], [0], [0], [1], [0, 0, 1, 1], [], []>} : vector<4x4xbf16>, vector<4x1024xbf16>, vector<4x1024xf32> -> vector<4x1024xf32>
    %22 = arith.addf %13, %21 : vector<4x1024xf32>
    %c32_i32 = arith.constant 32 : i32
    %23 = tpu.dynamic_rotate %12 by %c32_i32 dim 1 : vector<4x1024xf32>, i32 -> vector<4x1024xf32>
    %c1 = arith.constant 1 : index
    %c0_13 = arith.constant 0 : index
    %24 = vector.load %arg3[%c1, %c0_13] : memref<9x1024xf32, #tpu.memory_space<vmem>>, vector<1x1024xf32>
    %25 = vector.broadcast %24 : vector<1x1024xf32> to vector<4x1024xf32>
    %26 = arith.mulf %23, %25 : vector<4x1024xf32>
    %c1_14 = arith.constant 1 : index
    %c0_15 = arith.constant 0 : index
    %c0_16 = arith.constant 0 : index
    %27 = vector.load %arg6[%c1_14, %c0_15, %c0_16] : memref<9x4x4xbf16, #tpu.memory_space<vmem>>, vector<1x4x4xbf16>
    %28 = vector.shape_cast %27 : vector<1x4x4xbf16> to vector<4x4xbf16>
    %29 = arith.truncf %26 : vector<4x1024xf32> to vector<4x1024xbf16>
    %cst_17 = arith.constant dense<0.000000e+00> : vector<4x1024xf32>
    %30 = tpu.matmul %28, %29, %cst_17 {dimension_numbers = #tpu.dot_dimension_numbers<[1], [0], [0], [1], [0, 0, 1, 1], [], []>} : vector<4x4xbf16>, vector<4x1024xbf16>, vector<4x1024xf32> -> vector<4x1024xf32>
    %31 = arith.addf %22, %30 : vector<4x1024xf32>
    %c31_i32 = arith.constant 31 : i32
    %32 = tpu.dynamic_rotate %12 by %c31_i32 dim 1 : vector<4x1024xf32>, i32 -> vector<4x1024xf32>
    %c2 = arith.constant 2 : index
    %c0_18 = arith.constant 0 : index
    %33 = vector.load %arg3[%c2, %c0_18] : memref<9x1024xf32, #tpu.memory_space<vmem>>, vector<1x1024xf32>
    %34 = vector.broadcast %33 : vector<1x1024xf32> to vector<4x1024xf32>
    %35 = arith.mulf %32, %34 : vector<4x1024xf32>
    %c2_19 = arith.constant 2 : index
    %c0_20 = arith.constant 0 : index
    %c0_21 = arith.constant 0 : index
    %36 = vector.load %arg6[%c2_19, %c0_20, %c0_21] : memref<9x4x4xbf16, #tpu.memory_space<vmem>>, vector<1x4x4xbf16>
    %37 = vector.shape_cast %36 : vector<1x4x4xbf16> to vector<4x4xbf16>
    %38 = arith.truncf %35 : vector<4x1024xf32> to vector<4x1024xbf16>
    %cst_22 = arith.constant dense<0.000000e+00> : vector<4x1024xf32>
    %39 = tpu.matmul %37, %38, %cst_22 {dimension_numbers = #tpu.dot_dimension_numbers<[1], [0], [0], [1], [0, 0, 1, 1], [], []>} : vector<4x4xbf16>, vector<4x1024xbf16>, vector<4x1024xf32> -> vector<4x1024xf32>
    %40 = arith.addf %31, %39 : vector<4x1024xf32>
    %c1_i32 = arith.constant 1 : i32
    %41 = tpu.dynamic_rotate %12 by %c1_i32 dim 1 : vector<4x1024xf32>, i32 -> vector<4x1024xf32>
    %c3 = arith.constant 3 : index
    %c0_23 = arith.constant 0 : index
    %42 = vector.load %arg3[%c3, %c0_23] : memref<9x1024xf32, #tpu.memory_space<vmem>>, vector<1x1024xf32>
    %43 = vector.broadcast %42 : vector<1x1024xf32> to vector<4x1024xf32>
    %44 = arith.mulf %41, %43 : vector<4x1024xf32>
    %c3_24 = arith.constant 3 : index
    %c0_25 = arith.constant 0 : index
    %c0_26 = arith.constant 0 : index
    %45 = vector.load %arg6[%c3_24, %c0_25, %c0_26] : memref<9x4x4xbf16, #tpu.memory_space<vmem>>, vector<1x4x4xbf16>
    %46 = vector.shape_cast %45 : vector<1x4x4xbf16> to vector<4x4xbf16>
    %47 = arith.truncf %44 : vector<4x1024xf32> to vector<4x1024xbf16>
    %cst_27 = arith.constant dense<0.000000e+00> : vector<4x1024xf32>
    %48 = tpu.matmul %46, %47, %cst_27 {dimension_numbers = #tpu.dot_dimension_numbers<[1], [0], [0], [1], [0, 0, 1, 1], [], []>} : vector<4x4xbf16>, vector<4x1024xbf16>, vector<4x1024xf32> -> vector<4x1024xf32>
    %49 = arith.addf %40, %48 : vector<4x1024xf32>
    %c4 = arith.constant 4 : index
    %c0_28 = arith.constant 0 : index
    %c0_29 = arith.constant 0 : index
    %50 = vector.load %arg6[%c4, %c0_28, %c0_29] : memref<9x4x4xbf16, #tpu.memory_space<vmem>>, vector<1x4x4xbf16>
    %51 = vector.shape_cast %50 : vector<1x4x4xbf16> to vector<4x4xbf16>
    %52 = arith.truncf %12 : vector<4x1024xf32> to vector<4x1024xbf16>
    %cst_30 = arith.constant dense<0.000000e+00> : vector<4x1024xf32>
    %53 = tpu.matmul %51, %52, %cst_30 {dimension_numbers = #tpu.dot_dimension_numbers<[1], [0], [0], [1], [0, 0, 1, 1], [], []>} : vector<4x4xbf16>, vector<4x1024xbf16>, vector<4x1024xf32> -> vector<4x1024xf32>
    %54 = arith.addf %49, %53 : vector<4x1024xf32>
    %c1023_i32 = arith.constant 1023 : i32
    %55 = tpu.dynamic_rotate %12 by %c1023_i32 dim 1 : vector<4x1024xf32>, i32 -> vector<4x1024xf32>
    %c5 = arith.constant 5 : index
    %c0_31 = arith.constant 0 : index
    %56 = vector.load %arg3[%c5, %c0_31] : memref<9x1024xf32, #tpu.memory_space<vmem>>, vector<1x1024xf32>
    %57 = vector.broadcast %56 : vector<1x1024xf32> to vector<4x1024xf32>
    %58 = arith.mulf %55, %57 : vector<4x1024xf32>
    %c5_32 = arith.constant 5 : index
    %c0_33 = arith.constant 0 : index
    %c0_34 = arith.constant 0 : index
    %59 = vector.load %arg6[%c5_32, %c0_33, %c0_34] : memref<9x4x4xbf16, #tpu.memory_space<vmem>>, vector<1x4x4xbf16>
    %60 = vector.shape_cast %59 : vector<1x4x4xbf16> to vector<4x4xbf16>
    %61 = arith.truncf %58 : vector<4x1024xf32> to vector<4x1024xbf16>
    %cst_35 = arith.constant dense<0.000000e+00> : vector<4x1024xf32>
    %62 = tpu.matmul %60, %61, %cst_35 {dimension_numbers = #tpu.dot_dimension_numbers<[1], [0], [0], [1], [0, 0, 1, 1], [], []>} : vector<4x4xbf16>, vector<4x1024xbf16>, vector<4x1024xf32> -> vector<4x1024xf32>
    %63 = arith.addf %54, %62 : vector<4x1024xf32>
    %c993_i32 = arith.constant 993 : i32
    %64 = tpu.dynamic_rotate %12 by %c993_i32 dim 1 : vector<4x1024xf32>, i32 -> vector<4x1024xf32>
    %c6 = arith.constant 6 : index
    %c0_36 = arith.constant 0 : index
    %65 = vector.load %arg3[%c6, %c0_36] : memref<9x1024xf32, #tpu.memory_space<vmem>>, vector<1x1024xf32>
    %66 = vector.broadcast %65 : vector<1x1024xf32> to vector<4x1024xf32>
    %67 = arith.mulf %64, %66 : vector<4x1024xf32>
    %c6_37 = arith.constant 6 : index
    %c0_38 = arith.constant 0 : index
    %c0_39 = arith.constant 0 : index
    %68 = vector.load %arg6[%c6_37, %c0_38, %c0_39] : memref<9x4x4xbf16, #tpu.memory_space<vmem>>, vector<1x4x4xbf16>
    %69 = vector.shape_cast %68 : vector<1x4x4xbf16> to vector<4x4xbf16>
    %70 = arith.truncf %67 : vector<4x1024xf32> to vector<4x1024xbf16>
    %cst_40 = arith.constant dense<0.000000e+00> : vector<4x1024xf32>
    %71 = tpu.matmul %69, %70, %cst_40 {dimension_numbers = #tpu.dot_dimension_numbers<[1], [0], [0], [1], [0, 0, 1, 1], [], []>} : vector<4x4xbf16>, vector<4x1024xbf16>, vector<4x1024xf32> -> vector<4x1024xf32>
    %72 = arith.addf %63, %71 : vector<4x1024xf32>
    %c992_i32 = arith.constant 992 : i32
    %73 = tpu.dynamic_rotate %12 by %c992_i32 dim 1 : vector<4x1024xf32>, i32 -> vector<4x1024xf32>
    %c7 = arith.constant 7 : index
    %c0_41 = arith.constant 0 : index
    %74 = vector.load %arg3[%c7, %c0_41] : memref<9x1024xf32, #tpu.memory_space<vmem>>, vector<1x1024xf32>
    %75 = vector.broadcast %74 : vector<1x1024xf32> to vector<4x1024xf32>
    %76 = arith.mulf %73, %75 : vector<4x1024xf32>
    %c7_42 = arith.constant 7 : index
    %c0_43 = arith.constant 0 : index
    %c0_44 = arith.constant 0 : index
    %77 = vector.load %arg6[%c7_42, %c0_43, %c0_44] : memref<9x4x4xbf16, #tpu.memory_space<vmem>>, vector<1x4x4xbf16>
    %78 = vector.shape_cast %77 : vector<1x4x4xbf16> to vector<4x4xbf16>
    %79 = arith.truncf %76 : vector<4x1024xf32> to vector<4x1024xbf16>
    %cst_45 = arith.constant dense<0.000000e+00> : vector<4x1024xf32>
    %80 = tpu.matmul %78, %79, %cst_45 {dimension_numbers = #tpu.dot_dimension_numbers<[1], [0], [0], [1], [0, 0, 1, 1], [], []>} : vector<4x4xbf16>, vector<4x1024xbf16>, vector<4x1024xf32> -> vector<4x1024xf32>
    %81 = arith.addf %72, %80 : vector<4x1024xf32>
    %c991_i32 = arith.constant 991 : i32
    %82 = tpu.dynamic_rotate %12 by %c991_i32 dim 1 : vector<4x1024xf32>, i32 -> vector<4x1024xf32>
    %c8 = arith.constant 8 : index
    %c0_46 = arith.constant 0 : index
    %83 = vector.load %arg3[%c8, %c0_46] : memref<9x1024xf32, #tpu.memory_space<vmem>>, vector<1x1024xf32>
    %84 = vector.broadcast %83 : vector<1x1024xf32> to vector<4x1024xf32>
    %85 = arith.mulf %82, %84 : vector<4x1024xf32>
    %c8_47 = arith.constant 8 : index
    %c0_48 = arith.constant 0 : index
    %c0_49 = arith.constant 0 : index
    %86 = vector.load %arg6[%c8_47, %c0_48, %c0_49] : memref<9x4x4xbf16, #tpu.memory_space<vmem>>, vector<1x4x4xbf16>
    %87 = vector.shape_cast %86 : vector<1x4x4xbf16> to vector<4x4xbf16>
    %88 = arith.truncf %85 : vector<4x1024xf32> to vector<4x1024xbf16>
    %cst_50 = arith.constant dense<0.000000e+00> : vector<4x1024xf32>
    %89 = tpu.matmul %87, %88, %cst_50 {dimension_numbers = #tpu.dot_dimension_numbers<[1], [0], [0], [1], [0, 0, 1, 1], [], []>} : vector<4x4xbf16>, vector<4x1024xbf16>, vector<4x1024xf32> -> vector<4x1024xf32>
    %90 = arith.addf %81, %89 : vector<4x1024xf32>
    %c0_51 = arith.constant 0 : index
    %c0_52 = arith.constant 0 : index
    %c0_53 = arith.constant 0 : index
    %91 = vector.load %arg2[%c0_51, %c0_52, %c0_53] : memref<1x4x1024xf32, #tpu.memory_space<vmem>>, vector<1x4x1024xf32>
    %92 = vector.shape_cast %91 : vector<1x4x1024xf32> to vector<4x1024xf32>
    %c33_i32_54 = arith.constant 33 : i32
    %93 = tpu.dynamic_rotate %92 by %c33_i32_54 dim 1 : vector<4x1024xf32>, i32 -> vector<4x1024xf32>
    %c0_55 = arith.constant 0 : index
    %c0_56 = arith.constant 0 : index
    %94 = vector.load %arg3[%c0_55, %c0_56] : memref<9x1024xf32, #tpu.memory_space<vmem>>, vector<1x1024xf32>
    %95 = vector.broadcast %94 : vector<1x1024xf32> to vector<4x1024xf32>
    %96 = arith.mulf %93, %95 : vector<4x1024xf32>
    %c0_57 = arith.constant 0 : index
    %c0_58 = arith.constant 0 : index
    %c0_59 = arith.constant 0 : index
    %97 = vector.load %arg7[%c0_57, %c0_58, %c0_59] : memref<9x4x4xbf16, #tpu.memory_space<vmem>>, vector<1x4x4xbf16>
    %98 = vector.shape_cast %97 : vector<1x4x4xbf16> to vector<4x4xbf16>
    %99 = arith.truncf %96 : vector<4x1024xf32> to vector<4x1024xbf16>
    %cst_60 = arith.constant dense<0.000000e+00> : vector<4x1024xf32>
    %100 = tpu.matmul %98, %99, %cst_60 {dimension_numbers = #tpu.dot_dimension_numbers<[1], [0], [0], [1], [0, 0, 1, 1], [], []>} : vector<4x4xbf16>, vector<4x1024xbf16>, vector<4x1024xf32> -> vector<4x1024xf32>
    %101 = arith.addf %90, %100 : vector<4x1024xf32>
    %c32_i32_61 = arith.constant 32 : i32
    %102 = tpu.dynamic_rotate %92 by %c32_i32_61 dim 1 : vector<4x1024xf32>, i32 -> vector<4x1024xf32>
    %c1_62 = arith.constant 1 : index
    %c0_63 = arith.constant 0 : index
    %103 = vector.load %arg3[%c1_62, %c0_63] : memref<9x1024xf32, #tpu.memory_space<vmem>>, vector<1x1024xf32>
    %104 = vector.broadcast %103 : vector<1x1024xf32> to vector<4x1024xf32>
    %105 = arith.mulf %102, %104 : vector<4x1024xf32>
    %c1_64 = arith.constant 1 : index
    %c0_65 = arith.constant 0 : index
    %c0_66 = arith.constant 0 : index
    %106 = vector.load %arg7[%c1_64, %c0_65, %c0_66] : memref<9x4x4xbf16, #tpu.memory_space<vmem>>, vector<1x4x4xbf16>
    %107 = vector.shape_cast %106 : vector<1x4x4xbf16> to vector<4x4xbf16>
    %108 = arith.truncf %105 : vector<4x1024xf32> to vector<4x1024xbf16>
    %cst_67 = arith.constant dense<0.000000e+00> : vector<4x1024xf32>
    %109 = tpu.matmul %107, %108, %cst_67 {dimension_numbers = #tpu.dot_dimension_numbers<[1], [0], [0], [1], [0, 0, 1, 1], [], []>} : vector<4x4xbf16>, vector<4x1024xbf16>, vector<4x1024xf32> -> vector<4x1024xf32>
    %110 = arith.addf %101, %109 : vector<4x1024xf32>
    %c31_i32_68 = arith.constant 31 : i32
    %111 = tpu.dynamic_rotate %92 by %c31_i32_68 dim 1 : vector<4x1024xf32>, i32 -> vector<4x1024xf32>
    %c2_69 = arith.constant 2 : index
    %c0_70 = arith.constant 0 : index
    %112 = vector.load %arg3[%c2_69, %c0_70] : memref<9x1024xf32, #tpu.memory_space<vmem>>, vector<1x1024xf32>
    %113 = vector.broadcast %112 : vector<1x1024xf32> to vector<4x1024xf32>
    %114 = arith.mulf %111, %113 : vector<4x1024xf32>
    %c2_71 = arith.constant 2 : index
    %c0_72 = arith.constant 0 : index
    %c0_73 = arith.constant 0 : index
    %115 = vector.load %arg7[%c2_71, %c0_72, %c0_73] : memref<9x4x4xbf16, #tpu.memory_space<vmem>>, vector<1x4x4xbf16>
    %116 = vector.shape_cast %115 : vector<1x4x4xbf16> to vector<4x4xbf16>
    %117 = arith.truncf %114 : vector<4x1024xf32> to vector<4x1024xbf16>
    %cst_74 = arith.constant dense<0.000000e+00> : vector<4x1024xf32>
    %118 = tpu.matmul %116, %117, %cst_74 {dimension_numbers = #tpu.dot_dimension_numbers<[1], [0], [0], [1], [0, 0, 1, 1], [], []>} : vector<4x4xbf16>, vector<4x1024xbf16>, vector<4x1024xf32> -> vector<4x1024xf32>
    %119 = arith.addf %110, %118 : vector<4x1024xf32>
    %c1_i32_75 = arith.constant 1 : i32
    %120 = tpu.dynamic_rotate %92 by %c1_i32_75 dim 1 : vector<4x1024xf32>, i32 -> vector<4x1024xf32>
    %c3_76 = arith.constant 3 : index
    %c0_77 = arith.constant 0 : index
    %121 = vector.load %arg3[%c3_76, %c0_77] : memref<9x1024xf32, #tpu.memory_space<vmem>>, vector<1x1024xf32>
    %122 = vector.broadcast %121 : vector<1x1024xf32> to vector<4x1024xf32>
    %123 = arith.mulf %120, %122 : vector<4x1024xf32>
    %c3_78 = arith.constant 3 : index
    %c0_79 = arith.constant 0 : index
    %c0_80 = arith.constant 0 : index
    %124 = vector.load %arg7[%c3_78, %c0_79, %c0_80] : memref<9x4x4xbf16, #tpu.memory_space<vmem>>, vector<1x4x4xbf16>
    %125 = vector.shape_cast %124 : vector<1x4x4xbf16> to vector<4x4xbf16>
    %126 = arith.truncf %123 : vector<4x1024xf32> to vector<4x1024xbf16>
    %cst_81 = arith.constant dense<0.000000e+00> : vector<4x1024xf32>
    %127 = tpu.matmul %125, %126, %cst_81 {dimension_numbers = #tpu.dot_dimension_numbers<[1], [0], [0], [1], [0, 0, 1, 1], [], []>} : vector<4x4xbf16>, vector<4x1024xbf16>, vector<4x1024xf32> -> vector<4x1024xf32>
    %128 = arith.addf %119, %127 : vector<4x1024xf32>
    %c4_82 = arith.constant 4 : index
    %c0_83 = arith.constant 0 : index
    %c0_84 = arith.constant 0 : index
    %129 = vector.load %arg7[%c4_82, %c0_83, %c0_84] : memref<9x4x4xbf16, #tpu.memory_space<vmem>>, vector<1x4x4xbf16>
    %130 = vector.shape_cast %129 : vector<1x4x4xbf16> to vector<4x4xbf16>
    %131 = arith.truncf %92 : vector<4x1024xf32> to vector<4x1024xbf16>
    %cst_85 = arith.constant dense<0.000000e+00> : vector<4x1024xf32>
    %132 = tpu.matmul %130, %131, %cst_85 {dimension_numbers = #tpu.dot_dimension_numbers<[1], [0], [0], [1], [0, 0, 1, 1], [], []>} : vector<4x4xbf16>, vector<4x1024xbf16>, vector<4x1024xf32> -> vector<4x1024xf32>
    %133 = arith.addf %128, %132 : vector<4x1024xf32>
    %c1023_i32_86 = arith.constant 1023 : i32
    %134 = tpu.dynamic_rotate %92 by %c1023_i32_86 dim 1 : vector<4x1024xf32>, i32 -> vector<4x1024xf32>
    %c5_87 = arith.constant 5 : index
    %c0_88 = arith.constant 0 : index
    %135 = vector.load %arg3[%c5_87, %c0_88] : memref<9x1024xf32, #tpu.memory_space<vmem>>, vector<1x1024xf32>
    %136 = vector.broadcast %135 : vector<1x1024xf32> to vector<4x1024xf32>
    %137 = arith.mulf %134, %136 : vector<4x1024xf32>
    %c5_89 = arith.constant 5 : index
    %c0_90 = arith.constant 0 : index
    %c0_91 = arith.constant 0 : index
    %138 = vector.load %arg7[%c5_89, %c0_90, %c0_91] : memref<9x4x4xbf16, #tpu.memory_space<vmem>>, vector<1x4x4xbf16>
    %139 = vector.shape_cast %138 : vector<1x4x4xbf16> to vector<4x4xbf16>
    %140 = arith.truncf %137 : vector<4x1024xf32> to vector<4x1024xbf16>
    %cst_92 = arith.constant dense<0.000000e+00> : vector<4x1024xf32>
    %141 = tpu.matmul %139, %140, %cst_92 {dimension_numbers = #tpu.dot_dimension_numbers<[1], [0], [0], [1], [0, 0, 1, 1], [], []>} : vector<4x4xbf16>, vector<4x1024xbf16>, vector<4x1024xf32> -> vector<4x1024xf32>
    %142 = arith.addf %133, %141 : vector<4x1024xf32>
    %c993_i32_93 = arith.constant 993 : i32
    %143 = tpu.dynamic_rotate %92 by %c993_i32_93 dim 1 : vector<4x1024xf32>, i32 -> vector<4x1024xf32>
    %c6_94 = arith.constant 6 : index
    %c0_95 = arith.constant 0 : index
    %144 = vector.load %arg3[%c6_94, %c0_95] : memref<9x1024xf32, #tpu.memory_space<vmem>>, vector<1x1024xf32>
    %145 = vector.broadcast %144 : vector<1x1024xf32> to vector<4x1024xf32>
    %146 = arith.mulf %143, %145 : vector<4x1024xf32>
    %c6_96 = arith.constant 6 : index
    %c0_97 = arith.constant 0 : index
    %c0_98 = arith.constant 0 : index
    %147 = vector.load %arg7[%c6_96, %c0_97, %c0_98] : memref<9x4x4xbf16, #tpu.memory_space<vmem>>, vector<1x4x4xbf16>
    %148 = vector.shape_cast %147 : vector<1x4x4xbf16> to vector<4x4xbf16>
    %149 = arith.truncf %146 : vector<4x1024xf32> to vector<4x1024xbf16>
    %cst_99 = arith.constant dense<0.000000e+00> : vector<4x1024xf32>
    %150 = tpu.matmul %148, %149, %cst_99 {dimension_numbers = #tpu.dot_dimension_numbers<[1], [0], [0], [1], [0, 0, 1, 1], [], []>} : vector<4x4xbf16>, vector<4x1024xbf16>, vector<4x1024xf32> -> vector<4x1024xf32>
    %151 = arith.addf %142, %150 : vector<4x1024xf32>
    %c992_i32_100 = arith.constant 992 : i32
    %152 = tpu.dynamic_rotate %92 by %c992_i32_100 dim 1 : vector<4x1024xf32>, i32 -> vector<4x1024xf32>
    %c7_101 = arith.constant 7 : index
    %c0_102 = arith.constant 0 : index
    %153 = vector.load %arg3[%c7_101, %c0_102] : memref<9x1024xf32, #tpu.memory_space<vmem>>, vector<1x1024xf32>
    %154 = vector.broadcast %153 : vector<1x1024xf32> to vector<4x1024xf32>
    %155 = arith.mulf %152, %154 : vector<4x1024xf32>
    %c7_103 = arith.constant 7 : index
    %c0_104 = arith.constant 0 : index
    %c0_105 = arith.constant 0 : index
    %156 = vector.load %arg7[%c7_103, %c0_104, %c0_105] : memref<9x4x4xbf16, #tpu.memory_space<vmem>>, vector<1x4x4xbf16>
    %157 = vector.shape_cast %156 : vector<1x4x4xbf16> to vector<4x4xbf16>
    %158 = arith.truncf %155 : vector<4x1024xf32> to vector<4x1024xbf16>
    %cst_106 = arith.constant dense<0.000000e+00> : vector<4x1024xf32>
    %159 = tpu.matmul %157, %158, %cst_106 {dimension_numbers = #tpu.dot_dimension_numbers<[1], [0], [0], [1], [0, 0, 1, 1], [], []>} : vector<4x4xbf16>, vector<4x1024xbf16>, vector<4x1024xf32> -> vector<4x1024xf32>
    %160 = arith.addf %151, %159 : vector<4x1024xf32>
    %c991_i32_107 = arith.constant 991 : i32
    %161 = tpu.dynamic_rotate %92 by %c991_i32_107 dim 1 : vector<4x1024xf32>, i32 -> vector<4x1024xf32>
    %c8_108 = arith.constant 8 : index
    %c0_109 = arith.constant 0 : index
    %162 = vector.load %arg3[%c8_108, %c0_109] : memref<9x1024xf32, #tpu.memory_space<vmem>>, vector<1x1024xf32>
    %163 = vector.broadcast %162 : vector<1x1024xf32> to vector<4x1024xf32>
    %164 = arith.mulf %161, %163 : vector<4x1024xf32>
    %c8_110 = arith.constant 8 : index
    %c0_111 = arith.constant 0 : index
    %c0_112 = arith.constant 0 : index
    %165 = vector.load %arg7[%c8_110, %c0_111, %c0_112] : memref<9x4x4xbf16, #tpu.memory_space<vmem>>, vector<1x4x4xbf16>
    %166 = vector.shape_cast %165 : vector<1x4x4xbf16> to vector<4x4xbf16>
    %167 = arith.truncf %164 : vector<4x1024xf32> to vector<4x1024xbf16>
    %cst_113 = arith.constant dense<0.000000e+00> : vector<4x1024xf32>
    %168 = tpu.matmul %166, %167, %cst_113 {dimension_numbers = #tpu.dot_dimension_numbers<[1], [0], [0], [1], [0, 0, 1, 1], [], []>} : vector<4x4xbf16>, vector<4x1024xbf16>, vector<4x1024xf32> -> vector<4x1024xf32>
    %169 = arith.addf %160, %168 : vector<4x1024xf32>
    %c0_114 = arith.constant 0 : index
    %c0_115 = arith.constant 0 : index
    %170 = vector.load %arg8[%c0_114, %c0_115] : memref<4x1xf32, #tpu.memory_space<vmem>>, vector<4x1xf32>
    %171 = vector.broadcast %170 : vector<4x1xf32> to vector<4x1024xf32>
    %172 = arith.addf %169, %171 : vector<4x1024xf32>
    %cst_116 = arith.constant 0.000000e+00 : f32
    %173 = vector.broadcast %cst_116 : f32 to vector<4x1024xf32>
    %174 = arith.maximumf %172, %173 : vector<4x1024xf32>
    %cst_117 = arith.constant 0.000000e+00 : f32
    %175 = vector.broadcast %cst_117 : f32 to vector<4x1024xf32>
    %c33_i32_118 = arith.constant 33 : i32
    %176 = tpu.dynamic_rotate %174 by %c33_i32_118 dim 1 : vector<4x1024xf32>, i32 -> vector<4x1024xf32>
    %c0_119 = arith.constant 0 : index
    %c0_120 = arith.constant 0 : index
    %177 = vector.load %arg3[%c0_119, %c0_120] : memref<9x1024xf32, #tpu.memory_space<vmem>>, vector<1x1024xf32>
    %178 = vector.broadcast %177 : vector<1x1024xf32> to vector<4x1024xf32>
    %179 = arith.mulf %176, %178 : vector<4x1024xf32>
    %c0_121 = arith.constant 0 : index
    %c0_122 = arith.constant 0 : index
    %c0_123 = arith.constant 0 : index
    %180 = vector.load %arg9[%c0_121, %c0_122, %c0_123] : memref<9x4x4xbf16, #tpu.memory_space<vmem>>, vector<1x4x4xbf16>
    %181 = vector.shape_cast %180 : vector<1x4x4xbf16> to vector<4x4xbf16>
    %182 = arith.truncf %179 : vector<4x1024xf32> to vector<4x1024xbf16>
    %cst_124 = arith.constant dense<0.000000e+00> : vector<4x1024xf32>
    %183 = tpu.matmul %181, %182, %cst_124 {dimension_numbers = #tpu.dot_dimension_numbers<[1], [0], [0], [1], [0, 0, 1, 1], [], []>} : vector<4x4xbf16>, vector<4x1024xbf16>, vector<4x1024xf32> -> vector<4x1024xf32>
    %184 = arith.addf %175, %183 : vector<4x1024xf32>
    %c32_i32_125 = arith.constant 32 : i32
    %185 = tpu.dynamic_rotate %174 by %c32_i32_125 dim 1 : vector<4x1024xf32>, i32 -> vector<4x1024xf32>
    %c1_126 = arith.constant 1 : index
    %c0_127 = arith.constant 0 : index
    %186 = vector.load %arg3[%c1_126, %c0_127] : memref<9x1024xf32, #tpu.memory_space<vmem>>, vector<1x1024xf32>
    %187 = vector.broadcast %186 : vector<1x1024xf32> to vector<4x1024xf32>
    %188 = arith.mulf %185, %187 : vector<4x1024xf32>
    %c1_128 = arith.constant 1 : index
    %c0_129 = arith.constant 0 : index
    %c0_130 = arith.constant 0 : index
    %189 = vector.load %arg9[%c1_128, %c0_129, %c0_130] : memref<9x4x4xbf16, #tpu.memory_space<vmem>>, vector<1x4x4xbf16>
    %190 = vector.shape_cast %189 : vector<1x4x4xbf16> to vector<4x4xbf16>
    %191 = arith.truncf %188 : vector<4x1024xf32> to vector<4x1024xbf16>
    %cst_131 = arith.constant dense<0.000000e+00> : vector<4x1024xf32>
    %192 = tpu.matmul %190, %191, %cst_131 {dimension_numbers = #tpu.dot_dimension_numbers<[1], [0], [0], [1], [0, 0, 1, 1], [], []>} : vector<4x4xbf16>, vector<4x1024xbf16>, vector<4x1024xf32> -> vector<4x1024xf32>
    %193 = arith.addf %184, %192 : vector<4x1024xf32>
    %c31_i32_132 = arith.constant 31 : i32
    %194 = tpu.dynamic_rotate %174 by %c31_i32_132 dim 1 : vector<4x1024xf32>, i32 -> vector<4x1024xf32>
    %c2_133 = arith.constant 2 : index
    %c0_134 = arith.constant 0 : index
    %195 = vector.load %arg3[%c2_133, %c0_134] : memref<9x1024xf32, #tpu.memory_space<vmem>>, vector<1x1024xf32>
    %196 = vector.broadcast %195 : vector<1x1024xf32> to vector<4x1024xf32>
    %197 = arith.mulf %194, %196 : vector<4x1024xf32>
    %c2_135 = arith.constant 2 : index
    %c0_136 = arith.constant 0 : index
    %c0_137 = arith.constant 0 : index
    %198 = vector.load %arg9[%c2_135, %c0_136, %c0_137] : memref<9x4x4xbf16, #tpu.memory_space<vmem>>, vector<1x4x4xbf16>
    %199 = vector.shape_cast %198 : vector<1x4x4xbf16> to vector<4x4xbf16>
    %200 = arith.truncf %197 : vector<4x1024xf32> to vector<4x1024xbf16>
    %cst_138 = arith.constant dense<0.000000e+00> : vector<4x1024xf32>
    %201 = tpu.matmul %199, %200, %cst_138 {dimension_numbers = #tpu.dot_dimension_numbers<[1], [0], [0], [1], [0, 0, 1, 1], [], []>} : vector<4x4xbf16>, vector<4x1024xbf16>, vector<4x1024xf32> -> vector<4x1024xf32>
    %202 = arith.addf %193, %201 : vector<4x1024xf32>
    %c1_i32_139 = arith.constant 1 : i32
    %203 = tpu.dynamic_rotate %174 by %c1_i32_139 dim 1 : vector<4x1024xf32>, i32 -> vector<4x1024xf32>
    %c3_140 = arith.constant 3 : index
    %c0_141 = arith.constant 0 : index
    %204 = vector.load %arg3[%c3_140, %c0_141] : memref<9x1024xf32, #tpu.memory_space<vmem>>, vector<1x1024xf32>
    %205 = vector.broadcast %204 : vector<1x1024xf32> to vector<4x1024xf32>
    %206 = arith.mulf %203, %205 : vector<4x1024xf32>
    %c3_142 = arith.constant 3 : index
    %c0_143 = arith.constant 0 : index
    %c0_144 = arith.constant 0 : index
    %207 = vector.load %arg9[%c3_142, %c0_143, %c0_144] : memref<9x4x4xbf16, #tpu.memory_space<vmem>>, vector<1x4x4xbf16>
    %208 = vector.shape_cast %207 : vector<1x4x4xbf16> to vector<4x4xbf16>
    %209 = arith.truncf %206 : vector<4x1024xf32> to vector<4x1024xbf16>
    %cst_145 = arith.constant dense<0.000000e+00> : vector<4x1024xf32>
    %210 = tpu.matmul %208, %209, %cst_145 {dimension_numbers = #tpu.dot_dimension_numbers<[1], [0], [0], [1], [0, 0, 1, 1], [], []>} : vector<4x4xbf16>, vector<4x1024xbf16>, vector<4x1024xf32> -> vector<4x1024xf32>
    %211 = arith.addf %202, %210 : vector<4x1024xf32>
    %c4_146 = arith.constant 4 : index
    %c0_147 = arith.constant 0 : index
    %c0_148 = arith.constant 0 : index
    %212 = vector.load %arg9[%c4_146, %c0_147, %c0_148] : memref<9x4x4xbf16, #tpu.memory_space<vmem>>, vector<1x4x4xbf16>
    %213 = vector.shape_cast %212 : vector<1x4x4xbf16> to vector<4x4xbf16>
    %214 = arith.truncf %174 : vector<4x1024xf32> to vector<4x1024xbf16>
    %cst_149 = arith.constant dense<0.000000e+00> : vector<4x1024xf32>
    %215 = tpu.matmul %213, %214, %cst_149 {dimension_numbers = #tpu.dot_dimension_numbers<[1], [0], [0], [1], [0, 0, 1, 1], [], []>} : vector<4x4xbf16>, vector<4x1024xbf16>, vector<4x1024xf32> -> vector<4x1024xf32>
    %216 = arith.addf %211, %215 : vector<4x1024xf32>
    %c1023_i32_150 = arith.constant 1023 : i32
    %217 = tpu.dynamic_rotate %174 by %c1023_i32_150 dim 1 : vector<4x1024xf32>, i32 -> vector<4x1024xf32>
    %c5_151 = arith.constant 5 : index
    %c0_152 = arith.constant 0 : index
    %218 = vector.load %arg3[%c5_151, %c0_152] : memref<9x1024xf32, #tpu.memory_space<vmem>>, vector<1x1024xf32>
    %219 = vector.broadcast %218 : vector<1x1024xf32> to vector<4x1024xf32>
    %220 = arith.mulf %217, %219 : vector<4x1024xf32>
    %c5_153 = arith.constant 5 : index
    %c0_154 = arith.constant 0 : index
    %c0_155 = arith.constant 0 : index
    %221 = vector.load %arg9[%c5_153, %c0_154, %c0_155] : memref<9x4x4xbf16, #tpu.memory_space<vmem>>, vector<1x4x4xbf16>
    %222 = vector.shape_cast %221 : vector<1x4x4xbf16> to vector<4x4xbf16>
    %223 = arith.truncf %220 : vector<4x1024xf32> to vector<4x1024xbf16>
    %cst_156 = arith.constant dense<0.000000e+00> : vector<4x1024xf32>
    %224 = tpu.matmul %222, %223, %cst_156 {dimension_numbers = #tpu.dot_dimension_numbers<[1], [0], [0], [1], [0, 0, 1, 1], [], []>} : vector<4x4xbf16>, vector<4x1024xbf16>, vector<4x1024xf32> -> vector<4x1024xf32>
    %225 = arith.addf %216, %224 : vector<4x1024xf32>
    %c993_i32_157 = arith.constant 993 : i32
    %226 = tpu.dynamic_rotate %174 by %c993_i32_157 dim 1 : vector<4x1024xf32>, i32 -> vector<4x1024xf32>
    %c6_158 = arith.constant 6 : index
    %c0_159 = arith.constant 0 : index
    %227 = vector.load %arg3[%c6_158, %c0_159] : memref<9x1024xf32, #tpu.memory_space<vmem>>, vector<1x1024xf32>
    %228 = vector.broadcast %227 : vector<1x1024xf32> to vector<4x1024xf32>
    %229 = arith.mulf %226, %228 : vector<4x1024xf32>
    %c6_160 = arith.constant 6 : index
    %c0_161 = arith.constant 0 : index
    %c0_162 = arith.constant 0 : index
    %230 = vector.load %arg9[%c6_160, %c0_161, %c0_162] : memref<9x4x4xbf16, #tpu.memory_space<vmem>>, vector<1x4x4xbf16>
    %231 = vector.shape_cast %230 : vector<1x4x4xbf16> to vector<4x4xbf16>
    %232 = arith.truncf %229 : vector<4x1024xf32> to vector<4x1024xbf16>
    %cst_163 = arith.constant dense<0.000000e+00> : vector<4x1024xf32>
    %233 = tpu.matmul %231, %232, %cst_163 {dimension_numbers = #tpu.dot_dimension_numbers<[1], [0], [0], [1], [0, 0, 1, 1], [], []>} : vector<4x4xbf16>, vector<4x1024xbf16>, vector<4x1024xf32> -> vector<4x1024xf32>
    %234 = arith.addf %225, %233 : vector<4x1024xf32>
    %c992_i32_164 = arith.constant 992 : i32
    %235 = tpu.dynamic_rotate %174 by %c992_i32_164 dim 1 : vector<4x1024xf32>, i32 -> vector<4x1024xf32>
    %c7_165 = arith.constant 7 : index
    %c0_166 = arith.constant 0 : index
    %236 = vector.load %arg3[%c7_165, %c0_166] : memref<9x1024xf32, #tpu.memory_space<vmem>>, vector<1x1024xf32>
    %237 = vector.broadcast %236 : vector<1x1024xf32> to vector<4x1024xf32>
    %238 = arith.mulf %235, %237 : vector<4x1024xf32>
    %c7_167 = arith.constant 7 : index
    %c0_168 = arith.constant 0 : index
    %c0_169 = arith.constant 0 : index
    %239 = vector.load %arg9[%c7_167, %c0_168, %c0_169] : memref<9x4x4xbf16, #tpu.memory_space<vmem>>, vector<1x4x4xbf16>
    %240 = vector.shape_cast %239 : vector<1x4x4xbf16> to vector<4x4xbf16>
    %241 = arith.truncf %238 : vector<4x1024xf32> to vector<4x1024xbf16>
    %cst_170 = arith.constant dense<0.000000e+00> : vector<4x1024xf32>
    %242 = tpu.matmul %240, %241, %cst_170 {dimension_numbers = #tpu.dot_dimension_numbers<[1], [0], [0], [1], [0, 0, 1, 1], [], []>} : vector<4x4xbf16>, vector<4x1024xbf16>, vector<4x1024xf32> -> vector<4x1024xf32>
    %243 = arith.addf %234, %242 : vector<4x1024xf32>
    %c991_i32_171 = arith.constant 991 : i32
    %244 = tpu.dynamic_rotate %174 by %c991_i32_171 dim 1 : vector<4x1024xf32>, i32 -> vector<4x1024xf32>
    %c8_172 = arith.constant 8 : index
    %c0_173 = arith.constant 0 : index
    %245 = vector.load %arg3[%c8_172, %c0_173] : memref<9x1024xf32, #tpu.memory_space<vmem>>, vector<1x1024xf32>
    %246 = vector.broadcast %245 : vector<1x1024xf32> to vector<4x1024xf32>
    %247 = arith.mulf %244, %246 : vector<4x1024xf32>
    %c8_174 = arith.constant 8 : index
    %c0_175 = arith.constant 0 : index
    %c0_176 = arith.constant 0 : index
    %248 = vector.load %arg9[%c8_174, %c0_175, %c0_176] : memref<9x4x4xbf16, #tpu.memory_space<vmem>>, vector<1x4x4xbf16>
    %249 = vector.shape_cast %248 : vector<1x4x4xbf16> to vector<4x4xbf16>
    %250 = arith.truncf %247 : vector<4x1024xf32> to vector<4x1024xbf16>
    %cst_177 = arith.constant dense<0.000000e+00> : vector<4x1024xf32>
    %251 = tpu.matmul %249, %250, %cst_177 {dimension_numbers = #tpu.dot_dimension_numbers<[1], [0], [0], [1], [0, 0, 1, 1], [], []>} : vector<4x4xbf16>, vector<4x1024xbf16>, vector<4x1024xf32> -> vector<4x1024xf32>
    %252 = arith.addf %243, %251 : vector<4x1024xf32>
    %c0_178 = arith.constant 0 : index
    %c0_179 = arith.constant 0 : index
    %253 = vector.load %arg10[%c0_178, %c0_179] : memref<4x1xf32, #tpu.memory_space<vmem>>, vector<4x1xf32>
    %254 = vector.broadcast %253 : vector<4x1xf32> to vector<4x1024xf32>
    %255 = arith.addf %252, %254 : vector<4x1024xf32>
    %cst_180 = arith.constant 0.000000e+00 : f32
    %256 = vector.broadcast %cst_180 : f32 to vector<4x1024xf32>
    %257 = arith.maximumf %255, %256 : vector<4x1024xf32>
    %c0_181 = arith.constant 0 : index
    %c0_182 = arith.constant 0 : index
    %c0_183 = arith.constant 0 : index
    %258 = vector.load %arg11[%c0_181, %c0_182, %c0_183] : memref<1x4x1024xf32, #tpu.memory_space<vmem>>, vector<1x4x1024xf32>
    %259 = vector.shape_cast %258 : vector<1x4x1024xf32> to vector<4x1024xf32>
    %260 = vector.shape_cast %257 : vector<4x1024xf32> to vector<1x4x1024xf32>
    tpu.vector_store %arg11[%c0_181, %c0_182, %c0_183], %260 {strides = array<i32>} : memref<1x4x1024xf32, #tpu.memory_space<vmem>>, vector<1x4x1024xf32>,
    return
  }
  func.func @transform_0(%arg0: i32) -> (i32, i32, i32) {
    %c0_i32 = arith.constant 0 : i32
    %c0_i32_0 = arith.constant 0 : i32
    %c0_i32_1 = arith.constant 0 : i32
    return %arg0, %c0_i32, %c0_i32_0 : i32, i32, i32
  }
  func.func @transform_1(%arg0: i32) -> (i32, i32, i32) {
    %c0_i32 = arith.constant 0 : i32
    %c0_i32_0 = arith.constant 0 : i32
    %c0_i32_1 = arith.constant 0 : i32
    return %arg0, %c0_i32, %c0_i32_0 : i32, i32, i32
  }
  func.func @transform_2(%arg0: i32) -> (i32, i32) {
    %c0_i32 = arith.constant 0 : i32
    %c0_i32_0 = arith.constant 0 : i32
    %c0_i32_1 = arith.constant 0 : i32
    return %c0_i32, %c0_i32_0 : i32, i32
  }
  func.func @transform_3(%arg0: i32) -> (i32, i32) {
    %c0_i32 = arith.constant 0 : i32
    %c0_i32_0 = arith.constant 0 : i32
    %c0_i32_1 = arith.constant 0 : i32
    return %c0_i32, %c0_i32_0 : i32, i32
  }
  func.func @transform_4(%arg0: i32) -> (i32, i32) {
    %c0_i32 = arith.constant 0 : i32
    %c0_i32_0 = arith.constant 0 : i32
    %c0_i32_1 = arith.constant 0 : i32
    return %c0_i32, %c0_i32_0 : i32, i32
  }
  func.func @transform_5(%arg0: i32) -> (i32, i32, i32) {
    %c0_i32 = arith.constant 0 : i32
    %c0_i32_0 = arith.constant 0 : i32
    %c0_i32_1 = arith.constant 0 : i32
    %c0_i32_2 = arith.constant 0 : i32
    return %c0_i32, %c0_i32_0, %c0_i32_1 : i32, i32, i32
  }
  func.func @transform_6(%arg0: i32) -> (i32, i32, i32) {
    %c0_i32 = arith.constant 0 : i32
    %c0_i32_0 = arith.constant 0 : i32
    %c0_i32_1 = arith.constant 0 : i32
    %c0_i32_2 = arith.constant 0 : i32
    return %c0_i32, %c0_i32_0, %c0_i32_1 : i32, i32, i32
  }
  func.func @transform_7(%arg0: i32) -> (i32, i32) {
    %c0_i32 = arith.constant 0 : i32
    %c0_i32_0 = arith.constant 0 : i32
    %c0_i32_1 = arith.constant 0 : i32
    return %c0_i32, %c0_i32_0 : i32, i32
  }
  func.func @transform_8(%arg0: i32) -> (i32, i32, i32) {
    %c0_i32 = arith.constant 0 : i32
    %c0_i32_0 = arith.constant 0 : i32
    %c0_i32_1 = arith.constant 0 : i32
    %c0_i32_2 = arith.constant 0 : i32
    return %c0_i32, %c0_i32_0, %c0_i32_1 : i32, i32, i32
  }
  func.func @transform_9(%arg0: i32) -> (i32, i32) {
    %c0_i32 = arith.constant 0 : i32
    %c0_i32_0 = arith.constant 0 : i32
    %c0_i32_1 = arith.constant 0 : i32
    return %c0_i32, %c0_i32_0 : i32, i32
  }
  func.func @transform_10(%arg0: i32) -> (i32, i32, i32) {
    %c0_i32 = arith.constant 0 : i32
    %c0_i32_0 = arith.constant 0 : i32
    %c0_i32_1 = arith.constant 0 : i32
    return %arg0, %c0_i32, %c0_i32_0 : i32, i32, i32
  }
}

</mosaic_0001>

<llo_original>
// kernel: up_step.1
$region0: #{up_step.1}
  #allocation0 [shape = 'u32[]', space=smem, size = 0x4, offset = 0x4, fixed_abs, tag = 'smem constant byte address 0x4 - core index']
  #allocation1 [shape = 'u32[144,128]{1,0:T(1,128)}', space=vmem, size = 0x12000, scoped, tag = 'internal scratch']
  %s0 = inlined_call_operand.vmem [shape: bf16[2,16,512], index: 0, kind: input, shape index: {}]
  %s1 = inlined_call_operand.vmem [shape: f32[2,4,1024], index: 1, kind: input, shape index: {}]
  %s2 = inlined_call_operand.vmem [shape: f32[9,1024], index: 2, kind: input, shape index: {}]
  %s3 = inlined_call_operand.vmem [shape: bf16[8,16], index: 3, kind: input, shape index: {}]
  %s4 = inlined_call_operand.vmem [shape: f32[8,1], index: 4, kind: input, shape index: {}]
  %s5 = inlined_call_operand.vmem [shape: bf16[9,4,4], index: 5, kind: input, shape index: {}]
  %s6 = inlined_call_operand.vmem [shape: bf16[9,4,4], index: 6, kind: input, shape index: {}]
  %s7 = inlined_call_operand.vmem [shape: f32[4,1], index: 7, kind: input, shape index: {}]
  %s8 = inlined_call_operand.vmem [shape: bf16[9,4,4], index: 8, kind: input, shape index: {}]
  %s9 = inlined_call_operand.vmem [shape: f32[4,1], index: 9, kind: input, shape index: {}]
  %s10 = inlined_call_operand.vmem [shape: f32[2,4,1024], index: 10, kind: output, shape index: {}]
  %s11 = sld [smem:[#allocation0]]
  $region73: #{up_step.1} parent=0
    _
  %s13 = ssub.s32 1, %s11
  %s14 = scalar_select 0, %s13, %s11
  loop: start=0, step=1, limit=4
  $region2: #{up_step.1} parent=0 // loop_pre_header
    _
  $region3: #{up_step.1} parent=0 // loop_header
    %s16 = sphi 0, %s20
    %p17 = scmp.ge.s32.totalorder %s16, 4
    %s26 = sphi 0, %s28
    %s29 = sphi 0, %s26
    %s30 = sphi 0, %s29
    %s46 = sphi 0, %s30
    %s52 = sphi 0, %s54
    %s55 = sphi 0, %s52
    %s56 = sphi 0, %s55
    %s72 = sphi 0, %s56
    %s76 = sphi 0, %s76
    %s78 = sphi 0, %s76
    %s79 = sphi 0, %s78
    %s93 = sphi 0, %s79
    %s97 = sphi 0, %s97
    %s99 = sphi 0, %s97
    %s100 = sphi 0, %s99
    %s114 = sphi 0, %s100
    %s118 = sphi 0, %s118
    %s120 = sphi 0, %s118
    %s121 = sphi 0, %s120
    %s135 = sphi 0, %s121
    %s139 = sphi 0, %s139
    %s141 = sphi 0, %s139
    %s142 = sphi 0, %s141
    %s156 = sphi 0, %s142
    %s160 = sphi 0, %s160
    %s162 = sphi 0, %s160
    %s163 = sphi 0, %s162
    %s177 = sphi 0, %s163
    %s181 = sphi 0, %s181
    %s183 = sphi 0, %s181
    %s184 = sphi 0, %s183
    %s198 = sphi 0, %s184
    %s202 = sphi 0, %s202
    %s204 = sphi 0, %s202
    %s205 = sphi 0, %s204
    %s219 = sphi 0, %s205
    %s223 = sphi 0, %s223
    %s225 = sphi 0, %s223
    %s226 = sphi 0, %s225
    %s240 = sphi 0, %s226
    %s246 = sphi 0, %s248
    %s249 = sphi 0, %s246
    %s250 = sphi 0, %s249
    %s266 = sphi 0, %s250
  $region4: #{up_step.1} parent=0 // loop_header_branch
    %19 = sbr.rel (%p17) target = $region8
  $region5: #{up_step.1} parent=0 // loop_body
    %s21 = ssub.s32 %s16, 1
    %s22 = ssub.s32 %s16, 2
    %s23 = sadd.s32 %s16, 1
    %s24 = ssub.s32 %s16, %s23
    %p25 = scmp.eq.s32.totalorder %s24, 0
    %s27 = sadd.s32 %s26, 1
    %s28 = scalar_select %p25, %s26, %s27
    %p31 = pneg %p25
    %p32 = scmp.eq.s32.totalorder %s16, 1
    %p33 = por %p31, %p32
    %p34 = scmp.ne.s32.totalorder %s26, %s29
    %p35 = scmp.eq.s32.totalorder %s16, 0
    %p36 = por %p34, %p35
    %p37 = scmp.ne.s32.totalorder %s26, %s29
    %p38 = scmp.eq.s32.totalorder %s21, 1
    %p39 = por %p37, %p38
    %p40 = scmp.ne.s32.totalorder %s29, %s30
    %p41 = scmp.eq.s32.totalorder %s21, 0
    %p42 = por %p40, %p41
    %p43 = scmp.ne.s32.totalorder %s29, %s30
    %p44 = scmp.eq.s32.totalorder %s22, 1
    %p45 = por %p43, %p44
    %p47 = scmp.ne.s32.totalorder %s30, %s46
    %p48 = scmp.eq.s32.totalorder %s22, 0
    %p49 = por %p47, %p48
    %s50 = ssub.s32 %s16, %s23
    %p51 = scmp.eq.s32.totalorder %s50, 0
    %s53 = sadd.s32 %s52, 1
    %s54 = scalar_select %p51, %s52, %s53
    %p57 = pneg %p51
    %p58 = scmp.eq.s32.totalorder %s16, 1
    %p59 = por %p57, %p58
    %p60 = scmp.ne.s32.totalorder %s52, %s55
    %p61 = scmp.eq.s32.totalorder %s16, 0
    %p62 = por %p60, %p61
    %p63 = scmp.ne.s32.totalorder %s52, %s55
    %p64 = scmp.eq.s32.totalorder %s21, 1
    %p65 = por %p63, %p64
    %p66 = scmp.ne.s32.totalorder %s55, %s56
    %p67 = scmp.eq.s32.totalorder %s21, 0
    %p68 = por %p66, %p67
    %p69 = scmp.ne.s32.totalorder %s55, %s56
    %p70 = scmp.eq.s32.totalorder %s22, 1
    %p71 = por %p69, %p70
    %p73 = scmp.ne.s32.totalorder %s56, %s72
    %p74 = scmp.eq.s32.totalorder %s22, 0
    %p75 = por %p73, %p74
    %s77 = sadd.s32 %s76, 1
    %p80 = scmp.eq.s32.totalorder %s16, 1
    %p81 = scmp.ne.s32.totalorder %s76, %s78
    %p82 = scmp.eq.s32.totalorder %s16, 0
    %p83 = por %p81, %p82
    %p84 = scmp.ne.s32.totalorder %s76, %s78
    %p85 = scmp.eq.s32.totalorder %s21, 1
    %p86 = por %p84, %p85
    %p87 = scmp.ne.s32.totalorder %s78, %s79
    %p88 = scmp.eq.s32.totalorder %s21, 0
    %p89 = por %p87, %p88
    %p90 = scmp.ne.s32.totalorder %s78, %s79
    %p91 = scmp.eq.s32.totalorder %s22, 1
    %p92 = por %p90, %p91
    %p94 = scmp.ne.s32.totalorder %s79, %s93
    %p95 = scmp.eq.s32.totalorder %s22, 0
    %p96 = por %p94, %p95
    %s98 = sadd.s32 %s97, 1
    %p101 = scmp.eq.s32.totalorder %s16, 1
    %p102 = scmp.ne.s32.totalorder %s97, %s99
    %p103 = scmp.eq.s32.totalorder %s16, 0
    %p104 = por %p102, %p103
    %p105 = scmp.ne.s32.totalorder %s97, %s99
    %p106 = scmp.eq.s32.totalorder %s21, 1
    %p107 = por %p105, %p106
    %p108 = scmp.ne.s32.totalorder %s99, %s100
    %p109 = scmp.eq.s32.totalorder %s21, 0
    %p110 = por %p108, %p109
    %p111 = scmp.ne.s32.totalorder %s99, %s100
    %p112 = scmp.eq.s32.totalorder %s22, 1
    %p113 = por %p111, %p112
    %p115 = scmp.ne.s32.totalorder %s100, %s114
    %p116 = scmp.eq.s32.totalorder %s22, 0
    %p117 = por %p115, %p116
    %s119 = sadd.s32 %s118, 1
    %p122 = scmp.eq.s32.totalorder %s16, 1
    %p123 = scmp.ne.s32.totalorder %s118, %s120
    %p124 = scmp.eq.s32.totalorder %s16, 0
    %p125 = por %p123, %p124
    %p126 = scmp.ne.s32.totalorder %s118, %s120
    %p127 = scmp.eq.s32.totalorder %s21, 1
    %p128 = por %p126, %p127
    %p129 = scmp.ne.s32.totalorder %s120, %s121
    %p130 = scmp.eq.s32.totalorder %s21, 0
    %p131 = por %p129, %p130
    %p132 = scmp.ne.s32.totalorder %s120, %s121
    %p133 = scmp.eq.s32.totalorder %s22, 1
    %p134 = por %p132, %p133
    %p136 = scmp.ne.s32.totalorder %s121, %s135
    %p137 = scmp.eq.s32.totalorder %s22, 0
    %p138 = por %p136, %p137
    %s140 = sadd.s32 %s139, 1
    %p143 = scmp.eq.s32.totalorder %s16, 1
    %p144 = scmp.ne.s32.totalorder %s139, %s141
    %p145 = scmp.eq.s32.totalorder %s16, 0
    %p146 = por %p144, %p145
    %p147 = scmp.ne.s32.totalorder %s139, %s141
    %p148 = scmp.eq.s32.totalorder %s21, 1
    %p149 = por %p147, %p148
    %p150 = scmp.ne.s32.totalorder %s141, %s142
    %p151 = scmp.eq.s32.totalorder %s21, 0
    %p152 = por %p150, %p151
    %p153 = scmp.ne.s32.totalorder %s141, %s142
    %p154 = scmp.eq.s32.totalorder %s22, 1
    %p155 = por %p153, %p154
    %p157 = scmp.ne.s32.totalorder %s142, %s156
    %p158 = scmp.eq.s32.totalorder %s22, 0
    %p159 = por %p157, %p158
    %s161 = sadd.s32 %s160, 1
    %p164 = scmp.eq.s32.totalorder %s16, 1
    %p165 = scmp.ne.s32.totalorder %s160, %s162
    %p166 = scmp.eq.s32.totalorder %s16, 0
    %p167 = por %p165, %p166
    %p168 = scmp.ne.s32.totalorder %s160, %s162
    %p169 = scmp.eq.s32.totalorder %s21, 1
    %p170 = por %p168, %p169
    %p171 = scmp.ne.s32.totalorder %s162, %s163
    %p172 = scmp.eq.s32.totalorder %s21, 0
    %p173 = por %p171, %p172
    %p174 = scmp.ne.s32.totalorder %s162, %s163
    %p175 = scmp.eq.s32.totalorder %s22, 1
    %p176 = por %p174, %p175
    %p178 = scmp.ne.s32.totalorder %s163, %s177
    %p179 = scmp.eq.s32.totalorder %s22, 0
    %p180 = por %p178, %p179
    %s182 = sadd.s32 %s181, 1
    %p185 = scmp.eq.s32.totalorder %s16, 1
    %p186 = scmp.ne.s32.totalorder %s181, %s183
    %p187 = scmp.eq.s32.totalorder %s16, 0
    %p188 = por %p186, %p187
    %p189 = scmp.ne.s32.totalorder %s181, %s183
    %p190 = scmp.eq.s32.totalorder %s21, 1
    %p191 = por %p189, %p190
    %p192 = scmp.ne.s32.totalorder %s183, %s184
    %p193 = scmp.eq.s32.totalorder %s21, 0
    %p194 = por %p192, %p193
    %p195 = scmp.ne.s32.totalorder %s183, %s184
    %p196 = scmp.eq.s32.totalorder %s22, 1
    %p197 = por %p195, %p196
    %p199 = scmp.ne.s32.totalorder %s184, %s198
    %p200 = scmp.eq.s32.totalorder %s22, 0
    %p201 = por %p199, %p200
    %s203 = sadd.s32 %s202, 1
    %p206 = scmp.eq.s32.totalorder %s16, 1
    %p207 = scmp.ne.s32.totalorder %s202, %s204
    %p208 = scmp.eq.s32.totalorder %s16, 0
    %p209 = por %p207, %p208
    %p210 = scmp.ne.s32.totalorder %s202, %s204
    %p211 = scmp.eq.s32.totalorder %s21, 1
    %p212 = por %p210, %p211
    %p213 = scmp.ne.s32.totalorder %s204, %s205
    %p214 = scmp.eq.s32.totalorder %s21, 0
    %p215 = por %p213, %p214
    %p216 = scmp.ne.s32.totalorder %s204, %s205
    %p217 = scmp.eq.s32.totalorder %s22, 1
    %p218 = por %p216, %p217
    %p220 = scmp.ne.s32.totalorder %s205, %s219
    %p221 = scmp.eq.s32.totalorder %s22, 0
    %p222 = por %p220, %p221
    %s224 = sadd.s32 %s223, 1
    %p227 = scmp.eq.s32.totalorder %s16, 1
    %p228 = scmp.ne.s32.totalorder %s223, %s225
    %p229 = scmp.eq.s32.totalorder %s16, 0
    %p230 = por %p228, %p229
    %p231 = scmp.ne.s32.totalorder %s223, %s225
    %p232 = scmp.eq.s32.totalorder %s21, 1
    %p233 = por %p231, %p232
    %p234 = scmp.ne.s32.totalorder %s225, %s226
    %p235 = scmp.eq.s32.totalorder %s21, 0
    %p236 = por %p234, %p235
    %p237 = scmp.ne.s32.totalorder %s225, %s226
    %p238 = scmp.eq.s32.totalorder %s22, 1
    %p239 = por %p237, %p238
    %p241 = scmp.ne.s32.totalorder %s226, %s240
    %p242 = scmp.eq.s32.totalorder %s22, 0
    %p243 = por %p241, %p242
    %s244 = ssub.s32 %s16, %s23
    %p245 = scmp.eq.s32.totalorder %s244, 0
    %s247 = sadd.s32 %s246, 1
    %s248 = scalar_select %p245, %s246, %s247
    %p251 = pneg %p245
    %p252 = scmp.eq.s32.totalorder %s16, 1
    %p253 = por %p251, %p252
    %p254 = scmp.ne.s32.totalorder %s246, %s249
    %p255 = scmp.eq.s32.totalorder %s16, 0
    %p256 = por %p254, %p255
    %p257 = scmp.ne.s32.totalorder %s246, %s249
    %p258 = scmp.eq.s32.totalorder %s21, 1
    %p259 = por %p257, %p258
    %p260 = scmp.ne.s32.totalorder %s249, %s250
    %p261 = scmp.eq.s32.totalorder %s21, 0
    %p262 = por %p260, %p261
    %p263 = scmp.ne.s32.totalorder %s249, %s250
    %p264 = scmp.eq.s32.totalorder %s22, 1
    %p265 = por %p263, %p264
    %p267 = scmp.ne.s32.totalorder %s250, %s266
    %p268 = scmp.eq.s32.totalorder %s22, 0
    %p269 = por %p267, %p268
    %p270 = scmp.le.s32.totalorder 1, %s16
    %p271 = scmp.lt.s32.totalorder %s16, 3
    %p272 = pnand %p270, %p271
    %p273 = pneg %p272
    // Predicated region
    $region9: #{up_step.1} parent=5 // pred_check
      _
    $region10: #{up_step.1} parent=5 // pred_check_branch
      %275 = sbr.rel (%p272) target = $region12
    $region11: #{up_step.1} parent=5 // pred_region
      %s276 = ssub.s32 %s16, 1
      // Predicated region
      $region13: #{up_step.1} parent=11 // pred_check
        %p277 = pneg %p89
      $region14: #{up_step.1} parent=11 // pred_check_branch
        %279 = sbr.rel (%p277) target = $region16
      $region15: #{up_step.1} parent=11 // pred_region
        _
      $region16: #{up_step.1} parent=11 // pred_fallthru
        _
      // Predicated region
      $region17: #{up_step.1} parent=11 // pred_check
        %p280 = pneg %p110
      $region18: #{up_step.1} parent=11 // pred_check_branch
        %282 = sbr.rel (%p280) target = $region20
      $region19: #{up_step.1} parent=11 // pred_region
        _
      $region20: #{up_step.1} parent=11 // pred_fallthru
        _
      // Predicated region
      $region21: #{up_step.1} parent=11 // pred_check
        %p283 = pneg %p131
      $region22: #{up_step.1} parent=11 // pred_check_branch
        %285 = sbr.rel (%p283) target = $region24
      $region23: #{up_step.1} parent=11 // pred_region
        _
      $region24: #{up_step.1} parent=11 // pred_fallthru
        _
      // Predicated region
      $region25: #{up_step.1} parent=11 // pred_check
        %p286 = pneg %p152
      $region26: #{up_step.1} parent=11 // pred_check_branch
        %288 = sbr.rel (%p286) target = $region28
      $region27: #{up_step.1} parent=11 // pred_region
        _
      $region28: #{up_step.1} parent=11 // pred_fallthru
        _
      // Predicated region
      $region29: #{up_step.1} parent=11 // pred_check
        %p289 = pneg %p173
      $region30: #{up_step.1} parent=11 // pred_check_branch
        %291 = sbr.rel (%p289) target = $region32
      $region31: #{up_step.1} parent=11 // pred_region
        _
      $region32: #{up_step.1} parent=11 // pred_fallthru
        _
      // Predicated region
      $region33: #{up_step.1} parent=11 // pred_check
        %p292 = pneg %p194
      $region34: #{up_step.1} parent=11 // pred_check_branch
        %294 = sbr.rel (%p292) target = $region36
      $region35: #{up_step.1} parent=11 // pred_region
        _
      $region36: #{up_step.1} parent=11 // pred_fallthru
        _
      // Predicated region
      $region37: #{up_step.1} parent=11 // pred_check
        %p295 = pneg %p215
      $region38: #{up_step.1} parent=11 // pred_check_branch
        %297 = sbr.rel (%p295) target = $region40
      $region39: #{up_step.1} parent=11 // pred_region
        _
      $region40: #{up_step.1} parent=11 // pred_fallthru
        _
      // Predicated region
      $region41: #{up_step.1} parent=11 // pred_check
        %p298 = pneg %p236
      $region42: #{up_step.1} parent=11 // pred_check_branch
        %300 = sbr.rel (%p298) target = $region44
      $region43: #{up_step.1} parent=11 // pred_region
        _
      $region44: #{up_step.1} parent=11 // pred_fallthru
        _
    $region12: #{up_step.1} parent=5 // pred_fallthru
      _
    %p301 = scmp.lt.s32.totalorder %s16, 2
    // Predicated region
    $region45: #{up_step.1} parent=5 // pred_check
      %p302 = pneg %p301
    $region46: #{up_step.1} parent=5 // pred_check_branch
      %304 = sbr.rel (%p302) target = $region48
    $region47: #{up_step.1} parent=5 // pred_region
      // Predicated region
      $region49: #{up_step.1} parent=47 // pred_check
        %p305 = pneg %p36
      $region50: #{up_step.1} parent=47 // pred_check_branch
        %307 = sbr.rel (%p305) target = $region52
      $region51: #{up_step.1} parent=47 // pred_region
        %p308 = scmp.lt.s32.totalorder %s16, 1
        %s309 = scalar_select %p308, %s16, 1
        %s310 = smul.addr %s309, 8
        %s311 = smul.addr %s310, 4
        %s312 = scalar_lea.vmem %s0, %s311
      $region52: #{up_step.1} parent=47 // pred_fallthru
        _
      // Predicated region
      $region53: #{up_step.1} parent=47 // pred_check
        %p313 = pneg %p62
      $region54: #{up_step.1} parent=47 // pred_check_branch
        %315 = sbr.rel (%p313) target = $region56
      $region55: #{up_step.1} parent=47 // pred_region
        %p316 = scmp.lt.s32.totalorder %s16, 1
        %s317 = scalar_select %p316, %s16, 1
        %s318 = smul.addr %s317, 8
        %s319 = smul.addr %s318, 4
        %s320 = scalar_lea.vmem %s1, %s319
      $region56: #{up_step.1} parent=47 // pred_fallthru
        _
    $region48: #{up_step.1} parent=5 // pred_fallthru
      _
    %p321 = scmp.le.s32.totalorder 1, %s16
    %p322 = scmp.lt.s32.totalorder %s16, 3
    %p323 = pnand %p321, %p322
    %p324 = pneg %p323
    // Predicated region
    $region57: #{up_step.1} parent=5 // pred_check
      _
    $region58: #{up_step.1} parent=5 // pred_check_branch
      %326 = sbr.rel (%p323) target = $region60
    $region59: #{up_step.1} parent=5 // pred_region
      %s327 = ssub.s32 %s16, 1
      %p328 = scmp.lt.s32.totalorder %s21, 1
      %s329 = scalar_select %p328, %s21, 1
      %s330 = smul.addr %s329, 8
      %s331 = smul.addr %s330, 4
      %s332 = scalar_lea.vmem %s0, %s331
      %p333 = pneg %p42
      %p334 = pneg %p39
      %p335 = scmp.lt.s32.totalorder %s21, 1
      %s336 = scalar_select %p335, %s21, 1
      %s337 = smul.addr %s336, 8
      %s338 = smul.addr %s337, 4
      %s339 = scalar_lea.vmem %s1, %s338
      %p340 = pneg %p68
      %p341 = pneg %p65
      %p342 = pneg %p89
      %p343 = pneg %p86
      %p344 = pneg %p110
      %p345 = pneg %p107
      %p346 = pneg %p131
      %p347 = pneg %p128
      %p348 = pneg %p152
      %p349 = pneg %p149
      %p350 = pneg %p173
      %p351 = pneg %p170
      %p352 = pneg %p194
      %p353 = pneg %p191
      %p354 = pneg %p215
      %p355 = pneg %p212
      %p356 = pneg %p236
      %p357 = pneg %p233
      %p358 = pneg %p262
      %p359 = pneg %p259
      %p360 = scmp.lt.s32.totalorder %s21, 1
      %s361 = scalar_select %p360, %s21, 1
      %s362 = smul.addr %s361, 8
      %s363 = smul.addr %s362, 4
      %s364 = scalar_lea.vmem %s10, %s363
      %p365 = scmp.lt.s32.totalorder %s21, 1
      %s366 = scalar_select %p365, %s21, 1
      %s367 = smul.addr %s366, 8
      %s368 = smul.addr %s367, 4
      %s369 = scalar_lea.vmem %s0, %s368
      %p370 = scmp.lt.s32.totalorder %s21, 1
      %s371 = scalar_select %p370, %s21, 1
      %s372 = smul.addr %s371, 8
      %s373 = smul.addr %s372, 4
      %s374 = scalar_lea.vmem %s1, %s373
      %p375 = scmp.lt.s32.totalorder %s21, 1
      %s376 = scalar_select %p375, %s21, 1
      %s377 = smul.addr %s376, 8
      %s378 = smul.addr %s377, 4
      %s379 = scalar_lea.vmem %s10, %s378
      %v381 = vld [vmem:[%s3] sm:$0xf]
      %v382 = vld [vmem:[%s369] sm:$0xff]
      %v383 = vld [vmem:[%s369 + $0x8] sm:$0xff]
      %v384 = vld [vmem:[%s369 + $0x10] sm:$0xff]
      %v385 = vld [vmem:[%s369 + $0x18] sm:$0xff]
      %v386 = vld [vmem:[%s4] sm:$0xff]
      %388 = vset.pattern.permute.xlu0 0
      %389 = vperm.xlu0 %388, %v386
      %v390 = vpop.permute.xlu0 %389
      %v396 = vunpack.c.l.b16 %v382
      %v397 = vunpack.c.h.b16 %v382
      %v398 = vunpack.c.l.b16 %v383
      %v399 = vunpack.c.h.b16 %v383
      %v400 = vunpack.c.l.b16 %v384
      %v401 = vunpack.c.h.b16 %v384
      %v402 = vunpack.c.l.b16 %v385
      %v403 = vunpack.c.h.b16 %v385
      %v404 = vpack.c.b16 %v400, %v396
      %v405 = vpack.c.b16 %v401, %v397
      %v406 = vpack.c.b16 %v402, %v398
      %v407 = vpack.c.b16 %v403, %v399
      %vm412 = vcmask 130048
      %v414 = vsel %vm412, %v381, 0
      %416 = vmatprep.subr.bf16.mxu0 0
      %417 = vmatpush1.bf16.msra.mxu0 0
      %418 = vmatprep.subr.bf16.mxu0 0
      %419 = vmatpush1.bf16.msra.mxu0 0
      %420 = vmatprep.subr.bf16.mxu0 0
      %421 = vmatpush1.bf16.msra.mxu0 0
      %422 = vmatprep.subr.bf16.mxu0 0
      %423 = vmatpush1.bf16.msra.mxu0 0
      %424 = vmatprep.subr.bf16.mxu0 0
      %425 = vmatpush1.bf16.msra.mxu0 0
      %426 = vmatprep.subr.bf16.mxu0 0
      %427 = vmatpush1.bf16.msra.mxu0 0
      %428 = vmatprep.subr.bf16.mxu0 0
      %429 = vmatpush1.bf16.msra.mxu0 0
      %430 = vmatprep.subr.bf16.mxu0 %v405
      %431 = vmatpush1.bf16.msra.mxu0 %v404
      %432 = vmatprep.subr.bf16.mxu0 0
      %433 = vmatpush2.bf16.msra.mxu0 0
      %434 = vmatprep.subr.bf16.mxu0 0
      %435 = vmatpush2.bf16.msra.mxu0 0
      %436 = vmatprep.subr.bf16.mxu0 0
      %437 = vmatpush2.bf16.msra.mxu0 0
      %438 = vmatprep.subr.bf16.mxu0 0
      %439 = vmatpush2.bf16.msra.mxu0 0
      %440 = vmatprep.subr.bf16.mxu0 0
      %441 = vmatpush2.bf16.msra.mxu0 0
      %442 = vmatprep.subr.bf16.mxu0 0
      %443 = vmatpush2.bf16.msra.mxu0 0
      %444 = vmatprep.subr.bf16.mxu0 0
      %445 = vmatpush2.bf16.msra.mxu0 0
      %446 = vmatprep.subr.bf16.mxu0 0
      %447 = vmatpush2.bf16.msra.mxu0 0
      %448 = vmatprep.mubr.bf16.mxu0 0
      %449 = vmatmul.mubr.bf16.gmra.mxu0 %v414
      %v450 = vpop.f32.mrf.mxu0
      %v451 = vadd.f32 %v390, %v450
      %v452 = vpop.f32.mrf.mxu0
      %v453 = vadd.f32 %v390, %v452
      %v454 = vpop.f32.mrf.mxu0
      %v455 = vpop.f32.mrf.mxu0
      %456 = vdwg.mxu0
      %457 = vmatprep.subr.bf16.mxu0 0
      %458 = vmatpush1.bf16.msra.mxu0 0
      %459 = vmatprep.subr.bf16.mxu0 0
      %460 = vmatpush1.bf16.msra.mxu0 0
      %461 = vmatprep.subr.bf16.mxu0 0
      %462 = vmatpush1.bf16.msra.mxu0 0
      %463 = vmatprep.subr.bf16.mxu0 0
      %464 = vmatpush1.bf16.msra.mxu0 0
      %465 = vmatprep.subr.bf16.mxu0 0
      %466 = vmatpush1.bf16.msra.mxu0 0
      %467 = vmatprep.subr.bf16.mxu0 0
      %468 = vmatpush1.bf16.msra.mxu0 0
      %469 = vmatprep.subr.bf16.mxu0 0
      %470 = vmatpush1.bf16.msra.mxu0 0
      %471 = vmatprep.subr.bf16.mxu0 %v407
      %472 = vmatpush1.bf16.msra.mxu0 %v406
      %473 = vmatprep.subr.bf16.mxu0 0
      %474 = vmatpush2.bf16.msra.mxu0 0
      %475 = vmatprep.subr.bf16.mxu0 0
      %476 = vmatpush2.bf16.msra.mxu0 0
      %477 = vmatprep.subr.bf16.mxu0 0
      %478 = vmatpush2.bf16.msra.mxu0 0
      %479 = vmatprep.subr.bf16.mxu0 0
      %480 = vmatpush2.bf16.msra.mxu0 0
      %481 = vmatprep.subr.bf16.mxu0 0
      %482 = vmatpush2.bf16.msra.mxu0 0
      %483 = vmatprep.subr.bf16.mxu0 0
      %484 = vmatpush2.bf16.msra.mxu0 0
      %485 = vmatprep.subr.bf16.mxu0 0
      %486 = vmatpush2.bf16.msra.mxu0 0
      %487 = vmatprep.subr.bf16.mxu0 0
      %488 = vmatpush2.bf16.msra.mxu0 0
      %489 = vmatprep.mubr.bf16.mxu0 0
      %490 = vmatmul.mubr.bf16.gmra.mxu0 %v414
      %v491 = vpop.f32.mrf.mxu0
      %v492 = vadd.f32 %v390, %v491
      %v493 = vpop.f32.mrf.mxu0
      %v494 = vadd.f32 %v390, %v493
      %v495 = vpop.f32.mrf.mxu0
      %v496 = vpop.f32.mrf.mxu0
      %497 = vdwg.mxu0
      %499 = vrot.lane.b32.xlu0 %v451, 96
      %v500 = vpop.permute.xlu0 %499
      %502 = vrot.lane.b32.xlu0 %v451, 64
      %v503 = vpop.permute.xlu0 %502
      %505 = vrot.lane.b32.xlu0 %v451, 32
      %v506 = vpop.permute.xlu0 %505
      %509 = vrot.lane.b32.xlu0 %v453, 96
      %v510 = vpop.permute.xlu0 %509
      %512 = vrot.lane.b32.xlu0 %v453, 64
      %v513 = vpop.permute.xlu0 %512
      %515 = vrot.lane.b32.xlu0 %v453, 32
      %v516 = vpop.permute.xlu0 %515
      %519 = vrot.lane.b32.xlu0 %v492, 96
      %v520 = vpop.permute.xlu0 %519
      %522 = vrot.lane.b32.xlu0 %v492, 64
      %v523 = vpop.permute.xlu0 %522
      %525 = vrot.lane.b32.xlu0 %v492, 32
      %v526 = vpop.permute.xlu0 %525
      %529 = vrot.lane.b32.xlu0 %v494, 96
      %v530 = vpop.permute.xlu0 %529
      %532 = vrot.lane.b32.xlu0 %v494, 64
      %v533 = vpop.permute.xlu0 %532
      %535 = vrot.lane.b32.xlu0 %v494, 32
      %v536 = vpop.permute.xlu0 %535
      %v538 = vcombine.low %v451, %v503
      %v540 = vunpack.c.l.s4 1983009808
      %v541 = vunpack.c.0.s8 %v540
      %v542 = vlaneseq
      %v543 = vshrl.u32 %v542, 7
      %v544 = vsub.s32 %v541, %v543
      %v545 = vrot.slane %v538, %v544
      %v546 = vcombine.low %v500, %v506
      %v548 = vunpack.c.l.s4 1983009808
      %v549 = vunpack.c.0.s8 %v548
      %v550 = vlaneseq
      %v551 = vshrl.u32 %v550, 7
      %v552 = vsub.s32 %v549, %v551
      %v553 = vrot.slane %v546, %v552
      %v554 = vcombine.low %v453, %v513
      %v556 = vunpack.c.l.s4 1983009808
      %v557 = vunpack.c.0.s8 %v556
      %v558 = vlaneseq
      %v559 = vshrl.u32 %v558, 7
      %v560 = vsub.s32 %v557, %v559
      %v561 = vrot.slane %v554, %v560
      %v562 = vcombine.low %v510, %v516
      %v564 = vunpack.c.l.s4 1983009808
      %v565 = vunpack.c.0.s8 %v564
      %v566 = vlaneseq
      %v567 = vshrl.u32 %v566, 7
      %v568 = vsub.s32 %v565, %v567
      %v569 = vrot.slane %v562, %v568
      %v570 = vcombine.low %v545, %v553
      %v571 = vcombine.high %v545, %v553
      %v573 = vunpack.c.l.s4 1934713408
      %v574 = vunpack.c.0.s8 %v573
      %v575 = vlaneseq
      %v576 = vshrl.u32 %v575, 7
      %v577 = vsub.s32 %v574, %v576
      %v578 = vrot.slane %v570, %v577
      %v580 = vunpack.c.l.s4 1934713408
      %v581 = vunpack.c.0.s8 %v580
      %v582 = vlaneseq
      %v583 = vshrl.u32 %v582, 7
      %v584 = vsub.s32 %v581, %v583
      %v585 = vrot.slane %v571, %v584
      %v586 = vcombine.low %v561, %v569
      %v587 = vcombine.high %v561, %v569
      %v589 = vunpack.c.l.s4 1934713408
      %v590 = vunpack.c.0.s8 %v589
      %v591 = vlaneseq
      %v592 = vshrl.u32 %v591, 7
      %v593 = vsub.s32 %v590, %v592
      %v594 = vrot.slane %v586, %v593
      %v596 = vunpack.c.l.s4 1934713408
      %v597 = vunpack.c.0.s8 %v596
      %v598 = vlaneseq
      %v599 = vshrl.u32 %v598, 7
      %v600 = vsub.s32 %v597, %v599
      %v601 = vrot.slane %v587, %v600
      %v602 = vcombine.low %v578, %v594
      %v603 = vcombine.high %v578, %v594
      %v604 = vcombine.low %v585, %v601
      %v605 = vcombine.high %v585, %v601
      %v606 = vcombine.low %v492, %v523
      %v608 = vunpack.c.l.s4 1983009808
      %v609 = vunpack.c.0.s8 %v608
      %v610 = vlaneseq
      %v611 = vshrl.u32 %v610, 7
      %v612 = vsub.s32 %v609, %v611
      %v613 = vrot.slane %v606, %v612
      %v614 = vcombine.low %v520, %v526
      %v616 = vunpack.c.l.s4 1983009808
      %v617 = vunpack.c.0.s8 %v616
      %v618 = vlaneseq
      %v619 = vshrl.u32 %v618, 7
      %v620 = vsub.s32 %v617, %v619
      %v621 = vrot.slane %v614, %v620
      %v622 = vcombine.low %v494, %v533
      %v624 = vunpack.c.l.s4 1983009808
      %v625 = vunpack.c.0.s8 %v624
      %v626 = vlaneseq
      %v627 = vshrl.u32 %v626, 7
      %v628 = vsub.s32 %v625, %v627
      %v629 = vrot.slane %v622, %v628
      %v630 = vcombine.low %v530, %v536
      %v632 = vunpack.c.l.s4 1983009808
      %v633 = vunpack.c.0.s8 %v632
      %v634 = vlaneseq
      %v635 = vshrl.u32 %v634, 7
      %v636 = vsub.s32 %v633, %v635
      %v637 = vrot.slane %v630, %v636
      %v638 = vcombine.low %v613, %v621
      %v639 = vcombine.high %v613, %v621
      %v641 = vunpack.c.l.s4 1934713408
      %v642 = vunpack.c.0.s8 %v641
      %v643 = vlaneseq
      %v644 = vshrl.u32 %v643, 7
      %v645 = vsub.s32 %v642, %v644
      %v646 = vrot.slane %v638, %v645
      %v648 = vunpack.c.l.s4 1934713408
      %v649 = vunpack.c.0.s8 %v648
      %v650 = vlaneseq
      %v651 = vshrl.u32 %v650, 7
      %v652 = vsub.s32 %v649, %v651
      %v653 = vrot.slane %v639, %v652
      %v654 = vcombine.low %v629, %v637
      %v655 = vcombine.high %v629, %v637
      %v657 = vunpack.c.l.s4 1934713408
      %v658 = vunpack.c.0.s8 %v657
      %v659 = vlaneseq
      %v660 = vshrl.u32 %v659, 7
      %v661 = vsub.s32 %v658, %v660
      %v662 = vrot.slane %v654, %v661
      %v664 = vunpack.c.l.s4 1934713408
      %v665 = vunpack.c.0.s8 %v664
      %v666 = vlaneseq
      %v667 = vshrl.u32 %v666, 7
      %v668 = vsub.s32 %v665, %v667
      %v669 = vrot.slane %v655, %v668
      %v670 = vcombine.low %v646, %v662
      %v671 = vcombine.high %v646, %v662
      %v672 = vcombine.low %v653, %v669
      %v673 = vcombine.high %v653, %v669
      %v674 = vrot.slane %v451, 4
      %v675 = vrot.slane %v500, 4
      %v676 = vrot.slane %v503, 4
      %v677 = vrot.slane %v506, 4
      %v678 = vrot.slane %v453, 4
      %v679 = vrot.slane %v510, 4
      %v680 = vrot.slane %v513, 4
      %v681 = vrot.slane %v516, 4
      %v682 = vrot.slane %v492, 4
      %v683 = vrot.slane %v520, 4
      %v684 = vrot.slane %v523, 4
      %v685 = vrot.slane %v526, 4
      %v686 = vrot.slane %v494, 4
      %v687 = vrot.slane %v530, 4
      %v688 = vrot.slane %v533, 4
      %v689 = vrot.slane %v536, 4
      %v706 = vcombine.low %v674, %v676
      %v708 = vunpack.c.l.s4 1983009808
      %v709 = vunpack.c.0.s8 %v708
      %v710 = vlaneseq
      %v711 = vshrl.u32 %v710, 7
      %v712 = vsub.s32 %v709, %v711
      %v713 = vrot.slane %v706, %v712
      %v714 = vcombine.low %v675, %v677
      %v716 = vunpack.c.l.s4 1983009808
      %v717 = vunpack.c.0.s8 %v716
      %v718 = vlaneseq
      %v719 = vshrl.u32 %v718, 7
      %v720 = vsub.s32 %v717, %v719
      %v721 = vrot.slane %v714, %v720
      %v722 = vcombine.low %v678, %v680
      %v724 = vunpack.c.l.s4 1983009808
      %v725 = vunpack.c.0.s8 %v724
      %v726 = vlaneseq
      %v727 = vshrl.u32 %v726, 7
      %v728 = vsub.s32 %v725, %v727
      %v729 = vrot.slane %v722, %v728
      %v730 = vcombine.low %v679, %v681
      %v732 = vunpack.c.l.s4 1983009808
      %v733 = vunpack.c.0.s8 %v732
      %v734 = vlaneseq
      %v735 = vshrl.u32 %v734, 7
      %v736 = vsub.s32 %v733, %v735
      %v737 = vrot.slane %v730, %v736
      %v738 = vcombine.low %v713, %v721
      %v739 = vcombine.high %v713, %v721
      %v741 = vunpack.c.l.s4 1934713408
      %v742 = vunpack.c.0.s8 %v741
      %v743 = vlaneseq
      %v744 = vshrl.u32 %v743, 7
      %v745 = vsub.s32 %v742, %v744
      %v746 = vrot.slane %v738, %v745
      %v748 = vunpack.c.l.s4 1934713408
      %v749 = vunpack.c.0.s8 %v748
      %v750 = vlaneseq
      %v751 = vshrl.u32 %v750, 7
      %v752 = vsub.s32 %v749, %v751
      %v753 = vrot.slane %v739, %v752
      %v754 = vcombine.low %v729, %v737
      %v755 = vcombine.high %v729, %v737
      %v757 = vunpack.c.l.s4 1934713408
      %v758 = vunpack.c.0.s8 %v757
      %v759 = vlaneseq
      %v760 = vshrl.u32 %v759, 7
      %v761 = vsub.s32 %v758, %v760
      %v762 = vrot.slane %v754, %v761
      %v764 = vunpack.c.l.s4 1934713408
      %v765 = vunpack.c.0.s8 %v764
      %v766 = vlaneseq
      %v767 = vshrl.u32 %v766, 7
      %v768 = vsub.s32 %v765, %v767
      %v769 = vrot.slane %v755, %v768
      %v770 = vcombine.low %v746, %v762
      %v771 = vcombine.high %v746, %v762
      %v772 = vcombine.low %v753, %v769
      %v773 = vcombine.high %v753, %v769
      %v774 = vcombine.low %v682, %v684
      %v776 = vunpack.c.l.s4 1983009808
      %v777 = vunpack.c.0.s8 %v776
      %v778 = vlaneseq
      %v779 = vshrl.u32 %v778, 7
      %v780 = vsub.s32 %v777, %v779
      %v781 = vrot.slane %v774, %v780
      %v782 = vcombine.low %v683, %v685
      %v784 = vunpack.c.l.s4 1983009808
      %v785 = vunpack.c.0.s8 %v784
      %v786 = vlaneseq
      %v787 = vshrl.u32 %v786, 7
      %v788 = vsub.s32 %v785, %v787
      %v789 = vrot.slane %v782, %v788
      %v790 = vcombine.low %v686, %v688
      %v792 = vunpack.c.l.s4 1983009808
      %v793 = vunpack.c.0.s8 %v792
      %v794 = vlaneseq
      %v795 = vshrl.u32 %v794, 7
      %v796 = vsub.s32 %v793, %v795
      %v797 = vrot.slane %v790, %v796
      %v798 = vcombine.low %v687, %v689
      %v800 = vunpack.c.l.s4 1983009808
      %v801 = vunpack.c.0.s8 %v800
      %v802 = vlaneseq
      %v803 = vshrl.u32 %v802, 7
      %v804 = vsub.s32 %v801, %v803
      %v805 = vrot.slane %v798, %v804
      %v806 = vcombine.low %v781, %v789
      %v807 = vcombine.high %v781, %v789
      %v809 = vunpack.c.l.s4 1934713408
      %v810 = vunpack.c.0.s8 %v809
      %v811 = vlaneseq
      %v812 = vshrl.u32 %v811, 7
      %v813 = vsub.s32 %v810, %v812
      %v814 = vrot.slane %v806, %v813
      %v816 = vunpack.c.l.s4 1934713408
      %v817 = vunpack.c.0.s8 %v816
      %v818 = vlaneseq
      %v819 = vshrl.u32 %v818, 7
      %v820 = vsub.s32 %v817, %v819
      %v821 = vrot.slane %v807, %v820
      %v822 = vcombine.low %v797, %v805
      %v823 = vcombine.high %v797, %v805
      %v825 = vunpack.c.l.s4 1934713408
      %v826 = vunpack.c.0.s8 %v825
      %v827 = vlaneseq
      %v828 = vshrl.u32 %v827, 7
      %v829 = vsub.s32 %v826, %v828
      %v830 = vrot.slane %v822, %v829
      %v832 = vunpack.c.l.s4 1934713408
      %v833 = vunpack.c.0.s8 %v832
      %v834 = vlaneseq
      %v835 = vshrl.u32 %v834, 7
      %v836 = vsub.s32 %v833, %v835
      %v837 = vrot.slane %v823, %v836
      %v838 = vcombine.low %v814, %v830
      %v839 = vcombine.high %v814, %v830
      %v840 = vcombine.low %v821, %v837
      %v841 = vcombine.high %v821, %v837
      %850 = vrot.lane.b32.xlu0 %v770, 32
      %v851 = vpop.permute.xlu0 %850
      %852 = vrot.lane.b32.xlu0 %v838, 32
      %v853 = vpop.permute.xlu0 %852
      %854 = vrot.lane.b32.xlu0 %v771, 32
      %v855 = vpop.permute.xlu0 %854
      %856 = vrot.lane.b32.xlu0 %v839, 32
      %v857 = vpop.permute.xlu0 %856
      %858 = vrot.lane.b32.xlu0 %v772, 32
      %v859 = vpop.permute.xlu0 %858
      %860 = vrot.lane.b32.xlu0 %v840, 32
      %v861 = vpop.permute.xlu0 %860
      %862 = vrot.lane.b32.xlu0 %v773, 32
      %v863 = vpop.permute.xlu0 %862
      %864 = vrot.lane.b32.xlu0 %v841, 32
      %v865 = vpop.permute.xlu0 %864
      %vm874 = vcmask 261120
      %v875 = vsel %vm874, %v602, %v851
      %v876 = vsel %vm874, %v670, %v853
      %v877 = vsel %vm874, %v603, %v855
      %v878 = vsel %vm874, %v671, %v857
      %v879 = vsel %vm874, %v604, %v859
      %v880 = vsel %vm874, %v672, %v861
      %v881 = vsel %vm874, %v605, %v863
      %v882 = vsel %vm874, %v673, %v865
      %v883 = vcombine.low %v875, %v879
      %v884 = vcombine.high %v875, %v879
      %v886 = vunpack.c.l.s4 1983009808
      %v887 = vunpack.c.0.s8 %v886
      %v888 = vlaneseq
      %v889 = vshrl.u32 %v888, 7
      %v890 = vsub.s32 %v887, %v889
      %v891 = vrot.slane %v883, %v890
      %v893 = vunpack.c.l.s4 1983009808
      %v894 = vunpack.c.0.s8 %v893
      %v895 = vlaneseq
      %v896 = vshrl.u32 %v895, 7
      %v897 = vsub.s32 %v894, %v896
      %v898 = vrot.slane %v884, %v897
      %v899 = vcombine.low %v877, %v881
      %v900 = vcombine.high %v877, %v881
      %v902 = vunpack.c.l.s4 1983009808
      %v903 = vunpack.c.0.s8 %v902
      %v904 = vlaneseq
      %v905 = vshrl.u32 %v904, 7
      %v906 = vsub.s32 %v903, %v905
      %v907 = vrot.slane %v899, %v906
      %v909 = vunpack.c.l.s4 1983009808
      %v910 = vunpack.c.0.s8 %v909
      %v911 = vlaneseq
      %v912 = vshrl.u32 %v911, 7
      %v913 = vsub.s32 %v910, %v912
      %v914 = vrot.slane %v900, %v913
      %v915 = vcombine.low %v891, %v907
      %v916 = vcombine.high %v891, %v907
      %v918 = vunpack.c.l.s4 1934713408
      %v919 = vunpack.c.0.s8 %v918
      %v920 = vlaneseq
      %v921 = vshrl.u32 %v920, 7
      %v922 = vsub.s32 %v919, %v921
      %v923 = vrot.slane %v915, %v922
      %v925 = vunpack.c.l.s4 1934713408
      %v926 = vunpack.c.0.s8 %v925
      %v927 = vlaneseq
      %v928 = vshrl.u32 %v927, 7
      %v929 = vsub.s32 %v926, %v928
      %v930 = vrot.slane %v916, %v929
      %v931 = vcombine.low %v898, %v914
      %v932 = vcombine.high %v898, %v914
      %v934 = vunpack.c.l.s4 1934713408
      %v935 = vunpack.c.0.s8 %v934
      %v936 = vlaneseq
      %v937 = vshrl.u32 %v936, 7
      %v938 = vsub.s32 %v935, %v937
      %v939 = vrot.slane %v931, %v938
      %v941 = vunpack.c.l.s4 1934713408
      %v942 = vunpack.c.0.s8 %v941
      %v943 = vlaneseq
      %v944 = vshrl.u32 %v943, 7
      %v945 = vsub.s32 %v942, %v944
      %v946 = vrot.slane %v932, %v945
      %v947 = vcombine.high %v923, 0.0
      %v948 = vcombine.high %v930, 0.0
      %v949 = vcombine.high %v939, 0.0
      %v950 = vcombine.high %v946, 0.0
      %v951 = vcombine.low %v876, %v880
      %v952 = vcombine.high %v876, %v880
      %v954 = vunpack.c.l.s4 1983009808
      %v955 = vunpack.c.0.s8 %v954
      %v956 = vlaneseq
      %v957 = vshrl.u32 %v956, 7
      %v958 = vsub.s32 %v955, %v957
      %v959 = vrot.slane %v951, %v958
      %v961 = vunpack.c.l.s4 1983009808
      %v962 = vunpack.c.0.s8 %v961
      %v963 = vlaneseq
      %v964 = vshrl.u32 %v963, 7
      %v965 = vsub.s32 %v962, %v964
      %v966 = vrot.slane %v952, %v965
      %v967 = vcombine.low %v878, %v882
      %v968 = vcombine.high %v878, %v882
      %v970 = vunpack.c.l.s4 1983009808
      %v971 = vunpack.c.0.s8 %v970
      %v972 = vlaneseq
      %v973 = vshrl.u32 %v972, 7
      %v974 = vsub.s32 %v971, %v973
      %v975 = vrot.slane %v967, %v974
      %v977 = vunpack.c.l.s4 1983009808
      %v978 = vunpack.c.0.s8 %v977
      %v979 = vlaneseq
      %v980 = vshrl.u32 %v979, 7
      %v981 = vsub.s32 %v978, %v980
      %v982 = vrot.slane %v968, %v981
      %v983 = vcombine.low %v959, %v975
      %v984 = vcombine.high %v959, %v975
      %v986 = vunpack.c.l.s4 1934713408
      %v987 = vunpack.c.0.s8 %v986
      %v988 = vlaneseq
      %v989 = vshrl.u32 %v988, 7
      %v990 = vsub.s32 %v987, %v989
      %v991 = vrot.slane %v983, %v990
      %v993 = vunpack.c.l.s4 1934713408
      %v994 = vunpack.c.0.s8 %v993
      %v995 = vlaneseq
      %v996 = vshrl.u32 %v995, 7
      %v997 = vsub.s32 %v994, %v996
      %v998 = vrot.slane %v984, %v997
      %v999 = vcombine.low %v966, %v982
      %v1000 = vcombine.high %v966, %v982
      %v1002 = vunpack.c.l.s4 1934713408
      %v1003 = vunpack.c.0.s8 %v1002
      %v1004 = vlaneseq
      %v1005 = vshrl.u32 %v1004, 7
      %v1006 = vsub.s32 %v1003, %v1005
      %v1007 = vrot.slane %v999, %v1006
      %v1009 = vunpack.c.l.s4 1934713408
      %v1010 = vunpack.c.0.s8 %v1009
      %v1011 = vlaneseq
      %v1012 = vshrl.u32 %v1011, 7
      %v1013 = vsub.s32 %v1010, %v1012
      %v1014 = vrot.slane %v1000, %v1013
      %v1015 = vcombine.high %v991, 0.0
      %v1016 = vcombine.high %v998, 0.0
      %v1017 = vcombine.high %v1007, 0.0
      %v1018 = vcombine.high %v1014, 0.0
      %1020 = vrot.lane.b32.xlu0 %v947, 64
      %v1021 = vpop.permute.xlu0 %1020
      %1024 = vrot.lane.b32.xlu0 %v948, 64
      %v1025 = vpop.permute.xlu0 %1024
      %1028 = vrot.lane.b32.xlu0 %v949, 64
      %v1029 = vpop.permute.xlu0 %1028
      %1032 = vrot.lane.b32.xlu0 %v950, 64
      %v1033 = vpop.permute.xlu0 %1032
      %1036 = vrot.lane.b32.xlu0 %v1015, 64
      %v1037 = vpop.permute.xlu0 %1036
      %1040 = vrot.lane.b32.xlu0 %v1016, 64
      %v1041 = vpop.permute.xlu0 %1040
      %1044 = vrot.lane.b32.xlu0 %v1017, 64
      %v1045 = vpop.permute.xlu0 %1044
      %1048 = vrot.lane.b32.xlu0 %v1018, 64
      %v1049 = vpop.permute.xlu0 %1048
      %vm1051 = vcmask 523264
      %v1052 = vsel %vm1051, %v923, %v1021
      %v1053 = vsel %vm1051, %v930, %v1025
      %v1054 = vsel %vm1051, %v939, %v1029
      %v1055 = vsel %vm1051, %v946, %v1033
      %v1056 = vsel %vm1051, %v991, %v1037
      %v1057 = vsel %vm1051, %v998, %v1041
      %v1058 = vsel %vm1051, %v1007, %v1045
      %v1059 = vsel %vm1051, %v1014, %v1049
      %1060 = vrot.lane.b32.xlu0 %v1052, 33
      %v1061 = vpop.permute.xlu0 %1060
      %1062 = vrot.lane.b32.xlu0 %v1053, 33
      %v1063 = vpop.permute.xlu0 %1062
      %1064 = vrot.lane.b32.xlu0 %v1054, 33
      %v1065 = vpop.permute.xlu0 %1064
      %1066 = vrot.lane.b32.xlu0 %v1055, 33
      %v1067 = vpop.permute.xlu0 %1066
      %1068 = vrot.lane.b32.xlu0 %v1056, 33
      %v1069 = vpop.permute.xlu0 %1068
      %1070 = vrot.lane.b32.xlu0 %v1057, 33
      %v1071 = vpop.permute.xlu0 %1070
      %1072 = vrot.lane.b32.xlu0 %v1058, 33
      %v1073 = vpop.permute.xlu0 %1072
      %1074 = vrot.lane.b32.xlu0 %v1059, 33
      %v1075 = vpop.permute.xlu0 %1074
      %v1076 = vlaneseq
      %v1077 = vand.u32 %v1076, 127
      %vm1078 = vcmp.lt.s32.totalorder %v1077, 33
      %v1079 = vsel %vm1078, %v1073, %v1075
      %v1080 = vsel %vm1078, %v1071, %v1073
      %v1081 = vsel %vm1078, %v1069, %v1071
      %v1082 = vsel %vm1078, %v1067, %v1069
      %v1083 = vsel %vm1078, %v1065, %v1067
      %v1084 = vsel %vm1078, %v1063, %v1065
      %v1085 = vsel %vm1078, %v1061, %v1063
      %v1086 = vsel %vm1078, %v1075, %v1061
      %v1087 = vld [vmem:[%s2] ss:$8 sm:$0xf]
      %v1088 = vld [vmem:[%s2] ss:$8 sm:$0xf0]
      %v1089 = vor.u32 %v1087, %v1088
      %v1091 = vlaneseq
      %v1092 = vshrl.u32 %v1091, 7
      %v1093 = vsub.s32 0, %v1092
      %v1094 = vrot.slane %v1089, %v1093
      %v1095 = vlaneseq
      %v1096 = vshrl.u32 %v1095, 7
      %v1097 = vsub.s32 1, %v1096
      %v1098 = vrot.slane %v1089, %v1097
      %v1099 = vlaneseq
      %v1100 = vshrl.u32 %v1099, 7
      %v1101 = vsub.s32 2, %v1100
      %v1102 = vrot.slane %v1089, %v1101
      %v1103 = vlaneseq
      %v1104 = vshrl.u32 %v1103, 7
      %v1105 = vsub.s32 3, %v1104
      %v1106 = vrot.slane %v1089, %v1105
      %v1107 = vlaneseq
      %v1108 = vshrl.u32 %v1107, 7
      %v1109 = vsub.s32 4, %v1108
      %v1110 = vrot.slane %v1089, %v1109
      %v1111 = vlaneseq
      %v1112 = vshrl.u32 %v1111, 7
      %v1113 = vsub.s32 5, %v1112
      %v1114 = vrot.slane %v1089, %v1113
      %v1115 = vlaneseq
      %v1116 = vshrl.u32 %v1115, 7
      %v1117 = vsub.s32 6, %v1116
      %v1118 = vrot.slane %v1089, %v1117
      %v1119 = vlaneseq
      %v1120 = vshrl.u32 %v1119, 7
      %v1121 = vsub.s32 7, %v1120
      %v1122 = vrot.slane %v1089, %v1121
      %v1131 = vmul.f32 %v1086, %v1094
      %v1132 = vmul.f32 %v1085, %v1098
      %v1133 = vmul.f32 %v1084, %v1102
      %v1134 = vmul.f32 %v1083, %v1106
      %v1135 = vmul.f32 %v1082, %v1110
      %v1136 = vmul.f32 %v1081, %v1114
      %v1137 = vmul.f32 %v1080, %v1118
      %v1138 = vmul.f32 %v1079, %v1122
      %v1139 = vld [vmem:[%s5] sm:$0x3]
      %v1140 = vpack.c.bf16 %v1131, %v1131
      %v1141 = vpack.c.bf16 %v1132, %v1132
      %v1142 = vpack.c.bf16 %v1133, %v1133
      %v1143 = vpack.c.bf16 %v1134, %v1134
      %v1144 = vpack.c.bf16 %v1135, %v1135
      %v1145 = vpack.c.bf16 %v1136, %v1136
      %v1146 = vpack.c.bf16 %v1137, %v1137
      %v1147 = vpack.c.bf16 %v1138, %v1138
      %1148 = vrot.lane.b32.xlu0 %v1052, 32
      %v1149 = vpop.permute.xlu0 %1148
      %1150 = vrot.lane.b32.xlu0 %v1053, 32
      %v1151 = vpop.permute.xlu0 %1150
      %1152 = vrot.lane.b32.xlu0 %v1054, 32
      %v1153 = vpop.permute.xlu0 %1152
      %1154 = vrot.lane.b32.xlu0 %v1055, 32
      %v1155 = vpop.permute.xlu0 %1154
      %1156 = vrot.lane.b32.xlu0 %v1056, 32
      %v1157 = vpop.permute.xlu0 %1156
      %1158 = vrot.lane.b32.xlu0 %v1057, 32
      %v1159 = vpop.permute.xlu0 %1158
      %1160 = vrot.lane.b32.xlu0 %v1058, 32
      %v1161 = vpop.permute.xlu0 %1160
      %1162 = vrot.lane.b32.xlu0 %v1059, 32
      %v1163 = vpop.permute.xlu0 %1162
      %vm1164 = vcmp.lt.s32.totalorder %v1077, 32
      %v1165 = vsel %vm1164, %v1161, %v1163
      %v1166 = vsel %vm1164, %v1159, %v1161
      %v1167 = vsel %vm1164, %v1157, %v1159
      %v1168 = vsel %vm1164, %v1155, %v1157
      %v1169 = vsel %vm1164, %v1153, %v1155
      %v1170 = vsel %vm1164, %v1151, %v1153
      %v1171 = vsel %vm1164, %v1149, %v1151
      %v1172 = vsel %vm1164, %v1163, %v1149
      %s1173 = scalar_lea.vmem %s2, 1
      %v1174 = vld [vmem:[%s1173] ss:$8 sm:$0xf]
      %v1175 = vld [vmem:[%s1173] ss:$8 sm:$0xf0]
      %v1176 = vor.u32 %v1174, %v1175
      %v1178 = vlaneseq
      %v1179 = vshrl.u32 %v1178, 7
      %v1180 = vsub.s32 0, %v1179
      %v1181 = vrot.slane %v1176, %v1180
      %v1182 = vlaneseq
      %v1183 = vshrl.u32 %v1182, 7
      %v1184 = vsub.s32 1, %v1183
      %v1185 = vrot.slane %v1176, %v1184
      %v1186 = vlaneseq
      %v1187 = vshrl.u32 %v1186, 7
      %v1188 = vsub.s32 2, %v1187
      %v1189 = vrot.slane %v1176, %v1188
      %v1190 = vlaneseq
      %v1191 = vshrl.u32 %v1190, 7
      %v1192 = vsub.s32 3, %v1191
      %v1193 = vrot.slane %v1176, %v1192
      %v1194 = vlaneseq
      %v1195 = vshrl.u32 %v1194, 7
      %v1196 = vsub.s32 4, %v1195
      %v1197 = vrot.slane %v1176, %v1196
      %v1198 = vlaneseq
      %v1199 = vshrl.u32 %v1198, 7
      %v1200 = vsub.s32 5, %v1199
      %v1201 = vrot.slane %v1176, %v1200
      %v1202 = vlaneseq
      %v1203 = vshrl.u32 %v1202, 7
      %v1204 = vsub.s32 6, %v1203
      %v1205 = vrot.slane %v1176, %v1204
      %v1206 = vlaneseq
      %v1207 = vshrl.u32 %v1206, 7
      %v1208 = vsub.s32 7, %v1207
      %v1209 = vrot.slane %v1176, %v1208
      %v1218 = vmul.f32 %v1172, %v1181
      %v1219 = vmul.f32 %v1171, %v1185
      %v1220 = vmul.f32 %v1170, %v1189
      %v1221 = vmul.f32 %v1169, %v1193
      %v1222 = vmul.f32 %v1168, %v1197
      %v1223 = vmul.f32 %v1167, %v1201
      %v1224 = vmul.f32 %v1166, %v1205
      %v1225 = vmul.f32 %v1165, %v1209
      %s1226 = scalar_lea.vmem %s5, 2
      %v1227 = vld [vmem:[%s1226] sm:$0x3]
      %v1228 = vpack.c.bf16 %v1218, %v1218
      %v1229 = vpack.c.bf16 %v1219, %v1219
      %v1230 = vpack.c.bf16 %v1220, %v1220
      %v1231 = vpack.c.bf16 %v1221, %v1221
      %v1232 = vpack.c.bf16 %v1222, %v1222
      %v1233 = vpack.c.bf16 %v1223, %v1223
      %v1234 = vpack.c.bf16 %v1224, %v1224
      %v1235 = vpack.c.bf16 %v1225, %v1225
      %vm1236 = vcmask 31744
      %v1238 = vsel %vm1236, %v1227, 0
      %vm1240 = vcmask 1041408
      %v1242 = vsel %vm1240, %v1228, 0
      %v1245 = vsel %vm1240, %v1229, 0
      %v1248 = vsel %vm1240, %v1230, 0
      %v1251 = vsel %vm1240, %v1231, 0
      %v1254 = vsel %vm1240, %v1232, 0
      %v1257 = vsel %vm1240, %v1233, 0
      %v1260 = vsel %vm1240, %v1234, 0
      %v1263 = vsel %vm1240, %v1235, 0
      %1265 = vmatprep.subr.bf16.mxu0 0
      %1266 = vmatpush1.bf16.msra.mxu0 0
      %1267 = vmatprep.subr.bf16.mxu0 0
      %1268 = vmatpush1.bf16.msra.mxu0 0
      %1269 = vmatprep.subr.bf16.mxu0 0
      %1270 = vmatpush1.bf16.msra.mxu0 0
      %1271 = vmatprep.subr.bf16.mxu0 0
      %1272 = vmatpush1.bf16.msra.mxu0 0
      %1273 = vmatprep.subr.bf16.mxu0 0
      %1274 = vmatpush1.bf16.msra.mxu0 0
      %1275 = vmatprep.subr.bf16.mxu0 0
      %1276 = vmatpush1.bf16.msra.mxu0 0
      %1277 = vmatprep.subr.bf16.mxu0 0
      %1278 = vmatpush1.bf16.msra.mxu0 0
      %1279 = vmatprep.subr.bf16.mxu0 %v1245
      %1280 = vmatpush1.bf16.msra.mxu0 %v1242
      %1281 = vmatprep.subr.bf16.mxu0 0
      %1282 = vmatpush2.bf16.msra.mxu0 0
      %1283 = vmatprep.subr.bf16.mxu0 0
      %1284 = vmatpush2.bf16.msra.mxu0 0
      %1285 = vmatprep.subr.bf16.mxu0 0
      %1286 = vmatpush2.bf16.msra.mxu0 0
      %1287 = vmatprep.subr.bf16.mxu0 0
      %1288 = vmatpush2.bf16.msra.mxu0 0
      %1289 = vmatprep.subr.bf16.mxu0 0
      %1290 = vmatpush2.bf16.msra.mxu0 0
      %1291 = vmatprep.subr.bf16.mxu0 0
      %1292 = vmatpush2.bf16.msra.mxu0 0
      %1293 = vmatprep.subr.bf16.mxu0 0
      %1294 = vmatpush2.bf16.msra.mxu0 0
      %1295 = vmatprep.subr.bf16.mxu0 0
      %1296 = vmatpush2.bf16.msra.mxu0 0
      %1297 = vmatprep.mubr.bf16.mxu0 0
      %1298 = vmatmul.mubr.bf16.gmra.mxu0 %v1238
      %v1299 = vpop.f32.mrf.mxu0
      %v1300 = vadd.f32 0.0, %v1299
      %v1301 = vpop.f32.mrf.mxu0
      %v1302 = vadd.f32 0.0, %v1301
      %v1303 = vpop.f32.mrf.mxu0
      %v1304 = vpop.f32.mrf.mxu0
      %1305 = vdwg.mxu0
      %1306 = vmatprep.subr.bf16.mxu0 0
      %1307 = vmatpush1.bf16.msra.mxu0 0
      %1308 = vmatprep.subr.bf16.mxu0 0
      %1309 = vmatpush1.bf16.msra.mxu0 0
      %1310 = vmatprep.subr.bf16.mxu0 0
      %1311 = vmatpush1.bf16.msra.mxu0 0
      %1312 = vmatprep.subr.bf16.mxu0 0
      %1313 = vmatpush1.bf16.msra.mxu0 0
      %1314 = vmatprep.subr.bf16.mxu0 0
      %1315 = vmatpush1.bf16.msra.mxu0 0
      %1316 = vmatprep.subr.bf16.mxu0 0
      %1317 = vmatpush1.bf16.msra.mxu0 0
      %1318 = vmatprep.subr.bf16.mxu0 0
      %1319 = vmatpush1.bf16.msra.mxu0 0
      %1320 = vmatprep.subr.bf16.mxu0 %v1251
      %1321 = vmatpush1.bf16.msra.mxu0 %v1248
      %1322 = vmatprep.subr.bf16.mxu0 0
      %1323 = vmatpush2.bf16.msra.mxu0 0
      %1324 = vmatprep.subr.bf16.mxu0 0
      %1325 = vmatpush2.bf16.msra.mxu0 0
      %1326 = vmatprep.subr.bf16.mxu0 0
      %1327 = vmatpush2.bf16.msra.mxu0 0
      %1328 = vmatprep.subr.bf16.mxu0 0
      %1329 = vmatpush2.bf16.msra.mxu0 0
      %1330 = vmatprep.subr.bf16.mxu0 0
      %1331 = vmatpush2.bf16.msra.mxu0 0
      %1332 = vmatprep.subr.bf16.mxu0 0
      %1333 = vmatpush2.bf16.msra.mxu0 0
      %1334 = vmatprep.subr.bf16.mxu0 0
      %1335 = vmatpush2.bf16.msra.mxu0 0
      %1336 = vmatprep.subr.bf16.mxu0 0
      %1337 = vmatpush2.bf16.msra.mxu0 0
      %1338 = vmatprep.mubr.bf16.mxu0 0
      %1339 = vmatmul.mubr.bf16.gmra.mxu0 %v1238
      %v1340 = vpop.f32.mrf.mxu0
      %v1341 = vadd.f32 0.0, %v1340
      %v1342 = vpop.f32.mrf.mxu0
      %v1343 = vadd.f32 0.0, %v1342
      %v1344 = vpop.f32.mrf.mxu0
      %v1345 = vpop.f32.mrf.mxu0
      %1346 = vdwg.mxu0
      %1347 = vmatprep.subr.bf16.mxu0 0
      %1348 = vmatpush1.bf16.msra.mxu0 0
      %1349 = vmatprep.subr.bf16.mxu0 0
      %1350 = vmatpush1.bf16.msra.mxu0 0
      %1351 = vmatprep.subr.bf16.mxu0 0
      %1352 = vmatpush1.bf16.msra.mxu0 0
      %1353 = vmatprep.subr.bf16.mxu0 0
      %1354 = vmatpush1.bf16.msra.mxu0 0
      %1355 = vmatprep.subr.bf16.mxu0 0
      %1356 = vmatpush1.bf16.msra.mxu0 0
      %1357 = vmatprep.subr.bf16.mxu0 0
      %1358 = vmatpush1.bf16.msra.mxu0 0
      %1359 = vmatprep.subr.bf16.mxu0 0
      %1360 = vmatpush1.bf16.msra.mxu0 0
      %1361 = vmatprep.subr.bf16.mxu0 %v1257
      %1362 = vmatpush1.bf16.msra.mxu0 %v1254
      %1363 = vmatprep.subr.bf16.mxu0 0
      %1364 = vmatpush2.bf16.msra.mxu0 0
      %1365 = vmatprep.subr.bf16.mxu0 0
      %1366 = vmatpush2.bf16.msra.mxu0 0
      %1367 = vmatprep.subr.bf16.mxu0 0
      %1368 = vmatpush2.bf16.msra.mxu0 0
      %1369 = vmatprep.subr.bf16.mxu0 0
      %1370 = vmatpush2.bf16.msra.mxu0 0
      %1371 = vmatprep.subr.bf16.mxu0 0
      %1372 = vmatpush2.bf16.msra.mxu0 0
      %1373 = vmatprep.subr.bf16.mxu0 0
      %1374 = vmatpush2.bf16.msra.mxu0 0
      %1375 = vmatprep.subr.bf16.mxu0 0
      %1376 = vmatpush2.bf16.msra.mxu0 0
      %1377 = vmatprep.subr.bf16.mxu0 0
      %1378 = vmatpush2.bf16.msra.mxu0 0
      %1379 = vmatprep.mubr.bf16.mxu0 0
      %1380 = vmatmul.mubr.bf16.gmra.mxu0 %v1238
      %v1381 = vpop.f32.mrf.mxu0
      %v1382 = vadd.f32 0.0, %v1381
      %v1383 = vpop.f32.mrf.mxu0
      %v1384 = vadd.f32 0.0, %v1383
      %v1385 = vpop.f32.mrf.mxu0
      %v1386 = vpop.f32.mrf.mxu0
      %1387 = vdwg.mxu0
      %1388 = vmatprep.subr.bf16.mxu0 0
      %1389 = vmatpush1.bf16.msra.mxu0 0
      %1390 = vmatprep.subr.bf16.mxu0 0
      %1391 = vmatpush1.bf16.msra.mxu0 0
      %1392 = vmatprep.subr.bf16.mxu0 0
      %1393 = vmatpush1.bf16.msra.mxu0 0
      %1394 = vmatprep.subr.bf16.mxu0 0
      %1395 = vmatpush1.bf16.msra.mxu0 0
      %1396 = vmatprep.subr.bf16.mxu0 0
      %1397 = vmatpush1.bf16.msra.mxu0 0
      %1398 = vmatprep.subr.bf16.mxu0 0
      %1399 = vmatpush1.bf16.msra.mxu0 0
      %1400 = vmatprep.subr.bf16.mxu0 0
      %1401 = vmatpush1.bf16.msra.mxu0 0
      %1402 = vmatprep.subr.bf16.mxu0 %v1263
      %1403 = vmatpush1.bf16.msra.mxu0 %v1260
      %1404 = vmatprep.subr.bf16.mxu0 0
      %1405 = vmatpush2.bf16.msra.mxu0 0
      %1406 = vmatprep.subr.bf16.mxu0 0
      %1407 = vmatpush2.bf16.msra.mxu0 0
      %1408 = vmatprep.subr.bf16.mxu0 0
      %1409 = vmatpush2.bf16.msra.mxu0 0
      %1410 = vmatprep.subr.bf16.mxu0 0
      %1411 = vmatpush2.bf16.msra.mxu0 0
      %1412 = vmatprep.subr.bf16.mxu0 0
      %1413 = vmatpush2.bf16.msra.mxu0 0
      %1414 = vmatprep.subr.bf16.mxu0 0
      %1415 = vmatpush2.bf16.msra.mxu0 0
      %1416 = vmatprep.subr.bf16.mxu0 0
      %1417 = vmatpush2.bf16.msra.mxu0 0
      %1418 = vmatprep.subr.bf16.mxu0 0
      %1419 = vmatpush2.bf16.msra.mxu0 0
      %1420 = vmatprep.mubr.bf16.mxu0 0
      %1421 = vmatmul.mubr.bf16.gmra.mxu0 %v1238
      %v1422 = vpop.f32.mrf.mxu0
      %v1423 = vadd.f32 0.0, %v1422
      %v1424 = vpop.f32.mrf.mxu0
      %v1425 = vadd.f32 0.0, %v1424
      %v1426 = vpop.f32.mrf.mxu0
      %v1427 = vpop.f32.mrf.mxu0
      %1428 = vdwg.mxu0
      %v1430 = vsel %vm1236, %v1139, 0
      %v1433 = vsel %vm1240, %v1140, 0
      %v1436 = vsel %vm1240, %v1141, 0
      %v1439 = vsel %vm1240, %v1142, 0
      %v1442 = vsel %vm1240, %v1143, 0
      %v1445 = vsel %vm1240, %v1144, 0
      %v1448 = vsel %vm1240, %v1145, 0
      %v1451 = vsel %vm1240, %v1146, 0
      %v1454 = vsel %vm1240, %v1147, 0
      %1456 = vmatprep.subr.bf16.mxu0 0
      %1457 = vmatpush1.bf16.msra.mxu0 0
      %1458 = vmatprep.subr.bf16.mxu0 0
      %1459 = vmatpush1.bf16.msra.mxu0 0
      %1460 = vmatprep.subr.bf16.mxu0 0
      %1461 = vmatpush1.bf16.msra.mxu0 0
      %1462 = vmatprep.subr.bf16.mxu0 0
      %1463 = vmatpush1.bf16.msra.mxu0 0
      %1464 = vmatprep.subr.bf16.mxu0 0
      %1465 = vmatpush1.bf16.msra.mxu0 0
      %1466 = vmatprep.subr.bf16.mxu0 0
      %1467 = vmatpush1.bf16.msra.mxu0 0
      %1468 = vmatprep.subr.bf16.mxu0 0
      %1469 = vmatpush1.bf16.msra.mxu0 0
      %1470 = vmatprep.subr.bf16.mxu0 %v1436
      %1471 = vmatpush1.bf16.msra.mxu0 %v1433
      %1472 = vmatprep.subr.bf16.mxu0 0
      %1473 = vmatpush2.bf16.msra.mxu0 0
      %1474 = vmatprep.subr.bf16.mxu0 0
      %1475 = vmatpush2.bf16.msra.mxu0 0
      %1476 = vmatprep.subr.bf16.mxu0 0
      %1477 = vmatpush2.bf16.msra.mxu0 0
      %1478 = vmatprep.subr.bf16.mxu0 0
      %1479 = vmatpush2.bf16.msra.mxu0 0
      %1480 = vmatprep.subr.bf16.mxu0 0
      %1481 = vmatpush2.bf16.msra.mxu0 0
      %1482 = vmatprep.subr.bf16.mxu0 0
      %1483 = vmatpush2.bf16.msra.mxu0 0
      %1484 = vmatprep.subr.bf16.mxu0 0
      %1485 = vmatpush2.bf16.msra.mxu0 0
      %1486 = vmatprep.subr.bf16.mxu0 0
      %1487 = vmatpush2.bf16.msra.mxu0 0
      %1488 = vmatprep.mubr.bf16.mxu0 0
      %1489 = vmatmul.mubr.bf16.gmra.mxu0 %v1430
      %v1490 = vpop.f32.mrf.mxu0
      %v1491 = vadd.f32 %v1300, %v1490
      %v1492 = vpop.f32.mrf.mxu0
      %v1493 = vadd.f32 %v1302, %v1492
      %v1494 = vpop.f32.mrf.mxu0
      %v1495 = vpop.f32.mrf.mxu0
      %1496 = vdwg.mxu0
      %1497 = vmatprep.subr.bf16.mxu0 0
      %1498 = vmatpush1.bf16.msra.mxu0 0
      %1499 = vmatprep.subr.bf16.mxu0 0
      %1500 = vmatpush1.bf16.msra.mxu0 0
      %1501 = vmatprep.subr.bf16.mxu0 0
      %1502 = vmatpush1.bf16.msra.mxu0 0
      %1503 = vmatprep.subr.bf16.mxu0 0
      %1504 = vmatpush1.bf16.msra.mxu0 0
      %1505 = vmatprep.subr.bf16.mxu0 0
      %1506 = vmatpush1.bf16.msra.mxu0 0
      %1507 = vmatprep.subr.bf16.mxu0 0
      %1508 = vmatpush1.bf16.msra.mxu0 0
      %1509 = vmatprep.subr.bf16.mxu0 0
      %1510 = vmatpush1.bf16.msra.mxu0 0
      %1511 = vmatprep.subr.bf16.mxu0 %v1442
      %1512 = vmatpush1.bf16.msra.mxu0 %v1439
      %1513 = vmatprep.subr.bf16.mxu0 0
      %1514 = vmatpush2.bf16.msra.mxu0 0
      %1515 = vmatprep.subr.bf16.mxu0 0
      %1516 = vmatpush2.bf16.msra.mxu0 0
      %1517 = vmatprep.subr.bf16.mxu0 0
      %1518 = vmatpush2.bf16.msra.mxu0 0
      %1519 = vmatprep.subr.bf16.mxu0 0
      %1520 = vmatpush2.bf16.msra.mxu0 0
      %1521 = vmatprep.subr.bf16.mxu0 0
      %1522 = vmatpush2.bf16.msra.mxu0 0
      %1523 = vmatprep.subr.bf16.mxu0 0
      %1524 = vmatpush2.bf16.msra.mxu0 0
      %1525 = vmatprep.subr.bf16.mxu0 0
      %1526 = vmatpush2.bf16.msra.mxu0 0
      %1527 = vmatprep.subr.bf16.mxu0 0
      %1528 = vmatpush2.bf16.msra.mxu0 0
      %1529 = vmatprep.mubr.bf16.mxu0 0
      %1530 = vmatmul.mubr.bf16.gmra.mxu0 %v1430
      %v1531 = vpop.f32.mrf.mxu0
      %v1532 = vadd.f32 %v1341, %v1531
      %v1533 = vpop.f32.mrf.mxu0
      %v1534 = vadd.f32 %v1343, %v1533
      %v1535 = vpop.f32.mrf.mxu0
      %v1536 = vpop.f32.mrf.mxu0
      %1537 = vdwg.mxu0
      %1538 = vmatprep.subr.bf16.mxu0 0
      %1539 = vmatpush1.bf16.msra.mxu0 0
      %1540 = vmatprep.subr.bf16.mxu0 0
      %1541 = vmatpush1.bf16.msra.mxu0 0
      %1542 = vmatprep.subr.bf16.mxu0 0
      %1543 = vmatpush1.bf16.msra.mxu0 0
      %1544 = vmatprep.subr.bf16.mxu0 0
      %1545 = vmatpush1.bf16.msra.mxu0 0
      %1546 = vmatprep.subr.bf16.mxu0 0
      %1547 = vmatpush1.bf16.msra.mxu0 0
      %1548 = vmatprep.subr.bf16.mxu0 0
      %1549 = vmatpush1.bf16.msra.mxu0 0
      %1550 = vmatprep.subr.bf16.mxu0 0
      %1551 = vmatpush1.bf16.msra.mxu0 0
      %1552 = vmatprep.subr.bf16.mxu0 %v1448
      %1553 = vmatpush1.bf16.msra.mxu0 %v1445
      %1554 = vmatprep.subr.bf16.mxu0 0
      %1555 = vmatpush2.bf16.msra.mxu0 0
      %1556 = vmatprep.subr.bf16.mxu0 0
      %1557 = vmatpush2.bf16.msra.mxu0 0
      %1558 = vmatprep.subr.bf16.mxu0 0
      %1559 = vmatpush2.bf16.msra.mxu0 0
      %1560 = vmatprep.subr.bf16.mxu0 0
      %1561 = vmatpush2.bf16.msra.mxu0 0
      %1562 = vmatprep.subr.bf16.mxu0 0
      %1563 = vmatpush2.bf16.msra.mxu0 0
      %1564 = vmatprep.subr.bf16.mxu0 0
      %1565 = vmatpush2.bf16.msra.mxu0 0
      %1566 = vmatprep.subr.bf16.mxu0 0
      %1567 = vmatpush2.bf16.msra.mxu0 0
      %1568 = vmatprep.subr.bf16.mxu0 0
      %1569 = vmatpush2.bf16.msra.mxu0 0
      %1570 = vmatprep.mubr.bf16.mxu0 0
      %1571 = vmatmul.mubr.bf16.gmra.mxu0 %v1430
      %v1572 = vpop.f32.mrf.mxu0
      %v1573 = vadd.f32 %v1382, %v1572
      %v1574 = vpop.f32.mrf.mxu0
      %v1575 = vadd.f32 %v1384, %v1574
      %v1576 = vpop.f32.mrf.mxu0
      %v1577 = vpop.f32.mrf.mxu0
      %1578 = vdwg.mxu0
      %1579 = vmatprep.subr.bf16.mxu0 0
      %1580 = vmatpush1.bf16.msra.mxu0 0
      %1581 = vmatprep.subr.bf16.mxu0 0
      %1582 = vmatpush1.bf16.msra.mxu0 0
      %1583 = vmatprep.subr.bf16.mxu0 0
      %1584 = vmatpush1.bf16.msra.mxu0 0
      %1585 = vmatprep.subr.bf16.mxu0 0
      %1586 = vmatpush1.bf16.msra.mxu0 0
      %1587 = vmatprep.subr.bf16.mxu0 0
      %1588 = vmatpush1.bf16.msra.mxu0 0
      %1589 = vmatprep.subr.bf16.mxu0 0
      %1590 = vmatpush1.bf16.msra.mxu0 0
      %1591 = vmatprep.subr.bf16.mxu0 0
      %1592 = vmatpush1.bf16.msra.mxu0 0
      %1593 = vmatprep.subr.bf16.mxu0 %v1454
      %1594 = vmatpush1.bf16.msra.mxu0 %v1451
      %1595 = vmatprep.subr.bf16.mxu0 0
      %1596 = vmatpush2.bf16.msra.mxu0 0
      %1597 = vmatprep.subr.bf16.mxu0 0
      %1598 = vmatpush2.bf16.msra.mxu0 0
      %1599 = vmatprep.subr.bf16.mxu0 0
      %1600 = vmatpush2.bf16.msra.mxu0 0
      %1601 = vmatprep.subr.bf16.mxu0 0
      %1602 = vmatpush2.bf16.msra.mxu0 0
      %1603 = vmatprep.subr.bf16.mxu0 0
      %1604 = vmatpush2.bf16.msra.mxu0 0
      %1605 = vmatprep.subr.bf16.mxu0 0
      %1606 = vmatpush2.bf16.msra.mxu0 0
      %1607 = vmatprep.subr.bf16.mxu0 0
      %1608 = vmatpush2.bf16.msra.mxu0 0
      %1609 = vmatprep.subr.bf16.mxu0 0
      %1610 = vmatpush2.bf16.msra.mxu0 0
      %1611 = vmatprep.mubr.bf16.mxu0 0
      %1612 = vmatmul.mubr.bf16.gmra.mxu0 %v1430
      %v1613 = vpop.f32.mrf.mxu0
      %v1614 = vadd.f32 %v1423, %v1613
      %v1615 = vpop.f32.mrf.mxu0
      %v1616 = vadd.f32 %v1425, %v1615
      %v1617 = vpop.f32.mrf.mxu0
      %v1618 = vpop.f32.mrf.mxu0
      %1619 = vdwg.mxu0
      %1620 = vrot.lane.b32.xlu0 %v1052, 31
      %v1621 = vpop.permute.xlu0 %1620
      %1622 = vrot.lane.b32.xlu0 %v1053, 31
      %v1623 = vpop.permute.xlu0 %1622
      %1624 = vrot.lane.b32.xlu0 %v1054, 31
      %v1625 = vpop.permute.xlu0 %1624
      %1626 = vrot.lane.b32.xlu0 %v1055, 31
      %v1627 = vpop.permute.xlu0 %1626
      %1628 = vrot.lane.b32.xlu0 %v1056, 31
      %v1629 = vpop.permute.xlu0 %1628
      %1630 = vrot.lane.b32.xlu0 %v1057, 31
      %v1631 = vpop.permute.xlu0 %1630
      %1632 = vrot.lane.b32.xlu0 %v1058, 31
      %v1633 = vpop.permute.xlu0 %1632
      %1634 = vrot.lane.b32.xlu0 %v1059, 31
      %v1635 = vpop.permute.xlu0 %1634
      %vm1636 = vcmp.lt.s32.totalorder %v1077, 31
      %v1637 = vsel %vm1636, %v1633, %v1635
      %v1638 = vsel %vm1636, %v1631, %v1633
      %v1639 = vsel %vm1636, %v1629, %v1631
      %v1640 = vsel %vm1636, %v1627, %v1629
      %v1641 = vsel %vm1636, %v1625, %v1627
      %v1642 = vsel %vm1636, %v1623, %v1625
      %v1643 = vsel %vm1636, %v1621, %v1623
      %v1644 = vsel %vm1636, %v1635, %v1621
      %s1645 = scalar_lea.vmem %s2, 2
      %v1646 = vld [vmem:[%s1645] ss:$8 sm:$0xf]
      %v1647 = vld [vmem:[%s1645] ss:$8 sm:$0xf0]
      %v1648 = vor.u32 %v1646, %v1647
      %v1650 = vlaneseq
      %v1651 = vshrl.u32 %v1650, 7
      %v1652 = vsub.s32 0, %v1651
      %v1653 = vrot.slane %v1648, %v1652
      %v1654 = vlaneseq
      %v1655 = vshrl.u32 %v1654, 7
      %v1656 = vsub.s32 1, %v1655
      %v1657 = vrot.slane %v1648, %v1656
      %v1658 = vlaneseq
      %v1659 = vshrl.u32 %v1658, 7
      %v1660 = vsub.s32 2, %v1659
      %v1661 = vrot.slane %v1648, %v1660
      %v1662 = vlaneseq
      %v1663 = vshrl.u32 %v1662, 7
      %v1664 = vsub.s32 3, %v1663
      %v1665 = vrot.slane %v1648, %v1664
      %v1666 = vlaneseq
      %v1667 = vshrl.u32 %v1666, 7
      %v1668 = vsub.s32 4, %v1667
      %v1669 = vrot.slane %v1648, %v1668
      %v1670 = vlaneseq
      %v1671 = vshrl.u32 %v1670, 7
      %v1672 = vsub.s32 5, %v1671
      %v1673 = vrot.slane %v1648, %v1672
      %v1674 = vlaneseq
      %v1675 = vshrl.u32 %v1674, 7
      %v1676 = vsub.s32 6, %v1675
      %v1677 = vrot.slane %v1648, %v1676
      %v1678 = vlaneseq
      %v1679 = vshrl.u32 %v1678, 7
      %v1680 = vsub.s32 7, %v1679
      %v1681 = vrot.slane %v1648, %v1680
      %v1690 = vmul.f32 %v1644, %v1653
      %v1691 = vmul.f32 %v1643, %v1657
      %v1692 = vmul.f32 %v1642, %v1661
      %v1693 = vmul.f32 %v1641, %v1665
      %v1694 = vmul.f32 %v1640, %v1669
      %v1695 = vmul.f32 %v1639, %v1673
      %v1696 = vmul.f32 %v1638, %v1677
      %v1697 = vmul.f32 %v1637, %v1681
      %s1698 = scalar_lea.vmem %s5, 4
      %v1699 = vld [vmem:[%s1698] sm:$0x3]
      %v1700 = vpack.c.bf16 %v1690, %v1690
      %v1701 = vpack.c.bf16 %v1691, %v1691
      %v1702 = vpack.c.bf16 %v1692, %v1692
      %v1703 = vpack.c.bf16 %v1693, %v1693
      %v1704 = vpack.c.bf16 %v1694, %v1694
      %v1705 = vpack.c.bf16 %v1695, %v1695
      %v1706 = vpack.c.bf16 %v1696, %v1696
      %v1707 = vpack.c.bf16 %v1697, %v1697
      %v1709 = vsel %vm1236, %v1699, 0
      %v1712 = vsel %vm1240, %v1700, 0
      %v1715 = vsel %vm1240, %v1701, 0
      %v1718 = vsel %vm1240, %v1702, 0
      %v1721 = vsel %vm1240, %v1703, 0
      %v1724 = vsel %vm1240, %v1704, 0
      %v1727 = vsel %vm1240, %v1705, 0
      %v1730 = vsel %vm1240, %v1706, 0
      %v1733 = vsel %vm1240, %v1707, 0
      %1735 = vmatprep.subr.bf16.mxu0 0
      %1736 = vmatpush1.bf16.msra.mxu0 0
      %1737 = vmatprep.subr.bf16.mxu0 0
      %1738 = vmatpush1.bf16.msra.mxu0 0
      %1739 = vmatprep.subr.bf16.mxu0 0
      %1740 = vmatpush1.bf16.msra.mxu0 0
      %1741 = vmatprep.subr.bf16.mxu0 0
      %1742 = vmatpush1.bf16.msra.mxu0 0
      %1743 = vmatprep.subr.bf16.mxu0 0
      %1744 = vmatpush1.bf16.msra.mxu0 0
      %1745 = vmatprep.subr.bf16.mxu0 0
      %1746 = vmatpush1.bf16.msra.mxu0 0
      %1747 = vmatprep.subr.bf16.mxu0 0
      %1748 = vmatpush1.bf16.msra.mxu0 0
      %1749 = vmatprep.subr.bf16.mxu0 %v1715
      %1750 = vmatpush1.bf16.msra.mxu0 %v1712
      %1751 = vmatprep.subr.bf16.mxu0 0
      %1752 = vmatpush2.bf16.msra.mxu0 0
      %1753 = vmatprep.subr.bf16.mxu0 0
      %1754 = vmatpush2.bf16.msra.mxu0 0
      %1755 = vmatprep.subr.bf16.mxu0 0
      %1756 = vmatpush2.bf16.msra.mxu0 0
      %1757 = vmatprep.subr.bf16.mxu0 0
      %1758 = vmatpush2.bf16.msra.mxu0 0
      %1759 = vmatprep.subr.bf16.mxu0 0
      %1760 = vmatpush2.bf16.msra.mxu0 0
      %1761 = vmatprep.subr.bf16.mxu0 0
      %1762 = vmatpush2.bf16.msra.mxu0 0
      %1763 = vmatprep.subr.bf16.mxu0 0
      %1764 = vmatpush2.bf16.msra.mxu0 0
      %1765 = vmatprep.subr.bf16.mxu0 0
      %1766 = vmatpush2.bf16.msra.mxu0 0
      %1767 = vmatprep.mubr.bf16.mxu0 0
      %1768 = vmatmul.mubr.bf16.gmra.mxu0 %v1709
      %v1769 = vpop.f32.mrf.mxu0
      %v1770 = vadd.f32 0.0, %v1769
      %v1771 = vpop.f32.mrf.mxu0
      %v1772 = vadd.f32 0.0, %v1771
      %v1773 = vpop.f32.mrf.mxu0
      %v1774 = vpop.f32.mrf.mxu0
      %1775 = vdwg.mxu0
      %1776 = vmatprep.subr.bf16.mxu0 0
      %1777 = vmatpush1.bf16.msra.mxu0 0
      %1778 = vmatprep.subr.bf16.mxu0 0
      %1779 = vmatpush1.bf16.msra.mxu0 0
      %1780 = vmatprep.subr.bf16.mxu0 0
      %1781 = vmatpush1.bf16.msra.mxu0 0
      %1782 = vmatprep.subr.bf16.mxu0 0
      %1783 = vmatpush1.bf16.msra.mxu0 0
      %1784 = vmatprep.subr.bf16.mxu0 0
      %1785 = vmatpush1.bf16.msra.mxu0 0
      %1786 = vmatprep.subr.bf16.mxu0 0
      %1787 = vmatpush1.bf16.msra.mxu0 0
      %1788 = vmatprep.subr.bf16.mxu0 0
      %1789 = vmatpush1.bf16.msra.mxu0 0
      %1790 = vmatprep.subr.bf16.mxu0 %v1721
      %1791 = vmatpush1.bf16.msra.mxu0 %v1718
      %1792 = vmatprep.subr.bf16.mxu0 0
      %1793 = vmatpush2.bf16.msra.mxu0 0
      %1794 = vmatprep.subr.bf16.mxu0 0
      %1795 = vmatpush2.bf16.msra.mxu0 0
      %1796 = vmatprep.subr.bf16.mxu0 0
      %1797 = vmatpush2.bf16.msra.mxu0 0
      %1798 = vmatprep.subr.bf16.mxu0 0
      %1799 = vmatpush2.bf16.msra.mxu0 0
      %1800 = vmatprep.subr.bf16.mxu0 0
      %1801 = vmatpush2.bf16.msra.mxu0 0
      %1802 = vmatprep.subr.bf16.mxu0 0
      %1803 = vmatpush2.bf16.msra.mxu0 0
      %1804 = vmatprep.subr.bf16.mxu0 0
      %1805 = vmatpush2.bf16.msra.mxu0 0
      %1806 = vmatprep.subr.bf16.mxu0 0
      %1807 = vmatpush2.bf16.msra.mxu0 0
      %1808 = vmatprep.mubr.bf16.mxu0 0
      %1809 = vmatmul.mubr.bf16.gmra.mxu0 %v1709
      %v1810 = vpop.f32.mrf.mxu0
      %v1811 = vadd.f32 0.0, %v1810
      %v1812 = vpop.f32.mrf.mxu0
      %v1813 = vadd.f32 0.0, %v1812
      %v1814 = vpop.f32.mrf.mxu0
      %v1815 = vpop.f32.mrf.mxu0
      %1816 = vdwg.mxu0
      %1817 = vmatprep.subr.bf16.mxu0 0
      %1818 = vmatpush1.bf16.msra.mxu0 0
      %1819 = vmatprep.subr.bf16.mxu0 0
      %1820 = vmatpush1.bf16.msra.mxu0 0
      %1821 = vmatprep.subr.bf16.mxu0 0
      %1822 = vmatpush1.bf16.msra.mxu0 0
      %1823 = vmatprep.subr.bf16.mxu0 0
      %1824 = vmatpush1.bf16.msra.mxu0 0
      %1825 = vmatprep.subr.bf16.mxu0 0
      %1826 = vmatpush1.bf16.msra.mxu0 0
      %1827 = vmatprep.subr.bf16.mxu0 0
      %1828 = vmatpush1.bf16.msra.mxu0 0
      %1829 = vmatprep.subr.bf16.mxu0 0
      %1830 = vmatpush1.bf16.msra.mxu0 0
      %1831 = vmatprep.subr.bf16.mxu0 %v1727
      %1832 = vmatpush1.bf16.msra.mxu0 %v1724
      %1833 = vmatprep.subr.bf16.mxu0 0
      %1834 = vmatpush2.bf16.msra.mxu0 0
      %1835 = vmatprep.subr.bf16.mxu0 0
      %1836 = vmatpush2.bf16.msra.mxu0 0
      %1837 = vmatprep.subr.bf16.mxu0 0
      %1838 = vmatpush2.bf16.msra.mxu0 0
      %1839 = vmatprep.subr.bf16.mxu0 0
      %1840 = vmatpush2.bf16.msra.mxu0 0
      %1841 = vmatprep.subr.bf16.mxu0 0
      %1842 = vmatpush2.bf16.msra.mxu0 0
      %1843 = vmatprep.subr.bf16.mxu0 0
      %1844 = vmatpush2.bf16.msra.mxu0 0
      %1845 = vmatprep.subr.bf16.mxu0 0
      %1846 = vmatpush2.bf16.msra.mxu0 0
      %1847 = vmatprep.subr.bf16.mxu0 0
      %1848 = vmatpush2.bf16.msra.mxu0 0
      %1849 = vmatprep.mubr.bf16.mxu0 0
      %1850 = vmatmul.mubr.bf16.gmra.mxu0 %v1709
      %v1851 = vpop.f32.mrf.mxu0
      %v1852 = vadd.f32 0.0, %v1851
      %v1853 = vpop.f32.mrf.mxu0
      %v1854 = vadd.f32 0.0, %v1853
      %v1855 = vpop.f32.mrf.mxu0
      %v1856 = vpop.f32.mrf.mxu0
      %1857 = vdwg.mxu0
      %1858 = vmatprep.subr.bf16.mxu0 0
      %1859 = vmatpush1.bf16.msra.mxu0 0
      %1860 = vmatprep.subr.bf16.mxu0 0
      %1861 = vmatpush1.bf16.msra.mxu0 0
      %1862 = vmatprep.subr.bf16.mxu0 0
      %1863 = vmatpush1.bf16.msra.mxu0 0
      %1864 = vmatprep.subr.bf16.mxu0 0
      %1865 = vmatpush1.bf16.msra.mxu0 0
      %1866 = vmatprep.subr.bf16.mxu0 0
      %1867 = vmatpush1.bf16.msra.mxu0 0
      %1868 = vmatprep.subr.bf16.mxu0 0
      %1869 = vmatpush1.bf16.msra.mxu0 0
      %1870 = vmatprep.subr.bf16.mxu0 0
      %1871 = vmatpush1.bf16.msra.mxu0 0
      %1872 = vmatprep.subr.bf16.mxu0 %v1733
      %1873 = vmatpush1.bf16.msra.mxu0 %v1730
      %1874 = vmatprep.subr.bf16.mxu0 0
      %1875 = vmatpush2.bf16.msra.mxu0 0
      %1876 = vmatprep.subr.bf16.mxu0 0
      %1877 = vmatpush2.bf16.msra.mxu0 0
      %1878 = vmatprep.subr.bf16.mxu0 0
      %1879 = vmatpush2.bf16.msra.mxu0 0
      %1880 = vmatprep.subr.bf16.mxu0 0
      %1881 = vmatpush2.bf16.msra.mxu0 0
      %1882 = vmatprep.subr.bf16.mxu0 0
      %1883 = vmatpush2.bf16.msra.mxu0 0
      %1884 = vmatprep.subr.bf16.mxu0 0
      %1885 = vmatpush2.bf16.msra.mxu0 0
      %1886 = vmatprep.subr.bf16.mxu0 0
      %1887 = vmatpush2.bf16.msra.mxu0 0
      %1888 = vmatprep.subr.bf16.mxu0 0
      %1889 = vmatpush2.bf16.msra.mxu0 0
      %1890 = vmatprep.mubr.bf16.mxu0 0
      %1891 = vmatmul.mubr.bf16.gmra.mxu0 %v1709
      %v1892 = vpop.f32.mrf.mxu0
      %v1893 = vadd.f32 0.0, %v1892
      %v1894 = vpop.f32.mrf.mxu0
      %v1895 = vadd.f32 0.0, %v1894
      %v1896 = vpop.f32.mrf.mxu0
      %v1897 = vpop.f32.mrf.mxu0
      %1898 = vdwg.mxu0
      %v1899 = vadd.f32 %v1491, %v1770
      %v1900 = vadd.f32 %v1493, %v1772
      %v1901 = vadd.f32 %v1532, %v1811
      %v1902 = vadd.f32 %v1534, %v1813
      %v1903 = vadd.f32 %v1573, %v1852
      %v1904 = vadd.f32 %v1575, %v1854
      %v1905 = vadd.f32 %v1614, %v1893
      %v1906 = vadd.f32 %v1616, %v1895
      %1907 = vrot.lane.b32.xlu0 %v1052, 1
      %v1908 = vpop.permute.xlu0 %1907
      %1909 = vrot.lane.b32.xlu0 %v1053, 1
      %v1910 = vpop.permute.xlu0 %1909
      %1911 = vrot.lane.b32.xlu0 %v1054, 1
      %v1912 = vpop.permute.xlu0 %1911
      %1913 = vrot.lane.b32.xlu0 %v1055, 1
      %v1914 = vpop.permute.xlu0 %1913
      %1915 = vrot.lane.b32.xlu0 %v1056, 1
      %v1916 = vpop.permute.xlu0 %1915
      %1917 = vrot.lane.b32.xlu0 %v1057, 1
      %v1918 = vpop.permute.xlu0 %1917
      %1919 = vrot.lane.b32.xlu0 %v1058, 1
      %v1920 = vpop.permute.xlu0 %1919
      %1921 = vrot.lane.b32.xlu0 %v1059, 1
      %v1922 = vpop.permute.xlu0 %1921
      %vm1923 = vcmp.lt.s32.totalorder %v1077, 1
      %v1924 = vsel %vm1923, %v1920, %v1922
      %v1925 = vsel %vm1923, %v1918, %v1920
      %v1926 = vsel %vm1923, %v1916, %v1918
      %v1927 = vsel %vm1923, %v1914, %v1916
      %v1928 = vsel %vm1923, %v1912, %v1914
      %v1929 = vsel %vm1923, %v1910, %v1912
      %v1930 = vsel %vm1923, %v1908, %v1910
      %v1931 = vsel %vm1923, %v1922, %v1908
      %s1932 = scalar_lea.vmem %s2, 3
      %v1933 = vld [vmem:[%s1932] ss:$8 sm:$0xf]
      %v1934 = vld [vmem:[%s1932] ss:$8 sm:$0xf0]
      %v1935 = vor.u32 %v1933, %v1934
      %v1937 = vlaneseq
      %v1938 = vshrl.u32 %v1937, 7
      %v1939 = vsub.s32 0, %v1938
      %v1940 = vrot.slane %v1935, %v1939
      %v1941 = vlaneseq
      %v1942 = vshrl.u32 %v1941, 7
      %v1943 = vsub.s32 1, %v1942
      %v1944 = vrot.slane %v1935, %v1943
      %v1945 = vlaneseq
      %v1946 = vshrl.u32 %v1945, 7
      %v1947 = vsub.s32 2, %v1946
      %v1948 = vrot.slane %v1935, %v1947
      %v1949 = vlaneseq
      %v1950 = vshrl.u32 %v1949, 7
      %v1951 = vsub.s32 3, %v1950
      %v1952 = vrot.slane %v1935, %v1951
      %v1953 = vlaneseq
      %v1954 = vshrl.u32 %v1953, 7
      %v1955 = vsub.s32 4, %v1954
      %v1956 = vrot.slane %v1935, %v1955
      %v1957 = vlaneseq
      %v1958 = vshrl.u32 %v1957, 7
      %v1959 = vsub.s32 5, %v1958
      %v1960 = vrot.slane %v1935, %v1959
      %v1961 = vlaneseq
      %v1962 = vshrl.u32 %v1961, 7
      %v1963 = vsub.s32 6, %v1962
      %v1964 = vrot.slane %v1935, %v1963
      %v1965 = vlaneseq
      %v1966 = vshrl.u32 %v1965, 7
      %v1967 = vsub.s32 7, %v1966
      %v1968 = vrot.slane %v1935, %v1967
      %v1977 = vmul.f32 %v1931, %v1940
      %v1978 = vmul.f32 %v1930, %v1944
      %v1979 = vmul.f32 %v1929, %v1948
      %v1980 = vmul.f32 %v1928, %v1952
      %v1981 = vmul.f32 %v1927, %v1956
      %v1982 = vmul.f32 %v1926, %v1960
      %v1983 = vmul.f32 %v1925, %v1964
      %v1984 = vmul.f32 %v1924, %v1968
      %s1985 = scalar_lea.vmem %s5, 6
      %v1986 = vld [vmem:[%s1985] sm:$0x3]
      %v1987 = vpack.c.bf16 %v1977, %v1977
      %v1988 = vpack.c.bf16 %v1978, %v1978
      %v1989 = vpack.c.bf16 %v1979, %v1979
      %v1990 = vpack.c.bf16 %v1980, %v1980
      %v1991 = vpack.c.bf16 %v1981, %v1981
      %v1992 = vpack.c.bf16 %v1982, %v1982
      %v1993 = vpack.c.bf16 %v1983, %v1983
      %v1994 = vpack.c.bf16 %v1984, %v1984
      %v1996 = vsel %vm1236, %v1986, 0
      %v1999 = vsel %vm1240, %v1987, 0
      %v2002 = vsel %vm1240, %v1988, 0
      %v2005 = vsel %vm1240, %v1989, 0
      %v2008 = vsel %vm1240, %v1990, 0
      %v2011 = vsel %vm1240, %v1991, 0
      %v2014 = vsel %vm1240, %v1992, 0
      %v2017 = vsel %vm1240, %v1993, 0
      %v2020 = vsel %vm1240, %v1994, 0
      %2022 = vmatprep.subr.bf16.mxu0 0
      %2023 = vmatpush1.bf16.msra.mxu0 0
      %2024 = vmatprep.subr.bf16.mxu0 0
      %2025 = vmatpush1.bf16.msra.mxu0 0
      %2026 = vmatprep.subr.bf16.mxu0 0
      %2027 = vmatpush1.bf16.msra.mxu0 0
      %2028 = vmatprep.subr.bf16.mxu0 0
      %2029 = vmatpush1.bf16.msra.mxu0 0
      %2030 = vmatprep.subr.bf16.mxu0 0
      %2031 = vmatpush1.bf16.msra.mxu0 0
      %2032 = vmatprep.subr.bf16.mxu0 0
      %2033 = vmatpush1.bf16.msra.mxu0 0
      %2034 = vmatprep.subr.bf16.mxu0 0
      %2035 = vmatpush1.bf16.msra.mxu0 0
      %2036 = vmatprep.subr.bf16.mxu0 %v2002
      %2037 = vmatpush1.bf16.msra.mxu0 %v1999
      %2038 = vmatprep.subr.bf16.mxu0 0
      %2039 = vmatpush2.bf16.msra.mxu0 0
      %2040 = vmatprep.subr.bf16.mxu0 0
      %2041 = vmatpush2.bf16.msra.mxu0 0
      %2042 = vmatprep.subr.bf16.mxu0 0
      %2043 = vmatpush2.bf16.msra.mxu0 0
      %2044 = vmatprep.subr.bf16.mxu0 0
      %2045 = vmatpush2.bf16.msra.mxu0 0
      %2046 = vmatprep.subr.bf16.mxu0 0
      %2047 = vmatpush2.bf16.msra.mxu0 0
      %2048 = vmatprep.subr.bf16.mxu0 0
      %2049 = vmatpush2.bf16.msra.mxu0 0
      %2050 = vmatprep.subr.bf16.mxu0 0
      %2051 = vmatpush2.bf16.msra.mxu0 0
      %2052 = vmatprep.subr.bf16.mxu0 0
      %2053 = vmatpush2.bf16.msra.mxu0 0
      %2054 = vmatprep.mubr.bf16.mxu0 0
      %2055 = vmatmul.mubr.bf16.gmra.mxu0 %v1996
      %v2056 = vpop.f32.mrf.mxu0
      %v2057 = vadd.f32 0.0, %v2056
      %v2058 = vpop.f32.mrf.mxu0
      %v2059 = vadd.f32 0.0, %v2058
      %v2060 = vpop.f32.mrf.mxu0
      %v2061 = vpop.f32.mrf.mxu0
      %2062 = vdwg.mxu0
      %2063 = vmatprep.subr.bf16.mxu0 0
      %2064 = vmatpush1.bf16.msra.mxu0 0
      %2065 = vmatprep.subr.bf16.mxu0 0
      %2066 = vmatpush1.bf16.msra.mxu0 0
      %2067 = vmatprep.subr.bf16.mxu0 0
      %2068 = vmatpush1.bf16.msra.mxu0 0
      %2069 = vmatprep.subr.bf16.mxu0 0
      %2070 = vmatpush1.bf16.msra.mxu0 0
      %2071 = vmatprep.subr.bf16.mxu0 0
      %2072 = vmatpush1.bf16.msra.mxu0 0
      %2073 = vmatprep.subr.bf16.mxu0 0
      %2074 = vmatpush1.bf16.msra.mxu0 0
      %2075 = vmatprep.subr.bf16.mxu0 0
      %2076 = vmatpush1.bf16.msra.mxu0 0
      %2077 = vmatprep.subr.bf16.mxu0 %v2008
      %2078 = vmatpush1.bf16.msra.mxu0 %v2005
      %2079 = vmatprep.subr.bf16.mxu0 0
      %2080 = vmatpush2.bf16.msra.mxu0 0
      %2081 = vmatprep.subr.bf16.mxu0 0
      %2082 = vmatpush2.bf16.msra.mxu0 0
      %2083 = vmatprep.subr.bf16.mxu0 0
      %2084 = vmatpush2.bf16.msra.mxu0 0
      %2085 = vmatprep.subr.bf16.mxu0 0
      %2086 = vmatpush2.bf16.msra.mxu0 0
      %2087 = vmatprep.subr.bf16.mxu0 0
      %2088 = vmatpush2.bf16.msra.mxu0 0
      %2089 = vmatprep.subr.bf16.mxu0 0
      %2090 = vmatpush2.bf16.msra.mxu0 0
      %2091 = vmatprep.subr.bf16.mxu0 0
      %2092 = vmatpush2.bf16.msra.mxu0 0
      %2093 = vmatprep.subr.bf16.mxu0 0
      %2094 = vmatpush2.bf16.msra.mxu0 0
      %2095 = vmatprep.mubr.bf16.mxu0 0
      %2096 = vmatmul.mubr.bf16.gmra.mxu0 %v1996
      %v2097 = vpop.f32.mrf.mxu0
      %v2098 = vadd.f32 0.0, %v2097
      %v2099 = vpop.f32.mrf.mxu0
      %v2100 = vadd.f32 0.0, %v2099
      %v2101 = vpop.f32.mrf.mxu0
      %v2102 = vpop.f32.mrf.mxu0
      %2103 = vdwg.mxu0
      %2104 = vmatprep.subr.bf16.mxu0 0
      %2105 = vmatpush1.bf16.msra.mxu0 0
      %2106 = vmatprep.subr.bf16.mxu0 0
      %2107 = vmatpush1.bf16.msra.mxu0 0
      %2108 = vmatprep.subr.bf16.mxu0 0
      %2109 = vmatpush1.bf16.msra.mxu0 0
      %2110 = vmatprep.subr.bf16.mxu0 0
      %2111 = vmatpush1.bf16.msra.mxu0 0
      %2112 = vmatprep.subr.bf16.mxu0 0
      %2113 = vmatpush1.bf16.msra.mxu0 0
      %2114 = vmatprep.subr.bf16.mxu0 0
      %2115 = vmatpush1.bf16.msra.mxu0 0
      %2116 = vmatprep.subr.bf16.mxu0 0
      %2117 = vmatpush1.bf16.msra.mxu0 0
      %2118 = vmatprep.subr.bf16.mxu0 %v2014
      %2119 = vmatpush1.bf16.msra.mxu0 %v2011
      %2120 = vmatprep.subr.bf16.mxu0 0
      %2121 = vmatpush2.bf16.msra.mxu0 0
      %2122 = vmatprep.subr.bf16.mxu0 0
      %2123 = vmatpush2.bf16.msra.mxu0 0
      %2124 = vmatprep.subr.bf16.mxu0 0
      %2125 = vmatpush2.bf16.msra.mxu0 0
      %2126 = vmatprep.subr.bf16.mxu0 0
      %2127 = vmatpush2.bf16.msra.mxu0 0
      %2128 = vmatprep.subr.bf16.mxu0 0
      %2129 = vmatpush2.bf16.msra.mxu0 0
      %2130 = vmatprep.subr.bf16.mxu0 0
      %2131 = vmatpush2.bf16.msra.mxu0 0
      %2132 = vmatprep.subr.bf16.mxu0 0
      %2133 = vmatpush2.bf16.msra.mxu0 0
      %2134 = vmatprep.subr.bf16.mxu0 0
      %2135 = vmatpush2.bf16.msra.mxu0 0
      %2136 = vmatprep.mubr.bf16.mxu0 0
      %2137 = vmatmul.mubr.bf16.gmra.mxu0 %v1996
      %v2138 = vpop.f32.mrf.mxu0
      %v2139 = vadd.f32 0.0, %v2138
      %v2140 = vpop.f32.mrf.mxu0
      %v2141 = vadd.f32 0.0, %v2140
      %v2142 = vpop.f32.mrf.mxu0
      %v2143 = vpop.f32.mrf.mxu0
      %2144 = vdwg.mxu0
      %2145 = vmatprep.subr.bf16.mxu0 0
      %2146 = vmatpush1.bf16.msra.mxu0 0
      %2147 = vmatprep.subr.bf16.mxu0 0
      %2148 = vmatpush1.bf16.msra.mxu0 0
      %2149 = vmatprep.subr.bf16.mxu0 0
      %2150 = vmatpush1.bf16.msra.mxu0 0
      %2151 = vmatprep.subr.bf16.mxu0 0
      %2152 = vmatpush1.bf16.msra.mxu0 0
      %2153 = vmatprep.subr.bf16.mxu0 0
      %2154 = vmatpush1.bf16.msra.mxu0 0
      %2155 = vmatprep.subr.bf16.mxu0 0
      %2156 = vmatpush1.bf16.msra.mxu0 0
      %2157 = vmatprep.subr.bf16.mxu0 0
      %2158 = vmatpush1.bf16.msra.mxu0 0
      %2159 = vmatprep.subr.bf16.mxu0 %v2020
      %2160 = vmatpush1.bf16.msra.mxu0 %v2017
      %2161 = vmatprep.subr.bf16.mxu0 0
      %2162 = vmatpush2.bf16.msra.mxu0 0
      %2163 = vmatprep.subr.bf16.mxu0 0
      %2164 = vmatpush2.bf16.msra.mxu0 0
      %2165 = vmatprep.subr.bf16.mxu0 0
      %2166 = vmatpush2.bf16.msra.mxu0 0
      %2167 = vmatprep.subr.bf16.mxu0 0
      %2168 = vmatpush2.bf16.msra.mxu0 0
      %2169 = vmatprep.subr.bf16.mxu0 0
      %2170 = vmatpush2.bf16.msra.mxu0 0
      %2171 = vmatprep.subr.bf16.mxu0 0
      %2172 = vmatpush2.bf16.msra.mxu0 0
      %2173 = vmatprep.subr.bf16.mxu0 0
      %2174 = vmatpush2.bf16.msra.mxu0 0
      %2175 = vmatprep.subr.bf16.mxu0 0
      %2176 = vmatpush2.bf16.msra.mxu0 0
      %2177 = vmatprep.mubr.bf16.mxu0 0
      %2178 = vmatmul.mubr.bf16.gmra.mxu0 %v1996
      %v2179 = vpop.f32.mrf.mxu0
      %v2180 = vadd.f32 0.0, %v2179
      %v2181 = vpop.f32.mrf.mxu0
      %v2182 = vadd.f32 0.0, %v2181
      %v2183 = vpop.f32.mrf.mxu0
      %v2184 = vpop.f32.mrf.mxu0
      %2185 = vdwg.mxu0
      %v2186 = vadd.f32 %v1899, %v2057
      %v2187 = vadd.f32 %v1900, %v2059
      %v2188 = vadd.f32 %v1901, %v2098
      %v2189 = vadd.f32 %v1902, %v2100
      %v2190 = vadd.f32 %v1903, %v2139
      %v2191 = vadd.f32 %v1904, %v2141
      %v2192 = vadd.f32 %v1905, %v2180
      %v2193 = vadd.f32 %v1906, %v2182
      %s2194 = scalar_lea.vmem %s5, 8
      %v2195 = vld [vmem:[%s2194] sm:$0x3]
      %v2196 = vpack.c.bf16 %v1052, %v1052
      %v2197 = vpack.c.bf16 %v1053, %v1053
      %v2198 = vpack.c.bf16 %v1054, %v1054
      %v2199 = vpack.c.bf16 %v1055, %v1055
      %v2200 = vpack.c.bf16 %v1056, %v1056
      %v2201 = vpack.c.bf16 %v1057, %v1057
      %v2202 = vpack.c.bf16 %v1058, %v1058
      %v2203 = vpack.c.bf16 %v1059, %v1059
      %v2205 = vsel %vm1236, %v2195, 0
      %v2208 = vsel %vm1240, %v2196, 0
      %v2211 = vsel %vm1240, %v2197, 0
      %v2214 = vsel %vm1240, %v2198, 0
      %v2217 = vsel %vm1240, %v2199, 0
      %v2220 = vsel %vm1240, %v2200, 0
      %v2223 = vsel %vm1240, %v2201, 0
      %v2226 = vsel %vm1240, %v2202, 0
      %v2229 = vsel %vm1240, %v2203, 0
      %2231 = vmatprep.subr.bf16.mxu0 0
      %2232 = vmatpush1.bf16.msra.mxu0 0
      %2233 = vmatprep.subr.bf16.mxu0 0
      %2234 = vmatpush1.bf16.msra.mxu0 0
      %2235 = vmatprep.subr.bf16.mxu0 0
      %2236 = vmatpush1.bf16.msra.mxu0 0
      %2237 = vmatprep.subr.bf16.mxu0 0
      %2238 = vmatpush1.bf16.msra.mxu0 0
      %2239 = vmatprep.subr.bf16.mxu0 0
      %2240 = vmatpush1.bf16.msra.mxu0 0
      %2241 = vmatprep.subr.bf16.mxu0 0
      %2242 = vmatpush1.bf16.msra.mxu0 0
      %2243 = vmatprep.subr.bf16.mxu0 0
      %2244 = vmatpush1.bf16.msra.mxu0 0
      %2245 = vmatprep.subr.bf16.mxu0 %v2211
      %2246 = vmatpush1.bf16.msra.mxu0 %v2208
      %2247 = vmatprep.subr.bf16.mxu0 0
      %2248 = vmatpush2.bf16.msra.mxu0 0
      %2249 = vmatprep.subr.bf16.mxu0 0
      %2250 = vmatpush2.bf16.msra.mxu0 0
      %2251 = vmatprep.subr.bf16.mxu0 0
      %2252 = vmatpush2.bf16.msra.mxu0 0
      %2253 = vmatprep.subr.bf16.mxu0 0
      %2254 = vmatpush2.bf16.msra.mxu0 0
      %2255 = vmatprep.subr.bf16.mxu0 0
      %2256 = vmatpush2.bf16.msra.mxu0 0
      %2257 = vmatprep.subr.bf16.mxu0 0
      %2258 = vmatpush2.bf16.msra.mxu0 0
      %2259 = vmatprep.subr.bf16.mxu0 0
      %2260 = vmatpush2.bf16.msra.mxu0 0
      %2261 = vmatprep.subr.bf16.mxu0 0
      %2262 = vmatpush2.bf16.msra.mxu0 0
      %2263 = vmatprep.mubr.bf16.mxu0 0
      %2264 = vmatmul.mubr.bf16.gmra.mxu0 %v2205
      %v2265 = vpop.f32.mrf.mxu0
      %v2266 = vadd.f32 0.0, %v2265
      %v2267 = vpop.f32.mrf.mxu0
      %v2268 = vadd.f32 0.0, %v2267
      %v2269 = vpop.f32.mrf.mxu0
      %v2270 = vpop.f32.mrf.mxu0
      %2271 = vdwg.mxu0
      %2272 = vmatprep.subr.bf16.mxu0 0
      %2273 = vmatpush1.bf16.msra.mxu0 0
      %2274 = vmatprep.subr.bf16.mxu0 0
      %2275 = vmatpush1.bf16.msra.mxu0 0
      %2276 = vmatprep.subr.bf16.mxu0 0
      %2277 = vmatpush1.bf16.msra.mxu0 0
      %2278 = vmatprep.subr.bf16.mxu0 0
      %2279 = vmatpush1.bf16.msra.mxu0 0
      %2280 = vmatprep.subr.bf16.mxu0 0
      %2281 = vmatpush1.bf16.msra.mxu0 0
      %2282 = vmatprep.subr.bf16.mxu0 0
      %2283 = vmatpush1.bf16.msra.mxu0 0
      %2284 = vmatprep.subr.bf16.mxu0 0
      %2285 = vmatpush1.bf16.msra.mxu0 0
      %2286 = vmatprep.subr.bf16.mxu0 %v2217
      %2287 = vmatpush1.bf16.msra.mxu0 %v2214
      %2288 = vmatprep.subr.bf16.mxu0 0
      %2289 = vmatpush2.bf16.msra.mxu0 0
      %2290 = vmatprep.subr.bf16.mxu0 0
      %2291 = vmatpush2.bf16.msra.mxu0 0
      %2292 = vmatprep.subr.bf16.mxu0 0
      %2293 = vmatpush2.bf16.msra.mxu0 0
      %2294 = vmatprep.subr.bf16.mxu0 0
      %2295 = vmatpush2.bf16.msra.mxu0 0
      %2296 = vmatprep.subr.bf16.mxu0 0
      %2297 = vmatpush2.bf16.msra.mxu0 0
      %2298 = vmatprep.subr.bf16.mxu0 0
      %2299 = vmatpush2.bf16.msra.mxu0 0
      %2300 = vmatprep.subr.bf16.mxu0 0
      %2301 = vmatpush2.bf16.msra.mxu0 0
      %2302 = vmatprep.subr.bf16.mxu0 0
      %2303 = vmatpush2.bf16.msra.mxu0 0
      %2304 = vmatprep.mubr.bf16.mxu0 0
      %2305 = vmatmul.mubr.bf16.gmra.mxu0 %v2205
      %v2306 = vpop.f32.mrf.mxu0
      %v2307 = vadd.f32 0.0, %v2306
      %v2308 = vpop.f32.mrf.mxu0
      %v2309 = vadd.f32 0.0, %v2308
      %v2310 = vpop.f32.mrf.mxu0
      %v2311 = vpop.f32.mrf.mxu0
      %2312 = vdwg.mxu0
      %2313 = vmatprep.subr.bf16.mxu0 0
      %2314 = vmatpush1.bf16.msra.mxu0 0
      %2315 = vmatprep.subr.bf16.mxu0 0
      %2316 = vmatpush1.bf16.msra.mxu0 0
      %2317 = vmatprep.subr.bf16.mxu0 0
      %2318 = vmatpush1.bf16.msra.mxu0 0
      %2319 = vmatprep.subr.bf16.mxu0 0
      %2320 = vmatpush1.bf16.msra.mxu0 0
      %2321 = vmatprep.subr.bf16.mxu0 0
      %2322 = vmatpush1.bf16.msra.mxu0 0
      %2323 = vmatprep.subr.bf16.mxu0 0
      %2324 = vmatpush1.bf16.msra.mxu0 0
      %2325 = vmatprep.subr.bf16.mxu0 0
      %2326 = vmatpush1.bf16.msra.mxu0 0
      %2327 = vmatprep.subr.bf16.mxu0 %v2223
      %2328 = vmatpush1.bf16.msra.mxu0 %v2220
      %2329 = vmatprep.subr.bf16.mxu0 0
      %2330 = vmatpush2.bf16.msra.mxu0 0
      %2331 = vmatprep.subr.bf16.mxu0 0
      %2332 = vmatpush2.bf16.msra.mxu0 0
      %2333 = vmatprep.subr.bf16.mxu0 0
      %2334 = vmatpush2.bf16.msra.mxu0 0
      %2335 = vmatprep.subr.bf16.mxu0 0
      %2336 = vmatpush2.bf16.msra.mxu0 0
      %2337 = vmatprep.subr.bf16.mxu0 0
      %2338 = vmatpush2.bf16.msra.mxu0 0
      %2339 = vmatprep.subr.bf16.mxu0 0
      %2340 = vmatpush2.bf16.msra.mxu0 0
      %2341 = vmatprep.subr.bf16.mxu0 0
      %2342 = vmatpush2.bf16.msra.mxu0 0
      %2343 = vmatprep.subr.bf16.mxu0 0
      %2344 = vmatpush2.bf16.msra.mxu0 0
      %2345 = vmatprep.mubr.bf16.mxu0 0
      %2346 = vmatmul.mubr.bf16.gmra.mxu0 %v2205
      %v2347 = vpop.f32.mrf.mxu0
      %v2348 = vadd.f32 0.0, %v2347
      %v2349 = vpop.f32.mrf.mxu0
      %v2350 = vadd.f32 0.0, %v2349
      %v2351 = vpop.f32.mrf.mxu0
      %v2352 = vpop.f32.mrf.mxu0
      %2353 = vdwg.mxu0
      %2354 = vmatprep.subr.bf16.mxu0 0
      %2355 = vmatpush1.bf16.msra.mxu0 0
      %2356 = vmatprep.subr.bf16.mxu0 0
      %2357 = vmatpush1.bf16.msra.mxu0 0
      %2358 = vmatprep.subr.bf16.mxu0 0
      %2359 = vmatpush1.bf16.msra.mxu0 0
      %2360 = vmatprep.subr.bf16.mxu0 0
      %2361 = vmatpush1.bf16.msra.mxu0 0
      %2362 = vmatprep.subr.bf16.mxu0 0
      %2363 = vmatpush1.bf16.msra.mxu0 0
      %2364 = vmatprep.subr.bf16.mxu0 0
      %2365 = vmatpush1.bf16.msra.mxu0 0
      %2366 = vmatprep.subr.bf16.mxu0 0
      %2367 = vmatpush1.bf16.msra.mxu0 0
      %2368 = vmatprep.subr.bf16.mxu0 %v2229
      %2369 = vmatpush1.bf16.msra.mxu0 %v2226
      %2370 = vmatprep.subr.bf16.mxu0 0
      %2371 = vmatpush2.bf16.msra.mxu0 0
      %2372 = vmatprep.subr.bf16.mxu0 0
      %2373 = vmatpush2.bf16.msra.mxu0 0
      %2374 = vmatprep.subr.bf16.mxu0 0
      %2375 = vmatpush2.bf16.msra.mxu0 0
      %2376 = vmatprep.subr.bf16.mxu0 0
      %2377 = vmatpush2.bf16.msra.mxu0 0
      %2378 = vmatprep.subr.bf16.mxu0 0
      %2379 = vmatpush2.bf16.msra.mxu0 0
      %2380 = vmatprep.subr.bf16.mxu0 0
      %2381 = vmatpush2.bf16.msra.mxu0 0
      %2382 = vmatprep.subr.bf16.mxu0 0
      %2383 = vmatpush2.bf16.msra.mxu0 0
      %2384 = vmatprep.subr.bf16.mxu0 0
      %2385 = vmatpush2.bf16.msra.mxu0 0
      %2386 = vmatprep.mubr.bf16.mxu0 0
      %2387 = vmatmul.mubr.bf16.gmra.mxu0 %v2205
      %v2388 = vpop.f32.mrf.mxu0
      %v2389 = vadd.f32 0.0, %v2388
      %v2390 = vpop.f32.mrf.mxu0
      %v2391 = vadd.f32 0.0, %v2390
      %v2392 = vpop.f32.mrf.mxu0
      %v2393 = vpop.f32.mrf.mxu0
      %2394 = vdwg.mxu0
      %v2395 = vadd.f32 %v2186, %v2266
      %v2396 = vadd.f32 %v2187, %v2268
      %v2397 = vadd.f32 %v2188, %v2307
      %v2398 = vadd.f32 %v2189, %v2309
      %v2399 = vadd.f32 %v2190, %v2348
      %v2400 = vadd.f32 %v2191, %v2350
      %v2401 = vadd.f32 %v2192, %v2389
      %v2402 = vadd.f32 %v2193, %v2391
      %2403 = vrot.lane.b32.xlu0 %v1052, 127
      %v2404 = vpop.permute.xlu0 %2403
      %2405 = vrot.lane.b32.xlu0 %v1053, 127
      %v2406 = vpop.permute.xlu0 %2405
      %2407 = vrot.lane.b32.xlu0 %v1054, 127
      %v2408 = vpop.permute.xlu0 %2407
      %2409 = vrot.lane.b32.xlu0 %v1055, 127
      %v2410 = vpop.permute.xlu0 %2409
      %2411 = vrot.lane.b32.xlu0 %v1056, 127
      %v2412 = vpop.permute.xlu0 %2411
      %2413 = vrot.lane.b32.xlu0 %v1057, 127
      %v2414 = vpop.permute.xlu0 %2413
      %2415 = vrot.lane.b32.xlu0 %v1058, 127
      %v2416 = vpop.permute.xlu0 %2415
      %2417 = vrot.lane.b32.xlu0 %v1059, 127
      %v2418 = vpop.permute.xlu0 %2417
      %vm2419 = vcmp.lt.s32.totalorder %v1077, 127
      %v2420 = vsel %vm2419, %v2416, %v2418
      %v2421 = vsel %vm2419, %v2414, %v2416
      %v2422 = vsel %vm2419, %v2412, %v2414
      %v2423 = vsel %vm2419, %v2410, %v2412
      %v2424 = vsel %vm2419, %v2408, %v2410
      %v2425 = vsel %vm2419, %v2406, %v2408
      %v2426 = vsel %vm2419, %v2404, %v2406
      %v2427 = vsel %vm2419, %v2418, %v2404
      %s2428 = scalar_lea.vmem %s2, 5
      %v2429 = vld [vmem:[%s2428] ss:$8 sm:$0xf]
      %v2430 = vld [vmem:[%s2428] ss:$8 sm:$0xf0]
      %v2431 = vor.u32 %v2429, %v2430
      %v2433 = vlaneseq
      %v2434 = vshrl.u32 %v2433, 7
      %v2435 = vsub.s32 0, %v2434
      %v2436 = vrot.slane %v2431, %v2435
      %v2437 = vlaneseq
      %v2438 = vshrl.u32 %v2437, 7
      %v2439 = vsub.s32 1, %v2438
      %v2440 = vrot.slane %v2431, %v2439
      %v2441 = vlaneseq
      %v2442 = vshrl.u32 %v2441, 7
      %v2443 = vsub.s32 2, %v2442
      %v2444 = vrot.slane %v2431, %v2443
      %v2445 = vlaneseq
      %v2446 = vshrl.u32 %v2445, 7
      %v2447 = vsub.s32 3, %v2446
      %v2448 = vrot.slane %v2431, %v2447
      %v2449 = vlaneseq
      %v2450 = vshrl.u32 %v2449, 7
      %v2451 = vsub.s32 4, %v2450
      %v2452 = vrot.slane %v2431, %v2451
      %v2453 = vlaneseq
      %v2454 = vshrl.u32 %v2453, 7
      %v2455 = vsub.s32 5, %v2454
      %v2456 = vrot.slane %v2431, %v2455
      %v2457 = vlaneseq
      %v2458 = vshrl.u32 %v2457, 7
      %v2459 = vsub.s32 6, %v2458
      %v2460 = vrot.slane %v2431, %v2459
      %v2461 = vlaneseq
      %v2462 = vshrl.u32 %v2461, 7
      %v2463 = vsub.s32 7, %v2462
      %v2464 = vrot.slane %v2431, %v2463
      %v2473 = vmul.f32 %v2426, %v2436
      %v2474 = vmul.f32 %v2425, %v2440
      %v2475 = vmul.f32 %v2424, %v2444
      %v2476 = vmul.f32 %v2423, %v2448
      %v2477 = vmul.f32 %v2422, %v2452
      %v2478 = vmul.f32 %v2421, %v2456
      %v2479 = vmul.f32 %v2420, %v2460
      %v2480 = vmul.f32 %v2427, %v2464
      %s2481 = scalar_lea.vmem %s5, 10
      %v2482 = vld [vmem:[%s2481] sm:$0x3]
      %v2483 = vpack.c.bf16 %v2473, %v2473
      %v2484 = vpack.c.bf16 %v2474, %v2474
      %v2485 = vpack.c.bf16 %v2475, %v2475
      %v2486 = vpack.c.bf16 %v2476, %v2476
      %v2487 = vpack.c.bf16 %v2477, %v2477
      %v2488 = vpack.c.bf16 %v2478, %v2478
      %v2489 = vpack.c.bf16 %v2479, %v2479
      %v2490 = vpack.c.bf16 %v2480, %v2480
      %v2492 = vsel %vm1236, %v2482, 0
      %v2495 = vsel %vm1240, %v2483, 0
      %v2498 = vsel %vm1240, %v2484, 0
      %v2501 = vsel %vm1240, %v2485, 0
      %v2504 = vsel %vm1240, %v2486, 0
      %v2507 = vsel %vm1240, %v2487, 0
      %v2510 = vsel %vm1240, %v2488, 0
      %v2513 = vsel %vm1240, %v2489, 0
      %v2516 = vsel %vm1240, %v2490, 0
      %2518 = vmatprep.subr.bf16.mxu0 0
      %2519 = vmatpush1.bf16.msra.mxu0 0
      %2520 = vmatprep.subr.bf16.mxu0 0
      %2521 = vmatpush1.bf16.msra.mxu0 0
      %2522 = vmatprep.subr.bf16.mxu0 0
      %2523 = vmatpush1.bf16.msra.mxu0 0
      %2524 = vmatprep.subr.bf16.mxu0 0
      %2525 = vmatpush1.bf16.msra.mxu0 0
      %2526 = vmatprep.subr.bf16.mxu0 0
      %2527 = vmatpush1.bf16.msra.mxu0 0
      %2528 = vmatprep.subr.bf16.mxu0 0
      %2529 = vmatpush1.bf16.msra.mxu0 0
      %2530 = vmatprep.subr.bf16.mxu0 0
      %2531 = vmatpush1.bf16.msra.mxu0 0
      %2532 = vmatprep.subr.bf16.mxu0 %v2498
      %2533 = vmatpush1.bf16.msra.mxu0 %v2495
      %2534 = vmatprep.subr.bf16.mxu0 0
      %2535 = vmatpush2.bf16.msra.mxu0 0
      %2536 = vmatprep.subr.bf16.mxu0 0
      %2537 = vmatpush2.bf16.msra.mxu0 0
      %2538 = vmatprep.subr.bf16.mxu0 0
      %2539 = vmatpush2.bf16.msra.mxu0 0
      %2540 = vmatprep.subr.bf16.mxu0 0
      %2541 = vmatpush2.bf16.msra.mxu0 0
      %2542 = vmatprep.subr.bf16.mxu0 0
      %2543 = vmatpush2.bf16.msra.mxu0 0
      %2544 = vmatprep.subr.bf16.mxu0 0
      %2545 = vmatpush2.bf16.msra.mxu0 0
      %2546 = vmatprep.subr.bf16.mxu0 0
      %2547 = vmatpush2.bf16.msra.mxu0 0
      %2548 = vmatprep.subr.bf16.mxu0 0
      %2549 = vmatpush2.bf16.msra.mxu0 0
      %2550 = vmatprep.mubr.bf16.mxu0 0
      %2551 = vmatmul.mubr.bf16.gmra.mxu0 %v2492
      %v2552 = vpop.f32.mrf.mxu0
      %v2553 = vadd.f32 0.0, %v2552
      %v2554 = vpop.f32.mrf.mxu0
      %v2555 = vadd.f32 0.0, %v2554
      %v2556 = vpop.f32.mrf.mxu0
      %v2557 = vpop.f32.mrf.mxu0
      %2558 = vdwg.mxu0
      %2559 = vmatprep.subr.bf16.mxu0 0
      %2560 = vmatpush1.bf16.msra.mxu0 0
      %2561 = vmatprep.subr.bf16.mxu0 0
      %2562 = vmatpush1.bf16.msra.mxu0 0
      %2563 = vmatprep.subr.bf16.mxu0 0
      %2564 = vmatpush1.bf16.msra.mxu0 0
      %2565 = vmatprep.subr.bf16.mxu0 0
      %2566 = vmatpush1.bf16.msra.mxu0 0
      %2567 = vmatprep.subr.bf16.mxu0 0
      %2568 = vmatpush1.bf16.msra.mxu0 0
      %2569 = vmatprep.subr.bf16.mxu0 0
      %2570 = vmatpush1.bf16.msra.mxu0 0
      %2571 = vmatprep.subr.bf16.mxu0 0
      %2572 = vmatpush1.bf16.msra.mxu0 0
      %2573 = vmatprep.subr.bf16.mxu0 %v2504
      %2574 = vmatpush1.bf16.msra.mxu0 %v2501
      %2575 = vmatprep.subr.bf16.mxu0 0
      %2576 = vmatpush2.bf16.msra.mxu0 0
      %2577 = vmatprep.subr.bf16.mxu0 0
      %2578 = vmatpush2.bf16.msra.mxu0 0
      %2579 = vmatprep.subr.bf16.mxu0 0
      %2580 = vmatpush2.bf16.msra.mxu0 0
      %2581 = vmatprep.subr.bf16.mxu0 0
      %2582 = vmatpush2.bf16.msra.mxu0 0
      %2583 = vmatprep.subr.bf16.mxu0 0
      %2584 = vmatpush2.bf16.msra.mxu0 0
      %2585 = vmatprep.subr.bf16.mxu0 0
      %2586 = vmatpush2.bf16.msra.mxu0 0
      %2587 = vmatprep.subr.bf16.mxu0 0
      %2588 = vmatpush2.bf16.msra.mxu0 0
      %2589 = vmatprep.subr.bf16.mxu0 0
      %2590 = vmatpush2.bf16.msra.mxu0 0
      %2591 = vmatprep.mubr.bf16.mxu0 0
      %2592 = vmatmul.mubr.bf16.gmra.mxu0 %v2492
      %v2593 = vpop.f32.mrf.mxu0
      %v2594 = vadd.f32 0.0, %v2593
      %v2595 = vpop.f32.mrf.mxu0
      %v2596 = vadd.f32 0.0, %v2595
      %v2597 = vpop.f32.mrf.mxu0
      %v2598 = vpop.f32.mrf.mxu0
      %2599 = vdwg.mxu0
      %2600 = vmatprep.subr.bf16.mxu0 0
      %2601 = vmatpush1.bf16.msra.mxu0 0
      %2602 = vmatprep.subr.bf16.mxu0 0
      %2603 = vmatpush1.bf16.msra.mxu0 0
      %2604 = vmatprep.subr.bf16.mxu0 0
      %2605 = vmatpush1.bf16.msra.mxu0 0
      %2606 = vmatprep.subr.bf16.mxu0 0
      %2607 = vmatpush1.bf16.msra.mxu0 0
      %2608 = vmatprep.subr.bf16.mxu0 0
      %2609 = vmatpush1.bf16.msra.mxu0 0
      %2610 = vmatprep.subr.bf16.mxu0 0
      %2611 = vmatpush1.bf16.msra.mxu0 0
      %2612 = vmatprep.subr.bf16.mxu0 0
      %2613 = vmatpush1.bf16.msra.mxu0 0
      %2614 = vmatprep.subr.bf16.mxu0 %v2510
      %2615 = vmatpush1.bf16.msra.mxu0 %v2507
      %2616 = vmatprep.subr.bf16.mxu0 0
      %2617 = vmatpush2.bf16.msra.mxu0 0
      %2618 = vmatprep.subr.bf16.mxu0 0
      %2619 = vmatpush2.bf16.msra.mxu0 0
      %2620 = vmatprep.subr.bf16.mxu0 0
      %2621 = vmatpush2.bf16.msra.mxu0 0
      %2622 = vmatprep.subr.bf16.mxu0 0
      %2623 = vmatpush2.bf16.msra.mxu0 0
      %2624 = vmatprep.subr.bf16.mxu0 0
      %2625 = vmatpush2.bf16.msra.mxu0 0
      %2626 = vmatprep.subr.bf16.mxu0 0
      %2627 = vmatpush2.bf16.msra.mxu0 0
      %2628 = vmatprep.subr.bf16.mxu0 0
      %2629 = vmatpush2.bf16.msra.mxu0 0
      %2630 = vmatprep.subr.bf16.mxu0 0
      %2631 = vmatpush2.bf16.msra.mxu0 0
      %2632 = vmatprep.mubr.bf16.mxu0 0
      %2633 = vmatmul.mubr.bf16.gmra.mxu0 %v2492
      %v2634 = vpop.f32.mrf.mxu0
      %v2635 = vadd.f32 0.0, %v2634
      %v2636 = vpop.f32.mrf.mxu0
      %v2637 = vadd.f32 0.0, %v2636
      %v2638 = vpop.f32.mrf.mxu0
      %v2639 = vpop.f32.mrf.mxu0
      %2640 = vdwg.mxu0
      %2641 = vmatprep.subr.bf16.mxu0 0
      %2642 = vmatpush1.bf16.msra.mxu0 0
      %2643 = vmatprep.subr.bf16.mxu0 0
      %2644 = vmatpush1.bf16.msra.mxu0 0
      %2645 = vmatprep.subr.bf16.mxu0 0
      %2646 = vmatpush1.bf16.msra.mxu0 0
      %2647 = vmatprep.subr.bf16.mxu0 0
      %2648 = vmatpush1.bf16.msra.mxu0 0
      %2649 = vmatprep.subr.bf16.mxu0 0
      %2650 = vmatpush1.bf16.msra.mxu0 0
      %2651 = vmatprep.subr.bf16.mxu0 0
      %2652 = vmatpush1.bf16.msra.mxu0 0
      %2653 = vmatprep.subr.bf16.mxu0 0
      %2654 = vmatpush1.bf16.msra.mxu0 0
      %2655 = vmatprep.subr.bf16.mxu0 %v2516
      %2656 = vmatpush1.bf16.msra.mxu0 %v2513
      %2657 = vmatprep.subr.bf16.mxu0 0
      %2658 = vmatpush2.bf16.msra.mxu0 0
      %2659 = vmatprep.subr.bf16.mxu0 0
      %2660 = vmatpush2.bf16.msra.mxu0 0
      %2661 = vmatprep.subr.bf16.mxu0 0
      %2662 = vmatpush2.bf16.msra.mxu0 0
      %2663 = vmatprep.subr.bf16.mxu0 0
      %2664 = vmatpush2.bf16.msra.mxu0 0
      %2665 = vmatprep.subr.bf16.mxu0 0
      %2666 = vmatpush2.bf16.msra.mxu0 0
      %2667 = vmatprep.subr.bf16.mxu0 0
      %2668 = vmatpush2.bf16.msra.mxu0 0
      %2669 = vmatprep.subr.bf16.mxu0 0
      %2670 = vmatpush2.bf16.msra.mxu0 0
      %2671 = vmatprep.subr.bf16.mxu0 0
      %2672 = vmatpush2.bf16.msra.mxu0 0
      %2673 = vmatprep.mubr.bf16.mxu0 0
      %2674 = vmatmul.mubr.bf16.gmra.mxu0 %v2492
      %v2675 = vpop.f32.mrf.mxu0
      %v2676 = vadd.f32 0.0, %v2675
      %v2677 = vpop.f32.mrf.mxu0
      %v2678 = vadd.f32 0.0, %v2677
      %v2679 = vpop.f32.mrf.mxu0
      %v2680 = vpop.f32.mrf.mxu0
      %2681 = vdwg.mxu0
      %v2682 = vadd.f32 %v2395, %v2553
      %v2683 = vadd.f32 %v2396, %v2555
      %v2684 = vadd.f32 %v2397, %v2594
      %v2685 = vadd.f32 %v2398, %v2596
      %v2686 = vadd.f32 %v2399, %v2635
      %v2687 = vadd.f32 %v2400, %v2637
      %v2688 = vadd.f32 %v2401, %v2676
      %v2689 = vadd.f32 %v2402, %v2678
      %2690 = vrot.lane.b32.xlu0 %v1052, 97
      %v2691 = vpop.permute.xlu0 %2690
      %2692 = vrot.lane.b32.xlu0 %v1053, 97
      %v2693 = vpop.permute.xlu0 %2692
      %2694 = vrot.lane.b32.xlu0 %v1054, 97
      %v2695 = vpop.permute.xlu0 %2694
      %2696 = vrot.lane.b32.xlu0 %v1055, 97
      %v2697 = vpop.permute.xlu0 %2696
      %2698 = vrot.lane.b32.xlu0 %v1056, 97
      %v2699 = vpop.permute.xlu0 %2698
      %2700 = vrot.lane.b32.xlu0 %v1057, 97
      %v2701 = vpop.permute.xlu0 %2700
      %2702 = vrot.lane.b32.xlu0 %v1058, 97
      %v2703 = vpop.permute.xlu0 %2702
      %2704 = vrot.lane.b32.xlu0 %v1059, 97
      %v2705 = vpop.permute.xlu0 %2704
      %vm2706 = vcmp.lt.s32.totalorder %v1077, 97
      %v2707 = vsel %vm2706, %v2703, %v2705
      %v2708 = vsel %vm2706, %v2701, %v2703
      %v2709 = vsel %vm2706, %v2699, %v2701
      %v2710 = vsel %vm2706, %v2697, %v2699
      %v2711 = vsel %vm2706, %v2695, %v2697
      %v2712 = vsel %vm2706, %v2693, %v2695
      %v2713 = vsel %vm2706, %v2691, %v2693
      %v2714 = vsel %vm2706, %v2705, %v2691
      %s2715 = scalar_lea.vmem %s2, 6
      %v2716 = vld [vmem:[%s2715] ss:$8 sm:$0xf]
      %v2717 = vld [vmem:[%s2715] ss:$8 sm:$0xf0]
      %v2718 = vor.u32 %v2716, %v2717
      %v2720 = vlaneseq
      %v2721 = vshrl.u32 %v2720, 7
      %v2722 = vsub.s32 0, %v2721
      %v2723 = vrot.slane %v2718, %v2722
      %v2724 = vlaneseq
      %v2725 = vshrl.u32 %v2724, 7
      %v2726 = vsub.s32 1, %v2725
      %v2727 = vrot.slane %v2718, %v2726
      %v2728 = vlaneseq
      %v2729 = vshrl.u32 %v2728, 7
      %v2730 = vsub.s32 2, %v2729
      %v2731 = vrot.slane %v2718, %v2730
      %v2732 = vlaneseq
      %v2733 = vshrl.u32 %v2732, 7
      %v2734 = vsub.s32 3, %v2733
      %v2735 = vrot.slane %v2718, %v2734
      %v2736 = vlaneseq
      %v2737 = vshrl.u32 %v2736, 7
      %v2738 = vsub.s32 4, %v2737
      %v2739 = vrot.slane %v2718, %v2738
      %v2740 = vlaneseq
      %v2741 = vshrl.u32 %v2740, 7
      %v2742 = vsub.s32 5, %v2741
      %v2743 = vrot.slane %v2718, %v2742
      %v2744 = vlaneseq
      %v2745 = vshrl.u32 %v2744, 7
      %v2746 = vsub.s32 6, %v2745
      %v2747 = vrot.slane %v2718, %v2746
      %v2748 = vlaneseq
      %v2749 = vshrl.u32 %v2748, 7
      %v2750 = vsub.s32 7, %v2749
      %v2751 = vrot.slane %v2718, %v2750
      %v2760 = vmul.f32 %v2713, %v2723
      %v2761 = vmul.f32 %v2712, %v2727
      %v2762 = vmul.f32 %v2711, %v2731
      %v2763 = vmul.f32 %v2710, %v2735
      %v2764 = vmul.f32 %v2709, %v2739
      %v2765 = vmul.f32 %v2708, %v2743
      %v2766 = vmul.f32 %v2707, %v2747
      %v2767 = vmul.f32 %v2714, %v2751
      %s2768 = scalar_lea.vmem %s5, 12
      %v2769 = vld [vmem:[%s2768] sm:$0x3]
      %v2770 = vpack.c.bf16 %v2760, %v2760
      %v2771 = vpack.c.bf16 %v2761, %v2761
      %v2772 = vpack.c.bf16 %v2762, %v2762
      %v2773 = vpack.c.bf16 %v2763, %v2763
      %v2774 = vpack.c.bf16 %v2764, %v2764
      %v2775 = vpack.c.bf16 %v2765, %v2765
      %v2776 = vpack.c.bf16 %v2766, %v2766
      %v2777 = vpack.c.bf16 %v2767, %v2767
      %v2779 = vsel %vm1236, %v2769, 0
      %v2782 = vsel %vm1240, %v2770, 0
      %v2785 = vsel %vm1240, %v2771, 0
      %v2788 = vsel %vm1240, %v2772, 0
      %v2791 = vsel %vm1240, %v2773, 0
      %v2794 = vsel %vm1240, %v2774, 0
      %v2797 = vsel %vm1240, %v2775, 0
      %v2800 = vsel %vm1240, %v2776, 0
      %v2803 = vsel %vm1240, %v2777, 0
      %2805 = vmatprep.subr.bf16.mxu0 0
      %2806 = vmatpush1.bf16.msra.mxu0 0
      %2807 = vmatprep.subr.bf16.mxu0 0
      %2808 = vmatpush1.bf16.msra.mxu0 0
      %2809 = vmatprep.subr.bf16.mxu0 0
      %2810 = vmatpush1.bf16.msra.mxu0 0
      %2811 = vmatprep.subr.bf16.mxu0 0
      %2812 = vmatpush1.bf16.msra.mxu0 0
      %2813 = vmatprep.subr.bf16.mxu0 0
      %2814 = vmatpush1.bf16.msra.mxu0 0
      %2815 = vmatprep.subr.bf16.mxu0 0
      %2816 = vmatpush1.bf16.msra.mxu0 0
      %2817 = vmatprep.subr.bf16.mxu0 0
      %2818 = vmatpush1.bf16.msra.mxu0 0
      %2819 = vmatprep.subr.bf16.mxu0 %v2785
      %2820 = vmatpush1.bf16.msra.mxu0 %v2782
      %2821 = vmatprep.subr.bf16.mxu0 0
      %2822 = vmatpush2.bf16.msra.mxu0 0
      %2823 = vmatprep.subr.bf16.mxu0 0
      %2824 = vmatpush2.bf16.msra.mxu0 0
      %2825 = vmatprep.subr.bf16.mxu0 0
      %2826 = vmatpush2.bf16.msra.mxu0 0
      %2827 = vmatprep.subr.bf16.mxu0 0
      %2828 = vmatpush2.bf16.msra.mxu0 0
      %2829 = vmatprep.subr.bf16.mxu0 0
      %2830 = vmatpush2.bf16.msra.mxu0 0
      %2831 = vmatprep.subr.bf16.mxu0 0
      %2832 = vmatpush2.bf16.msra.mxu0 0
      %2833 = vmatprep.subr.bf16.mxu0 0
      %2834 = vmatpush2.bf16.msra.mxu0 0
      %2835 = vmatprep.subr.bf16.mxu0 0
      %2836 = vmatpush2.bf16.msra.mxu0 0
      %2837 = vmatprep.mubr.bf16.mxu0 0
      %2838 = vmatmul.mubr.bf16.gmra.mxu0 %v2779
      %v2839 = vpop.f32.mrf.mxu0
      %v2840 = vadd.f32 0.0, %v2839
      %v2841 = vpop.f32.mrf.mxu0
      %v2842 = vadd.f32 0.0, %v2841
      %v2843 = vpop.f32.mrf.mxu0
      %v2844 = vpop.f32.mrf.mxu0
      %2845 = vdwg.mxu0
      %2846 = vmatprep.subr.bf16.mxu0 0
      %2847 = vmatpush1.bf16.msra.mxu0 0
      %2848 = vmatprep.subr.bf16.mxu0 0
      %2849 = vmatpush1.bf16.msra.mxu0 0
      %2850 = vmatprep.subr.bf16.mxu0 0
      %2851 = vmatpush1.bf16.msra.mxu0 0
      %2852 = vmatprep.subr.bf16.mxu0 0
      %2853 = vmatpush1.bf16.msra.mxu0 0
      %2854 = vmatprep.subr.bf16.mxu0 0
      %2855 = vmatpush1.bf16.msra.mxu0 0
      %2856 = vmatprep.subr.bf16.mxu0 0
      %2857 = vmatpush1.bf16.msra.mxu0 0
      %2858 = vmatprep.subr.bf16.mxu0 0
      %2859 = vmatpush1.bf16.msra.mxu0 0
      %2860 = vmatprep.subr.bf16.mxu0 %v2791
      %2861 = vmatpush1.bf16.msra.mxu0 %v2788
      %2862 = vmatprep.subr.bf16.mxu0 0
      %2863 = vmatpush2.bf16.msra.mxu0 0
      %2864 = vmatprep.subr.bf16.mxu0 0
      %2865 = vmatpush2.bf16.msra.mxu0 0
      %2866 = vmatprep.subr.bf16.mxu0 0
      %2867 = vmatpush2.bf16.msra.mxu0 0
      %2868 = vmatprep.subr.bf16.mxu0 0
      %2869 = vmatpush2.bf16.msra.mxu0 0
      %2870 = vmatprep.subr.bf16.mxu0 0
      %2871 = vmatpush2.bf16.msra.mxu0 0
      %2872 = vmatprep.subr.bf16.mxu0 0
      %2873 = vmatpush2.bf16.msra.mxu0 0
      %2874 = vmatprep.subr.bf16.mxu0 0
      %2875 = vmatpush2.bf16.msra.mxu0 0
      %2876 = vmatprep.subr.bf16.mxu0 0
      %2877 = vmatpush2.bf16.msra.mxu0 0
      %2878 = vmatprep.mubr.bf16.mxu0 0
      %2879 = vmatmul.mubr.bf16.gmra.mxu0 %v2779
      %v2880 = vpop.f32.mrf.mxu0
      %v2881 = vadd.f32 0.0, %v2880
      %v2882 = vpop.f32.mrf.mxu0
      %v2883 = vadd.f32 0.0, %v2882
      %v2884 = vpop.f32.mrf.mxu0
      %v2885 = vpop.f32.mrf.mxu0
      %2886 = vdwg.mxu0
      %2887 = vmatprep.subr.bf16.mxu0 0
      %2888 = vmatpush1.bf16.msra.mxu0 0
      %2889 = vmatprep.subr.bf16.mxu0 0
      %2890 = vmatpush1.bf16.msra.mxu0 0
      %2891 = vmatprep.subr.bf16.mxu0 0
      %2892 = vmatpush1.bf16.msra.mxu0 0
      %2893 = vmatprep.subr.bf16.mxu0 0
      %2894 = vmatpush1.bf16.msra.mxu0 0
      %2895 = vmatprep.subr.bf16.mxu0 0
      %2896 = vmatpush1.bf16.msra.mxu0 0
      %2897 = vmatprep.subr.bf16.mxu0 0
      %2898 = vmatpush1.bf16.msra.mxu0 0
      %2899 = vmatprep.subr.bf16.mxu0 0
      %2900 = vmatpush1.bf16.msra.mxu0 0
      %2901 = vmatprep.subr.bf16.mxu0 %v2797
      %2902 = vmatpush1.bf16.msra.mxu0 %v2794
      %2903 = vmatprep.subr.bf16.mxu0 0
      %2904 = vmatpush2.bf16.msra.mxu0 0
      %2905 = vmatprep.subr.bf16.mxu0 0
      %2906 = vmatpush2.bf16.msra.mxu0 0
      %2907 = vmatprep.subr.bf16.mxu0 0
      %2908 = vmatpush2.bf16.msra.mxu0 0
      %2909 = vmatprep.subr.bf16.mxu0 0
      %2910 = vmatpush2.bf16.msra.mxu0 0
      %2911 = vmatprep.subr.bf16.mxu0 0
      %2912 = vmatpush2.bf16.msra.mxu0 0
      %2913 = vmatprep.subr.bf16.mxu0 0
      %2914 = vmatpush2.bf16.msra.mxu0 0
      %2915 = vmatprep.subr.bf16.mxu0 0
      %2916 = vmatpush2.bf16.msra.mxu0 0
      %2917 = vmatprep.subr.bf16.mxu0 0
      %2918 = vmatpush2.bf16.msra.mxu0 0
      %2919 = vmatprep.mubr.bf16.mxu0 0
      %2920 = vmatmul.mubr.bf16.gmra.mxu0 %v2779
      %v2921 = vpop.f32.mrf.mxu0
      %v2922 = vadd.f32 0.0, %v2921
      %v2923 = vpop.f32.mrf.mxu0
      %v2924 = vadd.f32 0.0, %v2923
      %v2925 = vpop.f32.mrf.mxu0
      %v2926 = vpop.f32.mrf.mxu0
      %2927 = vdwg.mxu0
      %2928 = vmatprep.subr.bf16.mxu0 0
      %2929 = vmatpush1.bf16.msra.mxu0 0
      %2930 = vmatprep.subr.bf16.mxu0 0
      %2931 = vmatpush1.bf16.msra.mxu0 0
      %2932 = vmatprep.subr.bf16.mxu0 0
      %2933 = vmatpush1.bf16.msra.mxu0 0
      %2934 = vmatprep.subr.bf16.mxu0 0
      %2935 = vmatpush1.bf16.msra.mxu0 0
      %2936 = vmatprep.subr.bf16.mxu0 0
      %2937 = vmatpush1.bf16.msra.mxu0 0
      %2938 = vmatprep.subr.bf16.mxu0 0
      %2939 = vmatpush1.bf16.msra.mxu0 0
      %2940 = vmatprep.subr.bf16.mxu0 0
      %2941 = vmatpush1.bf16.msra.mxu0 0
      %2942 = vmatprep.subr.bf16.mxu0 %v2803
      %2943 = vmatpush1.bf16.msra.mxu0 %v2800
      %2944 = vmatprep.subr.bf16.mxu0 0
      %2945 = vmatpush2.bf16.msra.mxu0 0
      %2946 = vmatprep.subr.bf16.mxu0 0
      %2947 = vmatpush2.bf16.msra.mxu0 0
      %2948 = vmatprep.subr.bf16.mxu0 0
      %2949 = vmatpush2.bf16.msra.mxu0 0
      %2950 = vmatprep.subr.bf16.mxu0 0
      %2951 = vmatpush2.bf16.msra.mxu0 0
      %2952 = vmatprep.subr.bf16.mxu0 0
      %2953 = vmatpush2.bf16.msra.mxu0 0
      %2954 = vmatprep.subr.bf16.mxu0 0
      %2955 = vmatpush2.bf16.msra.mxu0 0
      %2956 = vmatprep.subr.bf16.mxu0 0
      %2957 = vmatpush2.bf16.msra.mxu0 0
      %2958 = vmatprep.subr.bf16.mxu0 0
      %2959 = vmatpush2.bf16.msra.mxu0 0
      %2960 = vmatprep.mubr.bf16.mxu0 0
      %2961 = vmatmul.mubr.bf16.gmra.mxu0 %v2779
      %v2962 = vpop.f32.mrf.mxu0
      %v2963 = vadd.f32 0.0, %v2962
      %v2964 = vpop.f32.mrf.mxu0
      %v2965 = vadd.f32 0.0, %v2964
      %v2966 = vpop.f32.mrf.mxu0
      %v2967 = vpop.f32.mrf.mxu0
      %2968 = vdwg.mxu0
      %v2969 = vadd.f32 %v2682, %v2840
      %v2970 = vadd.f32 %v2683, %v2842
      %v2971 = vadd.f32 %v2684, %v2881
      %v2972 = vadd.f32 %v2685, %v2883
      %v2973 = vadd.f32 %v2686, %v2922
      %v2974 = vadd.f32 %v2687, %v2924
      %v2975 = vadd.f32 %v2688, %v2963
      %v2976 = vadd.f32 %v2689, %v2965
      %2977 = vrot.lane.b32.xlu0 %v1052, 96
      %v2978 = vpop.permute.xlu0 %2977
      %2979 = vrot.lane.b32.xlu0 %v1053, 96
      %v2980 = vpop.permute.xlu0 %2979
      %2981 = vrot.lane.b32.xlu0 %v1054, 96
      %v2982 = vpop.permute.xlu0 %2981
      %2983 = vrot.lane.b32.xlu0 %v1055, 96
      %v2984 = vpop.permute.xlu0 %2983
      %2985 = vrot.lane.b32.xlu0 %v1056, 96
      %v2986 = vpop.permute.xlu0 %2985
      %2987 = vrot.lane.b32.xlu0 %v1057, 96
      %v2988 = vpop.permute.xlu0 %2987
      %2989 = vrot.lane.b32.xlu0 %v1058, 96
      %v2990 = vpop.permute.xlu0 %2989
      %2991 = vrot.lane.b32.xlu0 %v1059, 96
      %v2992 = vpop.permute.xlu0 %2991
      %vm2993 = vcmp.lt.s32.totalorder %v1077, 96
      %v2994 = vsel %vm2993, %v2990, %v2992
      %v2995 = vsel %vm2993, %v2988, %v2990
      %v2996 = vsel %vm2993, %v2986, %v2988
      %v2997 = vsel %vm2993, %v2984, %v2986
      %v2998 = vsel %vm2993, %v2982, %v2984
      %v2999 = vsel %vm2993, %v2980, %v2982
      %v3000 = vsel %vm2993, %v2978, %v2980
      %v3001 = vsel %vm2993, %v2992, %v2978
      %s3002 = scalar_lea.vmem %s2, 7
      %v3003 = vld [vmem:[%s3002] ss:$8 sm:$0xf]
      %v3004 = vld [vmem:[%s3002] ss:$8 sm:$0xf0]
      %v3005 = vor.u32 %v3003, %v3004
      %v3007 = vlaneseq
      %v3008 = vshrl.u32 %v3007, 7
      %v3009 = vsub.s32 0, %v3008
      %v3010 = vrot.slane %v3005, %v3009
      %v3011 = vlaneseq
      %v3012 = vshrl.u32 %v3011, 7
      %v3013 = vsub.s32 1, %v3012
      %v3014 = vrot.slane %v3005, %v3013
      %v3015 = vlaneseq
      %v3016 = vshrl.u32 %v3015, 7
      %v3017 = vsub.s32 2, %v3016
      %v3018 = vrot.slane %v3005, %v3017
      %v3019 = vlaneseq
      %v3020 = vshrl.u32 %v3019, 7
      %v3021 = vsub.s32 3, %v3020
      %v3022 = vrot.slane %v3005, %v3021
      %v3023 = vlaneseq
      %v3024 = vshrl.u32 %v3023, 7
      %v3025 = vsub.s32 4, %v3024
      %v3026 = vrot.slane %v3005, %v3025
      %v3027 = vlaneseq
      %v3028 = vshrl.u32 %v3027, 7
      %v3029 = vsub.s32 5, %v3028
      %v3030 = vrot.slane %v3005, %v3029
      %v3031 = vlaneseq
      %v3032 = vshrl.u32 %v3031, 7
      %v3033 = vsub.s32 6, %v3032
      %v3034 = vrot.slane %v3005, %v3033
      %v3035 = vlaneseq
      %v3036 = vshrl.u32 %v3035, 7
      %v3037 = vsub.s32 7, %v3036
      %v3038 = vrot.slane %v3005, %v3037
      %v3047 = vmul.f32 %v3000, %v3010
      %v3048 = vmul.f32 %v2999, %v3014
      %v3049 = vmul.f32 %v2998, %v3018
      %v3050 = vmul.f32 %v2997, %v3022
      %v3051 = vmul.f32 %v2996, %v3026
      %v3052 = vmul.f32 %v2995, %v3030
      %v3053 = vmul.f32 %v2994, %v3034
      %v3054 = vmul.f32 %v3001, %v3038
      %s3055 = scalar_lea.vmem %s5, 14
      %v3056 = vld [vmem:[%s3055] sm:$0x3]
      %v3057 = vpack.c.bf16 %v3047, %v3047
      %v3058 = vpack.c.bf16 %v3048, %v3048
      %v3059 = vpack.c.bf16 %v3049, %v3049
      %v3060 = vpack.c.bf16 %v3050, %v3050
      %v3061 = vpack.c.bf16 %v3051, %v3051
      %v3062 = vpack.c.bf16 %v3052, %v3052
      %v3063 = vpack.c.bf16 %v3053, %v3053
      %v3064 = vpack.c.bf16 %v3054, %v3054
      %v3066 = vsel %vm1236, %v3056, 0
      %v3069 = vsel %vm1240, %v3057, 0
      %v3072 = vsel %vm1240, %v3058, 0
      %v3075 = vsel %vm1240, %v3059, 0
      %v3078 = vsel %vm1240, %v3060, 0
      %v3081 = vsel %vm1240, %v3061, 0
      %v3084 = vsel %vm1240, %v3062, 0
      %v3087 = vsel %vm1240, %v3063, 0
      %v3090 = vsel %vm1240, %v3064, 0
      %3092 = vmatprep.subr.bf16.mxu0 0
      %3093 = vmatpush1.bf16.msra.mxu0 0
      %3094 = vmatprep.subr.bf16.mxu0 0
      %3095 = vmatpush1.bf16.msra.mxu0 0
      %3096 = vmatprep.subr.bf16.mxu0 0
      %3097 = vmatpush1.bf16.msra.mxu0 0
      %3098 = vmatprep.subr.bf16.mxu0 0
      %3099 = vmatpush1.bf16.msra.mxu0 0
      %3100 = vmatprep.subr.bf16.mxu0 0
      %3101 = vmatpush1.bf16.msra.mxu0 0
      %3102 = vmatprep.subr.bf16.mxu0 0
      %3103 = vmatpush1.bf16.msra.mxu0 0
      %3104 = vmatprep.subr.bf16.mxu0 0
      %3105 = vmatpush1.bf16.msra.mxu0 0
      %3106 = vmatprep.subr.bf16.mxu0 %v3072
      %3107 = vmatpush1.bf16.msra.mxu0 %v3069
      %3108 = vmatprep.subr.bf16.mxu0 0
      %3109 = vmatpush2.bf16.msra.mxu0 0
      %3110 = vmatprep.subr.bf16.mxu0 0
      %3111 = vmatpush2.bf16.msra.mxu0 0
      %3112 = vmatprep.subr.bf16.mxu0 0
      %3113 = vmatpush2.bf16.msra.mxu0 0
      %3114 = vmatprep.subr.bf16.mxu0 0
      %3115 = vmatpush2.bf16.msra.mxu0 0
      %3116 = vmatprep.subr.bf16.mxu0 0
      %3117 = vmatpush2.bf16.msra.mxu0 0
      %3118 = vmatprep.subr.bf16.mxu0 0
      %3119 = vmatpush2.bf16.msra.mxu0 0
      %3120 = vmatprep.subr.bf16.mxu0 0
      %3121 = vmatpush2.bf16.msra.mxu0 0
      %3122 = vmatprep.subr.bf16.mxu0 0
      %3123 = vmatpush2.bf16.msra.mxu0 0
      %3124 = vmatprep.mubr.bf16.mxu0 0
      %3125 = vmatmul.mubr.bf16.gmra.mxu0 %v3066
      %v3126 = vpop.f32.mrf.mxu0
      %v3127 = vadd.f32 0.0, %v3126
      %v3128 = vpop.f32.mrf.mxu0
      %v3129 = vadd.f32 0.0, %v3128
      %v3130 = vpop.f32.mrf.mxu0
      %v3131 = vpop.f32.mrf.mxu0
      %3132 = vdwg.mxu0
      %3133 = vmatprep.subr.bf16.mxu0 0
      %3134 = vmatpush1.bf16.msra.mxu0 0
      %3135 = vmatprep.subr.bf16.mxu0 0
      %3136 = vmatpush1.bf16.msra.mxu0 0
      %3137 = vmatprep.subr.bf16.mxu0 0
      %3138 = vmatpush1.bf16.msra.mxu0 0
      %3139 = vmatprep.subr.bf16.mxu0 0
      %3140 = vmatpush1.bf16.msra.mxu0 0
      %3141 = vmatprep.subr.bf16.mxu0 0
      %3142 = vmatpush1.bf16.msra.mxu0 0
      %3143 = vmatprep.subr.bf16.mxu0 0
      %3144 = vmatpush1.bf16.msra.mxu0 0
      %3145 = vmatprep.subr.bf16.mxu0 0
      %3146 = vmatpush1.bf16.msra.mxu0 0
      %3147 = vmatprep.subr.bf16.mxu0 %v3078
      %3148 = vmatpush1.bf16.msra.mxu0 %v3075
      %3149 = vmatprep.subr.bf16.mxu0 0
      %3150 = vmatpush2.bf16.msra.mxu0 0
      %3151 = vmatprep.subr.bf16.mxu0 0
      %3152 = vmatpush2.bf16.msra.mxu0 0
      %3153 = vmatprep.subr.bf16.mxu0 0
      %3154 = vmatpush2.bf16.msra.mxu0 0
      %3155 = vmatprep.subr.bf16.mxu0 0
      %3156 = vmatpush2.bf16.msra.mxu0 0
      %3157 = vmatprep.subr.bf16.mxu0 0
      %3158 = vmatpush2.bf16.msra.mxu0 0
      %3159 = vmatprep.subr.bf16.mxu0 0
      %3160 = vmatpush2.bf16.msra.mxu0 0
      %3161 = vmatprep.subr.bf16.mxu0 0
      %3162 = vmatpush2.bf16.msra.mxu0 0
      %3163 = vmatprep.subr.bf16.mxu0 0
      %3164 = vmatpush2.bf16.msra.mxu0 0
      %3165 = vmatprep.mubr.bf16.mxu0 0
      %3166 = vmatmul.mubr.bf16.gmra.mxu0 %v3066
      %v3167 = vpop.f32.mrf.mxu0
      %v3168 = vadd.f32 0.0, %v3167
      %v3169 = vpop.f32.mrf.mxu0
      %v3170 = vadd.f32 0.0, %v3169
      %v3171 = vpop.f32.mrf.mxu0
      %v3172 = vpop.f32.mrf.mxu0
      %3173 = vdwg.mxu0
      %3174 = vmatprep.subr.bf16.mxu0 0
      %3175 = vmatpush1.bf16.msra.mxu0 0
      %3176 = vmatprep.subr.bf16.mxu0 0
      %3177 = vmatpush1.bf16.msra.mxu0 0
      %3178 = vmatprep.subr.bf16.mxu0 0
      %3179 = vmatpush1.bf16.msra.mxu0 0
      %3180 = vmatprep.subr.bf16.mxu0 0
      %3181 = vmatpush1.bf16.msra.mxu0 0
      %3182 = vmatprep.subr.bf16.mxu0 0
      %3183 = vmatpush1.bf16.msra.mxu0 0
      %3184 = vmatprep.subr.bf16.mxu0 0
      %3185 = vmatpush1.bf16.msra.mxu0 0
      %3186 = vmatprep.subr.bf16.mxu0 0
      %3187 = vmatpush1.bf16.msra.mxu0 0
      %3188 = vmatprep.subr.bf16.mxu0 %v3084
      %3189 = vmatpush1.bf16.msra.mxu0 %v3081
      %3190 = vmatprep.subr.bf16.mxu0 0
      %3191 = vmatpush2.bf16.msra.mxu0 0
      %3192 = vmatprep.subr.bf16.mxu0 0
      %3193 = vmatpush2.bf16.msra.mxu0 0
      %3194 = vmatprep.subr.bf16.mxu0 0
      %3195 = vmatpush2.bf16.msra.mxu0 0
      %3196 = vmatprep.subr.bf16.mxu0 0
      %3197 = vmatpush2.bf16.msra.mxu0 0
      %3198 = vmatprep.subr.bf16.mxu0 0
      %3199 = vmatpush2.bf16.msra.mxu0 0
      %3200 = vmatprep.subr.bf16.mxu0 0
      %3201 = vmatpush2.bf16.msra.mxu0 0
      %3202 = vmatprep.subr.bf16.mxu0 0
      %3203 = vmatpush2.bf16.msra.mxu0 0
      %3204 = vmatprep.subr.bf16.mxu0 0
      %3205 = vmatpush2.bf16.msra.mxu0 0
      %3206 = vmatprep.mubr.bf16.mxu0 0
      %3207 = vmatmul.mubr.bf16.gmra.mxu0 %v3066
      %v3208 = vpop.f32.mrf.mxu0
      %v3209 = vadd.f32 0.0, %v3208
      %v3210 = vpop.f32.mrf.mxu0
      %v3211 = vadd.f32 0.0, %v3210
      %v3212 = vpop.f32.mrf.mxu0
      %v3213 = vpop.f32.mrf.mxu0
      %3214 = vdwg.mxu0
      %3215 = vmatprep.subr.bf16.mxu0 0
      %3216 = vmatpush1.bf16.msra.mxu0 0
      %3217 = vmatprep.subr.bf16.mxu0 0
      %3218 = vmatpush1.bf16.msra.mxu0 0
      %3219 = vmatprep.subr.bf16.mxu0 0
      %3220 = vmatpush1.bf16.msra.mxu0 0
      %3221 = vmatprep.subr.bf16.mxu0 0
      %3222 = vmatpush1.bf16.msra.mxu0 0
      %3223 = vmatprep.subr.bf16.mxu0 0
      %3224 = vmatpush1.bf16.msra.mxu0 0
      %3225 = vmatprep.subr.bf16.mxu0 0
      %3226 = vmatpush1.bf16.msra.mxu0 0
      %3227 = vmatprep.subr.bf16.mxu0 0
      %3228 = vmatpush1.bf16.msra.mxu0 0
      %3229 = vmatprep.subr.bf16.mxu0 %v3090
      %3230 = vmatpush1.bf16.msra.mxu0 %v3087
      %3231 = vmatprep.subr.bf16.mxu0 0
      %3232 = vmatpush2.bf16.msra.mxu0 0
      %3233 = vmatprep.subr.bf16.mxu0 0
      %3234 = vmatpush2.bf16.msra.mxu0 0
      %3235 = vmatprep.subr.bf16.mxu0 0
      %3236 = vmatpush2.bf16.msra.mxu0 0
      %3237 = vmatprep.subr.bf16.mxu0 0
      %3238 = vmatpush2.bf16.msra.mxu0 0
      %3239 = vmatprep.subr.bf16.mxu0 0
      %3240 = vmatpush2.bf16.msra.mxu0 0
      %3241 = vmatprep.subr.bf16.mxu0 0
      %3242 = vmatpush2.bf16.msra.mxu0 0
      %3243 = vmatprep.subr.bf16.mxu0 0
      %3244 = vmatpush2.bf16.msra.mxu0 0
      %3245 = vmatprep.subr.bf16.mxu0 0
      %3246 = vmatpush2.bf16.msra.mxu0 0
      %3247 = vmatprep.mubr.bf16.mxu0 0
      %3248 = vmatmul.mubr.bf16.gmra.mxu0 %v3066
      %v3249 = vpop.f32.mrf.mxu0
      %v3250 = vadd.f32 0.0, %v3249
      %v3251 = vpop.f32.mrf.mxu0
      %v3252 = vadd.f32 0.0, %v3251
      %v3253 = vpop.f32.mrf.mxu0
      %v3254 = vpop.f32.mrf.mxu0
      %3255 = vdwg.mxu0
      %v3256 = vadd.f32 %v2969, %v3127
      %v3257 = vadd.f32 %v2970, %v3129
      %v3258 = vadd.f32 %v2971, %v3168
      %v3259 = vadd.f32 %v2972, %v3170
      %v3260 = vadd.f32 %v2973, %v3209
      %v3261 = vadd.f32 %v2974, %v3211
      %v3262 = vadd.f32 %v2975, %v3250
      %v3263 = vadd.f32 %v2976, %v3252
      %3264 = vrot.lane.b32.xlu0 %v1052, 95
      %v3265 = vpop.permute.xlu0 %3264
      %3266 = vrot.lane.b32.xlu0 %v1053, 95
      %v3267 = vpop.permute.xlu0 %3266
      %3268 = vrot.lane.b32.xlu0 %v1054, 95
      %v3269 = vpop.permute.xlu0 %3268
      %3270 = vrot.lane.b32.xlu0 %v1055, 95
      %v3271 = vpop.permute.xlu0 %3270
      %3272 = vrot.lane.b32.xlu0 %v1056, 95
      %v3273 = vpop.permute.xlu0 %3272
      %3274 = vrot.lane.b32.xlu0 %v1057, 95
      %v3275 = vpop.permute.xlu0 %3274
      %3276 = vrot.lane.b32.xlu0 %v1058, 95
      %v3277 = vpop.permute.xlu0 %3276
      %3278 = vrot.lane.b32.xlu0 %v1059, 95
      %v3279 = vpop.permute.xlu0 %3278
      %vm3280 = vcmp.lt.s32.totalorder %v1077, 95
      %v3281 = vsel %vm3280, %v3277, %v3279
      %v3282 = vsel %vm3280, %v3275, %v3277
      %v3283 = vsel %vm3280, %v3273, %v3275
      %v3284 = vsel %vm3280, %v3271, %v3273
      %v3285 = vsel %vm3280, %v3269, %v3271
      %v3286 = vsel %vm3280, %v3267, %v3269
      %v3287 = vsel %vm3280, %v3265, %v3267
      %v3288 = vsel %vm3280, %v3279, %v3265
      %s3289 = scalar_lea.vmem %s2, 64
      %v3290 = vld [vmem:[%s3289] ss:$8 sm:$0xf]
      %v3291 = vld [vmem:[%s3289] ss:$8 sm:$0xf0]
      %v3292 = vor.u32 %v3290, %v3291
      %v3294 = vlaneseq
      %v3295 = vshrl.u32 %v3294, 7
      %v3296 = vsub.s32 0, %v3295
      %v3297 = vrot.slane %v3292, %v3296
      %v3298 = vlaneseq
      %v3299 = vshrl.u32 %v3298, 7
      %v3300 = vsub.s32 1, %v3299
      %v3301 = vrot.slane %v3292, %v3300
      %v3302 = vlaneseq
      %v3303 = vshrl.u32 %v3302, 7
      %v3304 = vsub.s32 2, %v3303
      %v3305 = vrot.slane %v3292, %v3304
      %v3306 = vlaneseq
      %v3307 = vshrl.u32 %v3306, 7
      %v3308 = vsub.s32 3, %v3307
      %v3309 = vrot.slane %v3292, %v3308
      %v3310 = vlaneseq
      %v3311 = vshrl.u32 %v3310, 7
      %v3312 = vsub.s32 4, %v3311
      %v3313 = vrot.slane %v3292, %v3312
      %v3314 = vlaneseq
      %v3315 = vshrl.u32 %v3314, 7
      %v3316 = vsub.s32 5, %v3315
      %v3317 = vrot.slane %v3292, %v3316
      %v3318 = vlaneseq
      %v3319 = vshrl.u32 %v3318, 7
      %v3320 = vsub.s32 6, %v3319
      %v3321 = vrot.slane %v3292, %v3320
      %v3322 = vlaneseq
      %v3323 = vshrl.u32 %v3322, 7
      %v3324 = vsub.s32 7, %v3323
      %v3325 = vrot.slane %v3292, %v3324
      %v3334 = vmul.f32 %v3287, %v3297
      %v3335 = vmul.f32 %v3286, %v3301
      %v3336 = vmul.f32 %v3285, %v3305
      %v3337 = vmul.f32 %v3284, %v3309
      %v3338 = vmul.f32 %v3283, %v3313
      %v3339 = vmul.f32 %v3282, %v3317
      %v3340 = vmul.f32 %v3281, %v3321
      %v3341 = vmul.f32 %v3288, %v3325
      %s3342 = scalar_lea.vmem %s5, 16
      %v3343 = vld [vmem:[%s3342] sm:$0x3]
      %v3344 = vpack.c.bf16 %v3334, %v3334
      %v3345 = vpack.c.bf16 %v3335, %v3335
      %v3346 = vpack.c.bf16 %v3336, %v3336
      %v3347 = vpack.c.bf16 %v3337, %v3337
      %v3348 = vpack.c.bf16 %v3338, %v3338
      %v3349 = vpack.c.bf16 %v3339, %v3339
      %v3350 = vpack.c.bf16 %v3340, %v3340
      %v3351 = vpack.c.bf16 %v3341, %v3341
      %v3353 = vsel %vm1236, %v3343, 0
      %v3356 = vsel %vm1240, %v3344, 0
      %v3359 = vsel %vm1240, %v3345, 0
      %v3362 = vsel %vm1240, %v3346, 0
      %v3365 = vsel %vm1240, %v3347, 0
      %v3368 = vsel %vm1240, %v3348, 0
      %v3371 = vsel %vm1240, %v3349, 0
      %v3374 = vsel %vm1240, %v3350, 0
      %v3377 = vsel %vm1240, %v3351, 0
      %3379 = vmatprep.subr.bf16.mxu0 0
      %3380 = vmatpush1.bf16.msra.mxu0 0
      %3381 = vmatprep.subr.bf16.mxu0 0
      %3382 = vmatpush1.bf16.msra.mxu0 0
      %3383 = vmatprep.subr.bf16.mxu0 0
      %3384 = vmatpush1.bf16.msra.mxu0 0
      %3385 = vmatprep.subr.bf16.mxu0 0
      %3386 = vmatpush1.bf16.msra.mxu0 0
      %3387 = vmatprep.subr.bf16.mxu0 0
      %3388 = vmatpush1.bf16.msra.mxu0 0
      %3389 = vmatprep.subr.bf16.mxu0 0
      %3390 = vmatpush1.bf16.msra.mxu0 0
      %3391 = vmatprep.subr.bf16.mxu0 0
      %3392 = vmatpush1.bf16.msra.mxu0 0
      %3393 = vmatprep.subr.bf16.mxu0 %v3359
      %3394 = vmatpush1.bf16.msra.mxu0 %v3356
      %3395 = vmatprep.subr.bf16.mxu0 0
      %3396 = vmatpush2.bf16.msra.mxu0 0
      %3397 = vmatprep.subr.bf16.mxu0 0
      %3398 = vmatpush2.bf16.msra.mxu0 0
      %3399 = vmatprep.subr.bf16.mxu0 0
      %3400 = vmatpush2.bf16.msra.mxu0 0
      %3401 = vmatprep.subr.bf16.mxu0 0
      %3402 = vmatpush2.bf16.msra.mxu0 0
      %3403 = vmatprep.subr.bf16.mxu0 0
      %3404 = vmatpush2.bf16.msra.mxu0 0
      %3405 = vmatprep.subr.bf16.mxu0 0
      %3406 = vmatpush2.bf16.msra.mxu0 0
      %3407 = vmatprep.subr.bf16.mxu0 0
      %3408 = vmatpush2.bf16.msra.mxu0 0
      %3409 = vmatprep.subr.bf16.mxu0 0
      %3410 = vmatpush2.bf16.msra.mxu0 0
      %3411 = vmatprep.mubr.bf16.mxu0 0
      %3412 = vmatmul.mubr.bf16.gmra.mxu0 %v3353
      %v3413 = vpop.f32.mrf.mxu0
      %v3414 = vadd.f32 0.0, %v3413
      %v3415 = vpop.f32.mrf.mxu0
      %v3416 = vadd.f32 0.0, %v3415
      %v3417 = vpop.f32.mrf.mxu0
      %v3418 = vpop.f32.mrf.mxu0
      %3419 = vdwg.mxu0
      %3420 = vmatprep.subr.bf16.mxu0 0
      %3421 = vmatpush1.bf16.msra.mxu0 0
      %3422 = vmatprep.subr.bf16.mxu0 0
      %3423 = vmatpush1.bf16.msra.mxu0 0
      %3424 = vmatprep.subr.bf16.mxu0 0
      %3425 = vmatpush1.bf16.msra.mxu0 0
      %3426 = vmatprep.subr.bf16.mxu0 0
      %3427 = vmatpush1.bf16.msra.mxu0 0
      %3428 = vmatprep.subr.bf16.mxu0 0
      %3429 = vmatpush1.bf16.msra.mxu0 0
      %3430 = vmatprep.subr.bf16.mxu0 0
      %3431 = vmatpush1.bf16.msra.mxu0 0
      %3432 = vmatprep.subr.bf16.mxu0 0
      %3433 = vmatpush1.bf16.msra.mxu0 0
      %3434 = vmatprep.subr.bf16.mxu0 %v3365
      %3435 = vmatpush1.bf16.msra.mxu0 %v3362
      %3436 = vmatprep.subr.bf16.mxu0 0
      %3437 = vmatpush2.bf16.msra.mxu0 0
      %3438 = vmatprep.subr.bf16.mxu0 0
      %3439 = vmatpush2.bf16.msra.mxu0 0
      %3440 = vmatprep.subr.bf16.mxu0 0
      %3441 = vmatpush2.bf16.msra.mxu0 0
      %3442 = vmatprep.subr.bf16.mxu0 0
      %3443 = vmatpush2.bf16.msra.mxu0 0
      %3444 = vmatprep.subr.bf16.mxu0 0
      %3445 = vmatpush2.bf16.msra.mxu0 0
      %3446 = vmatprep.subr.bf16.mxu0 0
      %3447 = vmatpush2.bf16.msra.mxu0 0
      %3448 = vmatprep.subr.bf16.mxu0 0
      %3449 = vmatpush2.bf16.msra.mxu0 0
      %3450 = vmatprep.subr.bf16.mxu0 0
      %3451 = vmatpush2.bf16.msra.mxu0 0
      %3452 = vmatprep.mubr.bf16.mxu0 0
      %3453 = vmatmul.mubr.bf16.gmra.mxu0 %v3353
      %v3454 = vpop.f32.mrf.mxu0
      %v3455 = vadd.f32 0.0, %v3454
      %v3456 = vpop.f32.mrf.mxu0
      %v3457 = vadd.f32 0.0, %v3456
      %v3458 = vpop.f32.mrf.mxu0
      %v3459 = vpop.f32.mrf.mxu0
      %3460 = vdwg.mxu0
      %3461 = vmatprep.subr.bf16.mxu0 0
      %3462 = vmatpush1.bf16.msra.mxu0 0
      %3463 = vmatprep.subr.bf16.mxu0 0
      %3464 = vmatpush1.bf16.msra.mxu0 0
      %3465 = vmatprep.subr.bf16.mxu0 0
      %3466 = vmatpush1.bf16.msra.mxu0 0
      %3467 = vmatprep.subr.bf16.mxu0 0
      %3468 = vmatpush1.bf16.msra.mxu0 0
      %3469 = vmatprep.subr.bf16.mxu0 0
      %3470 = vmatpush1.bf16.msra.mxu0 0
      %3471 = vmatprep.subr.bf16.mxu0 0
      %3472 = vmatpush1.bf16.msra.mxu0 0
      %3473 = vmatprep.subr.bf16.mxu0 0
      %3474 = vmatpush1.bf16.msra.mxu0 0
      %3475 = vmatprep.subr.bf16.mxu0 %v3371
      %3476 = vmatpush1.bf16.msra.mxu0 %v3368
      %3477 = vmatprep.subr.bf16.mxu0 0
      %3478 = vmatpush2.bf16.msra.mxu0 0
      %3479 = vmatprep.subr.bf16.mxu0 0
      %3480 = vmatpush2.bf16.msra.mxu0 0
      %3481 = vmatprep.subr.bf16.mxu0 0
      %3482 = vmatpush2.bf16.msra.mxu0 0
      %3483 = vmatprep.subr.bf16.mxu0 0
      %3484 = vmatpush2.bf16.msra.mxu0 0
      %3485 = vmatprep.subr.bf16.mxu0 0
      %3486 = vmatpush2.bf16.msra.mxu0 0
      %3487 = vmatprep.subr.bf16.mxu0 0
      %3488 = vmatpush2.bf16.msra.mxu0 0
      %3489 = vmatprep.subr.bf16.mxu0 0
      %3490 = vmatpush2.bf16.msra.mxu0 0
      %3491 = vmatprep.subr.bf16.mxu0 0
      %3492 = vmatpush2.bf16.msra.mxu0 0
      %3493 = vmatprep.mubr.bf16.mxu0 0
      %3494 = vmatmul.mubr.bf16.gmra.mxu0 %v3353
      %v3495 = vpop.f32.mrf.mxu0
      %v3496 = vadd.f32 0.0, %v3495
      %v3497 = vpop.f32.mrf.mxu0
      %v3498 = vadd.f32 0.0, %v3497
      %v3499 = vpop.f32.mrf.mxu0
      %v3500 = vpop.f32.mrf.mxu0
      %3501 = vdwg.mxu0
      %3502 = vmatprep.subr.bf16.mxu0 0
      %3503 = vmatpush1.bf16.msra.mxu0 0
      %3504 = vmatprep.subr.bf16.mxu0 0
      %3505 = vmatpush1.bf16.msra.mxu0 0
      %3506 = vmatprep.subr.bf16.mxu0 0
      %3507 = vmatpush1.bf16.msra.mxu0 0
      %3508 = vmatprep.subr.bf16.mxu0 0
      %3509 = vmatpush1.bf16.msra.mxu0 0
      %3510 = vmatprep.subr.bf16.mxu0 0
      %3511 = vmatpush1.bf16.msra.mxu0 0
      %3512 = vmatprep.subr.bf16.mxu0 0
      %3513 = vmatpush1.bf16.msra.mxu0 0
      %3514 = vmatprep.subr.bf16.mxu0 0
      %3515 = vmatpush1.bf16.msra.mxu0 0
      %3516 = vmatprep.subr.bf16.mxu0 %v3377
      %3517 = vmatpush1.bf16.msra.mxu0 %v3374
      %3518 = vmatprep.subr.bf16.mxu0 0
      %3519 = vmatpush2.bf16.msra.mxu0 0
      %3520 = vmatprep.subr.bf16.mxu0 0
      %3521 = vmatpush2.bf16.msra.mxu0 0
      %3522 = vmatprep.subr.bf16.mxu0 0
      %3523 = vmatpush2.bf16.msra.mxu0 0
      %3524 = vmatprep.subr.bf16.mxu0 0
      %3525 = vmatpush2.bf16.msra.mxu0 0
      %3526 = vmatprep.subr.bf16.mxu0 0
      %3527 = vmatpush2.bf16.msra.mxu0 0
      %3528 = vmatprep.subr.bf16.mxu0 0
      %3529 = vmatpush2.bf16.msra.mxu0 0
      %3530 = vmatprep.subr.bf16.mxu0 0
      %3531 = vmatpush2.bf16.msra.mxu0 0
      %3532 = vmatprep.subr.bf16.mxu0 0
      %3533 = vmatpush2.bf16.msra.mxu0 0
      %3534 = vmatprep.mubr.bf16.mxu0 0
      %3535 = vmatmul.mubr.bf16.gmra.mxu0 %v3353
      %v3536 = vpop.f32.mrf.mxu0
      %v3537 = vadd.f32 0.0, %v3536
      %v3538 = vpop.f32.mrf.mxu0
      %v3539 = vadd.f32 0.0, %v3538
      %v3540 = vpop.f32.mrf.mxu0
      %v3541 = vpop.f32.mrf.mxu0
      %3542 = vdwg.mxu0
      %v3543 = vadd.f32 %v3256, %v3414
      %v3544 = vadd.f32 %v3257, %v3416
      %v3545 = vadd.f32 %v3258, %v3455
      %v3546 = vadd.f32 %v3259, %v3457
      %v3547 = vadd.f32 %v3260, %v3496
      %v3548 = vadd.f32 %v3261, %v3498
      %v3549 = vadd.f32 %v3262, %v3537
      %v3550 = vadd.f32 %v3263, %v3539
      %v3551 = vld [vmem:[%s374] sm:$0xff]
      %v3552 = vld [vmem:[%s374 + $0x8] sm:$0xff]
      %v3553 = vld [vmem:[%s374 + $0x10] sm:$0xff]
      %v3554 = vld [vmem:[%s374 + $0x18] sm:$0xff]
      %v3559 = vcombine.high %v3551, %v3551
      %v3560 = vcombine.high %v3552, %v3552
      %v3561 = vcombine.high %v3553, %v3553
      %v3562 = vcombine.high %v3554, %v3554
      %3567 = vrot.lane.b32.xlu0 %v3551, 33
      %v3568 = vpop.permute.xlu0 %3567
      %3569 = vrot.lane.b32.xlu0 %v3559, 33
      %v3570 = vpop.permute.xlu0 %3569
      %3571 = vrot.lane.b32.xlu0 %v3552, 33
      %v3572 = vpop.permute.xlu0 %3571
      %3573 = vrot.lane.b32.xlu0 %v3560, 33
      %v3574 = vpop.permute.xlu0 %3573
      %3575 = vrot.lane.b32.xlu0 %v3553, 33
      %v3576 = vpop.permute.xlu0 %3575
      %3577 = vrot.lane.b32.xlu0 %v3561, 33
      %v3578 = vpop.permute.xlu0 %3577
      %3579 = vrot.lane.b32.xlu0 %v3554, 33
      %v3580 = vpop.permute.xlu0 %3579
      %3581 = vrot.lane.b32.xlu0 %v3562, 33
      %v3582 = vpop.permute.xlu0 %3581
      %v3583 = vsel %vm1078, %v3580, %v3582
      %v3584 = vsel %vm1078, %v3578, %v3580
      %v3585 = vsel %vm1078, %v3576, %v3578
      %v3586 = vsel %vm1078, %v3574, %v3576
      %v3587 = vsel %vm1078, %v3572, %v3574
      %v3588 = vsel %vm1078, %v3570, %v3572
      %v3589 = vsel %vm1078, %v3568, %v3570
      %v3590 = vsel %vm1078, %v3582, %v3568
      %v3591 = vmul.f32 %v3590, %v1094
      %v3592 = vmul.f32 %v3589, %v1098
      %v3593 = vmul.f32 %v3588, %v1102
      %v3594 = vmul.f32 %v3587, %v1106
      %v3595 = vmul.f32 %v3586, %v1110
      %v3596 = vmul.f32 %v3585, %v1114
      %v3597 = vmul.f32 %v3584, %v1118
      %v3598 = vmul.f32 %v3583, %v1122
      %v3599 = vld [vmem:[%s6] sm:$0x3]
      %v3600 = vpack.c.bf16 %v3591, %v3591
      %v3601 = vpack.c.bf16 %v3592, %v3592
      %v3602 = vpack.c.bf16 %v3593, %v3593
      %v3603 = vpack.c.bf16 %v3594, %v3594
      %v3604 = vpack.c.bf16 %v3595, %v3595
      %v3605 = vpack.c.bf16 %v3596, %v3596
      %v3606 = vpack.c.bf16 %v3597, %v3597
      %v3607 = vpack.c.bf16 %v3598, %v3598
      %v3609 = vsel %vm1236, %v3599, 0
      %v3612 = vsel %vm1240, %v3600, 0
      %v3615 = vsel %vm1240, %v3601, 0
      %v3618 = vsel %vm1240, %v3602, 0
      %v3621 = vsel %vm1240, %v3603, 0
      %v3624 = vsel %vm1240, %v3604, 0
      %v3627 = vsel %vm1240, %v3605, 0
      %v3630 = vsel %vm1240, %v3606, 0
      %v3633 = vsel %vm1240, %v3607, 0
      %3635 = vmatprep.subr.bf16.mxu0 0
      %3636 = vmatpush1.bf16.msra.mxu0 0
      %3637 = vmatprep.subr.bf16.mxu0 0
      %3638 = vmatpush1.bf16.msra.mxu0 0
      %3639 = vmatprep.subr.bf16.mxu0 0
      %3640 = vmatpush1.bf16.msra.mxu0 0
      %3641 = vmatprep.subr.bf16.mxu0 0
      %3642 = vmatpush1.bf16.msra.mxu0 0
      %3643 = vmatprep.subr.bf16.mxu0 0
      %3644 = vmatpush1.bf16.msra.mxu0 0
      %3645 = vmatprep.subr.bf16.mxu0 0
      %3646 = vmatpush1.bf16.msra.mxu0 0
      %3647 = vmatprep.subr.bf16.mxu0 0
      %3648 = vmatpush1.bf16.msra.mxu0 0
      %3649 = vmatprep.subr.bf16.mxu0 %v3615
      %3650 = vmatpush1.bf16.msra.mxu0 %v3612
      %3651 = vmatprep.subr.bf16.mxu0 0
      %3652 = vmatpush2.bf16.msra.mxu0 0
      %3653 = vmatprep.subr.bf16.mxu0 0
      %3654 = vmatpush2.bf16.msra.mxu0 0
      %3655 = vmatprep.subr.bf16.mxu0 0
      %3656 = vmatpush2.bf16.msra.mxu0 0
      %3657 = vmatprep.subr.bf16.mxu0 0
      %3658 = vmatpush2.bf16.msra.mxu0 0
      %3659 = vmatprep.subr.bf16.mxu0 0
      %3660 = vmatpush2.bf16.msra.mxu0 0
      %3661 = vmatprep.subr.bf16.mxu0 0
      %3662 = vmatpush2.bf16.msra.mxu0 0
      %3663 = vmatprep.subr.bf16.mxu0 0
      %3664 = vmatpush2.bf16.msra.mxu0 0
      %3665 = vmatprep.subr.bf16.mxu0 0
      %3666 = vmatpush2.bf16.msra.mxu0 0
      %3667 = vmatprep.mubr.bf16.mxu0 0
      %3668 = vmatmul.mubr.bf16.gmra.mxu0 %v3609
      %v3669 = vpop.f32.mrf.mxu0
      %v3670 = vadd.f32 0.0, %v3669
      %v3671 = vpop.f32.mrf.mxu0
      %v3672 = vadd.f32 0.0, %v3671
      %v3673 = vpop.f32.mrf.mxu0
      %v3674 = vpop.f32.mrf.mxu0
      %3675 = vdwg.mxu0
      %3676 = vmatprep.subr.bf16.mxu0 0
      %3677 = vmatpush1.bf16.msra.mxu0 0
      %3678 = vmatprep.subr.bf16.mxu0 0
      %3679 = vmatpush1.bf16.msra.mxu0 0
      %3680 = vmatprep.subr.bf16.mxu0 0
      %3681 = vmatpush1.bf16.msra.mxu0 0
      %3682 = vmatprep.subr.bf16.mxu0 0
      %3683 = vmatpush1.bf16.msra.mxu0 0
      %3684 = vmatprep.subr.bf16.mxu0 0
      %3685 = vmatpush1.bf16.msra.mxu0 0
      %3686 = vmatprep.subr.bf16.mxu0 0
      %3687 = vmatpush1.bf16.msra.mxu0 0
      %3688 = vmatprep.subr.bf16.mxu0 0
      %3689 = vmatpush1.bf16.msra.mxu0 0
      %3690 = vmatprep.subr.bf16.mxu0 %v3621
      %3691 = vmatpush1.bf16.msra.mxu0 %v3618
      %3692 = vmatprep.subr.bf16.mxu0 0
      %3693 = vmatpush2.bf16.msra.mxu0 0
      %3694 = vmatprep.subr.bf16.mxu0 0
      %3695 = vmatpush2.bf16.msra.mxu0 0
      %3696 = vmatprep.subr.bf16.mxu0 0
      %3697 = vmatpush2.bf16.msra.mxu0 0
      %3698 = vmatprep.subr.bf16.mxu0 0
      %3699 = vmatpush2.bf16.msra.mxu0 0
      %3700 = vmatprep.subr.bf16.mxu0 0
      %3701 = vmatpush2.bf16.msra.mxu0 0
      %3702 = vmatprep.subr.bf16.mxu0 0
      %3703 = vmatpush2.bf16.msra.mxu0 0
      %3704 = vmatprep.subr.bf16.mxu0 0
      %3705 = vmatpush2.bf16.msra.mxu0 0
      %3706 = vmatprep.subr.bf16.mxu0 0
      %3707 = vmatpush2.bf16.msra.mxu0 0
      %3708 = vmatprep.mubr.bf16.mxu0 0
      %3709 = vmatmul.mubr.bf16.gmra.mxu0 %v3609
      %v3710 = vpop.f32.mrf.mxu0
      %v3711 = vadd.f32 0.0, %v3710
      %v3712 = vpop.f32.mrf.mxu0
      %v3713 = vadd.f32 0.0, %v3712
      %v3714 = vpop.f32.mrf.mxu0
      %v3715 = vpop.f32.mrf.mxu0
      %3716 = vdwg.mxu0
      %3717 = vmatprep.subr.bf16.mxu0 0
      %3718 = vmatpush1.bf16.msra.mxu0 0
      %3719 = vmatprep.subr.bf16.mxu0 0
      %3720 = vmatpush1.bf16.msra.mxu0 0
      %3721 = vmatprep.subr.bf16.mxu0 0
      %3722 = vmatpush1.bf16.msra.mxu0 0
      %3723 = vmatprep.subr.bf16.mxu0 0
      %3724 = vmatpush1.bf16.msra.mxu0 0
      %3725 = vmatprep.subr.bf16.mxu0 0
      %3726 = vmatpush1.bf16.msra.mxu0 0
      %3727 = vmatprep.subr.bf16.mxu0 0
      %3728 = vmatpush1.bf16.msra.mxu0 0
      %3729 = vmatprep.subr.bf16.mxu0 0
      %3730 = vmatpush1.bf16.msra.mxu0 0
      %3731 = vmatprep.subr.bf16.mxu0 %v3627
      %3732 = vmatpush1.bf16.msra.mxu0 %v3624
      %3733 = vmatprep.subr.bf16.mxu0 0
      %3734 = vmatpush2.bf16.msra.mxu0 0
      %3735 = vmatprep.subr.bf16.mxu0 0
      %3736 = vmatpush2.bf16.msra.mxu0 0
      %3737 = vmatprep.subr.bf16.mxu0 0
      %3738 = vmatpush2.bf16.msra.mxu0 0
      %3739 = vmatprep.subr.bf16.mxu0 0
      %3740 = vmatpush2.bf16.msra.mxu0 0
      %3741 = vmatprep.subr.bf16.mxu0 0
      %3742 = vmatpush2.bf16.msra.mxu0 0
      %3743 = vmatprep.subr.bf16.mxu0 0
      %3744 = vmatpush2.bf16.msra.mxu0 0
      %3745 = vmatprep.subr.bf16.mxu0 0
      %3746 = vmatpush2.bf16.msra.mxu0 0
      %3747 = vmatprep.subr.bf16.mxu0 0
      %3748 = vmatpush2.bf16.msra.mxu0 0
      %3749 = vmatprep.mubr.bf16.mxu0 0
      %3750 = vmatmul.mubr.bf16.gmra.mxu0 %v3609
      %v3751 = vpop.f32.mrf.mxu0
      %v3752 = vadd.f32 0.0, %v3751
      %v3753 = vpop.f32.mrf.mxu0
      %v3754 = vadd.f32 0.0, %v3753
      %v3755 = vpop.f32.mrf.mxu0
      %v3756 = vpop.f32.mrf.mxu0
      %3757 = vdwg.mxu0
      %3758 = vmatprep.subr.bf16.mxu0 0
      %3759 = vmatpush1.bf16.msra.mxu0 0
      %3760 = vmatprep.subr.bf16.mxu0 0
      %3761 = vmatpush1.bf16.msra.mxu0 0
      %3762 = vmatprep.subr.bf16.mxu0 0
      %3763 = vmatpush1.bf16.msra.mxu0 0
      %3764 = vmatprep.subr.bf16.mxu0 0
      %3765 = vmatpush1.bf16.msra.mxu0 0
      %3766 = vmatprep.subr.bf16.mxu0 0
      %3767 = vmatpush1.bf16.msra.mxu0 0
      %3768 = vmatprep.subr.bf16.mxu0 0
      %3769 = vmatpush1.bf16.msra.mxu0 0
      %3770 = vmatprep.subr.bf16.mxu0 0
      %3771 = vmatpush1.bf16.msra.mxu0 0
      %3772 = vmatprep.subr.bf16.mxu0 %v3633
      %3773 = vmatpush1.bf16.msra.mxu0 %v3630
      %3774 = vmatprep.subr.bf16.mxu0 0
      %3775 = vmatpush2.bf16.msra.mxu0 0
      %3776 = vmatprep.subr.bf16.mxu0 0
      %3777 = vmatpush2.bf16.msra.mxu0 0
      %3778 = vmatprep.subr.bf16.mxu0 0
      %3779 = vmatpush2.bf16.msra.mxu0 0
      %3780 = vmatprep.subr.bf16.mxu0 0
      %3781 = vmatpush2.bf16.msra.mxu0 0
      %3782 = vmatprep.subr.bf16.mxu0 0
      %3783 = vmatpush2.bf16.msra.mxu0 0
      %3784 = vmatprep.subr.bf16.mxu0 0
      %3785 = vmatpush2.bf16.msra.mxu0 0
      %3786 = vmatprep.subr.bf16.mxu0 0
      %3787 = vmatpush2.bf16.msra.mxu0 0
      %3788 = vmatprep.subr.bf16.mxu0 0
      %3789 = vmatpush2.bf16.msra.mxu0 0
      %3790 = vmatprep.mubr.bf16.mxu0 0
      %3791 = vmatmul.mubr.bf16.gmra.mxu0 %v3609
      %v3792 = vpop.f32.mrf.mxu0
      %v3793 = vadd.f32 0.0, %v3792
      %v3794 = vpop.f32.mrf.mxu0
      %v3795 = vadd.f32 0.0, %v3794
      %v3796 = vpop.f32.mrf.mxu0
      %v3797 = vpop.f32.mrf.mxu0
      %3798 = vdwg.mxu0
      %v3799 = vadd.f32 %v3543, %v3670
      %v3800 = vadd.f32 %v3544, %v3672
      %v3801 = vadd.f32 %v3545, %v3711
      %v3802 = vadd.f32 %v3546, %v3713
      %v3803 = vadd.f32 %v3547, %v3752
      %v3804 = vadd.f32 %v3548, %v3754
      %v3805 = vadd.f32 %v3549, %v3793
      %v3806 = vadd.f32 %v3550, %v3795
      %3807 = vrot.lane.b32.xlu0 %v3551, 32
      %v3808 = vpop.permute.xlu0 %3807
      %3809 = vrot.lane.b32.xlu0 %v3559, 32
      %v3810 = vpop.permute.xlu0 %3809
      %3811 = vrot.lane.b32.xlu0 %v3552, 32
      %v3812 = vpop.permute.xlu0 %3811
      %3813 = vrot.lane.b32.xlu0 %v3560, 32
      %v3814 = vpop.permute.xlu0 %3813
      %3815 = vrot.lane.b32.xlu0 %v3553, 32
      %v3816 = vpop.permute.xlu0 %3815
      %3817 = vrot.lane.b32.xlu0 %v3561, 32
      %v3818 = vpop.permute.xlu0 %3817
      %3819 = vrot.lane.b32.xlu0 %v3554, 32
      %v3820 = vpop.permute.xlu0 %3819
      %3821 = vrot.lane.b32.xlu0 %v3562, 32
      %v3822 = vpop.permute.xlu0 %3821
      %v3823 = vsel %vm1164, %v3820, %v3822
      %v3824 = vsel %vm1164, %v3818, %v3820
      %v3825 = vsel %vm1164, %v3816, %v3818
      %v3826 = vsel %vm1164, %v3814, %v3816
      %v3827 = vsel %vm1164, %v3812, %v3814
      %v3828 = vsel %vm1164, %v3810, %v3812
      %v3829 = vsel %vm1164, %v3808, %v3810
      %v3830 = vsel %vm1164, %v3822, %v3808
      %v3831 = vmul.f32 %v3830, %v1181
      %v3832 = vmul.f32 %v3829, %v1185
      %v3833 = vmul.f32 %v3828, %v1189
      %v3834 = vmul.f32 %v3827, %v1193
      %v3835 = vmul.f32 %v3826, %v1197
      %v3836 = vmul.f32 %v3825, %v1201
      %v3837 = vmul.f32 %v3824, %v1205
      %v3838 = vmul.f32 %v3823, %v1209
      %s3839 = scalar_lea.vmem %s6, 2
      %v3840 = vld [vmem:[%s3839] sm:$0x3]
      %v3841 = vpack.c.bf16 %v3831, %v3831
      %v3842 = vpack.c.bf16 %v3832, %v3832
      %v3843 = vpack.c.bf16 %v3833, %v3833
      %v3844 = vpack.c.bf16 %v3834, %v3834
      %v3845 = vpack.c.bf16 %v3835, %v3835
      %v3846 = vpack.c.bf16 %v3836, %v3836
      %v3847 = vpack.c.bf16 %v3837, %v3837
      %v3848 = vpack.c.bf16 %v3838, %v3838
      %v3850 = vsel %vm1236, %v3840, 0
      %v3853 = vsel %vm1240, %v3841, 0
      %v3856 = vsel %vm1240, %v3842, 0
      %v3859 = vsel %vm1240, %v3843, 0
      %v3862 = vsel %vm1240, %v3844, 0
      %v3865 = vsel %vm1240, %v3845, 0
      %v3868 = vsel %vm1240, %v3846, 0
      %v3871 = vsel %vm1240, %v3847, 0
      %v3874 = vsel %vm1240, %v3848, 0
      %3876 = vmatprep.subr.bf16.mxu0 0
      %3877 = vmatpush1.bf16.msra.mxu0 0
      %3878 = vmatprep.subr.bf16.mxu0 0
      %3879 = vmatpush1.bf16.msra.mxu0 0
      %3880 = vmatprep.subr.bf16.mxu0 0
      %3881 = vmatpush1.bf16.msra.mxu0 0
      %3882 = vmatprep.subr.bf16.mxu0 0
      %3883 = vmatpush1.bf16.msra.mxu0 0
      %3884 = vmatprep.subr.bf16.mxu0 0
      %3885 = vmatpush1.bf16.msra.mxu0 0
      %3886 = vmatprep.subr.bf16.mxu0 0
      %3887 = vmatpush1.bf16.msra.mxu0 0
      %3888 = vmatprep.subr.bf16.mxu0 0
      %3889 = vmatpush1.bf16.msra.mxu0 0
      %3890 = vmatprep.subr.bf16.mxu0 %v3856
      %3891 = vmatpush1.bf16.msra.mxu0 %v3853
      %3892 = vmatprep.subr.bf16.mxu0 0
      %3893 = vmatpush2.bf16.msra.mxu0 0
      %3894 = vmatprep.subr.bf16.mxu0 0
      %3895 = vmatpush2.bf16.msra.mxu0 0
      %3896 = vmatprep.subr.bf16.mxu0 0
      %3897 = vmatpush2.bf16.msra.mxu0 0
      %3898 = vmatprep.subr.bf16.mxu0 0
      %3899 = vmatpush2.bf16.msra.mxu0 0
      %3900 = vmatprep.subr.bf16.mxu0 0
      %3901 = vmatpush2.bf16.msra.mxu0 0
      %3902 = vmatprep.subr.bf16.mxu0 0
      %3903 = vmatpush2.bf16.msra.mxu0 0
      %3904 = vmatprep.subr.bf16.mxu0 0
      %3905 = vmatpush2.bf16.msra.mxu0 0
      %3906 = vmatprep.subr.bf16.mxu0 0
      %3907 = vmatpush2.bf16.msra.mxu0 0
      %3908 = vmatprep.mubr.bf16.mxu0 0
      %3909 = vmatmul.mubr.bf16.gmra.mxu0 %v3850
      %v3910 = vpop.f32.mrf.mxu0
      %v3911 = vadd.f32 0.0, %v3910
      %v3912 = vpop.f32.mrf.mxu0
      %v3913 = vadd.f32 0.0, %v3912
      %v3914 = vpop.f32.mrf.mxu0
      %v3915 = vpop.f32.mrf.mxu0
      %3916 = vdwg.mxu0
      %3917 = vmatprep.subr.bf16.mxu0 0
      %3918 = vmatpush1.bf16.msra.mxu0 0
      %3919 = vmatprep.subr.bf16.mxu0 0
      %3920 = vmatpush1.bf16.msra.mxu0 0
      %3921 = vmatprep.subr.bf16.mxu0 0
      %3922 = vmatpush1.bf16.msra.mxu0 0
      %3923 = vmatprep.subr.bf16.mxu0 0
      %3924 = vmatpush1.bf16.msra.mxu0 0
      %3925 = vmatprep.subr.bf16.mxu0 0
      %3926 = vmatpush1.bf16.msra.mxu0 0
      %3927 = vmatprep.subr.bf16.mxu0 0
      %3928 = vmatpush1.bf16.msra.mxu0 0
      %3929 = vmatprep.subr.bf16.mxu0 0
      %3930 = vmatpush1.bf16.msra.mxu0 0
      %3931 = vmatprep.subr.bf16.mxu0 %v3862
      %3932 = vmatpush1.bf16.msra.mxu0 %v3859
      %3933 = vmatprep.subr.bf16.mxu0 0
      %3934 = vmatpush2.bf16.msra.mxu0 0
      %3935 = vmatprep.subr.bf16.mxu0 0
      %3936 = vmatpush2.bf16.msra.mxu0 0
      %3937 = vmatprep.subr.bf16.mxu0 0
      %3938 = vmatpush2.bf16.msra.mxu0 0
      %3939 = vmatprep.subr.bf16.mxu0 0
      %3940 = vmatpush2.bf16.msra.mxu0 0
      %3941 = vmatprep.subr.bf16.mxu0 0
      %3942 = vmatpush2.bf16.msra.mxu0 0
      %3943 = vmatprep.subr.bf16.mxu0 0
      %3944 = vmatpush2.bf16.msra.mxu0 0
      %3945 = vmatprep.subr.bf16.mxu0 0
      %3946 = vmatpush2.bf16.msra.mxu0 0
      %3947 = vmatprep.subr.bf16.mxu0 0
      %3948 = vmatpush2.bf16.msra.mxu0 0
      %3949 = vmatprep.mubr.bf16.mxu0 0
      %3950 = vmatmul.mubr.bf16.gmra.mxu0 %v3850
      %v3951 = vpop.f32.mrf.mxu0
      %v3952 = vadd.f32 0.0, %v3951
      %v3953 = vpop.f32.mrf.mxu0
      %v3954 = vadd.f32 0.0, %v3953
      %v3955 = vpop.f32.mrf.mxu0
      %v3956 = vpop.f32.mrf.mxu0
      %3957 = vdwg.mxu0
      %3958 = vmatprep.subr.bf16.mxu0 0
      %3959 = vmatpush1.bf16.msra.mxu0 0
      %3960 = vmatprep.subr.bf16.mxu0 0
      %3961 = vmatpush1.bf16.msra.mxu0 0
      %3962 = vmatprep.subr.bf16.mxu0 0
      %3963 = vmatpush1.bf16.msra.mxu0 0
      %3964 = vmatprep.subr.bf16.mxu0 0
      %3965 = vmatpush1.bf16.msra.mxu0 0
      %3966 = vmatprep.subr.bf16.mxu0 0
      %3967 = vmatpush1.bf16.msra.mxu0 0
      %3968 = vmatprep.subr.bf16.mxu0 0
      %3969 = vmatpush1.bf16.msra.mxu0 0
      %3970 = vmatprep.subr.bf16.mxu0 0
      %3971 = vmatpush1.bf16.msra.mxu0 0
      %3972 = vmatprep.subr.bf16.mxu0 %v3868
      %3973 = vmatpush1.bf16.msra.mxu0 %v3865
      %3974 = vmatprep.subr.bf16.mxu0 0
      %3975 = vmatpush2.bf16.msra.mxu0 0
      %3976 = vmatprep.subr.bf16.mxu0 0
      %3977 = vmatpush2.bf16.msra.mxu0 0
      %3978 = vmatprep.subr.bf16.mxu0 0
      %3979 = vmatpush2.bf16.msra.mxu0 0
      %3980 = vmatprep.subr.bf16.mxu0 0
      %3981 = vmatpush2.bf16.msra.mxu0 0
      %3982 = vmatprep.subr.bf16.mxu0 0
      %3983 = vmatpush2.bf16.msra.mxu0 0
      %3984 = vmatprep.subr.bf16.mxu0 0
      %3985 = vmatpush2.bf16.msra.mxu0 0
      %3986 = vmatprep.subr.bf16.mxu0 0
      %3987 = vmatpush2.bf16.msra.mxu0 0
      %3988 = vmatprep.subr.bf16.mxu0 0
      %3989 = vmatpush2.bf16.msra.mxu0 0
      %3990 = vmatprep.mubr.bf16.mxu0 0
      %3991 = vmatmul.mubr.bf16.gmra.mxu0 %v3850
      %v3992 = vpop.f32.mrf.mxu0
      %v3993 = vadd.f32 0.0, %v3992
      %v3994 = vpop.f32.mrf.mxu0
      %v3995 = vadd.f32 0.0, %v3994
      %v3996 = vpop.f32.mrf.mxu0
      %v3997 = vpop.f32.mrf.mxu0
      %3998 = vdwg.mxu0
      %3999 = vmatprep.subr.bf16.mxu0 0
      %4000 = vmatpush1.bf16.msra.mxu0 0
      %4001 = vmatprep.subr.bf16.mxu0 0
      %4002 = vmatpush1.bf16.msra.mxu0 0
      %4003 = vmatprep.subr.bf16.mxu0 0
      %4004 = vmatpush1.bf16.msra.mxu0 0
      %4005 = vmatprep.subr.bf16.mxu0 0
      %4006 = vmatpush1.bf16.msra.mxu0 0
      %4007 = vmatprep.subr.bf16.mxu0 0
      %4008 = vmatpush1.bf16.msra.mxu0 0
      %4009 = vmatprep.subr.bf16.mxu0 0
      %4010 = vmatpush1.bf16.msra.mxu0 0
      %4011 = vmatprep.subr.bf16.mxu0 0
      %4012 = vmatpush1.bf16.msra.mxu0 0
      %4013 = vmatprep.subr.bf16.mxu0 %v3874
      %4014 = vmatpush1.bf16.msra.mxu0 %v3871
      %4015 = vmatprep.subr.bf16.mxu0 0
      %4016 = vmatpush2.bf16.msra.mxu0 0
      %4017 = vmatprep.subr.bf16.mxu0 0
      %4018 = vmatpush2.bf16.msra.mxu0 0
      %4019 = vmatprep.subr.bf16.mxu0 0
      %4020 = vmatpush2.bf16.msra.mxu0 0
      %4021 = vmatprep.subr.bf16.mxu0 0
      %4022 = vmatpush2.bf16.msra.mxu0 0
      %4023 = vmatprep.subr.bf16.mxu0 0
      %4024 = vmatpush2.bf16.msra.mxu0 0
      %4025 = vmatprep.subr.bf16.mxu0 0
      %4026 = vmatpush2.bf16.msra.mxu0 0
      %4027 = vmatprep.subr.bf16.mxu0 0
      %4028 = vmatpush2.bf16.msra.mxu0 0
      %4029 = vmatprep.subr.bf16.mxu0 0
      %4030 = vmatpush2.bf16.msra.mxu0 0
      %4031 = vmatprep.mubr.bf16.mxu0 0
      %4032 = vmatmul.mubr.bf16.gmra.mxu0 %v3850
      %v4033 = vpop.f32.mrf.mxu0
      %v4034 = vadd.f32 0.0, %v4033
      %v4035 = vpop.f32.mrf.mxu0
      %v4036 = vadd.f32 0.0, %v4035
      %v4037 = vpop.f32.mrf.mxu0
      %v4038 = vpop.f32.mrf.mxu0
      %4039 = vdwg.mxu0
      %v4040 = vadd.f32 %v3799, %v3911
      %v4041 = vadd.f32 %v3800, %v3913
      %v4042 = vadd.f32 %v3801, %v3952
      %v4043 = vadd.f32 %v3802, %v3954
      %v4044 = vadd.f32 %v3803, %v3993
      %v4045 = vadd.f32 %v3804, %v3995
      %v4046 = vadd.f32 %v3805, %v4034
      %v4047 = vadd.f32 %v3806, %v4036
      %4048 = vrot.lane.b32.xlu0 %v3551, 31
      %v4049 = vpop.permute.xlu0 %4048
      %4050 = vrot.lane.b32.xlu0 %v3559, 31
      %v4051 = vpop.permute.xlu0 %4050
      %4052 = vrot.lane.b32.xlu0 %v3552, 31
      %v4053 = vpop.permute.xlu0 %4052
      %4054 = vrot.lane.b32.xlu0 %v3560, 31
      %v4055 = vpop.permute.xlu0 %4054
      %4056 = vrot.lane.b32.xlu0 %v3553, 31
      %v4057 = vpop.permute.xlu0 %4056
      %4058 = vrot.lane.b32.xlu0 %v3561, 31
      %v4059 = vpop.permute.xlu0 %4058
      %4060 = vrot.lane.b32.xlu0 %v3554, 31
      %v4061 = vpop.permute.xlu0 %4060
      %4062 = vrot.lane.b32.xlu0 %v3562, 31
      %v4063 = vpop.permute.xlu0 %4062
      %v4064 = vsel %vm1636, %v4061, %v4063
      %v4065 = vsel %vm1636, %v4059, %v4061
      %v4066 = vsel %vm1636, %v4057, %v4059
      %v4067 = vsel %vm1636, %v4055, %v4057
      %v4068 = vsel %vm1636, %v4053, %v4055
      %v4069 = vsel %vm1636, %v4051, %v4053
      %v4070 = vsel %vm1636, %v4049, %v4051
      %v4071 = vsel %vm1636, %v4063, %v4049
      %v4072 = vmul.f32 %v4071, %v1653
      %v4073 = vmul.f32 %v4070, %v1657
      %v4074 = vmul.f32 %v4069, %v1661
      %v4075 = vmul.f32 %v4068, %v1665
      %v4076 = vmul.f32 %v4067, %v1669
      %v4077 = vmul.f32 %v4066, %v1673
      %v4078 = vmul.f32 %v4065, %v1677
      %v4079 = vmul.f32 %v4064, %v1681
      %s4080 = scalar_lea.vmem %s6, 4
      %v4081 = vld [vmem:[%s4080] sm:$0x3]
      %v4082 = vpack.c.bf16 %v4072, %v4072
      %v4083 = vpack.c.bf16 %v4073, %v4073
      %v4084 = vpack.c.bf16 %v4074, %v4074
      %v4085 = vpack.c.bf16 %v4075, %v4075
      %v4086 = vpack.c.bf16 %v4076, %v4076
      %v4087 = vpack.c.bf16 %v4077, %v4077
      %v4088 = vpack.c.bf16 %v4078, %v4078
      %v4089 = vpack.c.bf16 %v4079, %v4079
      %v4091 = vsel %vm1236, %v4081, 0
      %v4094 = vsel %vm1240, %v4082, 0
      %v4097 = vsel %vm1240, %v4083, 0
      %v4100 = vsel %vm1240, %v4084, 0
      %v4103 = vsel %vm1240, %v4085, 0
      %v4106 = vsel %vm1240, %v4086, 0
      %v4109 = vsel %vm1240, %v4087, 0
      %v4112 = vsel %vm1240, %v4088, 0
      %v4115 = vsel %vm1240, %v4089, 0
      %4117 = vmatprep.subr.bf16.mxu0 0
      %4118 = vmatpush1.bf16.msra.mxu0 0
      %4119 = vmatprep.subr.bf16.mxu0 0
      %4120 = vmatpush1.bf16.msra.mxu0 0
      %4121 = vmatprep.subr.bf16.mxu0 0
      %4122 = vmatpush1.bf16.msra.mxu0 0
      %4123 = vmatprep.subr.bf16.mxu0 0
      %4124 = vmatpush1.bf16.msra.mxu0 0
      %4125 = vmatprep.subr.bf16.mxu0 0
      %4126 = vmatpush1.bf16.msra.mxu0 0
      %4127 = vmatprep.subr.bf16.mxu0 0
      %4128 = vmatpush1.bf16.msra.mxu0 0
      %4129 = vmatprep.subr.bf16.mxu0 0
      %4130 = vmatpush1.bf16.msra.mxu0 0
      %4131 = vmatprep.subr.bf16.mxu0 %v4097
      %4132 = vmatpush1.bf16.msra.mxu0 %v4094
      %4133 = vmatprep.subr.bf16.mxu0 0
      %4134 = vmatpush2.bf16.msra.mxu0 0
      %4135 = vmatprep.subr.bf16.mxu0 0
      %4136 = vmatpush2.bf16.msra.mxu0 0
      %4137 = vmatprep.subr.bf16.mxu0 0
      %4138 = vmatpush2.bf16.msra.mxu0 0
      %4139 = vmatprep.subr.bf16.mxu0 0
      %4140 = vmatpush2.bf16.msra.mxu0 0
      %4141 = vmatprep.subr.bf16.mxu0 0
      %4142 = vmatpush2.bf16.msra.mxu0 0
      %4143 = vmatprep.subr.bf16.mxu0 0
      %4144 = vmatpush2.bf16.msra.mxu0 0
      %4145 = vmatprep.subr.bf16.mxu0 0
      %4146 = vmatpush2.bf16.msra.mxu0 0
      %4147 = vmatprep.subr.bf16.mxu0 0
      %4148 = vmatpush2.bf16.msra.mxu0 0
      %4149 = vmatprep.mubr.bf16.mxu0 0
      %4150 = vmatmul.mubr.bf16.gmra.mxu0 %v4091
      %v4151 = vpop.f32.mrf.mxu0
      %v4152 = vadd.f32 0.0, %v4151
      %v4153 = vpop.f32.mrf.mxu0
      %v4154 = vadd.f32 0.0, %v4153
      %v4155 = vpop.f32.mrf.mxu0
      %v4156 = vpop.f32.mrf.mxu0
      %4157 = vdwg.mxu0
      %4158 = vmatprep.subr.bf16.mxu0 0
      %4159 = vmatpush1.bf16.msra.mxu0 0
      %4160 = vmatprep.subr.bf16.mxu0 0
      %4161 = vmatpush1.bf16.msra.mxu0 0
      %4162 = vmatprep.subr.bf16.mxu0 0
      %4163 = vmatpush1.bf16.msra.mxu0 0
      %4164 = vmatprep.subr.bf16.mxu0 0
      %4165 = vmatpush1.bf16.msra.mxu0 0
      %4166 = vmatprep.subr.bf16.mxu0 0
      %4167 = vmatpush1.bf16.msra.mxu0 0
      %4168 = vmatprep.subr.bf16.mxu0 0
      %4169 = vmatpush1.bf16.msra.mxu0 0
      %4170 = vmatprep.subr.bf16.mxu0 0
      %4171 = vmatpush1.bf16.msra.mxu0 0
      %4172 = vmatprep.subr.bf16.mxu0 %v4103
      %4173 = vmatpush1.bf16.msra.mxu0 %v4100
      %4174 = vmatprep.subr.bf16.mxu0 0
      %4175 = vmatpush2.bf16.msra.mxu0 0
      %4176 = vmatprep.subr.bf16.mxu0 0
      %4177 = vmatpush2.bf16.msra.mxu0 0
      %4178 = vmatprep.subr.bf16.mxu0 0
      %4179 = vmatpush2.bf16.msra.mxu0 0
      %4180 = vmatprep.subr.bf16.mxu0 0
      %4181 = vmatpush2.bf16.msra.mxu0 0
      %4182 = vmatprep.subr.bf16.mxu0 0
      %4183 = vmatpush2.bf16.msra.mxu0 0
      %4184 = vmatprep.subr.bf16.mxu0 0
      %4185 = vmatpush2.bf16.msra.mxu0 0
      %4186 = vmatprep.subr.bf16.mxu0 0
      %4187 = vmatpush2.bf16.msra.mxu0 0
      %4188 = vmatprep.subr.bf16.mxu0 0
      %4189 = vmatpush2.bf16.msra.mxu0 0
      %4190 = vmatprep.mubr.bf16.mxu0 0
      %4191 = vmatmul.mubr.bf16.gmra.mxu0 %v4091
      %v4192 = vpop.f32.mrf.mxu0
      %v4193 = vadd.f32 0.0, %v4192
      %v4194 = vpop.f32.mrf.mxu0
      %v4195 = vadd.f32 0.0, %v4194
      %v4196 = vpop.f32.mrf.mxu0
      %v4197 = vpop.f32.mrf.mxu0
      %4198 = vdwg.mxu0
      %4199 = vmatprep.subr.bf16.mxu0 0
      %4200 = vmatpush1.bf16.msra.mxu0 0
      %4201 = vmatprep.subr.bf16.mxu0 0
      %4202 = vmatpush1.bf16.msra.mxu0 0
      %4203 = vmatprep.subr.bf16.mxu0 0
      %4204 = vmatpush1.bf16.msra.mxu0 0
      %4205 = vmatprep.subr.bf16.mxu0 0
      %4206 = vmatpush1.bf16.msra.mxu0 0
      %4207 = vmatprep.subr.bf16.mxu0 0
      %4208 = vmatpush1.bf16.msra.mxu0 0
      %4209 = vmatprep.subr.bf16.mxu0 0
      %4210 = vmatpush1.bf16.msra.mxu0 0
      %4211 = vmatprep.subr.bf16.mxu0 0
      %4212 = vmatpush1.bf16.msra.mxu0 0
      %4213 = vmatprep.subr.bf16.mxu0 %v4109
      %4214 = vmatpush1.bf16.msra.mxu0 %v4106
      %4215 = vmatprep.subr.bf16.mxu0 0
      %4216 = vmatpush2.bf16.msra.mxu0 0
      %4217 = vmatprep.subr.bf16.mxu0 0
      %4218 = vmatpush2.bf16.msra.mxu0 0
      %4219 = vmatprep.subr.bf16.mxu0 0
      %4220 = vmatpush2.bf16.msra.mxu0 0
      %4221 = vmatprep.subr.bf16.mxu0 0
      %4222 = vmatpush2.bf16.msra.mxu0 0
      %4223 = vmatprep.subr.bf16.mxu0 0
      %4224 = vmatpush2.bf16.msra.mxu0 0
      %4225 = vmatprep.subr.bf16.mxu0 0
      %4226 = vmatpush2.bf16.msra.mxu0 0
      %4227 = vmatprep.subr.bf16.mxu0 0
      %4228 = vmatpush2.bf16.msra.mxu0 0
      %4229 = vmatprep.subr.bf16.mxu0 0
      %4230 = vmatpush2.bf16.msra.mxu0 0
      %4231 = vmatprep.mubr.bf16.mxu0 0
      %4232 = vmatmul.mubr.bf16.gmra.mxu0 %v4091
      %v4233 = vpop.f32.mrf.mxu0
      %v4234 = vadd.f32 0.0, %v4233
      %v4235 = vpop.f32.mrf.mxu0
      %v4236 = vadd.f32 0.0, %v4235
      %v4237 = vpop.f32.mrf.mxu0
      %v4238 = vpop.f32.mrf.mxu0
      %4239 = vdwg.mxu0
      %4240 = vmatprep.subr.bf16.mxu0 0
      %4241 = vmatpush1.bf16.msra.mxu0 0
      %4242 = vmatprep.subr.bf16.mxu0 0
      %4243 = vmatpush1.bf16.msra.mxu0 0
      %4244 = vmatprep.subr.bf16.mxu0 0
      %4245 = vmatpush1.bf16.msra.mxu0 0
      %4246 = vmatprep.subr.bf16.mxu0 0
      %4247 = vmatpush1.bf16.msra.mxu0 0
      %4248 = vmatprep.subr.bf16.mxu0 0
      %4249 = vmatpush1.bf16.msra.mxu0 0
      %4250 = vmatprep.subr.bf16.mxu0 0
      %4251 = vmatpush1.bf16.msra.mxu0 0
      %4252 = vmatprep.subr.bf16.mxu0 0
      %4253 = vmatpush1.bf16.msra.mxu0 0
      %4254 = vmatprep.subr.bf16.mxu0 %v4115
      %4255 = vmatpush1.bf16.msra.mxu0 %v4112
      %4256 = vmatprep.subr.bf16.mxu0 0
      %4257 = vmatpush2.bf16.msra.mxu0 0
      %4258 = vmatprep.subr.bf16.mxu0 0
      %4259 = vmatpush2.bf16.msra.mxu0 0
      %4260 = vmatprep.subr.bf16.mxu0 0
      %4261 = vmatpush2.bf16.msra.mxu0 0
      %4262 = vmatprep.subr.bf16.mxu0 0
      %4263 = vmatpush2.bf16.msra.mxu0 0
      %4264 = vmatprep.subr.bf16.mxu0 0
      %4265 = vmatpush2.bf16.msra.mxu0 0
      %4266 = vmatprep.subr.bf16.mxu0 0
      %4267 = vmatpush2.bf16.msra.mxu0 0
      %4268 = vmatprep.subr.bf16.mxu0 0
      %4269 = vmatpush2.bf16.msra.mxu0 0
      %4270 = vmatprep.subr.bf16.mxu0 0
      %4271 = vmatpush2.bf16.msra.mxu0 0
      %4272 = vmatprep.mubr.bf16.mxu0 0
      %4273 = vmatmul.mubr.bf16.gmra.mxu0 %v4091
      %v4274 = vpop.f32.mrf.mxu0
      %v4275 = vadd.f32 0.0, %v4274
      %v4276 = vpop.f32.mrf.mxu0
      %v4277 = vadd.f32 0.0, %v4276
      %v4278 = vpop.f32.mrf.mxu0
      %v4279 = vpop.f32.mrf.mxu0
      %4280 = vdwg.mxu0
      %v4281 = vadd.f32 %v4040, %v4152
      %v4282 = vadd.f32 %v4041, %v4154
      %v4283 = vadd.f32 %v4042, %v4193
      %v4284 = vadd.f32 %v4043, %v4195
      %v4285 = vadd.f32 %v4044, %v4234
      %v4286 = vadd.f32 %v4045, %v4236
      %v4287 = vadd.f32 %v4046, %v4275
      %v4288 = vadd.f32 %v4047, %v4277
      %4289 = vrot.lane.b32.xlu0 %v3551, 1
      %v4290 = vpop.permute.xlu0 %4289
      %4291 = vrot.lane.b32.xlu0 %v3559, 1
      %v4292 = vpop.permute.xlu0 %4291
      %4293 = vrot.lane.b32.xlu0 %v3552, 1
      %v4294 = vpop.permute.xlu0 %4293
      %4295 = vrot.lane.b32.xlu0 %v3560, 1
      %v4296 = vpop.permute.xlu0 %4295
      %4297 = vrot.lane.b32.xlu0 %v3553, 1
      %v4298 = vpop.permute.xlu0 %4297
      %4299 = vrot.lane.b32.xlu0 %v3561, 1
      %v4300 = vpop.permute.xlu0 %4299
      %4301 = vrot.lane.b32.xlu0 %v3554, 1
      %v4302 = vpop.permute.xlu0 %4301
      %4303 = vrot.lane.b32.xlu0 %v3562, 1
      %v4304 = vpop.permute.xlu0 %4303
      %v4305 = vsel %vm1923, %v4302, %v4304
      %v4306 = vsel %vm1923, %v4300, %v4302
      %v4307 = vsel %vm1923, %v4298, %v4300
      %v4308 = vsel %vm1923, %v4296, %v4298
      %v4309 = vsel %vm1923, %v4294, %v4296
      %v4310 = vsel %vm1923, %v4292, %v4294
      %v4311 = vsel %vm1923, %v4290, %v4292
      %v4312 = vsel %vm1923, %v4304, %v4290
      %v4313 = vmul.f32 %v4312, %v1940
      %v4314 = vmul.f32 %v4311, %v1944
      %v4315 = vmul.f32 %v4310, %v1948
      %v4316 = vmul.f32 %v4309, %v1952
      %v4317 = vmul.f32 %v4308, %v1956
      %v4318 = vmul.f32 %v4307, %v1960
      %v4319 = vmul.f32 %v4306, %v1964
      %v4320 = vmul.f32 %v4305, %v1968
      %s4321 = scalar_lea.vmem %s6, 6
      %v4322 = vld [vmem:[%s4321] sm:$0x3]
      %v4323 = vpack.c.bf16 %v4313, %v4313
      %v4324 = vpack.c.bf16 %v4314, %v4314
      %v4325 = vpack.c.bf16 %v4315, %v4315
      %v4326 = vpack.c.bf16 %v4316, %v4316
      %v4327 = vpack.c.bf16 %v4317, %v4317
      %v4328 = vpack.c.bf16 %v4318, %v4318
      %v4329 = vpack.c.bf16 %v4319, %v4319
      %v4330 = vpack.c.bf16 %v4320, %v4320
      %v4332 = vsel %vm1236, %v4322, 0
      %v4335 = vsel %vm1240, %v4323, 0
      %v4338 = vsel %vm1240, %v4324, 0
      %v4341 = vsel %vm1240, %v4325, 0
      %v4344 = vsel %vm1240, %v4326, 0
      %v4347 = vsel %vm1240, %v4327, 0
      %v4350 = vsel %vm1240, %v4328, 0
      %v4353 = vsel %vm1240, %v4329, 0
      %v4356 = vsel %vm1240, %v4330, 0
      %4358 = vmatprep.subr.bf16.mxu0 0
      %4359 = vmatpush1.bf16.msra.mxu0 0
      %4360 = vmatprep.subr.bf16.mxu0 0
      %4361 = vmatpush1.bf16.msra.mxu0 0
      %4362 = vmatprep.subr.bf16.mxu0 0
      %4363 = vmatpush1.bf16.msra.mxu0 0
      %4364 = vmatprep.subr.bf16.mxu0 0
      %4365 = vmatpush1.bf16.msra.mxu0 0
      %4366 = vmatprep.subr.bf16.mxu0 0
      %4367 = vmatpush1.bf16.msra.mxu0 0
      %4368 = vmatprep.subr.bf16.mxu0 0
      %4369 = vmatpush1.bf16.msra.mxu0 0
      %4370 = vmatprep.subr.bf16.mxu0 0
      %4371 = vmatpush1.bf16.msra.mxu0 0
      %4372 = vmatprep.subr.bf16.mxu0 %v4338
      %4373 = vmatpush1.bf16.msra.mxu0 %v4335
      %4374 = vmatprep.subr.bf16.mxu0 0
      %4375 = vmatpush2.bf16.msra.mxu0 0
      %4376 = vmatprep.subr.bf16.mxu0 0
      %4377 = vmatpush2.bf16.msra.mxu0 0
      %4378 = vmatprep.subr.bf16.mxu0 0
      %4379 = vmatpush2.bf16.msra.mxu0 0
      %4380 = vmatprep.subr.bf16.mxu0 0
      %4381 = vmatpush2.bf16.msra.mxu0 0
      %4382 = vmatprep.subr.bf16.mxu0 0
      %4383 = vmatpush2.bf16.msra.mxu0 0
      %4384 = vmatprep.subr.bf16.mxu0 0
      %4385 = vmatpush2.bf16.msra.mxu0 0
      %4386 = vmatprep.subr.bf16.mxu0 0
      %4387 = vmatpush2.bf16.msra.mxu0 0
      %4388 = vmatprep.subr.bf16.mxu0 0
      %4389 = vmatpush2.bf16.msra.mxu0 0
      %4390 = vmatprep.mubr.bf16.mxu0 0
      %4391 = vmatmul.mubr.bf16.gmra.mxu0 %v4332
      %v4392 = vpop.f32.mrf.mxu0
      %v4393 = vadd.f32 0.0, %v4392
      %v4394 = vpop.f32.mrf.mxu0
      %v4395 = vadd.f32 0.0, %v4394
      %v4396 = vpop.f32.mrf.mxu0
      %v4397 = vpop.f32.mrf.mxu0
      %4398 = vdwg.mxu0
      %4399 = vmatprep.subr.bf16.mxu0 0
      %4400 = vmatpush1.bf16.msra.mxu0 0
      %4401 = vmatprep.subr.bf16.mxu0 0
      %4402 = vmatpush1.bf16.msra.mxu0 0
      %4403 = vmatprep.subr.bf16.mxu0 0
      %4404 = vmatpush1.bf16.msra.mxu0 0
      %4405 = vmatprep.subr.bf16.mxu0 0
      %4406 = vmatpush1.bf16.msra.mxu0 0
      %4407 = vmatprep.subr.bf16.mxu0 0
      %4408 = vmatpush1.bf16.msra.mxu0 0
      %4409 = vmatprep.subr.bf16.mxu0 0
      %4410 = vmatpush1.bf16.msra.mxu0 0
      %4411 = vmatprep.subr.bf16.mxu0 0
      %4412 = vmatpush1.bf16.msra.mxu0 0
      %4413 = vmatprep.subr.bf16.mxu0 %v4344
      %4414 = vmatpush1.bf16.msra.mxu0 %v4341
      %4415 = vmatprep.subr.bf16.mxu0 0
      %4416 = vmatpush2.bf16.msra.mxu0 0
      %4417 = vmatprep.subr.bf16.mxu0 0
      %4418 = vmatpush2.bf16.msra.mxu0 0
      %4419 = vmatprep.subr.bf16.mxu0 0
      %4420 = vmatpush2.bf16.msra.mxu0 0
      %4421 = vmatprep.subr.bf16.mxu0 0
      %4422 = vmatpush2.bf16.msra.mxu0 0
      %4423 = vmatprep.subr.bf16.mxu0 0
      %4424 = vmatpush2.bf16.msra.mxu0 0
      %4425 = vmatprep.subr.bf16.mxu0 0
      %4426 = vmatpush2.bf16.msra.mxu0 0
      %4427 = vmatprep.subr.bf16.mxu0 0
      %4428 = vmatpush2.bf16.msra.mxu0 0
      %4429 = vmatprep.subr.bf16.mxu0 0
      %4430 = vmatpush2.bf16.msra.mxu0 0
      %4431 = vmatprep.mubr.bf16.mxu0 0
      %4432 = vmatmul.mubr.bf16.gmra.mxu0 %v4332
      %v4433 = vpop.f32.mrf.mxu0
      %v4434 = vadd.f32 0.0, %v4433
      %v4435 = vpop.f32.mrf.mxu0
      %v4436 = vadd.f32 0.0, %v4435
      %v4437 = vpop.f32.mrf.mxu0
      %v4438 = vpop.f32.mrf.mxu0
      %4439 = vdwg.mxu0
      %4440 = vmatprep.subr.bf16.mxu0 0
      %4441 = vmatpush1.bf16.msra.mxu0 0
      %4442 = vmatprep.subr.bf16.mxu0 0
      %4443 = vmatpush1.bf16.msra.mxu0 0
      %4444 = vmatprep.subr.bf16.mxu0 0
      %4445 = vmatpush1.bf16.msra.mxu0 0
      %4446 = vmatprep.subr.bf16.mxu0 0
      %4447 = vmatpush1.bf16.msra.mxu0 0
      %4448 = vmatprep.subr.bf16.mxu0 0
      %4449 = vmatpush1.bf16.msra.mxu0 0
      %4450 = vmatprep.subr.bf16.mxu0 0
      %4451 = vmatpush1.bf16.msra.mxu0 0
      %4452 = vmatprep.subr.bf16.mxu0 0
      %4453 = vmatpush1.bf16.msra.mxu0 0
      %4454 = vmatprep.subr.bf16.mxu0 %v4350
      %4455 = vmatpush1.bf16.msra.mxu0 %v4347
      %4456 = vmatprep.subr.bf16.mxu0 0
      %4457 = vmatpush2.bf16.msra.mxu0 0
      %4458 = vmatprep.subr.bf16.mxu0 0
      %4459 = vmatpush2.bf16.msra.mxu0 0
      %4460 = vmatprep.subr.bf16.mxu0 0
      %4461 = vmatpush2.bf16.msra.mxu0 0
      %4462 = vmatprep.subr.bf16.mxu0 0
      %4463 = vmatpush2.bf16.msra.mxu0 0
      %4464 = vmatprep.subr.bf16.mxu0 0
      %4465 = vmatpush2.bf16.msra.mxu0 0
      %4466 = vmatprep.subr.bf16.mxu0 0
      %4467 = vmatpush2.bf16.msra.mxu0 0
      %4468 = vmatprep.subr.bf16.mxu0 0
      %4469 = vmatpush2.bf16.msra.mxu0 0
      %4470 = vmatprep.subr.bf16.mxu0 0
      %4471 = vmatpush2.bf16.msra.mxu0 0
      %4472 = vmatprep.mubr.bf16.mxu0 0
      %4473 = vmatmul.mubr.bf16.gmra.mxu0 %v4332
      %v4474 = vpop.f32.mrf.mxu0
      %v4475 = vadd.f32 0.0, %v4474
      %v4476 = vpop.f32.mrf.mxu0
      %v4477 = vadd.f32 0.0, %v4476
      %v4478 = vpop.f32.mrf.mxu0
      %v4479 = vpop.f32.mrf.mxu0
      %4480 = vdwg.mxu0
      %4481 = vmatprep.subr.bf16.mxu0 0
      %4482 = vmatpush1.bf16.msra.mxu0 0
      %4483 = vmatprep.subr.bf16.mxu0 0
      %4484 = vmatpush1.bf16.msra.mxu0 0
      %4485 = vmatprep.subr.bf16.mxu0 0
      %4486 = vmatpush1.bf16.msra.mxu0 0
      %4487 = vmatprep.subr.bf16.mxu0 0
      %4488 = vmatpush1.bf16.msra.mxu0 0
      %4489 = vmatprep.subr.bf16.mxu0 0
      %4490 = vmatpush1.bf16.msra.mxu0 0
      %4491 = vmatprep.subr.bf16.mxu0 0
      %4492 = vmatpush1.bf16.msra.mxu0 0
      %4493 = vmatprep.subr.bf16.mxu0 0
      %4494 = vmatpush1.bf16.msra.mxu0 0
      %4495 = vmatprep.subr.bf16.mxu0 %v4356
      %4496 = vmatpush1.bf16.msra.mxu0 %v4353
      %4497 = vmatprep.subr.bf16.mxu0 0
      %4498 = vmatpush2.bf16.msra.mxu0 0
      %4499 = vmatprep.subr.bf16.mxu0 0
      %4500 = vmatpush2.bf16.msra.mxu0 0
      %4501 = vmatprep.subr.bf16.mxu0 0
      %4502 = vmatpush2.bf16.msra.mxu0 0
      %4503 = vmatprep.subr.bf16.mxu0 0
      %4504 = vmatpush2.bf16.msra.mxu0 0
      %4505 = vmatprep.subr.bf16.mxu0 0
      %4506 = vmatpush2.bf16.msra.mxu0 0
      %4507 = vmatprep.subr.bf16.mxu0 0
      %4508 = vmatpush2.bf16.msra.mxu0 0
      %4509 = vmatprep.subr.bf16.mxu0 0
      %4510 = vmatpush2.bf16.msra.mxu0 0
      %4511 = vmatprep.subr.bf16.mxu0 0
      %4512 = vmatpush2.bf16.msra.mxu0 0
      %4513 = vmatprep.mubr.bf16.mxu0 0
      %4514 = vmatmul.mubr.bf16.gmra.mxu0 %v4332
      %v4515 = vpop.f32.mrf.mxu0
      %v4516 = vadd.f32 0.0, %v4515
      %v4517 = vpop.f32.mrf.mxu0
      %v4518 = vadd.f32 0.0, %v4517
      %v4519 = vpop.f32.mrf.mxu0
      %v4520 = vpop.f32.mrf.mxu0
      %4521 = vdwg.mxu0
      %v4522 = vadd.f32 %v4281, %v4393
      %v4523 = vadd.f32 %v4282, %v4395
      %v4524 = vadd.f32 %v4283, %v4434
      %v4525 = vadd.f32 %v4284, %v4436
      %v4526 = vadd.f32 %v4285, %v4475
      %v4527 = vadd.f32 %v4286, %v4477
      %v4528 = vadd.f32 %v4287, %v4516
      %v4529 = vadd.f32 %v4288, %v4518
      %s4530 = scalar_lea.vmem %s6, 8
      %v4531 = vld [vmem:[%s4530] sm:$0x3]
      %v4532 = vpack.c.bf16 %v3551, %v3551
      %v4533 = vpack.c.bf16 %v3559, %v3559
      %v4534 = vpack.c.bf16 %v3552, %v3552
      %v4535 = vpack.c.bf16 %v3560, %v3560
      %v4536 = vpack.c.bf16 %v3553, %v3553
      %v4537 = vpack.c.bf16 %v3561, %v3561
      %v4538 = vpack.c.bf16 %v3554, %v3554
      %v4539 = vpack.c.bf16 %v3562, %v3562
      %v4541 = vsel %vm1236, %v4531, 0
      %v4544 = vsel %vm1240, %v4532, 0
      %v4547 = vsel %vm1240, %v4533, 0
      %v4550 = vsel %vm1240, %v4534, 0
      %v4553 = vsel %vm1240, %v4535, 0
      %v4556 = vsel %vm1240, %v4536, 0
      %v4559 = vsel %vm1240, %v4537, 0
      %v4562 = vsel %vm1240, %v4538, 0
      %v4565 = vsel %vm1240, %v4539, 0
      %4567 = vmatprep.subr.bf16.mxu0 0
      %4568 = vmatpush1.bf16.msra.mxu0 0
      %4569 = vmatprep.subr.bf16.mxu0 0
      %4570 = vmatpush1.bf16.msra.mxu0 0
      %4571 = vmatprep.subr.bf16.mxu0 0
      %4572 = vmatpush1.bf16.msra.mxu0 0
      %4573 = vmatprep.subr.bf16.mxu0 0
      %4574 = vmatpush1.bf16.msra.mxu0 0
      %4575 = vmatprep.subr.bf16.mxu0 0
      %4576 = vmatpush1.bf16.msra.mxu0 0
      %4577 = vmatprep.subr.bf16.mxu0 0
      %4578 = vmatpush1.bf16.msra.mxu0 0
      %4579 = vmatprep.subr.bf16.mxu0 0
      %4580 = vmatpush1.bf16.msra.mxu0 0
      %4581 = vmatprep.subr.bf16.mxu0 %v4547
      %4582 = vmatpush1.bf16.msra.mxu0 %v4544
      %4583 = vmatprep.subr.bf16.mxu0 0
      %4584 = vmatpush2.bf16.msra.mxu0 0
      %4585 = vmatprep.subr.bf16.mxu0 0
      %4586 = vmatpush2.bf16.msra.mxu0 0
      %4587 = vmatprep.subr.bf16.mxu0 0
      %4588 = vmatpush2.bf16.msra.mxu0 0
      %4589 = vmatprep.subr.bf16.mxu0 0
      %4590 = vmatpush2.bf16.msra.mxu0 0
      %4591 = vmatprep.subr.bf16.mxu0 0
      %4592 = vmatpush2.bf16.msra.mxu0 0
      %4593 = vmatprep.subr.bf16.mxu0 0
      %4594 = vmatpush2.bf16.msra.mxu0 0
      %4595 = vmatprep.subr.bf16.mxu0 0
      %4596 = vmatpush2.bf16.msra.mxu0 0
      %4597 = vmatprep.subr.bf16.mxu0 0
      %4598 = vmatpush2.bf16.msra.mxu0 0
      %4599 = vmatprep.mubr.bf16.mxu0 0
      %4600 = vmatmul.mubr.bf16.gmra.mxu0 %v4541
      %v4601 = vpop.f32.mrf.mxu0
      %v4602 = vadd.f32 0.0, %v4601
      %v4603 = vpop.f32.mrf.mxu0
      %v4604 = vadd.f32 0.0, %v4603
      %v4605 = vpop.f32.mrf.mxu0
      %v4606 = vpop.f32.mrf.mxu0
      %4607 = vdwg.mxu0
      %4608 = vmatprep.subr.bf16.mxu0 0
      %4609 = vmatpush1.bf16.msra.mxu0 0
      %4610 = vmatprep.subr.bf16.mxu0 0
      %4611 = vmatpush1.bf16.msra.mxu0 0
      %4612 = vmatprep.subr.bf16.mxu0 0
      %4613 = vmatpush1.bf16.msra.mxu0 0
      %4614 = vmatprep.subr.bf16.mxu0 0
      %4615 = vmatpush1.bf16.msra.mxu0 0
      %4616 = vmatprep.subr.bf16.mxu0 0
      %4617 = vmatpush1.bf16.msra.mxu0 0
      %4618 = vmatprep.subr.bf16.mxu0 0
      %4619 = vmatpush1.bf16.msra.mxu0 0
      %4620 = vmatprep.subr.bf16.mxu0 0
      %4621 = vmatpush1.bf16.msra.mxu0 0
      %4622 = vmatprep.subr.bf16.mxu0 %v4553
      %4623 = vmatpush1.bf16.msra.mxu0 %v4550
      %4624 = vmatprep.subr.bf16.mxu0 0
      %4625 = vmatpush2.bf16.msra.mxu0 0
      %4626 = vmatprep.subr.bf16.mxu0 0
      %4627 = vmatpush2.bf16.msra.mxu0 0
      %4628 = vmatprep.subr.bf16.mxu0 0
      %4629 = vmatpush2.bf16.msra.mxu0 0
      %4630 = vmatprep.subr.bf16.mxu0 0
      %4631 = vmatpush2.bf16.msra.mxu0 0
      %4632 = vmatprep.subr.bf16.mxu0 0
      %4633 = vmatpush2.bf16.msra.mxu0 0
      %4634 = vmatprep.subr.bf16.mxu0 0
      %4635 = vmatpush2.bf16.msra.mxu0 0
      %4636 = vmatprep.subr.bf16.mxu0 0
      %4637 = vmatpush2.bf16.msra.mxu0 0
      %4638 = vmatprep.subr.bf16.mxu0 0
      %4639 = vmatpush2.bf16.msra.mxu0 0
      %4640 = vmatprep.mubr.bf16.mxu0 0
      %4641 = vmatmul.mubr.bf16.gmra.mxu0 %v4541
      %v4642 = vpop.f32.mrf.mxu0
      %v4643 = vadd.f32 0.0, %v4642
      %v4644 = vpop.f32.mrf.mxu0
      %v4645 = vadd.f32 0.0, %v4644
      %v4646 = vpop.f32.mrf.mxu0
      %v4647 = vpop.f32.mrf.mxu0
      %4648 = vdwg.mxu0
      %4649 = vmatprep.subr.bf16.mxu0 0
      %4650 = vmatpush1.bf16.msra.mxu0 0
      %4651 = vmatprep.subr.bf16.mxu0 0
      %4652 = vmatpush1.bf16.msra.mxu0 0
      %4653 = vmatprep.subr.bf16.mxu0 0
      %4654 = vmatpush1.bf16.msra.mxu0 0
      %4655 = vmatprep.subr.bf16.mxu0 0
      %4656 = vmatpush1.bf16.msra.mxu0 0
      %4657 = vmatprep.subr.bf16.mxu0 0
      %4658 = vmatpush1.bf16.msra.mxu0 0
      %4659 = vmatprep.subr.bf16.mxu0 0
      %4660 = vmatpush1.bf16.msra.mxu0 0
      %4661 = vmatprep.subr.bf16.mxu0 0
      %4662 = vmatpush1.bf16.msra.mxu0 0
      %4663 = vmatprep.subr.bf16.mxu0 %v4559
      %4664 = vmatpush1.bf16.msra.mxu0 %v4556
      %4665 = vmatprep.subr.bf16.mxu0 0
      %4666 = vmatpush2.bf16.msra.mxu0 0
      %4667 = vmatprep.subr.bf16.mxu0 0
      %4668 = vmatpush2.bf16.msra.mxu0 0
      %4669 = vmatprep.subr.bf16.mxu0 0
      %4670 = vmatpush2.bf16.msra.mxu0 0
      %4671 = vmatprep.subr.bf16.mxu0 0
      %4672 = vmatpush2.bf16.msra.mxu0 0
      %4673 = vmatprep.subr.bf16.mxu0 0
      %4674 = vmatpush2.bf16.msra.mxu0 0
      %4675 = vmatprep.subr.bf16.mxu0 0
      %4676 = vmatpush2.bf16.msra.mxu0 0
      %4677 = vmatprep.subr.bf16.mxu0 0
      %4678 = vmatpush2.bf16.msra.mxu0 0
      %4679 = vmatprep.subr.bf16.mxu0 0
      %4680 = vmatpush2.bf16.msra.mxu0 0
      %4681 = vmatprep.mubr.bf16.mxu0 0
      %4682 = vmatmul.mubr.bf16.gmra.mxu0 %v4541
      %v4683 = vpop.f32.mrf.mxu0
      %v4684 = vadd.f32 0.0, %v4683
      %v4685 = vpop.f32.mrf.mxu0
      %v4686 = vadd.f32 0.0, %v4685
      %v4687 = vpop.f32.mrf.mxu0
      %v4688 = vpop.f32.mrf.mxu0
      %4689 = vdwg.mxu0
      %4690 = vmatprep.subr.bf16.mxu0 0
      %4691 = vmatpush1.bf16.msra.mxu0 0
      %4692 = vmatprep.subr.bf16.mxu0 0
      %4693 = vmatpush1.bf16.msra.mxu0 0
      %4694 = vmatprep.subr.bf16.mxu0 0
      %4695 = vmatpush1.bf16.msra.mxu0 0
      %4696 = vmatprep.subr.bf16.mxu0 0
      %4697 = vmatpush1.bf16.msra.mxu0 0
      %4698 = vmatprep.subr.bf16.mxu0 0
      %4699 = vmatpush1.bf16.msra.mxu0 0
      %4700 = vmatprep.subr.bf16.mxu0 0
      %4701 = vmatpush1.bf16.msra.mxu0 0
      %4702 = vmatprep.subr.bf16.mxu0 0
      %4703 = vmatpush1.bf16.msra.mxu0 0
      %4704 = vmatprep.subr.bf16.mxu0 %v4565
      %4705 = vmatpush1.bf16.msra.mxu0 %v4562
      %4706 = vmatprep.subr.bf16.mxu0 0
      %4707 = vmatpush2.bf16.msra.mxu0 0
      %4708 = vmatprep.subr.bf16.mxu0 0
      %4709 = vmatpush2.bf16.msra.mxu0 0
      %4710 = vmatprep.subr.bf16.mxu0 0
      %4711 = vmatpush2.bf16.msra.mxu0 0
      %4712 = vmatprep.subr.bf16.mxu0 0
      %4713 = vmatpush2.bf16.msra.mxu0 0
      %4714 = vmatprep.subr.bf16.mxu0 0
      %4715 = vmatpush2.bf16.msra.mxu0 0
      %4716 = vmatprep.subr.bf16.mxu0 0
      %4717 = vmatpush2.bf16.msra.mxu0 0
      %4718 = vmatprep.subr.bf16.mxu0 0
      %4719 = vmatpush2.bf16.msra.mxu0 0
      %4720 = vmatprep.subr.bf16.mxu0 0
      %4721 = vmatpush2.bf16.msra.mxu0 0
      %4722 = vmatprep.mubr.bf16.mxu0 0
      %4723 = vmatmul.mubr.bf16.gmra.mxu0 %v4541
      %v4724 = vpop.f32.mrf.mxu0
      %v4725 = vadd.f32 0.0, %v4724
      %v4726 = vpop.f32.mrf.mxu0
      %v4727 = vadd.f32 0.0, %v4726
      %v4728 = vpop.f32.mrf.mxu0
      %v4729 = vpop.f32.mrf.mxu0
      %4730 = vdwg.mxu0
      %v4731 = vadd.f32 %v4522, %v4602
      %v4732 = vadd.f32 %v4523, %v4604
      %v4733 = vadd.f32 %v4524, %v4643
      %v4734 = vadd.f32 %v4525, %v4645
      %v4735 = vadd.f32 %v4526, %v4684
      %v4736 = vadd.f32 %v4527, %v4686
      %v4737 = vadd.f32 %v4528, %v4725
      %v4738 = vadd.f32 %v4529, %v4727
      %4739 = vrot.lane.b32.xlu0 %v3551, 127
      %v4740 = vpop.permute.xlu0 %4739
      %4741 = vrot.lane.b32.xlu0 %v3559, 127
      %v4742 = vpop.permute.xlu0 %4741
      %4743 = vrot.lane.b32.xlu0 %v3552, 127
      %v4744 = vpop.permute.xlu0 %4743
      %4745 = vrot.lane.b32.xlu0 %v3560, 127
      %v4746 = vpop.permute.xlu0 %4745
      %4747 = vrot.lane.b32.xlu0 %v3553, 127
      %v4748 = vpop.permute.xlu0 %4747
      %4749 = vrot.lane.b32.xlu0 %v3561, 127
      %v4750 = vpop.permute.xlu0 %4749
      %4751 = vrot.lane.b32.xlu0 %v3554, 127
      %v4752 = vpop.permute.xlu0 %4751
      %4753 = vrot.lane.b32.xlu0 %v3562, 127
      %v4754 = vpop.permute.xlu0 %4753
      %v4755 = vsel %vm2419, %v4752, %v4754
      %v4756 = vsel %vm2419, %v4750, %v4752
      %v4757 = vsel %vm2419, %v4748, %v4750
      %v4758 = vsel %vm2419, %v4746, %v4748
      %v4759 = vsel %vm2419, %v4744, %v4746
      %v4760 = vsel %vm2419, %v4742, %v4744
      %v4761 = vsel %vm2419, %v4740, %v4742
      %v4762 = vsel %vm2419, %v4754, %v4740
      %v4763 = vmul.f32 %v4761, %v2436
      %v4764 = vmul.f32 %v4760, %v2440
      %v4765 = vmul.f32 %v4759, %v2444
      %v4766 = vmul.f32 %v4758, %v2448
      %v4767 = vmul.f32 %v4757, %v2452
      %v4768 = vmul.f32 %v4756, %v2456
      %v4769 = vmul.f32 %v4755, %v2460
      %v4770 = vmul.f32 %v4762, %v2464
      %s4771 = scalar_lea.vmem %s6, 10
      %v4772 = vld [vmem:[%s4771] sm:$0x3]
      %v4773 = vpack.c.bf16 %v4763, %v4763
      %v4774 = vpack.c.bf16 %v4764, %v4764
      %v4775 = vpack.c.bf16 %v4765, %v4765
      %v4776 = vpack.c.bf16 %v4766, %v4766
      %v4777 = vpack.c.bf16 %v4767, %v4767
      %v4778 = vpack.c.bf16 %v4768, %v4768
      %v4779 = vpack.c.bf16 %v4769, %v4769
      %v4780 = vpack.c.bf16 %v4770, %v4770
      %v4782 = vsel %vm1236, %v4772, 0
      %v4785 = vsel %vm1240, %v4773, 0
      %v4788 = vsel %vm1240, %v4774, 0
      %v4791 = vsel %vm1240, %v4775, 0
      %v4794 = vsel %vm1240, %v4776, 0
      %v4797 = vsel %vm1240, %v4777, 0
      %v4800 = vsel %vm1240, %v4778, 0
      %v4803 = vsel %vm1240, %v4779, 0
      %v4806 = vsel %vm1240, %v4780, 0
      %4808 = vmatprep.subr.bf16.mxu0 0
      %4809 = vmatpush1.bf16.msra.mxu0 0
      %4810 = vmatprep.subr.bf16.mxu0 0
      %4811 = vmatpush1.bf16.msra.mxu0 0
      %4812 = vmatprep.subr.bf16.mxu0 0
      %4813 = vmatpush1.bf16.msra.mxu0 0
      %4814 = vmatprep.subr.bf16.mxu0 0
      %4815 = vmatpush1.bf16.msra.mxu0 0
      %4816 = vmatprep.subr.bf16.mxu0 0
      %4817 = vmatpush1.bf16.msra.mxu0 0
      %4818 = vmatprep.subr.bf16.mxu0 0
      %4819 = vmatpush1.bf16.msra.mxu0 0
      %4820 = vmatprep.subr.bf16.mxu0 0
      %4821 = vmatpush1.bf16.msra.mxu0 0
      %4822 = vmatprep.subr.bf16.mxu0 %v4788
      %4823 = vmatpush1.bf16.msra.mxu0 %v4785
      %4824 = vmatprep.subr.bf16.mxu0 0
      %4825 = vmatpush2.bf16.msra.mxu0 0
      %4826 = vmatprep.subr.bf16.mxu0 0
      %4827 = vmatpush2.bf16.msra.mxu0 0
      %4828 = vmatprep.subr.bf16.mxu0 0
      %4829 = vmatpush2.bf16.msra.mxu0 0
      %4830 = vmatprep.subr.bf16.mxu0 0
      %4831 = vmatpush2.bf16.msra.mxu0 0
      %4832 = vmatprep.subr.bf16.mxu0 0
      %4833 = vmatpush2.bf16.msra.mxu0 0
      %4834 = vmatprep.subr.bf16.mxu0 0
      %4835 = vmatpush2.bf16.msra.mxu0 0
      %4836 = vmatprep.subr.bf16.mxu0 0
      %4837 = vmatpush2.bf16.msra.mxu0 0
      %4838 = vmatprep.subr.bf16.mxu0 0
      %4839 = vmatpush2.bf16.msra.mxu0 0
      %4840 = vmatprep.mubr.bf16.mxu0 0
      %4841 = vmatmul.mubr.bf16.gmra.mxu0 %v4782
      %v4842 = vpop.f32.mrf.mxu0
      %v4843 = vadd.f32 0.0, %v4842
      %v4844 = vpop.f32.mrf.mxu0
      %v4845 = vadd.f32 0.0, %v4844
      %v4846 = vpop.f32.mrf.mxu0
      %v4847 = vpop.f32.mrf.mxu0
      %4848 = vdwg.mxu0
      %4849 = vmatprep.subr.bf16.mxu0 0
      %4850 = vmatpush1.bf16.msra.mxu0 0
      %4851 = vmatprep.subr.bf16.mxu0 0
      %4852 = vmatpush1.bf16.msra.mxu0 0
      %4853 = vmatprep.subr.bf16.mxu0 0
      %4854 = vmatpush1.bf16.msra.mxu0 0
      %4855 = vmatprep.subr.bf16.mxu0 0
      %4856 = vmatpush1.bf16.msra.mxu0 0
      %4857 = vmatprep.subr.bf16.mxu0 0
      %4858 = vmatpush1.bf16.msra.mxu0 0
      %4859 = vmatprep.subr.bf16.mxu0 0
      %4860 = vmatpush1.bf16.msra.mxu0 0
      %4861 = vmatprep.subr.bf16.mxu0 0
      %4862 = vmatpush1.bf16.msra.mxu0 0
      %4863 = vmatprep.subr.bf16.mxu0 %v4794
      %4864 = vmatpush1.bf16.msra.mxu0 %v4791
      %4865 = vmatprep.subr.bf16.mxu0 0
      %4866 = vmatpush2.bf16.msra.mxu0 0
      %4867 = vmatprep.subr.bf16.mxu0 0
      %4868 = vmatpush2.bf16.msra.mxu0 0
      %4869 = vmatprep.subr.bf16.mxu0 0
      %4870 = vmatpush2.bf16.msra.mxu0 0
      %4871 = vmatprep.subr.bf16.mxu0 0
      %4872 = vmatpush2.bf16.msra.mxu0 0
      %4873 = vmatprep.subr.bf16.mxu0 0
      %4874 = vmatpush2.bf16.msra.mxu0 0
      %4875 = vmatprep.subr.bf16.mxu0 0
      %4876 = vmatpush2.bf16.msra.mxu0 0
      %4877 = vmatprep.subr.bf16.mxu0 0
      %4878 = vmatpush2.bf16.msra.mxu0 0
      %4879 = vmatprep.subr.bf16.mxu0 0
      %4880 = vmatpush2.bf16.msra.mxu0 0
      %4881 = vmatprep.mubr.bf16.mxu0 0
      %4882 = vmatmul.mubr.bf16.gmra.mxu0 %v4782
      %v4883 = vpop.f32.mrf.mxu0
      %v4884 = vadd.f32 0.0, %v4883
      %v4885 = vpop.f32.mrf.mxu0
      %v4886 = vadd.f32 0.0, %v4885
      %v4887 = vpop.f32.mrf.mxu0
      %v4888 = vpop.f32.mrf.mxu0
      %4889 = vdwg.mxu0
      %4890 = vmatprep.subr.bf16.mxu0 0
      %4891 = vmatpush1.bf16.msra.mxu0 0
      %4892 = vmatprep.subr.bf16.mxu0 0
      %4893 = vmatpush1.bf16.msra.mxu0 0
      %4894 = vmatprep.subr.bf16.mxu0 0
      %4895 = vmatpush1.bf16.msra.mxu0 0
      %4896 = vmatprep.subr.bf16.mxu0 0
      %4897 = vmatpush1.bf16.msra.mxu0 0
      %4898 = vmatprep.subr.bf16.mxu0 0
      %4899 = vmatpush1.bf16.msra.mxu0 0
      %4900 = vmatprep.subr.bf16.mxu0 0
      %4901 = vmatpush1.bf16.msra.mxu0 0
      %4902 = vmatprep.subr.bf16.mxu0 0
      %4903 = vmatpush1.bf16.msra.mxu0 0
      %4904 = vmatprep.subr.bf16.mxu0 %v4800
      %4905 = vmatpush1.bf16.msra.mxu0 %v4797
      %4906 = vmatprep.subr.bf16.mxu0 0
      %4907 = vmatpush2.bf16.msra.mxu0 0
      %4908 = vmatprep.subr.bf16.mxu0 0
      %4909 = vmatpush2.bf16.msra.mxu0 0
      %4910 = vmatprep.subr.bf16.mxu0 0
      %4911 = vmatpush2.bf16.msra.mxu0 0
      %4912 = vmatprep.subr.bf16.mxu0 0
      %4913 = vmatpush2.bf16.msra.mxu0 0
      %4914 = vmatprep.subr.bf16.mxu0 0
      %4915 = vmatpush2.bf16.msra.mxu0 0
      %4916 = vmatprep.subr.bf16.mxu0 0
      %4917 = vmatpush2.bf16.msra.mxu0 0
      %4918 = vmatprep.subr.bf16.mxu0 0
      %4919 = vmatpush2.bf16.msra.mxu0 0
      %4920 = vmatprep.subr.bf16.mxu0 0
      %4921 = vmatpush2.bf16.msra.mxu0 0
      %4922 = vmatprep.mubr.bf16.mxu0 0
      %4923 = vmatmul.mubr.bf16.gmra.mxu0 %v4782
      %v4924 = vpop.f32.mrf.mxu0
      %v4925 = vadd.f32 0.0, %v4924
      %v4926 = vpop.f32.mrf.mxu0
      %v4927 = vadd.f32 0.0, %v4926
      %v4928 = vpop.f32.mrf.mxu0
      %v4929 = vpop.f32.mrf.mxu0
      %4930 = vdwg.mxu0
      %4931 = vmatprep.subr.bf16.mxu0 0
      %4932 = vmatpush1.bf16.msra.mxu0 0
      %4933 = vmatprep.subr.bf16.mxu0 0
      %4934 = vmatpush1.bf16.msra.mxu0 0
      %4935 = vmatprep.subr.bf16.mxu0 0
      %4936 = vmatpush1.bf16.msra.mxu0 0
      %4937 = vmatprep.subr.bf16.mxu0 0
      %4938 = vmatpush1.bf16.msra.mxu0 0
      %4939 = vmatprep.subr.bf16.mxu0 0
      %4940 = vmatpush1.bf16.msra.mxu0 0
      %4941 = vmatprep.subr.bf16.mxu0 0
      %4942 = vmatpush1.bf16.msra.mxu0 0
      %4943 = vmatprep.subr.bf16.mxu0 0
      %4944 = vmatpush1.bf16.msra.mxu0 0
      %4945 = vmatprep.subr.bf16.mxu0 %v4806
      %4946 = vmatpush1.bf16.msra.mxu0 %v4803
      %4947 = vmatprep.subr.bf16.mxu0 0
      %4948 = vmatpush2.bf16.msra.mxu0 0
      %4949 = vmatprep.subr.bf16.mxu0 0
      %4950 = vmatpush2.bf16.msra.mxu0 0
      %4951 = vmatprep.subr.bf16.mxu0 0
      %4952 = vmatpush2.bf16.msra.mxu0 0
      %4953 = vmatprep.subr.bf16.mxu0 0
      %4954 = vmatpush2.bf16.msra.mxu0 0
      %4955 = vmatprep.subr.bf16.mxu0 0
      %4956 = vmatpush2.bf16.msra.mxu0 0
      %4957 = vmatprep.subr.bf16.mxu0 0
      %4958 = vmatpush2.bf16.msra.mxu0 0
      %4959 = vmatprep.subr.bf16.mxu0 0
      %4960 = vmatpush2.bf16.msra.mxu0 0
      %4961 = vmatprep.subr.bf16.mxu0 0
      %4962 = vmatpush2.bf16.msra.mxu0 0
      %4963 = vmatprep.mubr.bf16.mxu0 0
      %4964 = vmatmul.mubr.bf16.gmra.mxu0 %v4782
      %v4965 = vpop.f32.mrf.mxu0
      %v4966 = vadd.f32 0.0, %v4965
      %v4967 = vpop.f32.mrf.mxu0
      %v4968 = vadd.f32 0.0, %v4967
      %v4969 = vpop.f32.mrf.mxu0
      %v4970 = vpop.f32.mrf.mxu0
      %4971 = vdwg.mxu0
      %v4972 = vadd.f32 %v4731, %v4843
      %v4973 = vadd.f32 %v4732, %v4845
      %v4974 = vadd.f32 %v4733, %v4884
      %v4975 = vadd.f32 %v4734, %v4886
      %v4976 = vadd.f32 %v4735, %v4925
      %v4977 = vadd.f32 %v4736, %v4927
      %v4978 = vadd.f32 %v4737, %v4966
      %v4979 = vadd.f32 %v4738, %v4968
      %4980 = vrot.lane.b32.xlu0 %v3551, 97
      %v4981 = vpop.permute.xlu0 %4980
      %4982 = vrot.lane.b32.xlu0 %v3559, 97
      %v4983 = vpop.permute.xlu0 %4982
      %4984 = vrot.lane.b32.xlu0 %v3552, 97
      %v4985 = vpop.permute.xlu0 %4984
      %4986 = vrot.lane.b32.xlu0 %v3560, 97
      %v4987 = vpop.permute.xlu0 %4986
      %4988 = vrot.lane.b32.xlu0 %v3553, 97
      %v4989 = vpop.permute.xlu0 %4988
      %4990 = vrot.lane.b32.xlu0 %v3561, 97
      %v4991 = vpop.permute.xlu0 %4990
      %4992 = vrot.lane.b32.xlu0 %v3554, 97
      %v4993 = vpop.permute.xlu0 %4992
      %4994 = vrot.lane.b32.xlu0 %v3562, 97
      %v4995 = vpop.permute.xlu0 %4994
      %v4996 = vsel %vm2706, %v4993, %v4995
      %v4997 = vsel %vm2706, %v4991, %v4993
      %v4998 = vsel %vm2706, %v4989, %v4991
      %v4999 = vsel %vm2706, %v4987, %v4989
      %v5000 = vsel %vm2706, %v4985, %v4987
      %v5001 = vsel %vm2706, %v4983, %v4985
      %v5002 = vsel %vm2706, %v4981, %v4983
      %v5003 = vsel %vm2706, %v4995, %v4981
      %v5004 = vmul.f32 %v5002, %v2723
      %v5005 = vmul.f32 %v5001, %v2727
      %v5006 = vmul.f32 %v5000, %v2731
      %v5007 = vmul.f32 %v4999, %v2735
      %v5008 = vmul.f32 %v4998, %v2739
      %v5009 = vmul.f32 %v4997, %v2743
      %v5010 = vmul.f32 %v4996, %v2747
      %v5011 = vmul.f32 %v5003, %v2751
      %s5012 = scalar_lea.vmem %s6, 12
      %v5013 = vld [vmem:[%s5012] sm:$0x3]
      %v5014 = vpack.c.bf16 %v5004, %v5004
      %v5015 = vpack.c.bf16 %v5005, %v5005
      %v5016 = vpack.c.bf16 %v5006, %v5006
      %v5017 = vpack.c.bf16 %v5007, %v5007
      %v5018 = vpack.c.bf16 %v5008, %v5008
      %v5019 = vpack.c.bf16 %v5009, %v5009
      %v5020 = vpack.c.bf16 %v5010, %v5010
      %v5021 = vpack.c.bf16 %v5011, %v5011
      %v5023 = vsel %vm1236, %v5013, 0
      %v5026 = vsel %vm1240, %v5014, 0
      %v5029 = vsel %vm1240, %v5015, 0
      %v5032 = vsel %vm1240, %v5016, 0
      %v5035 = vsel %vm1240, %v5017, 0
      %v5038 = vsel %vm1240, %v5018, 0
      %v5041 = vsel %vm1240, %v5019, 0
      %v5044 = vsel %vm1240, %v5020, 0
      %v5047 = vsel %vm1240, %v5021, 0
      %5049 = vmatprep.subr.bf16.mxu0 0
      %5050 = vmatpush1.bf16.msra.mxu0 0
      %5051 = vmatprep.subr.bf16.mxu0 0
      %5052 = vmatpush1.bf16.msra.mxu0 0
      %5053 = vmatprep.subr.bf16.mxu0 0
      %5054 = vmatpush1.bf16.msra.mxu0 0
      %5055 = vmatprep.subr.bf16.mxu0 0
      %5056 = vmatpush1.bf16.msra.mxu0 0
      %5057 = vmatprep.subr.bf16.mxu0 0
      %5058 = vmatpush1.bf16.msra.mxu0 0
      %5059 = vmatprep.subr.bf16.mxu0 0
      %5060 = vmatpush1.bf16.msra.mxu0 0
      %5061 = vmatprep.subr.bf16.mxu0 0
      %5062 = vmatpush1.bf16.msra.mxu0 0
      %5063 = vmatprep.subr.bf16.mxu0 %v5029
      %5064 = vmatpush1.bf16.msra.mxu0 %v5026
      %5065 = vmatprep.subr.bf16.mxu0 0
      %5066 = vmatpush2.bf16.msra.mxu0 0
      %5067 = vmatprep.subr.bf16.mxu0 0
      %5068 = vmatpush2.bf16.msra.mxu0 0
      %5069 = vmatprep.subr.bf16.mxu0 0
      %5070 = vmatpush2.bf16.msra.mxu0 0
      %5071 = vmatprep.subr.bf16.mxu0 0
      %5072 = vmatpush2.bf16.msra.mxu0 0
      %5073 = vmatprep.subr.bf16.mxu0 0
      %5074 = vmatpush2.bf16.msra.mxu0 0
      %5075 = vmatprep.subr.bf16.mxu0 0
      %5076 = vmatpush2.bf16.msra.mxu0 0
      %5077 = vmatprep.subr.bf16.mxu0 0
      %5078 = vmatpush2.bf16.msra.mxu0 0
      %5079 = vmatprep.subr.bf16.mxu0 0
      %5080 = vmatpush2.bf16.msra.mxu0 0
      %5081 = vmatprep.mubr.bf16.mxu0 0
      %5082 = vmatmul.mubr.bf16.gmra.mxu0 %v5023
      %v5083 = vpop.f32.mrf.mxu0
      %v5084 = vadd.f32 0.0, %v5083
      %v5085 = vpop.f32.mrf.mxu0
      %v5086 = vadd.f32 0.0, %v5085
      %v5087 = vpop.f32.mrf.mxu0
      %v5088 = vpop.f32.mrf.mxu0
      %5089 = vdwg.mxu0
      %5090 = vmatprep.subr.bf16.mxu0 0
      %5091 = vmatpush1.bf16.msra.mxu0 0
      %5092 = vmatprep.subr.bf16.mxu0 0
      %5093 = vmatpush1.bf16.msra.mxu0 0
      %5094 = vmatprep.subr.bf16.mxu0 0
      %5095 = vmatpush1.bf16.msra.mxu0 0
      %5096 = vmatprep.subr.bf16.mxu0 0
      %5097 = vmatpush1.bf16.msra.mxu0 0
      %5098 = vmatprep.subr.bf16.mxu0 0
      %5099 = vmatpush1.bf16.msra.mxu0 0
      %5100 = vmatprep.subr.bf16.mxu0 0
      %5101 = vmatpush1.bf16.msra.mxu0 0
      %5102 = vmatprep.subr.bf16.mxu0 0
      %5103 = vmatpush1.bf16.msra.mxu0 0
      %5104 = vmatprep.subr.bf16.mxu0 %v5035
      %5105 = vmatpush1.bf16.msra.mxu0 %v5032
      %5106 = vmatprep.subr.bf16.mxu0 0
      %5107 = vmatpush2.bf16.msra.mxu0 0
      %5108 = vmatprep.subr.bf16.mxu0 0
      %5109 = vmatpush2.bf16.msra.mxu0 0
      %5110 = vmatprep.subr.bf16.mxu0 0
      %5111 = vmatpush2.bf16.msra.mxu0 0
      %5112 = vmatprep.subr.bf16.mxu0 0
      %5113 = vmatpush2.bf16.msra.mxu0 0
      %5114 = vmatprep.subr.bf16.mxu0 0
      %5115 = vmatpush2.bf16.msra.mxu0 0
      %5116 = vmatprep.subr.bf16.mxu0 0
      %5117 = vmatpush2.bf16.msra.mxu0 0
      %5118 = vmatprep.subr.bf16.mxu0 0
      %5119 = vmatpush2.bf16.msra.mxu0 0
      %5120 = vmatprep.subr.bf16.mxu0 0
      %5121 = vmatpush2.bf16.msra.mxu0 0
      %5122 = vmatprep.mubr.bf16.mxu0 0
      %5123 = vmatmul.mubr.bf16.gmra.mxu0 %v5023
      %v5124 = vpop.f32.mrf.mxu0
      %v5125 = vadd.f32 0.0, %v5124
      %v5126 = vpop.f32.mrf.mxu0
      %v5127 = vadd.f32 0.0, %v5126
      %v5128 = vpop.f32.mrf.mxu0
      %v5129 = vpop.f32.mrf.mxu0
      %5130 = vdwg.mxu0
      %5131 = vmatprep.subr.bf16.mxu0 0
      %5132 = vmatpush1.bf16.msra.mxu0 0
      %5133 = vmatprep.subr.bf16.mxu0 0
      %5134 = vmatpush1.bf16.msra.mxu0 0
      %5135 = vmatprep.subr.bf16.mxu0 0
      %5136 = vmatpush1.bf16.msra.mxu0 0
      %5137 = vmatprep.subr.bf16.mxu0 0
      %5138 = vmatpush1.bf16.msra.mxu0 0
      %5139 = vmatprep.subr.bf16.mxu0 0
      %5140 = vmatpush1.bf16.msra.mxu0 0
      %5141 = vmatprep.subr.bf16.mxu0 0
      %5142 = vmatpush1.bf16.msra.mxu0 0
      %5143 = vmatprep.subr.bf16.mxu0 0
      %5144 = vmatpush1.bf16.msra.mxu0 0
      %5145 = vmatprep.subr.bf16.mxu0 %v5041
      %5146 = vmatpush1.bf16.msra.mxu0 %v5038
      %5147 = vmatprep.subr.bf16.mxu0 0
      %5148 = vmatpush2.bf16.msra.mxu0 0
      %5149 = vmatprep.subr.bf16.mxu0 0
      %5150 = vmatpush2.bf16.msra.mxu0 0
      %5151 = vmatprep.subr.bf16.mxu0 0
      %5152 = vmatpush2.bf16.msra.mxu0 0
      %5153 = vmatprep.subr.bf16.mxu0 0
      %5154 = vmatpush2.bf16.msra.mxu0 0
      %5155 = vmatprep.subr.bf16.mxu0 0
      %5156 = vmatpush2.bf16.msra.mxu0 0
      %5157 = vmatprep.subr.bf16.mxu0 0
      %5158 = vmatpush2.bf16.msra.mxu0 0
      %5159 = vmatprep.subr.bf16.mxu0 0
      %5160 = vmatpush2.bf16.msra.mxu0 0
      %5161 = vmatprep.subr.bf16.mxu0 0
      %5162 = vmatpush2.bf16.msra.mxu0 0
      %5163 = vmatprep.mubr.bf16.mxu0 0
      %5164 = vmatmul.mubr.bf16.gmra.mxu0 %v5023
      %v5165 = vpop.f32.mrf.mxu0
      %v5166 = vadd.f32 0.0, %v5165
      %v5167 = vpop.f32.mrf.mxu0
      %v5168 = vadd.f32 0.0, %v5167
      %v5169 = vpop.f32.mrf.mxu0
      %v5170 = vpop.f32.mrf.mxu0
      %5171 = vdwg.mxu0
      %5172 = vmatprep.subr.bf16.mxu0 0
      %5173 = vmatpush1.bf16.msra.mxu0 0
      %5174 = vmatprep.subr.bf16.mxu0 0
      %5175 = vmatpush1.bf16.msra.mxu0 0
      %5176 = vmatprep.subr.bf16.mxu0 0
      %5177 = vmatpush1.bf16.msra.mxu0 0
      %5178 = vmatprep.subr.bf16.mxu0 0
      %5179 = vmatpush1.bf16.msra.mxu0 0
      %5180 = vmatprep.subr.bf16.mxu0 0
      %5181 = vmatpush1.bf16.msra.mxu0 0
      %5182 = vmatprep.subr.bf16.mxu0 0
      %5183 = vmatpush1.bf16.msra.mxu0 0
      %5184 = vmatprep.subr.bf16.mxu0 0
      %5185 = vmatpush1.bf16.msra.mxu0 0
      %5186 = vmatprep.subr.bf16.mxu0 %v5047
      %5187 = vmatpush1.bf16.msra.mxu0 %v5044
      %5188 = vmatprep.subr.bf16.mxu0 0
      %5189 = vmatpush2.bf16.msra.mxu0 0
      %5190 = vmatprep.subr.bf16.mxu0 0
      %5191 = vmatpush2.bf16.msra.mxu0 0
      %5192 = vmatprep.subr.bf16.mxu0 0
      %5193 = vmatpush2.bf16.msra.mxu0 0
      %5194 = vmatprep.subr.bf16.mxu0 0
      %5195 = vmatpush2.bf16.msra.mxu0 0
      %5196 = vmatprep.subr.bf16.mxu0 0
      %5197 = vmatpush2.bf16.msra.mxu0 0
      %5198 = vmatprep.subr.bf16.mxu0 0
      %5199 = vmatpush2.bf16.msra.mxu0 0
      %5200 = vmatprep.subr.bf16.mxu0 0
      %5201 = vmatpush2.bf16.msra.mxu0 0
      %5202 = vmatprep.subr.bf16.mxu0 0
      %5203 = vmatpush2.bf16.msra.mxu0 0
      %5204 = vmatprep.mubr.bf16.mxu0 0
      %5205 = vmatmul.mubr.bf16.gmra.mxu0 %v5023
      %v5206 = vpop.f32.mrf.mxu0
      %v5207 = vadd.f32 0.0, %v5206
      %v5208 = vpop.f32.mrf.mxu0
      %v5209 = vadd.f32 0.0, %v5208
      %v5210 = vpop.f32.mrf.mxu0
      %v5211 = vpop.f32.mrf.mxu0
      %5212 = vdwg.mxu0
      %v5213 = vadd.f32 %v4972, %v5084
      %v5214 = vadd.f32 %v4973, %v5086
      %v5215 = vadd.f32 %v4974, %v5125
      %v5216 = vadd.f32 %v4975, %v5127
      %v5217 = vadd.f32 %v4976, %v5166
      %v5218 = vadd.f32 %v4977, %v5168
      %v5219 = vadd.f32 %v4978, %v5207
      %v5220 = vadd.f32 %v4979, %v5209
      %5221 = vrot.lane.b32.xlu0 %v3551, 96
      %v5222 = vpop.permute.xlu0 %5221
      %5223 = vrot.lane.b32.xlu0 %v3559, 96
      %v5224 = vpop.permute.xlu0 %5223
      %5225 = vrot.lane.b32.xlu0 %v3552, 96
      %v5226 = vpop.permute.xlu0 %5225
      %5227 = vrot.lane.b32.xlu0 %v3560, 96
      %v5228 = vpop.permute.xlu0 %5227
      %5229 = vrot.lane.b32.xlu0 %v3553, 96
      %v5230 = vpop.permute.xlu0 %5229
      %5231 = vrot.lane.b32.xlu0 %v3561, 96
      %v5232 = vpop.permute.xlu0 %5231
      %5233 = vrot.lane.b32.xlu0 %v3554, 96
      %v5234 = vpop.permute.xlu0 %5233
      %5235 = vrot.lane.b32.xlu0 %v3562, 96
      %v5236 = vpop.permute.xlu0 %5235
      %v5237 = vsel %vm2993, %v5234, %v5236
      %v5238 = vsel %vm2993, %v5232, %v5234
      %v5239 = vsel %vm2993, %v5230, %v5232
      %v5240 = vsel %vm2993, %v5228, %v5230
      %v5241 = vsel %vm2993, %v5226, %v5228
      %v5242 = vsel %vm2993, %v5224, %v5226
      %v5243 = vsel %vm2993, %v5222, %v5224
      %v5244 = vsel %vm2993, %v5236, %v5222
      %v5245 = vmul.f32 %v5243, %v3010
      %v5246 = vmul.f32 %v5242, %v3014
      %v5247 = vmul.f32 %v5241, %v3018
      %v5248 = vmul.f32 %v5240, %v3022
      %v5249 = vmul.f32 %v5239, %v3026
      %v5250 = vmul.f32 %v5238, %v3030
      %v5251 = vmul.f32 %v5237, %v3034
      %v5252 = vmul.f32 %v5244, %v3038
      %s5253 = scalar_lea.vmem %s6, 14
      %v5254 = vld [vmem:[%s5253] sm:$0x3]
      %v5255 = vpack.c.bf16 %v5245, %v5245
      %v5256 = vpack.c.bf16 %v5246, %v5246
      %v5257 = vpack.c.bf16 %v5247, %v5247
      %v5258 = vpack.c.bf16 %v5248, %v5248
      %v5259 = vpack.c.bf16 %v5249, %v5249
      %v5260 = vpack.c.bf16 %v5250, %v5250
      %v5261 = vpack.c.bf16 %v5251, %v5251
      %v5262 = vpack.c.bf16 %v5252, %v5252
      %v5264 = vsel %vm1236, %v5254, 0
      %v5267 = vsel %vm1240, %v5255, 0
      %v5270 = vsel %vm1240, %v5256, 0
      %v5273 = vsel %vm1240, %v5257, 0
      %v5276 = vsel %vm1240, %v5258, 0
      %v5279 = vsel %vm1240, %v5259, 0
      %v5282 = vsel %vm1240, %v5260, 0
      %v5285 = vsel %vm1240, %v5261, 0
      %v5288 = vsel %vm1240, %v5262, 0
      %5290 = vmatprep.subr.bf16.mxu0 0
      %5291 = vmatpush1.bf16.msra.mxu0 0
      %5292 = vmatprep.subr.bf16.mxu0 0
      %5293 = vmatpush1.bf16.msra.mxu0 0
      %5294 = vmatprep.subr.bf16.mxu0 0
      %5295 = vmatpush1.bf16.msra.mxu0 0
      %5296 = vmatprep.subr.bf16.mxu0 0
      %5297 = vmatpush1.bf16.msra.mxu0 0
      %5298 = vmatprep.subr.bf16.mxu0 0
      %5299 = vmatpush1.bf16.msra.mxu0 0
      %5300 = vmatprep.subr.bf16.mxu0 0
      %5301 = vmatpush1.bf16.msra.mxu0 0
      %5302 = vmatprep.subr.bf16.mxu0 0
      %5303 = vmatpush1.bf16.msra.mxu0 0
      %5304 = vmatprep.subr.bf16.mxu0 %v5270
      %5305 = vmatpush1.bf16.msra.mxu0 %v5267
      %5306 = vmatprep.subr.bf16.mxu0 0
      %5307 = vmatpush2.bf16.msra.mxu0 0
      %5308 = vmatprep.subr.bf16.mxu0 0
      %5309 = vmatpush2.bf16.msra.mxu0 0
      %5310 = vmatprep.subr.bf16.mxu0 0
      %5311 = vmatpush2.bf16.msra.mxu0 0
      %5312 = vmatprep.subr.bf16.mxu0 0
      %5313 = vmatpush2.bf16.msra.mxu0 0
      %5314 = vmatprep.subr.bf16.mxu0 0
      %5315 = vmatpush2.bf16.msra.mxu0 0
      %5316 = vmatprep.subr.bf16.mxu0 0
      %5317 = vmatpush2.bf16.msra.mxu0 0
      %5318 = vmatprep.subr.bf16.mxu0 0
      %5319 = vmatpush2.bf16.msra.mxu0 0
      %5320 = vmatprep.subr.bf16.mxu0 0
      %5321 = vmatpush2.bf16.msra.mxu0 0
      %5322 = vmatprep.mubr.bf16.mxu0 0
      %5323 = vmatmul.mubr.bf16.gmra.mxu0 %v5264
      %v5324 = vpop.f32.mrf.mxu0
      %v5325 = vadd.f32 0.0, %v5324
      %v5326 = vpop.f32.mrf.mxu0
      %v5327 = vadd.f32 0.0, %v5326
      %v5328 = vpop.f32.mrf.mxu0
      %v5329 = vpop.f32.mrf.mxu0
      %5330 = vdwg.mxu0
      %5331 = vmatprep.subr.bf16.mxu0 0
      %5332 = vmatpush1.bf16.msra.mxu0 0
      %5333 = vmatprep.subr.bf16.mxu0 0
      %5334 = vmatpush1.bf16.msra.mxu0 0
      %5335 = vmatprep.subr.bf16.mxu0 0
      %5336 = vmatpush1.bf16.msra.mxu0 0
      %5337 = vmatprep.subr.bf16.mxu0 0
      %5338 = vmatpush1.bf16.msra.mxu0 0
      %5339 = vmatprep.subr.bf16.mxu0 0
      %5340 = vmatpush1.bf16.msra.mxu0 0
      %5341 = vmatprep.subr.bf16.mxu0 0
      %5342 = vmatpush1.bf16.msra.mxu0 0
      %5343 = vmatprep.subr.bf16.mxu0 0
      %5344 = vmatpush1.bf16.msra.mxu0 0
      %5345 = vmatprep.subr.bf16.mxu0 %v5276
      %5346 = vmatpush1.bf16.msra.mxu0 %v5273
      %5347 = vmatprep.subr.bf16.mxu0 0
      %5348 = vmatpush2.bf16.msra.mxu0 0
      %5349 = vmatprep.subr.bf16.mxu0 0
      %5350 = vmatpush2.bf16.msra.mxu0 0
      %5351 = vmatprep.subr.bf16.mxu0 0
      %5352 = vmatpush2.bf16.msra.mxu0 0
      %5353 = vmatprep.subr.bf16.mxu0 0
      %5354 = vmatpush2.bf16.msra.mxu0 0
      %5355 = vmatprep.subr.bf16.mxu0 0
      %5356 = vmatpush2.bf16.msra.mxu0 0
      %5357 = vmatprep.subr.bf16.mxu0 0
      %5358 = vmatpush2.bf16.msra.mxu0 0
      %5359 = vmatprep.subr.bf16.mxu0 0
      %5360 = vmatpush2.bf16.msra.mxu0 0
      %5361 = vmatprep.subr.bf16.mxu0 0
      %5362 = vmatpush2.bf16.msra.mxu0 0
      %5363 = vmatprep.mubr.bf16.mxu0 0
      %5364 = vmatmul.mubr.bf16.gmra.mxu0 %v5264
      %v5365 = vpop.f32.mrf.mxu0
      %v5366 = vadd.f32 0.0, %v5365
      %v5367 = vpop.f32.mrf.mxu0
      %v5368 = vadd.f32 0.0, %v5367
      %v5369 = vpop.f32.mrf.mxu0
      %v5370 = vpop.f32.mrf.mxu0
      %5371 = vdwg.mxu0
      %5372 = vmatprep.subr.bf16.mxu0 0
      %5373 = vmatpush1.bf16.msra.mxu0 0
      %5374 = vmatprep.subr.bf16.mxu0 0
      %5375 = vmatpush1.bf16.msra.mxu0 0
      %5376 = vmatprep.subr.bf16.mxu0 0
      %5377 = vmatpush1.bf16.msra.mxu0 0
      %5378 = vmatprep.subr.bf16.mxu0 0
      %5379 = vmatpush1.bf16.msra.mxu0 0
      %5380 = vmatprep.subr.bf16.mxu0 0
      %5381 = vmatpush1.bf16.msra.mxu0 0
      %5382 = vmatprep.subr.bf16.mxu0 0
      %5383 = vmatpush1.bf16.msra.mxu0 0
      %5384 = vmatprep.subr.bf16.mxu0 0
      %5385 = vmatpush1.bf16.msra.mxu0 0
      %5386 = vmatprep.subr.bf16.mxu0 %v5282
      %5387 = vmatpush1.bf16.msra.mxu0 %v5279
      %5388 = vmatprep.subr.bf16.mxu0 0
      %5389 = vmatpush2.bf16.msra.mxu0 0
      %5390 = vmatprep.subr.bf16.mxu0 0
      %5391 = vmatpush2.bf16.msra.mxu0 0
      %5392 = vmatprep.subr.bf16.mxu0 0
      %5393 = vmatpush2.bf16.msra.mxu0 0
      %5394 = vmatprep.subr.bf16.mxu0 0
      %5395 = vmatpush2.bf16.msra.mxu0 0
      %5396 = vmatprep.subr.bf16.mxu0 0
      %5397 = vmatpush2.bf16.msra.mxu0 0
      %5398 = vmatprep.subr.bf16.mxu0 0
      %5399 = vmatpush2.bf16.msra.mxu0 0
      %5400 = vmatprep.subr.bf16.mxu0 0
      %5401 = vmatpush2.bf16.msra.mxu0 0
      %5402 = vmatprep.subr.bf16.mxu0 0
      %5403 = vmatpush2.bf16.msra.mxu0 0
      %5404 = vmatprep.mubr.bf16.mxu0 0
      %5405 = vmatmul.mubr.bf16.gmra.mxu0 %v5264
      %v5406 = vpop.f32.mrf.mxu0
      %v5407 = vadd.f32 0.0, %v5406
      %v5408 = vpop.f32.mrf.mxu0
      %v5409 = vadd.f32 0.0, %v5408
      %v5410 = vpop.f32.mrf.mxu0
      %v5411 = vpop.f32.mrf.mxu0
      %5412 = vdwg.mxu0
      %5413 = vmatprep.subr.bf16.mxu0 0
      %5414 = vmatpush1.bf16.msra.mxu0 0
      %5415 = vmatprep.subr.bf16.mxu0 0
      %5416 = vmatpush1.bf16.msra.mxu0 0
      %5417 = vmatprep.subr.bf16.mxu0 0
      %5418 = vmatpush1.bf16.msra.mxu0 0
      %5419 = vmatprep.subr.bf16.mxu0 0
      %5420 = vmatpush1.bf16.msra.mxu0 0
      %5421 = vmatprep.subr.bf16.mxu0 0
      %5422 = vmatpush1.bf16.msra.mxu0 0
      %5423 = vmatprep.subr.bf16.mxu0 0
      %5424 = vmatpush1.bf16.msra.mxu0 0
      %5425 = vmatprep.subr.bf16.mxu0 0
      %5426 = vmatpush1.bf16.msra.mxu0 0
      %5427 = vmatprep.subr.bf16.mxu0 %v5288
      %5428 = vmatpush1.bf16.msra.mxu0 %v5285
      %5429 = vmatprep.subr.bf16.mxu0 0
      %5430 = vmatpush2.bf16.msra.mxu0 0
      %5431 = vmatprep.subr.bf16.mxu0 0
      %5432 = vmatpush2.bf16.msra.mxu0 0
      %5433 = vmatprep.subr.bf16.mxu0 0
      %5434 = vmatpush2.bf16.msra.mxu0 0
      %5435 = vmatprep.subr.bf16.mxu0 0
      %5436 = vmatpush2.bf16.msra.mxu0 0
      %5437 = vmatprep.subr.bf16.mxu0 0
      %5438 = vmatpush2.bf16.msra.mxu0 0
      %5439 = vmatprep.subr.bf16.mxu0 0
      %5440 = vmatpush2.bf16.msra.mxu0 0
      %5441 = vmatprep.subr.bf16.mxu0 0
      %5442 = vmatpush2.bf16.msra.mxu0 0
      %5443 = vmatprep.subr.bf16.mxu0 0
      %5444 = vmatpush2.bf16.msra.mxu0 0
      %5445 = vmatprep.mubr.bf16.mxu0 0
      %5446 = vmatmul.mubr.bf16.gmra.mxu0 %v5264
      %v5447 = vpop.f32.mrf.mxu0
      %v5448 = vadd.f32 0.0, %v5447
      %v5449 = vpop.f32.mrf.mxu0
      %v5450 = vadd.f32 0.0, %v5449
      %v5451 = vpop.f32.mrf.mxu0
      %v5452 = vpop.f32.mrf.mxu0
      %5453 = vdwg.mxu0
      %v5454 = vadd.f32 %v5213, %v5325
      %v5455 = vadd.f32 %v5214, %v5327
      %v5456 = vadd.f32 %v5215, %v5366
      %v5457 = vadd.f32 %v5216, %v5368
      %v5458 = vadd.f32 %v5217, %v5407
      %v5459 = vadd.f32 %v5218, %v5409
      %v5460 = vadd.f32 %v5219, %v5448
      %v5461 = vadd.f32 %v5220, %v5450
      %5462 = vrot.lane.b32.xlu0 %v3551, 95
      %v5463 = vpop.permute.xlu0 %5462
      %5464 = vrot.lane.b32.xlu0 %v3559, 95
      %v5465 = vpop.permute.xlu0 %5464
      %5466 = vrot.lane.b32.xlu0 %v3552, 95
      %v5467 = vpop.permute.xlu0 %5466
      %5468 = vrot.lane.b32.xlu0 %v3560, 95
      %v5469 = vpop.permute.xlu0 %5468
      %5470 = vrot.lane.b32.xlu0 %v3553, 95
      %v5471 = vpop.permute.xlu0 %5470
      %5472 = vrot.lane.b32.xlu0 %v3561, 95
      %v5473 = vpop.permute.xlu0 %5472
      %5474 = vrot.lane.b32.xlu0 %v3554, 95
      %v5475 = vpop.permute.xlu0 %5474
      %5476 = vrot.lane.b32.xlu0 %v3562, 95
      %v5477 = vpop.permute.xlu0 %5476
      %v5478 = vsel %vm3280, %v5475, %v5477
      %v5479 = vsel %vm3280, %v5473, %v5475
      %v5480 = vsel %vm3280, %v5471, %v5473
      %v5481 = vsel %vm3280, %v5469, %v5471
      %v5482 = vsel %vm3280, %v5467, %v5469
      %v5483 = vsel %vm3280, %v5465, %v5467
      %v5484 = vsel %vm3280, %v5463, %v5465
      %v5485 = vsel %vm3280, %v5477, %v5463
      %v5486 = vmul.f32 %v5484, %v3297
      %v5487 = vmul.f32 %v5483, %v3301
      %v5488 = vmul.f32 %v5482, %v3305
      %v5489 = vmul.f32 %v5481, %v3309
      %v5490 = vmul.f32 %v5480, %v3313
      %v5491 = vmul.f32 %v5479, %v3317
      %v5492 = vmul.f32 %v5478, %v3321
      %v5493 = vmul.f32 %v5485, %v3325
      %s5494 = scalar_lea.vmem %s6, 16
      %v5495 = vld [vmem:[%s5494] sm:$0x3]
      %v5496 = vpack.c.bf16 %v5486, %v5486
      %v5497 = vpack.c.bf16 %v5487, %v5487
      %v5498 = vpack.c.bf16 %v5488, %v5488
      %v5499 = vpack.c.bf16 %v5489, %v5489
      %v5500 = vpack.c.bf16 %v5490, %v5490
      %v5501 = vpack.c.bf16 %v5491, %v5491
      %v5502 = vpack.c.bf16 %v5492, %v5492
      %v5503 = vpack.c.bf16 %v5493, %v5493
      %v5505 = vsel %vm1236, %v5495, 0
      %v5508 = vsel %vm1240, %v5496, 0
      %v5511 = vsel %vm1240, %v5497, 0
      %v5514 = vsel %vm1240, %v5498, 0
      %v5517 = vsel %vm1240, %v5499, 0
      %v5520 = vsel %vm1240, %v5500, 0
      %v5523 = vsel %vm1240, %v5501, 0
      %v5526 = vsel %vm1240, %v5502, 0
      %v5529 = vsel %vm1240, %v5503, 0
      %5531 = vmatprep.subr.bf16.mxu0 0
      %5532 = vmatpush1.bf16.msra.mxu0 0
      %5533 = vmatprep.subr.bf16.mxu0 0
      %5534 = vmatpush1.bf16.msra.mxu0 0
      %5535 = vmatprep.subr.bf16.mxu0 0
      %5536 = vmatpush1.bf16.msra.mxu0 0
      %5537 = vmatprep.subr.bf16.mxu0 0
      %5538 = vmatpush1.bf16.msra.mxu0 0
      %5539 = vmatprep.subr.bf16.mxu0 0
      %5540 = vmatpush1.bf16.msra.mxu0 0
      %5541 = vmatprep.subr.bf16.mxu0 0
      %5542 = vmatpush1.bf16.msra.mxu0 0
      %5543 = vmatprep.subr.bf16.mxu0 0
      %5544 = vmatpush1.bf16.msra.mxu0 0
      %5545 = vmatprep.subr.bf16.mxu0 %v5511
      %5546 = vmatpush1.bf16.msra.mxu0 %v5508
      %5547 = vmatprep.subr.bf16.mxu0 0
      %5548 = vmatpush2.bf16.msra.mxu0 0
      %5549 = vmatprep.subr.bf16.mxu0 0
      %5550 = vmatpush2.bf16.msra.mxu0 0
      %5551 = vmatprep.subr.bf16.mxu0 0
      %5552 = vmatpush2.bf16.msra.mxu0 0
      %5553 = vmatprep.subr.bf16.mxu0 0
      %5554 = vmatpush2.bf16.msra.mxu0 0
      %5555 = vmatprep.subr.bf16.mxu0 0
      %5556 = vmatpush2.bf16.msra.mxu0 0
      %5557 = vmatprep.subr.bf16.mxu0 0
      %5558 = vmatpush2.bf16.msra.mxu0 0
      %5559 = vmatprep.subr.bf16.mxu0 0
      %5560 = vmatpush2.bf16.msra.mxu0 0
      %5561 = vmatprep.subr.bf16.mxu0 0
      %5562 = vmatpush2.bf16.msra.mxu0 0
      %5563 = vmatprep.mubr.bf16.mxu0 0
      %5564 = vmatmul.mubr.bf16.gmra.mxu0 %v5505
      %v5565 = vpop.f32.mrf.mxu0
      %v5566 = vadd.f32 0.0, %v5565
      %v5567 = vpop.f32.mrf.mxu0
      %v5568 = vadd.f32 0.0, %v5567
      %v5569 = vpop.f32.mrf.mxu0
      %v5570 = vpop.f32.mrf.mxu0
      %5571 = vdwg.mxu0
      %5572 = vmatprep.subr.bf16.mxu0 0
      %5573 = vmatpush1.bf16.msra.mxu0 0
      %5574 = vmatprep.subr.bf16.mxu0 0
      %5575 = vmatpush1.bf16.msra.mxu0 0
      %5576 = vmatprep.subr.bf16.mxu0 0
      %5577 = vmatpush1.bf16.msra.mxu0 0
      %5578 = vmatprep.subr.bf16.mxu0 0
      %5579 = vmatpush1.bf16.msra.mxu0 0
      %5580 = vmatprep.subr.bf16.mxu0 0
      %5581 = vmatpush1.bf16.msra.mxu0 0
      %5582 = vmatprep.subr.bf16.mxu0 0
      %5583 = vmatpush1.bf16.msra.mxu0 0
      %5584 = vmatprep.subr.bf16.mxu0 0
      %5585 = vmatpush1.bf16.msra.mxu0 0
      %5586 = vmatprep.subr.bf16.mxu0 %v5517
      %5587 = vmatpush1.bf16.msra.mxu0 %v5514
      %5588 = vmatprep.subr.bf16.mxu0 0
      %5589 = vmatpush2.bf16.msra.mxu0 0
      %5590 = vmatprep.subr.bf16.mxu0 0
      %5591 = vmatpush2.bf16.msra.mxu0 0
      %5592 = vmatprep.subr.bf16.mxu0 0
      %5593 = vmatpush2.bf16.msra.mxu0 0
      %5594 = vmatprep.subr.bf16.mxu0 0
      %5595 = vmatpush2.bf16.msra.mxu0 0
      %5596 = vmatprep.subr.bf16.mxu0 0
      %5597 = vmatpush2.bf16.msra.mxu0 0
      %5598 = vmatprep.subr.bf16.mxu0 0
      %5599 = vmatpush2.bf16.msra.mxu0 0
      %5600 = vmatprep.subr.bf16.mxu0 0
      %5601 = vmatpush2.bf16.msra.mxu0 0
      %5602 = vmatprep.subr.bf16.mxu0 0
      %5603 = vmatpush2.bf16.msra.mxu0 0
      %5604 = vmatprep.mubr.bf16.mxu0 0
      %5605 = vmatmul.mubr.bf16.gmra.mxu0 %v5505
      %v5606 = vpop.f32.mrf.mxu0
      %v5607 = vadd.f32 0.0, %v5606
      %v5608 = vpop.f32.mrf.mxu0
      %v5609 = vadd.f32 0.0, %v5608
      %v5610 = vpop.f32.mrf.mxu0
      %v5611 = vpop.f32.mrf.mxu0
      %5612 = vdwg.mxu0
      %5613 = vmatprep.subr.bf16.mxu0 0
      %5614 = vmatpush1.bf16.msra.mxu0 0
      %5615 = vmatprep.subr.bf16.mxu0 0
      %5616 = vmatpush1.bf16.msra.mxu0 0
      %5617 = vmatprep.subr.bf16.mxu0 0
      %5618 = vmatpush1.bf16.msra.mxu0 0
      %5619 = vmatprep.subr.bf16.mxu0 0
      %5620 = vmatpush1.bf16.msra.mxu0 0
      %5621 = vmatprep.subr.bf16.mxu0 0
      %5622 = vmatpush1.bf16.msra.mxu0 0
      %5623 = vmatprep.subr.bf16.mxu0 0
      %5624 = vmatpush1.bf16.msra.mxu0 0
      %5625 = vmatprep.subr.bf16.mxu0 0
      %5626 = vmatpush1.bf16.msra.mxu0 0
      %5627 = vmatprep.subr.bf16.mxu0 %v5523
      %5628 = vmatpush1.bf16.msra.mxu0 %v5520
      %5629 = vmatprep.subr.bf16.mxu0 0
      %5630 = vmatpush2.bf16.msra.mxu0 0
      %5631 = vmatprep.subr.bf16.mxu0 0
      %5632 = vmatpush2.bf16.msra.mxu0 0
      %5633 = vmatprep.subr.bf16.mxu0 0
      %5634 = vmatpush2.bf16.msra.mxu0 0
      %5635 = vmatprep.subr.bf16.mxu0 0
      %5636 = vmatpush2.bf16.msra.mxu0 0
      %5637 = vmatprep.subr.bf16.mxu0 0
      %5638 = vmatpush2.bf16.msra.mxu0 0
      %5639 = vmatprep.subr.bf16.mxu0 0
      %5640 = vmatpush2.bf16.msra.mxu0 0
      %5641 = vmatprep.subr.bf16.mxu0 0
      %5642 = vmatpush2.bf16.msra.mxu0 0
      %5643 = vmatprep.subr.bf16.mxu0 0
      %5644 = vmatpush2.bf16.msra.mxu0 0
      %5645 = vmatprep.mubr.bf16.mxu0 0
      %5646 = vmatmul.mubr.bf16.gmra.mxu0 %v5505
      %v5647 = vpop.f32.mrf.mxu0
      %v5648 = vadd.f32 0.0, %v5647
      %v5649 = vpop.f32.mrf.mxu0
      %v5650 = vadd.f32 0.0, %v5649
      %v5651 = vpop.f32.mrf.mxu0
      %v5652 = vpop.f32.mrf.mxu0
      %5653 = vdwg.mxu0
      %5654 = vmatprep.subr.bf16.mxu0 0
      %5655 = vmatpush1.bf16.msra.mxu0 0
      %5656 = vmatprep.subr.bf16.mxu0 0
      %5657 = vmatpush1.bf16.msra.mxu0 0
      %5658 = vmatprep.subr.bf16.mxu0 0
      %5659 = vmatpush1.bf16.msra.mxu0 0
      %5660 = vmatprep.subr.bf16.mxu0 0
      %5661 = vmatpush1.bf16.msra.mxu0 0
      %5662 = vmatprep.subr.bf16.mxu0 0
      %5663 = vmatpush1.bf16.msra.mxu0 0
      %5664 = vmatprep.subr.bf16.mxu0 0
      %5665 = vmatpush1.bf16.msra.mxu0 0
      %5666 = vmatprep.subr.bf16.mxu0 0
      %5667 = vmatpush1.bf16.msra.mxu0 0
      %5668 = vmatprep.subr.bf16.mxu0 %v5529
      %5669 = vmatpush1.bf16.msra.mxu0 %v5526
      %5670 = vmatprep.subr.bf16.mxu0 0
      %5671 = vmatpush2.bf16.msra.mxu0 0
      %5672 = vmatprep.subr.bf16.mxu0 0
      %5673 = vmatpush2.bf16.msra.mxu0 0
      %5674 = vmatprep.subr.bf16.mxu0 0
      %5675 = vmatpush2.bf16.msra.mxu0 0
      %5676 = vmatprep.subr.bf16.mxu0 0
      %5677 = vmatpush2.bf16.msra.mxu0 0
      %5678 = vmatprep.subr.bf16.mxu0 0
      %5679 = vmatpush2.bf16.msra.mxu0 0
      %5680 = vmatprep.subr.bf16.mxu0 0
      %5681 = vmatpush2.bf16.msra.mxu0 0
      %5682 = vmatprep.subr.bf16.mxu0 0
      %5683 = vmatpush2.bf16.msra.mxu0 0
      %5684 = vmatprep.subr.bf16.mxu0 0
      %5685 = vmatpush2.bf16.msra.mxu0 0
      %5686 = vmatprep.mubr.bf16.mxu0 0
      %5687 = vmatmul.mubr.bf16.gmra.mxu0 %v5505
      %v5688 = vpop.f32.mrf.mxu0
      %v5689 = vadd.f32 0.0, %v5688
      %v5690 = vpop.f32.mrf.mxu0
      %v5691 = vadd.f32 0.0, %v5690
      %v5692 = vpop.f32.mrf.mxu0
      %v5693 = vpop.f32.mrf.mxu0
      %5694 = vdwg.mxu0
      %v5695 = vadd.f32 %v5454, %v5566
      %v5696 = vadd.f32 %v5455, %v5568
      %v5697 = vadd.f32 %v5456, %v5607
      %v5698 = vadd.f32 %v5457, %v5609
      %v5699 = vadd.f32 %v5458, %v5648
      %v5700 = vadd.f32 %v5459, %v5650
      %v5701 = vadd.f32 %v5460, %v5689
      %v5702 = vadd.f32 %v5461, %v5691
      %v5703 = vld [vmem:[%s7] sm:$0xf]
      %5705 = vset.pattern.permute.xlu0 0
      %5706 = vperm.xlu0 %5705, %v5703
      %v5707 = vpop.permute.xlu0 %5706
      %v5709 = vadd.f32 %v5695, %v5707
      %v5710 = vadd.f32 %v5696, %v5707
      %v5711 = vadd.f32 %v5697, %v5707
      %v5712 = vadd.f32 %v5698, %v5707
      %v5713 = vadd.f32 %v5699, %v5707
      %v5714 = vadd.f32 %v5700, %v5707
      %v5715 = vadd.f32 %v5701, %v5707
      %v5716 = vadd.f32 %v5702, %v5707
      %v5717 = vmax.f32 %v5709, 0.0
      %v5718 = vmax.f32 %v5710, 0.0
      %v5719 = vmax.f32 %v5711, 0.0
      %v5720 = vmax.f32 %v5712, 0.0
      %v5721 = vmax.f32 %v5713, 0.0
      %v5722 = vmax.f32 %v5714, 0.0
      %v5723 = vmax.f32 %v5715, 0.0
      %v5724 = vmax.f32 %v5716, 0.0
      %5725 = vrot.lane.b32.xlu0 %v5717, 33
      %v5726 = vpop.permute.xlu0 %5725
      %5727 = vrot.lane.b32.xlu0 %v5718, 33
      %v5728 = vpop.permute.xlu0 %5727
      %5729 = vrot.lane.b32.xlu0 %v5719, 33
      %v5730 = vpop.permute.xlu0 %5729
      %5731 = vrot.lane.b32.xlu0 %v5720, 33
      %v5732 = vpop.permute.xlu0 %5731
      %5733 = vrot.lane.b32.xlu0 %v5721, 33
      %v5734 = vpop.permute.xlu0 %5733
      %5735 = vrot.lane.b32.xlu0 %v5722, 33
      %v5736 = vpop.permute.xlu0 %5735
      %5737 = vrot.lane.b32.xlu0 %v5723, 33
      %v5738 = vpop.permute.xlu0 %5737
      %5739 = vrot.lane.b32.xlu0 %v5724, 33
      %v5740 = vpop.permute.xlu0 %5739
      %v5741 = vsel %vm1078, %v5738, %v5740
      %v5742 = vsel %vm1078, %v5736, %v5738
      %v5743 = vsel %vm1078, %v5734, %v5736
      %v5744 = vsel %vm1078, %v5732, %v5734
      %v5745 = vsel %vm1078, %v5730, %v5732
      %v5746 = vsel %vm1078, %v5728, %v5730
      %v5747 = vsel %vm1078, %v5726, %v5728
      %v5748 = vsel %vm1078, %v5740, %v5726
      %v5749 = vmul.f32 %v5748, %v1094
      %v5750 = vmul.f32 %v5747, %v1098
      %v5751 = vmul.f32 %v5746, %v1102
      %v5752 = vmul.f32 %v5745, %v1106
      %v5753 = vmul.f32 %v5744, %v1110
      %v5754 = vmul.f32 %v5743, %v1114
      %v5755 = vmul.f32 %v5742, %v1118
      %v5756 = vmul.f32 %v5741, %v1122
      %v5757 = vld [vmem:[%s8] sm:$0x3]
      %v5758 = vpack.c.bf16 %v5749, %v5749
      %v5759 = vpack.c.bf16 %v5750, %v5750
      %v5760 = vpack.c.bf16 %v5751, %v5751
      %v5761 = vpack.c.bf16 %v5752, %v5752
      %v5762 = vpack.c.bf16 %v5753, %v5753
      %v5763 = vpack.c.bf16 %v5754, %v5754
      %v5764 = vpack.c.bf16 %v5755, %v5755
      %v5765 = vpack.c.bf16 %v5756, %v5756
      %5766 = vrot.lane.b32.xlu0 %v5717, 32
      %v5767 = vpop.permute.xlu0 %5766
      %5768 = vrot.lane.b32.xlu0 %v5718, 32
      %v5769 = vpop.permute.xlu0 %5768
      %5770 = vrot.lane.b32.xlu0 %v5719, 32
      %v5771 = vpop.permute.xlu0 %5770
      %5772 = vrot.lane.b32.xlu0 %v5720, 32
      %v5773 = vpop.permute.xlu0 %5772
      %5774 = vrot.lane.b32.xlu0 %v5721, 32
      %v5775 = vpop.permute.xlu0 %5774
      %5776 = vrot.lane.b32.xlu0 %v5722, 32
      %v5777 = vpop.permute.xlu0 %5776
      %5778 = vrot.lane.b32.xlu0 %v5723, 32
      %v5779 = vpop.permute.xlu0 %5778
      %5780 = vrot.lane.b32.xlu0 %v5724, 32
      %v5781 = vpop.permute.xlu0 %5780
      %v5782 = vsel %vm1164, %v5779, %v5781
      %v5783 = vsel %vm1164, %v5777, %v5779
      %v5784 = vsel %vm1164, %v5775, %v5777
      %v5785 = vsel %vm1164, %v5773, %v5775
      %v5786 = vsel %vm1164, %v5771, %v5773
      %v5787 = vsel %vm1164, %v5769, %v5771
      %v5788 = vsel %vm1164, %v5767, %v5769
      %v5789 = vsel %vm1164, %v5781, %v5767
      %v5790 = vmul.f32 %v5789, %v1181
      %v5791 = vmul.f32 %v5788, %v1185
      %v5792 = vmul.f32 %v5787, %v1189
      %v5793 = vmul.f32 %v5786, %v1193
      %v5794 = vmul.f32 %v5785, %v1197
      %v5795 = vmul.f32 %v5784, %v1201
      %v5796 = vmul.f32 %v5783, %v1205
      %v5797 = vmul.f32 %v5782, %v1209
      %s5798 = scalar_lea.vmem %s8, 2
      %v5799 = vld [vmem:[%s5798] sm:$0x3]
      %v5800 = vpack.c.bf16 %v5790, %v5790
      %v5801 = vpack.c.bf16 %v5791, %v5791
      %v5802 = vpack.c.bf16 %v5792, %v5792
      %v5803 = vpack.c.bf16 %v5793, %v5793
      %v5804 = vpack.c.bf16 %v5794, %v5794
      %v5805 = vpack.c.bf16 %v5795, %v5795
      %v5806 = vpack.c.bf16 %v5796, %v5796
      %v5807 = vpack.c.bf16 %v5797, %v5797
      %v5809 = vsel %vm1236, %v5799, 0
      %v5812 = vsel %vm1240, %v5800, 0
      %v5815 = vsel %vm1240, %v5801, 0
      %v5818 = vsel %vm1240, %v5802, 0
      %v5821 = vsel %vm1240, %v5803, 0
      %v5824 = vsel %vm1240, %v5804, 0
      %v5827 = vsel %vm1240, %v5805, 0
      %v5830 = vsel %vm1240, %v5806, 0
      %v5833 = vsel %vm1240, %v5807, 0
      %5835 = vmatprep.subr.bf16.mxu0 0
      %5836 = vmatpush1.bf16.msra.mxu0 0
      %5837 = vmatprep.subr.bf16.mxu0 0
      %5838 = vmatpush1.bf16.msra.mxu0 0
      %5839 = vmatprep.subr.bf16.mxu0 0
      %5840 = vmatpush1.bf16.msra.mxu0 0
      %5841 = vmatprep.subr.bf16.mxu0 0
      %5842 = vmatpush1.bf16.msra.mxu0 0
      %5843 = vmatprep.subr.bf16.mxu0 0
      %5844 = vmatpush1.bf16.msra.mxu0 0
      %5845 = vmatprep.subr.bf16.mxu0 0
      %5846 = vmatpush1.bf16.msra.mxu0 0
      %5847 = vmatprep.subr.bf16.mxu0 0
      %5848 = vmatpush1.bf16.msra.mxu0 0
      %5849 = vmatprep.subr.bf16.mxu0 %v5815
      %5850 = vmatpush1.bf16.msra.mxu0 %v5812
      %5851 = vmatprep.subr.bf16.mxu0 0
      %5852 = vmatpush2.bf16.msra.mxu0 0
      %5853 = vmatprep.subr.bf16.mxu0 0
      %5854 = vmatpush2.bf16.msra.mxu0 0
      %5855 = vmatprep.subr.bf16.mxu0 0
      %5856 = vmatpush2.bf16.msra.mxu0 0
      %5857 = vmatprep.subr.bf16.mxu0 0
      %5858 = vmatpush2.bf16.msra.mxu0 0
      %5859 = vmatprep.subr.bf16.mxu0 0
      %5860 = vmatpush2.bf16.msra.mxu0 0
      %5861 = vmatprep.subr.bf16.mxu0 0
      %5862 = vmatpush2.bf16.msra.mxu0 0
      %5863 = vmatprep.subr.bf16.mxu0 0
      %5864 = vmatpush2.bf16.msra.mxu0 0
      %5865 = vmatprep.subr.bf16.mxu0 0
      %5866 = vmatpush2.bf16.msra.mxu0 0
      %5867 = vmatprep.mubr.bf16.mxu0 0
      %5868 = vmatmul.mubr.bf16.gmra.mxu0 %v5809
      %v5869 = vpop.f32.mrf.mxu0
      %v5870 = vadd.f32 0.0, %v5869
      %v5871 = vpop.f32.mrf.mxu0
      %v5872 = vadd.f32 0.0, %v5871
      %v5873 = vpop.f32.mrf.mxu0
      %v5874 = vpop.f32.mrf.mxu0
      %5875 = vdwg.mxu0
      %5876 = vmatprep.subr.bf16.mxu0 0
      %5877 = vmatpush1.bf16.msra.mxu0 0
      %5878 = vmatprep.subr.bf16.mxu0 0
      %5879 = vmatpush1.bf16.msra.mxu0 0
      %5880 = vmatprep.subr.bf16.mxu0 0
      %5881 = vmatpush1.bf16.msra.mxu0 0
      %5882 = vmatprep.subr.bf16.mxu0 0
      %5883 = vmatpush1.bf16.msra.mxu0 0
      %5884 = vmatprep.subr.bf16.mxu0 0
      %5885 = vmatpush1.bf16.msra.mxu0 0
      %5886 = vmatprep.subr.bf16.mxu0 0
      %5887 = vmatpush1.bf16.msra.mxu0 0
      %5888 = vmatprep.subr.bf16.mxu0 0
      %5889 = vmatpush1.bf16.msra.mxu0 0
      %5890 = vmatprep.subr.bf16.mxu0 %v5821
      %5891 = vmatpush1.bf16.msra.mxu0 %v5818
      %5892 = vmatprep.subr.bf16.mxu0 0
      %5893 = vmatpush2.bf16.msra.mxu0 0
      %5894 = vmatprep.subr.bf16.mxu0 0
      %5895 = vmatpush2.bf16.msra.mxu0 0
      %5896 = vmatprep.subr.bf16.mxu0 0
      %5897 = vmatpush2.bf16.msra.mxu0 0
      %5898 = vmatprep.subr.bf16.mxu0 0
      %5899 = vmatpush2.bf16.msra.mxu0 0
      %5900 = vmatprep.subr.bf16.mxu0 0
      %5901 = vmatpush2.bf16.msra.mxu0 0
      %5902 = vmatprep.subr.bf16.mxu0 0
      %5903 = vmatpush2.bf16.msra.mxu0 0
      %5904 = vmatprep.subr.bf16.mxu0 0
      %5905 = vmatpush2.bf16.msra.mxu0 0
      %5906 = vmatprep.subr.bf16.mxu0 0
      %5907 = vmatpush2.bf16.msra.mxu0 0
      %5908 = vmatprep.mubr.bf16.mxu0 0
      %5909 = vmatmul.mubr.bf16.gmra.mxu0 %v5809
      %v5910 = vpop.f32.mrf.mxu0
      %v5911 = vadd.f32 0.0, %v5910
      %v5912 = vpop.f32.mrf.mxu0
      %v5913 = vadd.f32 0.0, %v5912
      %v5914 = vpop.f32.mrf.mxu0
      %v5915 = vpop.f32.mrf.mxu0
      %5916 = vdwg.mxu0
      %5917 = vmatprep.subr.bf16.mxu0 0
      %5918 = vmatpush1.bf16.msra.mxu0 0
      %5919 = vmatprep.subr.bf16.mxu0 0
      %5920 = vmatpush1.bf16.msra.mxu0 0
      %5921 = vmatprep.subr.bf16.mxu0 0
      %5922 = vmatpush1.bf16.msra.mxu0 0
      %5923 = vmatprep.subr.bf16.mxu0 0
      %5924 = vmatpush1.bf16.msra.mxu0 0
      %5925 = vmatprep.subr.bf16.mxu0 0
      %5926 = vmatpush1.bf16.msra.mxu0 0
      %5927 = vmatprep.subr.bf16.mxu0 0
      %5928 = vmatpush1.bf16.msra.mxu0 0
      %5929 = vmatprep.subr.bf16.mxu0 0
      %5930 = vmatpush1.bf16.msra.mxu0 0
      %5931 = vmatprep.subr.bf16.mxu0 %v5827
      %5932 = vmatpush1.bf16.msra.mxu0 %v5824
      %5933 = vmatprep.subr.bf16.mxu0 0
      %5934 = vmatpush2.bf16.msra.mxu0 0
      %5935 = vmatprep.subr.bf16.mxu0 0
      %5936 = vmatpush2.bf16.msra.mxu0 0
      %5937 = vmatprep.subr.bf16.mxu0 0
      %5938 = vmatpush2.bf16.msra.mxu0 0
      %5939 = vmatprep.subr.bf16.mxu0 0
      %5940 = vmatpush2.bf16.msra.mxu0 0
      %5941 = vmatprep.subr.bf16.mxu0 0
      %5942 = vmatpush2.bf16.msra.mxu0 0
      %5943 = vmatprep.subr.bf16.mxu0 0
      %5944 = vmatpush2.bf16.msra.mxu0 0
      %5945 = vmatprep.subr.bf16.mxu0 0
      %5946 = vmatpush2.bf16.msra.mxu0 0
      %5947 = vmatprep.subr.bf16.mxu0 0
      %5948 = vmatpush2.bf16.msra.mxu0 0
      %5949 = vmatprep.mubr.bf16.mxu0 0
      %5950 = vmatmul.mubr.bf16.gmra.mxu0 %v5809
      %v5951 = vpop.f32.mrf.mxu0
      %v5952 = vadd.f32 0.0, %v5951
      %v5953 = vpop.f32.mrf.mxu0
      %v5954 = vadd.f32 0.0, %v5953
      %v5955 = vpop.f32.mrf.mxu0
      %v5956 = vpop.f32.mrf.mxu0
      %5957 = vdwg.mxu0
      %5958 = vmatprep.subr.bf16.mxu0 0
      %5959 = vmatpush1.bf16.msra.mxu0 0
      %5960 = vmatprep.subr.bf16.mxu0 0
      %5961 = vmatpush1.bf16.msra.mxu0 0
      %5962 = vmatprep.subr.bf16.mxu0 0
      %5963 = vmatpush1.bf16.msra.mxu0 0
      %5964 = vmatprep.subr.bf16.mxu0 0
      %5965 = vmatpush1.bf16.msra.mxu0 0
      %5966 = vmatprep.subr.bf16.mxu0 0
      %5967 = vmatpush1.bf16.msra.mxu0 0
      %5968 = vmatprep.subr.bf16.mxu0 0
      %5969 = vmatpush1.bf16.msra.mxu0 0
      %5970 = vmatprep.subr.bf16.mxu0 0
      %5971 = vmatpush1.bf16.msra.mxu0 0
      %5972 = vmatprep.subr.bf16.mxu0 %v5833
      %5973 = vmatpush1.bf16.msra.mxu0 %v5830
      %5974 = vmatprep.subr.bf16.mxu0 0
      %5975 = vmatpush2.bf16.msra.mxu0 0
      %5976 = vmatprep.subr.bf16.mxu0 0
      %5977 = vmatpush2.bf16.msra.mxu0 0
      %5978 = vmatprep.subr.bf16.mxu0 0
      %5979 = vmatpush2.bf16.msra.mxu0 0
      %5980 = vmatprep.subr.bf16.mxu0 0
      %5981 = vmatpush2.bf16.msra.mxu0 0
      %5982 = vmatprep.subr.bf16.mxu0 0
      %5983 = vmatpush2.bf16.msra.mxu0 0
      %5984 = vmatprep.subr.bf16.mxu0 0
      %5985 = vmatpush2.bf16.msra.mxu0 0
      %5986 = vmatprep.subr.bf16.mxu0 0
      %5987 = vmatpush2.bf16.msra.mxu0 0
      %5988 = vmatprep.subr.bf16.mxu0 0
      %5989 = vmatpush2.bf16.msra.mxu0 0
      %5990 = vmatprep.mubr.bf16.mxu0 0
      %5991 = vmatmul.mubr.bf16.gmra.mxu0 %v5809
      %v5992 = vpop.f32.mrf.mxu0
      %v5993 = vadd.f32 0.0, %v5992
      %v5994 = vpop.f32.mrf.mxu0
      %v5995 = vadd.f32 0.0, %v5994
      %v5996 = vpop.f32.mrf.mxu0
      %v5997 = vpop.f32.mrf.mxu0
      %5998 = vdwg.mxu0
      %v6000 = vsel %vm1236, %v5757, 0
      %v6003 = vsel %vm1240, %v5758, 0
      %v6006 = vsel %vm1240, %v5759, 0
      %v6009 = vsel %vm1240, %v5760, 0
      %v6012 = vsel %vm1240, %v5761, 0
      %v6015 = vsel %vm1240, %v5762, 0
      %v6018 = vsel %vm1240, %v5763, 0
      %v6021 = vsel %vm1240, %v5764, 0
      %v6024 = vsel %vm1240, %v5765, 0
      %6026 = vmatprep.subr.bf16.mxu0 0
      %6027 = vmatpush1.bf16.msra.mxu0 0
      %6028 = vmatprep.subr.bf16.mxu0 0
      %6029 = vmatpush1.bf16.msra.mxu0 0
      %6030 = vmatprep.subr.bf16.mxu0 0
      %6031 = vmatpush1.bf16.msra.mxu0 0
      %6032 = vmatprep.subr.bf16.mxu0 0
      %6033 = vmatpush1.bf16.msra.mxu0 0
      %6034 = vmatprep.subr.bf16.mxu0 0
      %6035 = vmatpush1.bf16.msra.mxu0 0
      %6036 = vmatprep.subr.bf16.mxu0 0
      %6037 = vmatpush1.bf16.msra.mxu0 0
      %6038 = vmatprep.subr.bf16.mxu0 0
      %6039 = vmatpush1.bf16.msra.mxu0 0
      %6040 = vmatprep.subr.bf16.mxu0 %v6006
      %6041 = vmatpush1.bf16.msra.mxu0 %v6003
      %6042 = vmatprep.subr.bf16.mxu0 0
      %6043 = vmatpush2.bf16.msra.mxu0 0
      %6044 = vmatprep.subr.bf16.mxu0 0
      %6045 = vmatpush2.bf16.msra.mxu0 0
      %6046 = vmatprep.subr.bf16.mxu0 0
      %6047 = vmatpush2.bf16.msra.mxu0 0
      %6048 = vmatprep.subr.bf16.mxu0 0
      %6049 = vmatpush2.bf16.msra.mxu0 0
      %6050 = vmatprep.subr.bf16.mxu0 0
      %6051 = vmatpush2.bf16.msra.mxu0 0
      %6052 = vmatprep.subr.bf16.mxu0 0
      %6053 = vmatpush2.bf16.msra.mxu0 0
      %6054 = vmatprep.subr.bf16.mxu0 0
      %6055 = vmatpush2.bf16.msra.mxu0 0
      %6056 = vmatprep.subr.bf16.mxu0 0
      %6057 = vmatpush2.bf16.msra.mxu0 0
      %6058 = vmatprep.mubr.bf16.mxu0 0
      %6059 = vmatmul.mubr.bf16.gmra.mxu0 %v6000
      %v6060 = vpop.f32.mrf.mxu0
      %v6061 = vadd.f32 %v5870, %v6060
      %v6062 = vpop.f32.mrf.mxu0
      %v6063 = vadd.f32 %v5872, %v6062
      %v6064 = vpop.f32.mrf.mxu0
      %v6065 = vpop.f32.mrf.mxu0
      %6066 = vdwg.mxu0
      %6067 = vmatprep.subr.bf16.mxu0 0
      %6068 = vmatpush1.bf16.msra.mxu0 0
      %6069 = vmatprep.subr.bf16.mxu0 0
      %6070 = vmatpush1.bf16.msra.mxu0 0
      %6071 = vmatprep.subr.bf16.mxu0 0
      %6072 = vmatpush1.bf16.msra.mxu0 0
      %6073 = vmatprep.subr.bf16.mxu0 0
      %6074 = vmatpush1.bf16.msra.mxu0 0
      %6075 = vmatprep.subr.bf16.mxu0 0
      %6076 = vmatpush1.bf16.msra.mxu0 0
      %6077 = vmatprep.subr.bf16.mxu0 0
      %6078 = vmatpush1.bf16.msra.mxu0 0
      %6079 = vmatprep.subr.bf16.mxu0 0
      %6080 = vmatpush1.bf16.msra.mxu0 0
      %6081 = vmatprep.subr.bf16.mxu0 %v6012
      %6082 = vmatpush1.bf16.msra.mxu0 %v6009
      %6083 = vmatprep.subr.bf16.mxu0 0
      %6084 = vmatpush2.bf16.msra.mxu0 0
      %6085 = vmatprep.subr.bf16.mxu0 0
      %6086 = vmatpush2.bf16.msra.mxu0 0
      %6087 = vmatprep.subr.bf16.mxu0 0
      %6088 = vmatpush2.bf16.msra.mxu0 0
      %6089 = vmatprep.subr.bf16.mxu0 0
      %6090 = vmatpush2.bf16.msra.mxu0 0
      %6091 = vmatprep.subr.bf16.mxu0 0
      %6092 = vmatpush2.bf16.msra.mxu0 0
      %6093 = vmatprep.subr.bf16.mxu0 0
      %6094 = vmatpush2.bf16.msra.mxu0 0
      %6095 = vmatprep.subr.bf16.mxu0 0
      %6096 = vmatpush2.bf16.msra.mxu0 0
      %6097 = vmatprep.subr.bf16.mxu0 0
      %6098 = vmatpush2.bf16.msra.mxu0 0
      %6099 = vmatprep.mubr.bf16.mxu0 0
      %6100 = vmatmul.mubr.bf16.gmra.mxu0 %v6000
      %v6101 = vpop.f32.mrf.mxu0
      %v6102 = vadd.f32 %v5911, %v6101
      %v6103 = vpop.f32.mrf.mxu0
      %v6104 = vadd.f32 %v5913, %v6103
      %v6105 = vpop.f32.mrf.mxu0
      %v6106 = vpop.f32.mrf.mxu0
      %6107 = vdwg.mxu0
      %6108 = vmatprep.subr.bf16.mxu0 0
      %6109 = vmatpush1.bf16.msra.mxu0 0
      %6110 = vmatprep.subr.bf16.mxu0 0
      %6111 = vmatpush1.bf16.msra.mxu0 0
      %6112 = vmatprep.subr.bf16.mxu0 0
      %6113 = vmatpush1.bf16.msra.mxu0 0
      %6114 = vmatprep.subr.bf16.mxu0 0
      %6115 = vmatpush1.bf16.msra.mxu0 0
      %6116 = vmatprep.subr.bf16.mxu0 0
      %6117 = vmatpush1.bf16.msra.mxu0 0
      %6118 = vmatprep.subr.bf16.mxu0 0
      %6119 = vmatpush1.bf16.msra.mxu0 0
      %6120 = vmatprep.subr.bf16.mxu0 0
      %6121 = vmatpush1.bf16.msra.mxu0 0
      %6122 = vmatprep.subr.bf16.mxu0 %v6018
      %6123 = vmatpush1.bf16.msra.mxu0 %v6015
      %6124 = vmatprep.subr.bf16.mxu0 0
      %6125 = vmatpush2.bf16.msra.mxu0 0
      %6126 = vmatprep.subr.bf16.mxu0 0
      %6127 = vmatpush2.bf16.msra.mxu0 0
      %6128 = vmatprep.subr.bf16.mxu0 0
      %6129 = vmatpush2.bf16.msra.mxu0 0
      %6130 = vmatprep.subr.bf16.mxu0 0
      %6131 = vmatpush2.bf16.msra.mxu0 0
      %6132 = vmatprep.subr.bf16.mxu0 0
      %6133 = vmatpush2.bf16.msra.mxu0 0
      %6134 = vmatprep.subr.bf16.mxu0 0
      %6135 = vmatpush2.bf16.msra.mxu0 0
      %6136 = vmatprep.subr.bf16.mxu0 0
      %6137 = vmatpush2.bf16.msra.mxu0 0
      %6138 = vmatprep.subr.bf16.mxu0 0
      %6139 = vmatpush2.bf16.msra.mxu0 0
      %6140 = vmatprep.mubr.bf16.mxu0 0
      %6141 = vmatmul.mubr.bf16.gmra.mxu0 %v6000
      %v6142 = vpop.f32.mrf.mxu0
      %v6143 = vadd.f32 %v5952, %v6142
      %v6144 = vpop.f32.mrf.mxu0
      %v6145 = vadd.f32 %v5954, %v6144
      %v6146 = vpop.f32.mrf.mxu0
      %v6147 = vpop.f32.mrf.mxu0
      %6148 = vdwg.mxu0
      %6149 = vmatprep.subr.bf16.mxu0 0
      %6150 = vmatpush1.bf16.msra.mxu0 0
      %6151 = vmatprep.subr.bf16.mxu0 0
      %6152 = vmatpush1.bf16.msra.mxu0 0
      %6153 = vmatprep.subr.bf16.mxu0 0
      %6154 = vmatpush1.bf16.msra.mxu0 0
      %6155 = vmatprep.subr.bf16.mxu0 0
      %6156 = vmatpush1.bf16.msra.mxu0 0
      %6157 = vmatprep.subr.bf16.mxu0 0
      %6158 = vmatpush1.bf16.msra.mxu0 0
      %6159 = vmatprep.subr.bf16.mxu0 0
      %6160 = vmatpush1.bf16.msra.mxu0 0
      %6161 = vmatprep.subr.bf16.mxu0 0
      %6162 = vmatpush1.bf16.msra.mxu0 0
      %6163 = vmatprep.subr.bf16.mxu0 %v6024
      %6164 = vmatpush1.bf16.msra.mxu0 %v6021
      %6165 = vmatprep.subr.bf16.mxu0 0
      %6166 = vmatpush2.bf16.msra.mxu0 0
      %6167 = vmatprep.subr.bf16.mxu0 0
      %6168 = vmatpush2.bf16.msra.mxu0 0
      %6169 = vmatprep.subr.bf16.mxu0 0
      %6170 = vmatpush2.bf16.msra.mxu0 0
      %6171 = vmatprep.subr.bf16.mxu0 0
      %6172 = vmatpush2.bf16.msra.mxu0 0
      %6173 = vmatprep.subr.bf16.mxu0 0
      %6174 = vmatpush2.bf16.msra.mxu0 0
      %6175 = vmatprep.subr.bf16.mxu0 0
      %6176 = vmatpush2.bf16.msra.mxu0 0
      %6177 = vmatprep.subr.bf16.mxu0 0
      %6178 = vmatpush2.bf16.msra.mxu0 0
      %6179 = vmatprep.subr.bf16.mxu0 0
      %6180 = vmatpush2.bf16.msra.mxu0 0
      %6181 = vmatprep.mubr.bf16.mxu0 0
      %6182 = vmatmul.mubr.bf16.gmra.mxu0 %v6000
      %v6183 = vpop.f32.mrf.mxu0
      %v6184 = vadd.f32 %v5993, %v6183
      %v6185 = vpop.f32.mrf.mxu0
      %v6186 = vadd.f32 %v5995, %v6185
      %v6187 = vpop.f32.mrf.mxu0
      %v6188 = vpop.f32.mrf.mxu0
      %6189 = vdwg.mxu0
      %6190 = vrot.lane.b32.xlu0 %v5717, 31
      %v6191 = vpop.permute.xlu0 %6190
      %6192 = vrot.lane.b32.xlu0 %v5718, 31
      %v6193 = vpop.permute.xlu0 %6192
      %6194 = vrot.lane.b32.xlu0 %v5719, 31
      %v6195 = vpop.permute.xlu0 %6194
      %6196 = vrot.lane.b32.xlu0 %v5720, 31
      %v6197 = vpop.permute.xlu0 %6196
      %6198 = vrot.lane.b32.xlu0 %v5721, 31
      %v6199 = vpop.permute.xlu0 %6198
      %6200 = vrot.lane.b32.xlu0 %v5722, 31
      %v6201 = vpop.permute.xlu0 %6200
      %6202 = vrot.lane.b32.xlu0 %v5723, 31
      %v6203 = vpop.permute.xlu0 %6202
      %6204 = vrot.lane.b32.xlu0 %v5724, 31
      %v6205 = vpop.permute.xlu0 %6204
      %v6206 = vsel %vm1636, %v6203, %v6205
      %v6207 = vsel %vm1636, %v6201, %v6203
      %v6208 = vsel %vm1636, %v6199, %v6201
      %v6209 = vsel %vm1636, %v6197, %v6199
      %v6210 = vsel %vm1636, %v6195, %v6197
      %v6211 = vsel %vm1636, %v6193, %v6195
      %v6212 = vsel %vm1636, %v6191, %v6193
      %v6213 = vsel %vm1636, %v6205, %v6191
      %v6214 = vmul.f32 %v6213, %v1653
      %v6215 = vmul.f32 %v6212, %v1657
      %v6216 = vmul.f32 %v6211, %v1661
      %v6217 = vmul.f32 %v6210, %v1665
      %v6218 = vmul.f32 %v6209, %v1669
      %v6219 = vmul.f32 %v6208, %v1673
      %v6220 = vmul.f32 %v6207, %v1677
      %v6221 = vmul.f32 %v6206, %v1681
      %s6222 = scalar_lea.vmem %s8, 4
      %v6223 = vld [vmem:[%s6222] sm:$0x3]
      %v6224 = vpack.c.bf16 %v6214, %v6214
      %v6225 = vpack.c.bf16 %v6215, %v6215
      %v6226 = vpack.c.bf16 %v6216, %v6216
      %v6227 = vpack.c.bf16 %v6217, %v6217
      %v6228 = vpack.c.bf16 %v6218, %v6218
      %v6229 = vpack.c.bf16 %v6219, %v6219
      %v6230 = vpack.c.bf16 %v6220, %v6220
      %v6231 = vpack.c.bf16 %v6221, %v6221
      %v6233 = vsel %vm1236, %v6223, 0
      %v6236 = vsel %vm1240, %v6224, 0
      %v6239 = vsel %vm1240, %v6225, 0
      %v6242 = vsel %vm1240, %v6226, 0
      %v6245 = vsel %vm1240, %v6227, 0
      %v6248 = vsel %vm1240, %v6228, 0
      %v6251 = vsel %vm1240, %v6229, 0
      %v6254 = vsel %vm1240, %v6230, 0
      %v6257 = vsel %vm1240, %v6231, 0
      %6259 = vmatprep.subr.bf16.mxu0 0
      %6260 = vmatpush1.bf16.msra.mxu0 0
      %6261 = vmatprep.subr.bf16.mxu0 0
      %6262 = vmatpush1.bf16.msra.mxu0 0
      %6263 = vmatprep.subr.bf16.mxu0 0
      %6264 = vmatpush1.bf16.msra.mxu0 0
      %6265 = vmatprep.subr.bf16.mxu0 0
      %6266 = vmatpush1.bf16.msra.mxu0 0
      %6267 = vmatprep.subr.bf16.mxu0 0
      %6268 = vmatpush1.bf16.msra.mxu0 0
      %6269 = vmatprep.subr.bf16.mxu0 0
      %6270 = vmatpush1.bf16.msra.mxu0 0
      %6271 = vmatprep.subr.bf16.mxu0 0
      %6272 = vmatpush1.bf16.msra.mxu0 0
      %6273 = vmatprep.subr.bf16.mxu0 %v6239
      %6274 = vmatpush1.bf16.msra.mxu0 %v6236
      %6275 = vmatprep.subr.bf16.mxu0 0
      %6276 = vmatpush2.bf16.msra.mxu0 0
      %6277 = vmatprep.subr.bf16.mxu0 0
      %6278 = vmatpush2.bf16.msra.mxu0 0
      %6279 = vmatprep.subr.bf16.mxu0 0
      %6280 = vmatpush2.bf16.msra.mxu0 0
      %6281 = vmatprep.subr.bf16.mxu0 0
      %6282 = vmatpush2.bf16.msra.mxu0 0
      %6283 = vmatprep.subr.bf16.mxu0 0
      %6284 = vmatpush2.bf16.msra.mxu0 0
      %6285 = vmatprep.subr.bf16.mxu0 0
      %6286 = vmatpush2.bf16.msra.mxu0 0
      %6287 = vmatprep.subr.bf16.mxu0 0
      %6288 = vmatpush2.bf16.msra.mxu0 0
      %6289 = vmatprep.subr.bf16.mxu0 0
      %6290 = vmatpush2.bf16.msra.mxu0 0
      %6291 = vmatprep.mubr.bf16.mxu0 0
      %6292 = vmatmul.mubr.bf16.gmra.mxu0 %v6233
      %v6293 = vpop.f32.mrf.mxu0
      %v6294 = vadd.f32 0.0, %v6293
      %v6295 = vpop.f32.mrf.mxu0
      %v6296 = vadd.f32 0.0, %v6295
      %v6297 = vpop.f32.mrf.mxu0
      %v6298 = vpop.f32.mrf.mxu0
      %6299 = vdwg.mxu0
      %6300 = vmatprep.subr.bf16.mxu0 0
      %6301 = vmatpush1.bf16.msra.mxu0 0
      %6302 = vmatprep.subr.bf16.mxu0 0
      %6303 = vmatpush1.bf16.msra.mxu0 0
      %6304 = vmatprep.subr.bf16.mxu0 0
      %6305 = vmatpush1.bf16.msra.mxu0 0
      %6306 = vmatprep.subr.bf16.mxu0 0
      %6307 = vmatpush1.bf16.msra.mxu0 0
      %6308 = vmatprep.subr.bf16.mxu0 0
      %6309 = vmatpush1.bf16.msra.mxu0 0
      %6310 = vmatprep.subr.bf16.mxu0 0
      %6311 = vmatpush1.bf16.msra.mxu0 0
      %6312 = vmatprep.subr.bf16.mxu0 0
      %6313 = vmatpush1.bf16.msra.mxu0 0
      %6314 = vmatprep.subr.bf16.mxu0 %v6245
      %6315 = vmatpush1.bf16.msra.mxu0 %v6242
      %6316 = vmatprep.subr.bf16.mxu0 0
      %6317 = vmatpush2.bf16.msra.mxu0 0
      %6318 = vmatprep.subr.bf16.mxu0 0
      %6319 = vmatpush2.bf16.msra.mxu0 0
      %6320 = vmatprep.subr.bf16.mxu0 0
      %6321 = vmatpush2.bf16.msra.mxu0 0
      %6322 = vmatprep.subr.bf16.mxu0 0
      %6323 = vmatpush2.bf16.msra.mxu0 0
      %6324 = vmatprep.subr.bf16.mxu0 0
      %6325 = vmatpush2.bf16.msra.mxu0 0
      %6326 = vmatprep.subr.bf16.mxu0 0
      %6327 = vmatpush2.bf16.msra.mxu0 0
      %6328 = vmatprep.subr.bf16.mxu0 0
      %6329 = vmatpush2.bf16.msra.mxu0 0
      %6330 = vmatprep.subr.bf16.mxu0 0
      %6331 = vmatpush2.bf16.msra.mxu0 0
      %6332 = vmatprep.mubr.bf16.mxu0 0
      %6333 = vmatmul.mubr.bf16.gmra.mxu0 %v6233
      %v6334 = vpop.f32.mrf.mxu0
      %v6335 = vadd.f32 0.0, %v6334
      %v6336 = vpop.f32.mrf.mxu0
      %v6337 = vadd.f32 0.0, %v6336
      %v6338 = vpop.f32.mrf.mxu0
      %v6339 = vpop.f32.mrf.mxu0
      %6340 = vdwg.mxu0
      %6341 = vmatprep.subr.bf16.mxu0 0
      %6342 = vmatpush1.bf16.msra.mxu0 0
      %6343 = vmatprep.subr.bf16.mxu0 0
      %6344 = vmatpush1.bf16.msra.mxu0 0
      %6345 = vmatprep.subr.bf16.mxu0 0
      %6346 = vmatpush1.bf16.msra.mxu0 0
      %6347 = vmatprep.subr.bf16.mxu0 0
      %6348 = vmatpush1.bf16.msra.mxu0 0
      %6349 = vmatprep.subr.bf16.mxu0 0
      %6350 = vmatpush1.bf16.msra.mxu0 0
      %6351 = vmatprep.subr.bf16.mxu0 0
      %6352 = vmatpush1.bf16.msra.mxu0 0
      %6353 = vmatprep.subr.bf16.mxu0 0
      %6354 = vmatpush1.bf16.msra.mxu0 0
      %6355 = vmatprep.subr.bf16.mxu0 %v6251
      %6356 = vmatpush1.bf16.msra.mxu0 %v6248
      %6357 = vmatprep.subr.bf16.mxu0 0
      %6358 = vmatpush2.bf16.msra.mxu0 0
      %6359 = vmatprep.subr.bf16.mxu0 0
      %6360 = vmatpush2.bf16.msra.mxu0 0
      %6361 = vmatprep.subr.bf16.mxu0 0
      %6362 = vmatpush2.bf16.msra.mxu0 0
      %6363 = vmatprep.subr.bf16.mxu0 0
      %6364 = vmatpush2.bf16.msra.mxu0 0
      %6365 = vmatprep.subr.bf16.mxu0 0
      %6366 = vmatpush2.bf16.msra.mxu0 0
      %6367 = vmatprep.subr.bf16.mxu0 0
      %6368 = vmatpush2.bf16.msra.mxu0 0
      %6369 = vmatprep.subr.bf16.mxu0 0
      %6370 = vmatpush2.bf16.msra.mxu0 0
      %6371 = vmatprep.subr.bf16.mxu0 0
      %6372 = vmatpush2.bf16.msra.mxu0 0
      %6373 = vmatprep.mubr.bf16.mxu0 0
      %6374 = vmatmul.mubr.bf16.gmra.mxu0 %v6233
      %v6375 = vpop.f32.mrf.mxu0
      %v6376 = vadd.f32 0.0, %v6375
      %v6377 = vpop.f32.mrf.mxu0
      %v6378 = vadd.f32 0.0, %v6377
      %v6379 = vpop.f32.mrf.mxu0
      %v6380 = vpop.f32.mrf.mxu0
      %6381 = vdwg.mxu0
      %6382 = vmatprep.subr.bf16.mxu0 0
      %6383 = vmatpush1.bf16.msra.mxu0 0
      %6384 = vmatprep.subr.bf16.mxu0 0
      %6385 = vmatpush1.bf16.msra.mxu0 0
      %6386 = vmatprep.subr.bf16.mxu0 0
      %6387 = vmatpush1.bf16.msra.mxu0 0
      %6388 = vmatprep.subr.bf16.mxu0 0
      %6389 = vmatpush1.bf16.msra.mxu0 0
      %6390 = vmatprep.subr.bf16.mxu0 0
      %6391 = vmatpush1.bf16.msra.mxu0 0
      %6392 = vmatprep.subr.bf16.mxu0 0
      %6393 = vmatpush1.bf16.msra.mxu0 0
      %6394 = vmatprep.subr.bf16.mxu0 0
      %6395 = vmatpush1.bf16.msra.mxu0 0
      %6396 = vmatprep.subr.bf16.mxu0 %v6257
      %6397 = vmatpush1.bf16.msra.mxu0 %v6254
      %6398 = vmatprep.subr.bf16.mxu0 0
      %6399 = vmatpush2.bf16.msra.mxu0 0
      %6400 = vmatprep.subr.bf16.mxu0 0
      %6401 = vmatpush2.bf16.msra.mxu0 0
      %6402 = vmatprep.subr.bf16.mxu0 0
      %6403 = vmatpush2.bf16.msra.mxu0 0
      %6404 = vmatprep.subr.bf16.mxu0 0
      %6405 = vmatpush2.bf16.msra.mxu0 0
      %6406 = vmatprep.subr.bf16.mxu0 0
      %6407 = vmatpush2.bf16.msra.mxu0 0
      %6408 = vmatprep.subr.bf16.mxu0 0
      %6409 = vmatpush2.bf16.msra.mxu0 0
      %6410 = vmatprep.subr.bf16.mxu0 0
      %6411 = vmatpush2.bf16.msra.mxu0 0
      %6412 = vmatprep.subr.bf16.mxu0 0
      %6413 = vmatpush2.bf16.msra.mxu0 0
      %6414 = vmatprep.mubr.bf16.mxu0 0
      %6415 = vmatmul.mubr.bf16.gmra.mxu0 %v6233
      %v6416 = vpop.f32.mrf.mxu0
      %v6417 = vadd.f32 0.0, %v6416
      %v6418 = vpop.f32.mrf.mxu0
      %v6419 = vadd.f32 0.0, %v6418
      %v6420 = vpop.f32.mrf.mxu0
      %v6421 = vpop.f32.mrf.mxu0
      %6422 = vdwg.mxu0
      %v6423 = vadd.f32 %v6061, %v6294
      %v6424 = vadd.f32 %v6063, %v6296
      %v6425 = vadd.f32 %v6102, %v6335
      %v6426 = vadd.f32 %v6104, %v6337
      %v6427 = vadd.f32 %v6143, %v6376
      %v6428 = vadd.f32 %v6145, %v6378
      %v6429 = vadd.f32 %v6184, %v6417
      %v6430 = vadd.f32 %v6186, %v6419
      %6431 = vrot.lane.b32.xlu0 %v5717, 1
      %v6432 = vpop.permute.xlu0 %6431
      %6433 = vrot.lane.b32.xlu0 %v5718, 1
      %v6434 = vpop.permute.xlu0 %6433
      %6435 = vrot.lane.b32.xlu0 %v5719, 1
      %v6436 = vpop.permute.xlu0 %6435
      %6437 = vrot.lane.b32.xlu0 %v5720, 1
      %v6438 = vpop.permute.xlu0 %6437
      %6439 = vrot.lane.b32.xlu0 %v5721, 1
      %v6440 = vpop.permute.xlu0 %6439
      %6441 = vrot.lane.b32.xlu0 %v5722, 1
      %v6442 = vpop.permute.xlu0 %6441
      %6443 = vrot.lane.b32.xlu0 %v5723, 1
      %v6444 = vpop.permute.xlu0 %6443
      %6445 = vrot.lane.b32.xlu0 %v5724, 1
      %v6446 = vpop.permute.xlu0 %6445
      %v6447 = vsel %vm1923, %v6444, %v6446
      %v6448 = vsel %vm1923, %v6442, %v6444
      %v6449 = vsel %vm1923, %v6440, %v6442
      %v6450 = vsel %vm1923, %v6438, %v6440
      %v6451 = vsel %vm1923, %v6436, %v6438
      %v6452 = vsel %vm1923, %v6434, %v6436
      %v6453 = vsel %vm1923, %v6432, %v6434
      %v6454 = vsel %vm1923, %v6446, %v6432
      %v6455 = vmul.f32 %v6454, %v1940
      %v6456 = vmul.f32 %v6453, %v1944
      %v6457 = vmul.f32 %v6452, %v1948
      %v6458 = vmul.f32 %v6451, %v1952
      %v6459 = vmul.f32 %v6450, %v1956
      %v6460 = vmul.f32 %v6449, %v1960
      %v6461 = vmul.f32 %v6448, %v1964
      %v6462 = vmul.f32 %v6447, %v1968
      %s6463 = scalar_lea.vmem %s8, 6
      %v6464 = vld [vmem:[%s6463] sm:$0x3]
      %v6465 = vpack.c.bf16 %v6455, %v6455
      %v6466 = vpack.c.bf16 %v6456, %v6456
      %v6467 = vpack.c.bf16 %v6457, %v6457
      %v6468 = vpack.c.bf16 %v6458, %v6458
      %v6469 = vpack.c.bf16 %v6459, %v6459
      %v6470 = vpack.c.bf16 %v6460, %v6460
      %v6471 = vpack.c.bf16 %v6461, %v6461
      %v6472 = vpack.c.bf16 %v6462, %v6462
      %v6474 = vsel %vm1236, %v6464, 0
      %v6477 = vsel %vm1240, %v6465, 0
      %v6480 = vsel %vm1240, %v6466, 0
      %v6483 = vsel %vm1240, %v6467, 0
      %v6486 = vsel %vm1240, %v6468, 0
      %v6489 = vsel %vm1240, %v6469, 0
      %v6492 = vsel %vm1240, %v6470, 0
      %v6495 = vsel %vm1240, %v6471, 0
      %v6498 = vsel %vm1240, %v6472, 0
      %6500 = vmatprep.subr.bf16.mxu0 0
      %6501 = vmatpush1.bf16.msra.mxu0 0
      %6502 = vmatprep.subr.bf16.mxu0 0
      %6503 = vmatpush1.bf16.msra.mxu0 0
      %6504 = vmatprep.subr.bf16.mxu0 0
      %6505 = vmatpush1.bf16.msra.mxu0 0
      %6506 = vmatprep.subr.bf16.mxu0 0
      %6507 = vmatpush1.bf16.msra.mxu0 0
      %6508 = vmatprep.subr.bf16.mxu0 0
      %6509 = vmatpush1.bf16.msra.mxu0 0
      %6510 = vmatprep.subr.bf16.mxu0 0
      %6511 = vmatpush1.bf16.msra.mxu0 0
      %6512 = vmatprep.subr.bf16.mxu0 0
      %6513 = vmatpush1.bf16.msra.mxu0 0
      %6514 = vmatprep.subr.bf16.mxu0 %v6480
      %6515 = vmatpush1.bf16.msra.mxu0 %v6477
      %6516 = vmatprep.subr.bf16.mxu0 0
      %6517 = vmatpush2.bf16.msra.mxu0 0
      %6518 = vmatprep.subr.bf16.mxu0 0
      %6519 = vmatpush2.bf16.msra.mxu0 0
      %6520 = vmatprep.subr.bf16.mxu0 0
      %6521 = vmatpush2.bf16.msra.mxu0 0
      %6522 = vmatprep.subr.bf16.mxu0 0
      %6523 = vmatpush2.bf16.msra.mxu0 0
      %6524 = vmatprep.subr.bf16.mxu0 0
      %6525 = vmatpush2.bf16.msra.mxu0 0
      %6526 = vmatprep.subr.bf16.mxu0 0
      %6527 = vmatpush2.bf16.msra.mxu0 0
      %6528 = vmatprep.subr.bf16.mxu0 0
      %6529 = vmatpush2.bf16.msra.mxu0 0
      %6530 = vmatprep.subr.bf16.mxu0 0
      %6531 = vmatpush2.bf16.msra.mxu0 0
      %6532 = vmatprep.mubr.bf16.mxu0 0
      %6533 = vmatmul.mubr.bf16.gmra.mxu0 %v6474
      %v6534 = vpop.f32.mrf.mxu0
      %v6535 = vadd.f32 0.0, %v6534
      %v6536 = vpop.f32.mrf.mxu0
      %v6537 = vadd.f32 0.0, %v6536
      %v6538 = vpop.f32.mrf.mxu0
      %v6539 = vpop.f32.mrf.mxu0
      %6540 = vdwg.mxu0
      %6541 = vmatprep.subr.bf16.mxu0 0
      %6542 = vmatpush1.bf16.msra.mxu0 0
      %6543 = vmatprep.subr.bf16.mxu0 0
      %6544 = vmatpush1.bf16.msra.mxu0 0
      %6545 = vmatprep.subr.bf16.mxu0 0
      %6546 = vmatpush1.bf16.msra.mxu0 0
      %6547 = vmatprep.subr.bf16.mxu0 0
      %6548 = vmatpush1.bf16.msra.mxu0 0
      %6549 = vmatprep.subr.bf16.mxu0 0
      %6550 = vmatpush1.bf16.msra.mxu0 0
      %6551 = vmatprep.subr.bf16.mxu0 0
      %6552 = vmatpush1.bf16.msra.mxu0 0
      %6553 = vmatprep.subr.bf16.mxu0 0
      %6554 = vmatpush1.bf16.msra.mxu0 0
      %6555 = vmatprep.subr.bf16.mxu0 %v6486
      %6556 = vmatpush1.bf16.msra.mxu0 %v6483
      %6557 = vmatprep.subr.bf16.mxu0 0
      %6558 = vmatpush2.bf16.msra.mxu0 0
      %6559 = vmatprep.subr.bf16.mxu0 0
      %6560 = vmatpush2.bf16.msra.mxu0 0
      %6561 = vmatprep.subr.bf16.mxu0 0
      %6562 = vmatpush2.bf16.msra.mxu0 0
      %6563 = vmatprep.subr.bf16.mxu0 0
      %6564 = vmatpush2.bf16.msra.mxu0 0
      %6565 = vmatprep.subr.bf16.mxu0 0
      %6566 = vmatpush2.bf16.msra.mxu0 0
      %6567 = vmatprep.subr.bf16.mxu0 0
      %6568 = vmatpush2.bf16.msra.mxu0 0
      %6569 = vmatprep.subr.bf16.mxu0 0
      %6570 = vmatpush2.bf16.msra.mxu0 0
      %6571 = vmatprep.subr.bf16.mxu0 0
      %6572 = vmatpush2.bf16.msra.mxu0 0
      %6573 = vmatprep.mubr.bf16.mxu0 0
      %6574 = vmatmul.mubr.bf16.gmra.mxu0 %v6474
      %v6575 = vpop.f32.mrf.mxu0
      %v6576 = vadd.f32 0.0, %v6575
      %v6577 = vpop.f32.mrf.mxu0
      %v6578 = vadd.f32 0.0, %v6577
      %v6579 = vpop.f32.mrf.mxu0
      %v6580 = vpop.f32.mrf.mxu0
      %6581 = vdwg.mxu0
      %6582 = vmatprep.subr.bf16.mxu0 0
      %6583 = vmatpush1.bf16.msra.mxu0 0
      %6584 = vmatprep.subr.bf16.mxu0 0
      %6585 = vmatpush1.bf16.msra.mxu0 0
      %6586 = vmatprep.subr.bf16.mxu0 0
      %6587 = vmatpush1.bf16.msra.mxu0 0
      %6588 = vmatprep.subr.bf16.mxu0 0
      %6589 = vmatpush1.bf16.msra.mxu0 0
      %6590 = vmatprep.subr.bf16.mxu0 0
      %6591 = vmatpush1.bf16.msra.mxu0 0
      %6592 = vmatprep.subr.bf16.mxu0 0
      %6593 = vmatpush1.bf16.msra.mxu0 0
      %6594 = vmatprep.subr.bf16.mxu0 0
      %6595 = vmatpush1.bf16.msra.mxu0 0
      %6596 = vmatprep.subr.bf16.mxu0 %v6492
      %6597 = vmatpush1.bf16.msra.mxu0 %v6489
      %6598 = vmatprep.subr.bf16.mxu0 0
      %6599 = vmatpush2.bf16.msra.mxu0 0
      %6600 = vmatprep.subr.bf16.mxu0 0
      %6601 = vmatpush2.bf16.msra.mxu0 0
      %6602 = vmatprep.subr.bf16.mxu0 0
      %6603 = vmatpush2.bf16.msra.mxu0 0
      %6604 = vmatprep.subr.bf16.mxu0 0
      %6605 = vmatpush2.bf16.msra.mxu0 0
      %6606 = vmatprep.subr.bf16.mxu0 0
      %6607 = vmatpush2.bf16.msra.mxu0 0
      %6608 = vmatprep.subr.bf16.mxu0 0
      %6609 = vmatpush2.bf16.msra.mxu0 0
      %6610 = vmatprep.subr.bf16.mxu0 0
      %6611 = vmatpush2.bf16.msra.mxu0 0
      %6612 = vmatprep.subr.bf16.mxu0 0
      %6613 = vmatpush2.bf16.msra.mxu0 0
      %6614 = vmatprep.mubr.bf16.mxu0 0
      %6615 = vmatmul.mubr.bf16.gmra.mxu0 %v6474
      %v6616 = vpop.f32.mrf.mxu0
      %v6617 = vadd.f32 0.0, %v6616
      %v6618 = vpop.f32.mrf.mxu0
      %v6619 = vadd.f32 0.0, %v6618
      %v6620 = vpop.f32.mrf.mxu0
      %v6621 = vpop.f32.mrf.mxu0
      %6622 = vdwg.mxu0
      %6623 = vmatprep.subr.bf16.mxu0 0
      %6624 = vmatpush1.bf16.msra.mxu0 0
      %6625 = vmatprep.subr.bf16.mxu0 0
      %6626 = vmatpush1.bf16.msra.mxu0 0
      %6627 = vmatprep.subr.bf16.mxu0 0
      %6628 = vmatpush1.bf16.msra.mxu0 0
      %6629 = vmatprep.subr.bf16.mxu0 0
      %6630 = vmatpush1.bf16.msra.mxu0 0
      %6631 = vmatprep.subr.bf16.mxu0 0
      %6632 = vmatpush1.bf16.msra.mxu0 0
      %6633 = vmatprep.subr.bf16.mxu0 0
      %6634 = vmatpush1.bf16.msra.mxu0 0
      %6635 = vmatprep.subr.bf16.mxu0 0
      %6636 = vmatpush1.bf16.msra.mxu0 0
      %6637 = vmatprep.subr.bf16.mxu0 %v6498
      %6638 = vmatpush1.bf16.msra.mxu0 %v6495
      %6639 = vmatprep.subr.bf16.mxu0 0
      %6640 = vmatpush2.bf16.msra.mxu0 0
      %6641 = vmatprep.subr.bf16.mxu0 0
      %6642 = vmatpush2.bf16.msra.mxu0 0
      %6643 = vmatprep.subr.bf16.mxu0 0
      %6644 = vmatpush2.bf16.msra.mxu0 0
      %6645 = vmatprep.subr.bf16.mxu0 0
      %6646 = vmatpush2.bf16.msra.mxu0 0
      %6647 = vmatprep.subr.bf16.mxu0 0
      %6648 = vmatpush2.bf16.msra.mxu0 0
      %6649 = vmatprep.subr.bf16.mxu0 0
      %6650 = vmatpush2.bf16.msra.mxu0 0
      %6651 = vmatprep.subr.bf16.mxu0 0
      %6652 = vmatpush2.bf16.msra.mxu0 0
      %6653 = vmatprep.subr.bf16.mxu0 0
      %6654 = vmatpush2.bf16.msra.mxu0 0
      %6655 = vmatprep.mubr.bf16.mxu0 0
      %6656 = vmatmul.mubr.bf16.gmra.mxu0 %v6474
      %v6657 = vpop.f32.mrf.mxu0
      %v6658 = vadd.f32 0.0, %v6657
      %v6659 = vpop.f32.mrf.mxu0
      %v6660 = vadd.f32 0.0, %v6659
      %v6661 = vpop.f32.mrf.mxu0
      %v6662 = vpop.f32.mrf.mxu0
      %6663 = vdwg.mxu0
      %v6664 = vadd.f32 %v6423, %v6535
      %v6665 = vadd.f32 %v6424, %v6537
      %v6666 = vadd.f32 %v6425, %v6576
      %v6667 = vadd.f32 %v6426, %v6578
      %v6668 = vadd.f32 %v6427, %v6617
      %v6669 = vadd.f32 %v6428, %v6619
      %v6670 = vadd.f32 %v6429, %v6658
      %v6671 = vadd.f32 %v6430, %v6660
      %s6672 = scalar_lea.vmem %s8, 8
      %v6673 = vld [vmem:[%s6672] sm:$0x3]
      %v6674 = vpack.c.bf16 %v5717, %v5717
      %v6675 = vpack.c.bf16 %v5718, %v5718
      %v6676 = vpack.c.bf16 %v5719, %v5719
      %v6677 = vpack.c.bf16 %v5720, %v5720
      %v6678 = vpack.c.bf16 %v5721, %v5721
      %v6679 = vpack.c.bf16 %v5722, %v5722
      %v6680 = vpack.c.bf16 %v5723, %v5723
      %v6681 = vpack.c.bf16 %v5724, %v5724
      %v6683 = vsel %vm1236, %v6673, 0
      %v6686 = vsel %vm1240, %v6674, 0
      %v6689 = vsel %vm1240, %v6675, 0
      %v6692 = vsel %vm1240, %v6676, 0
      %v6695 = vsel %vm1240, %v6677, 0
      %v6698 = vsel %vm1240, %v6678, 0
      %v6701 = vsel %vm1240, %v6679, 0
      %v6704 = vsel %vm1240, %v6680, 0
      %v6707 = vsel %vm1240, %v6681, 0
      %6709 = vmatprep.subr.bf16.mxu0 0
      %6710 = vmatpush1.bf16.msra.mxu0 0
      %6711 = vmatprep.subr.bf16.mxu0 0
      %6712 = vmatpush1.bf16.msra.mxu0 0
      %6713 = vmatprep.subr.bf16.mxu0 0
      %6714 = vmatpush1.bf16.msra.mxu0 0
      %6715 = vmatprep.subr.bf16.mxu0 0
      %6716 = vmatpush1.bf16.msra.mxu0 0
      %6717 = vmatprep.subr.bf16.mxu0 0
      %6718 = vmatpush1.bf16.msra.mxu0 0
      %6719 = vmatprep.subr.bf16.mxu0 0
      %6720 = vmatpush1.bf16.msra.mxu0 0
      %6721 = vmatprep.subr.bf16.mxu0 0
      %6722 = vmatpush1.bf16.msra.mxu0 0
      %6723 = vmatprep.subr.bf16.mxu0 %v6689
      %6724 = vmatpush1.bf16.msra.mxu0 %v6686
      %6725 = vmatprep.subr.bf16.mxu0 0
      %6726 = vmatpush2.bf16.msra.mxu0 0
      %6727 = vmatprep.subr.bf16.mxu0 0
      %6728 = vmatpush2.bf16.msra.mxu0 0
      %6729 = vmatprep.subr.bf16.mxu0 0
      %6730 = vmatpush2.bf16.msra.mxu0 0
      %6731 = vmatprep.subr.bf16.mxu0 0
      %6732 = vmatpush2.bf16.msra.mxu0 0
      %6733 = vmatprep.subr.bf16.mxu0 0
      %6734 = vmatpush2.bf16.msra.mxu0 0
      %6735 = vmatprep.subr.bf16.mxu0 0
      %6736 = vmatpush2.bf16.msra.mxu0 0
      %6737 = vmatprep.subr.bf16.mxu0 0
      %6738 = vmatpush2.bf16.msra.mxu0 0
      %6739 = vmatprep.subr.bf16.mxu0 0
      %6740 = vmatpush2.bf16.msra.mxu0 0
      %6741 = vmatprep.mubr.bf16.mxu0 0
      %6742 = vmatmul.mubr.bf16.gmra.mxu0 %v6683
      %v6743 = vpop.f32.mrf.mxu0
      %v6744 = vadd.f32 0.0, %v6743
      %v6745 = vpop.f32.mrf.mxu0
      %v6746 = vadd.f32 0.0, %v6745
      %v6747 = vpop.f32.mrf.mxu0
      %v6748 = vpop.f32.mrf.mxu0
      %6749 = vdwg.mxu0
      %6750 = vmatprep.subr.bf16.mxu0 0
      %6751 = vmatpush1.bf16.msra.mxu0 0
      %6752 = vmatprep.subr.bf16.mxu0 0
      %6753 = vmatpush1.bf16.msra.mxu0 0
      %6754 = vmatprep.subr.bf16.mxu0 0
      %6755 = vmatpush1.bf16.msra.mxu0 0
      %6756 = vmatprep.subr.bf16.mxu0 0
      %6757 = vmatpush1.bf16.msra.mxu0 0
      %6758 = vmatprep.subr.bf16.mxu0 0
      %6759 = vmatpush1.bf16.msra.mxu0 0
      %6760 = vmatprep.subr.bf16.mxu0 0
      %6761 = vmatpush1.bf16.msra.mxu0 0
      %6762 = vmatprep.subr.bf16.mxu0 0
      %6763 = vmatpush1.bf16.msra.mxu0 0
      %6764 = vmatprep.subr.bf16.mxu0 %v6695
      %6765 = vmatpush1.bf16.msra.mxu0 %v6692
      %6766 = vmatprep.subr.bf16.mxu0 0
      %6767 = vmatpush2.bf16.msra.mxu0 0
      %6768 = vmatprep.subr.bf16.mxu0 0
      %6769 = vmatpush2.bf16.msra.mxu0 0
      %6770 = vmatprep.subr.bf16.mxu0 0
      %6771 = vmatpush2.bf16.msra.mxu0 0
      %6772 = vmatprep.subr.bf16.mxu0 0
      %6773 = vmatpush2.bf16.msra.mxu0 0
      %6774 = vmatprep.subr.bf16.mxu0 0
      %6775 = vmatpush2.bf16.msra.mxu0 0
      %6776 = vmatprep.subr.bf16.mxu0 0
      %6777 = vmatpush2.bf16.msra.mxu0 0
      %6778 = vmatprep.subr.bf16.mxu0 0
      %6779 = vmatpush2.bf16.msra.mxu0 0
      %6780 = vmatprep.subr.bf16.mxu0 0
      %6781 = vmatpush2.bf16.msra.mxu0 0
      %6782 = vmatprep.mubr.bf16.mxu0 0
      %6783 = vmatmul.mubr.bf16.gmra.mxu0 %v6683
      %v6784 = vpop.f32.mrf.mxu0
      %v6785 = vadd.f32 0.0, %v6784
      %v6786 = vpop.f32.mrf.mxu0
      %v6787 = vadd.f32 0.0, %v6786
      %v6788 = vpop.f32.mrf.mxu0
      %v6789 = vpop.f32.mrf.mxu0
      %6790 = vdwg.mxu0
      %6791 = vmatprep.subr.bf16.mxu0 0
      %6792 = vmatpush1.bf16.msra.mxu0 0
      %6793 = vmatprep.subr.bf16.mxu0 0
      %6794 = vmatpush1.bf16.msra.mxu0 0
      %6795 = vmatprep.subr.bf16.mxu0 0
      %6796 = vmatpush1.bf16.msra.mxu0 0
      %6797 = vmatprep.subr.bf16.mxu0 0
      %6798 = vmatpush1.bf16.msra.mxu0 0
      %6799 = vmatprep.subr.bf16.mxu0 0
      %6800 = vmatpush1.bf16.msra.mxu0 0
      %6801 = vmatprep.subr.bf16.mxu0 0
      %6802 = vmatpush1.bf16.msra.mxu0 0
      %6803 = vmatprep.subr.bf16.mxu0 0
      %6804 = vmatpush1.bf16.msra.mxu0 0
      %6805 = vmatprep.subr.bf16.mxu0 %v6701
      %6806 = vmatpush1.bf16.msra.mxu0 %v6698
      %6807 = vmatprep.subr.bf16.mxu0 0
      %6808 = vmatpush2.bf16.msra.mxu0 0
      %6809 = vmatprep.subr.bf16.mxu0 0
      %6810 = vmatpush2.bf16.msra.mxu0 0
      %6811 = vmatprep.subr.bf16.mxu0 0
      %6812 = vmatpush2.bf16.msra.mxu0 0
      %6813 = vmatprep.subr.bf16.mxu0 0
      %6814 = vmatpush2.bf16.msra.mxu0 0
      %6815 = vmatprep.subr.bf16.mxu0 0
      %6816 = vmatpush2.bf16.msra.mxu0 0
      %6817 = vmatprep.subr.bf16.mxu0 0
      %6818 = vmatpush2.bf16.msra.mxu0 0
      %6819 = vmatprep.subr.bf16.mxu0 0
      %6820 = vmatpush2.bf16.msra.mxu0 0
      %6821 = vmatprep.subr.bf16.mxu0 0
      %6822 = vmatpush2.bf16.msra.mxu0 0
      %6823 = vmatprep.mubr.bf16.mxu0 0
      %6824 = vmatmul.mubr.bf16.gmra.mxu0 %v6683
      %v6825 = vpop.f32.mrf.mxu0
      %v6826 = vadd.f32 0.0, %v6825
      %v6827 = vpop.f32.mrf.mxu0
      %v6828 = vadd.f32 0.0, %v6827
      %v6829 = vpop.f32.mrf.mxu0
      %v6830 = vpop.f32.mrf.mxu0
      %6831 = vdwg.mxu0
      %6832 = vmatprep.subr.bf16.mxu0 0
      %6833 = vmatpush1.bf16.msra.mxu0 0
      %6834 = vmatprep.subr.bf16.mxu0 0
      %6835 = vmatpush1.bf16.msra.mxu0 0
      %6836 = vmatprep.subr.bf16.mxu0 0
      %6837 = vmatpush1.bf16.msra.mxu0 0
      %6838 = vmatprep.subr.bf16.mxu0 0
      %6839 = vmatpush1.bf16.msra.mxu0 0
      %6840 = vmatprep.subr.bf16.mxu0 0
      %6841 = vmatpush1.bf16.msra.mxu0 0
      %6842 = vmatprep.subr.bf16.mxu0 0
      %6843 = vmatpush1.bf16.msra.mxu0 0
      %6844 = vmatprep.subr.bf16.mxu0 0
      %6845 = vmatpush1.bf16.msra.mxu0 0
      %6846 = vmatprep.subr.bf16.mxu0 %v6707
      %6847 = vmatpush1.bf16.msra.mxu0 %v6704
      %6848 = vmatprep.subr.bf16.mxu0 0
      %6849 = vmatpush2.bf16.msra.mxu0 0
      %6850 = vmatprep.subr.bf16.mxu0 0
      %6851 = vmatpush2.bf16.msra.mxu0 0
      %6852 = vmatprep.subr.bf16.mxu0 0
      %6853 = vmatpush2.bf16.msra.mxu0 0
      %6854 = vmatprep.subr.bf16.mxu0 0
      %6855 = vmatpush2.bf16.msra.mxu0 0
      %6856 = vmatprep.subr.bf16.mxu0 0
      %6857 = vmatpush2.bf16.msra.mxu0 0
      %6858 = vmatprep.subr.bf16.mxu0 0
      %6859 = vmatpush2.bf16.msra.mxu0 0
      %6860 = vmatprep.subr.bf16.mxu0 0
      %6861 = vmatpush2.bf16.msra.mxu0 0
      %6862 = vmatprep.subr.bf16.mxu0 0
      %6863 = vmatpush2.bf16.msra.mxu0 0
      %6864 = vmatprep.mubr.bf16.mxu0 0
      %6865 = vmatmul.mubr.bf16.gmra.mxu0 %v6683
      %v6866 = vpop.f32.mrf.mxu0
      %v6867 = vadd.f32 0.0, %v6866
      %v6868 = vpop.f32.mrf.mxu0
      %v6869 = vadd.f32 0.0, %v6868
      %v6870 = vpop.f32.mrf.mxu0
      %v6871 = vpop.f32.mrf.mxu0
      %6872 = vdwg.mxu0
      %v6873 = vadd.f32 %v6664, %v6744
      %v6874 = vadd.f32 %v6665, %v6746
      %v6875 = vadd.f32 %v6666, %v6785
      %v6876 = vadd.f32 %v6667, %v6787
      %v6877 = vadd.f32 %v6668, %v6826
      %v6878 = vadd.f32 %v6669, %v6828
      %v6879 = vadd.f32 %v6670, %v6867
      %v6880 = vadd.f32 %v6671, %v6869
      %6881 = vrot.lane.b32.xlu0 %v5717, 127
      %v6882 = vpop.permute.xlu0 %6881
      %6883 = vrot.lane.b32.xlu0 %v5718, 127
      %v6884 = vpop.permute.xlu0 %6883
      %6885 = vrot.lane.b32.xlu0 %v5719, 127
      %v6886 = vpop.permute.xlu0 %6885
      %6887 = vrot.lane.b32.xlu0 %v5720, 127
      %v6888 = vpop.permute.xlu0 %6887
      %6889 = vrot.lane.b32.xlu0 %v5721, 127
      %v6890 = vpop.permute.xlu0 %6889
      %6891 = vrot.lane.b32.xlu0 %v5722, 127
      %v6892 = vpop.permute.xlu0 %6891
      %6893 = vrot.lane.b32.xlu0 %v5723, 127
      %v6894 = vpop.permute.xlu0 %6893
      %6895 = vrot.lane.b32.xlu0 %v5724, 127
      %v6896 = vpop.permute.xlu0 %6895
      %v6897 = vsel %vm2419, %v6894, %v6896
      %v6898 = vsel %vm2419, %v6892, %v6894
      %v6899 = vsel %vm2419, %v6890, %v6892
      %v6900 = vsel %vm2419, %v6888, %v6890
      %v6901 = vsel %vm2419, %v6886, %v6888
      %v6902 = vsel %vm2419, %v6884, %v6886
      %v6903 = vsel %vm2419, %v6882, %v6884
      %v6904 = vsel %vm2419, %v6896, %v6882
      %v6905 = vmul.f32 %v6903, %v2436
      %v6906 = vmul.f32 %v6902, %v2440
      %v6907 = vmul.f32 %v6901, %v2444
      %v6908 = vmul.f32 %v6900, %v2448
      %v6909 = vmul.f32 %v6899, %v2452
      %v6910 = vmul.f32 %v6898, %v2456
      %v6911 = vmul.f32 %v6897, %v2460
      %v6912 = vmul.f32 %v6904, %v2464
      %s6913 = scalar_lea.vmem %s8, 10
      %v6914 = vld [vmem:[%s6913] sm:$0x3]
      %v6915 = vpack.c.bf16 %v6905, %v6905
      %v6916 = vpack.c.bf16 %v6906, %v6906
      %v6917 = vpack.c.bf16 %v6907, %v6907
      %v6918 = vpack.c.bf16 %v6908, %v6908
      %v6919 = vpack.c.bf16 %v6909, %v6909
      %v6920 = vpack.c.bf16 %v6910, %v6910
      %v6921 = vpack.c.bf16 %v6911, %v6911
      %v6922 = vpack.c.bf16 %v6912, %v6912
      %v6924 = vsel %vm1236, %v6914, 0
      %v6927 = vsel %vm1240, %v6915, 0
      %v6930 = vsel %vm1240, %v6916, 0
      %v6933 = vsel %vm1240, %v6917, 0
      %v6936 = vsel %vm1240, %v6918, 0
      %v6939 = vsel %vm1240, %v6919, 0
      %v6942 = vsel %vm1240, %v6920, 0
      %v6945 = vsel %vm1240, %v6921, 0
      %v6948 = vsel %vm1240, %v6922, 0
      %6950 = vmatprep.subr.bf16.mxu0 0
      %6951 = vmatpush1.bf16.msra.mxu0 0
      %6952 = vmatprep.subr.bf16.mxu0 0
      %6953 = vmatpush1.bf16.msra.mxu0 0
      %6954 = vmatprep.subr.bf16.mxu0 0
      %6955 = vmatpush1.bf16.msra.mxu0 0
      %6956 = vmatprep.subr.bf16.mxu0 0
      %6957 = vmatpush1.bf16.msra.mxu0 0
      %6958 = vmatprep.subr.bf16.mxu0 0
      %6959 = vmatpush1.bf16.msra.mxu0 0
      %6960 = vmatprep.subr.bf16.mxu0 0
      %6961 = vmatpush1.bf16.msra.mxu0 0
      %6962 = vmatprep.subr.bf16.mxu0 0
      %6963 = vmatpush1.bf16.msra.mxu0 0
      %6964 = vmatprep.subr.bf16.mxu0 %v6930
      %6965 = vmatpush1.bf16.msra.mxu0 %v6927
      %6966 = vmatprep.subr.bf16.mxu0 0
      %6967 = vmatpush2.bf16.msra.mxu0 0
      %6968 = vmatprep.subr.bf16.mxu0 0
      %6969 = vmatpush2.bf16.msra.mxu0 0
      %6970 = vmatprep.subr.bf16.mxu0 0
      %6971 = vmatpush2.bf16.msra.mxu0 0
      %6972 = vmatprep.subr.bf16.mxu0 0
      %6973 = vmatpush2.bf16.msra.mxu0 0
      %6974 = vmatprep.subr.bf16.mxu0 0
      %6975 = vmatpush2.bf16.msra.mxu0 0
      %6976 = vmatprep.subr.bf16.mxu0 0
      %6977 = vmatpush2.bf16.msra.mxu0 0
      %6978 = vmatprep.subr.bf16.mxu0 0
      %6979 = vmatpush2.bf16.msra.mxu0 0
      %6980 = vmatprep.subr.bf16.mxu0 0
      %6981 = vmatpush2.bf16.msra.mxu0 0
      %6982 = vmatprep.mubr.bf16.mxu0 0
      %6983 = vmatmul.mubr.bf16.gmra.mxu0 %v6924
      %v6984 = vpop.f32.mrf.mxu0
      %v6985 = vadd.f32 0.0, %v6984
      %v6986 = vpop.f32.mrf.mxu0
      %v6987 = vadd.f32 0.0, %v6986
      %v6988 = vpop.f32.mrf.mxu0
      %v6989 = vpop.f32.mrf.mxu0
      %6990 = vdwg.mxu0
      %6991 = vmatprep.subr.bf16.mxu0 0
      %6992 = vmatpush1.bf16.msra.mxu0 0
      %6993 = vmatprep.subr.bf16.mxu0 0
      %6994 = vmatpush1.bf16.msra.mxu0 0
      %6995 = vmatprep.subr.bf16.mxu0 0
      %6996 = vmatpush1.bf16.msra.mxu0 0
      %6997 = vmatprep.subr.bf16.mxu0 0
      %6998 = vmatpush1.bf16.msra.mxu0 0
      %6999 = vmatprep.subr.bf16.mxu0 0
      %7000 = vmatpush1.bf16.msra.mxu0 0
      %7001 = vmatprep.subr.bf16.mxu0 0
      %7002 = vmatpush1.bf16.msra.mxu0 0
      %7003 = vmatprep.subr.bf16.mxu0 0
      %7004 = vmatpush1.bf16.msra.mxu0 0
      %7005 = vmatprep.subr.bf16.mxu0 %v6936
      %7006 = vmatpush1.bf16.msra.mxu0 %v6933
      %7007 = vmatprep.subr.bf16.mxu0 0
      %7008 = vmatpush2.bf16.msra.mxu0 0
      %7009 = vmatprep.subr.bf16.mxu0 0
      %7010 = vmatpush2.bf16.msra.mxu0 0
      %7011 = vmatprep.subr.bf16.mxu0 0
      %7012 = vmatpush2.bf16.msra.mxu0 0
      %7013 = vmatprep.subr.bf16.mxu0 0
      %7014 = vmatpush2.bf16.msra.mxu0 0
      %7015 = vmatprep.subr.bf16.mxu0 0
      %7016 = vmatpush2.bf16.msra.mxu0 0
      %7017 = vmatprep.subr.bf16.mxu0 0
      %7018 = vmatpush2.bf16.msra.mxu0 0
      %7019 = vmatprep.subr.bf16.mxu0 0
      %7020 = vmatpush2.bf16.msra.mxu0 0
      %7021 = vmatprep.subr.bf16.mxu0 0
      %7022 = vmatpush2.bf16.msra.mxu0 0
      %7023 = vmatprep.mubr.bf16.mxu0 0
      %7024 = vmatmul.mubr.bf16.gmra.mxu0 %v6924
      %v7025 = vpop.f32.mrf.mxu0
      %v7026 = vadd.f32 0.0, %v7025
      %v7027 = vpop.f32.mrf.mxu0
      %v7028 = vadd.f32 0.0, %v7027
      %v7029 = vpop.f32.mrf.mxu0
      %v7030 = vpop.f32.mrf.mxu0
      %7031 = vdwg.mxu0
      %7032 = vmatprep.subr.bf16.mxu0 0
      %7033 = vmatpush1.bf16.msra.mxu0 0
      %7034 = vmatprep.subr.bf16.mxu0 0
      %7035 = vmatpush1.bf16.msra.mxu0 0
      %7036 = vmatprep.subr.bf16.mxu0 0
      %7037 = vmatpush1.bf16.msra.mxu0 0
      %7038 = vmatprep.subr.bf16.mxu0 0
      %7039 = vmatpush1.bf16.msra.mxu0 0
      %7040 = vmatprep.subr.bf16.mxu0 0
      %7041 = vmatpush1.bf16.msra.mxu0 0
      %7042 = vmatprep.subr.bf16.mxu0 0
      %7043 = vmatpush1.bf16.msra.mxu0 0
      %7044 = vmatprep.subr.bf16.mxu0 0
      %7045 = vmatpush1.bf16.msra.mxu0 0
      %7046 = vmatprep.subr.bf16.mxu0 %v6942
      %7047 = vmatpush1.bf16.msra.mxu0 %v6939
      %7048 = vmatprep.subr.bf16.mxu0 0
      %7049 = vmatpush2.bf16.msra.mxu0 0
      %7050 = vmatprep.subr.bf16.mxu0 0
      %7051 = vmatpush2.bf16.msra.mxu0 0
      %7052 = vmatprep.subr.bf16.mxu0 0
      %7053 = vmatpush2.bf16.msra.mxu0 0
      %7054 = vmatprep.subr.bf16.mxu0 0
      %7055 = vmatpush2.bf16.msra.mxu0 0
      %7056 = vmatprep.subr.bf16.mxu0 0
      %7057 = vmatpush2.bf16.msra.mxu0 0
      %7058 = vmatprep.subr.bf16.mxu0 0
      %7059 = vmatpush2.bf16.msra.mxu0 0
      %7060 = vmatprep.subr.bf16.mxu0 0
      %7061 = vmatpush2.bf16.msra.mxu0 0
      %7062 = vmatprep.subr.bf16.mxu0 0
      %7063 = vmatpush2.bf16.msra.mxu0 0
      %7064 = vmatprep.mubr.bf16.mxu0 0
      %7065 = vmatmul.mubr.bf16.gmra.mxu0 %v6924
      %v7066 = vpop.f32.mrf.mxu0
      %v7067 = vadd.f32 0.0, %v7066
      %v7068 = vpop.f32.mrf.mxu0
      %v7069 = vadd.f32 0.0, %v7068
      %v7070 = vpop.f32.mrf.mxu0
      %v7071 = vpop.f32.mrf.mxu0
      %7072 = vdwg.mxu0
      %7073 = vmatprep.subr.bf16.mxu0 0
      %7074 = vmatpush1.bf16.msra.mxu0 0
      %7075 = vmatprep.subr.bf16.mxu0 0
      %7076 = vmatpush1.bf16.msra.mxu0 0
      %7077 = vmatprep.subr.bf16.mxu0 0
      %7078 = vmatpush1.bf16.msra.mxu0 0
      %7079 = vmatprep.subr.bf16.mxu0 0
      %7080 = vmatpush1.bf16.msra.mxu0 0
      %7081 = vmatprep.subr.bf16.mxu0 0
      %7082 = vmatpush1.bf16.msra.mxu0 0
      %7083 = vmatprep.subr.bf16.mxu0 0
      %7084 = vmatpush1.bf16.msra.mxu0 0
      %7085 = vmatprep.subr.bf16.mxu0 0
      %7086 = vmatpush1.bf16.msra.mxu0 0
      %7087 = vmatprep.subr.bf16.mxu0 %v6948
      %7088 = vmatpush1.bf16.msra.mxu0 %v6945
      %7089 = vmatprep.subr.bf16.mxu0 0
      %7090 = vmatpush2.bf16.msra.mxu0 0
      %7091 = vmatprep.subr.bf16.mxu0 0
      %7092 = vmatpush2.bf16.msra.mxu0 0
      %7093 = vmatprep.subr.bf16.mxu0 0
      %7094 = vmatpush2.bf16.msra.mxu0 0
      %7095 = vmatprep.subr.bf16.mxu0 0
      %7096 = vmatpush2.bf16.msra.mxu0 0
      %7097 = vmatprep.subr.bf16.mxu0 0
      %7098 = vmatpush2.bf16.msra.mxu0 0
      %7099 = vmatprep.subr.bf16.mxu0 0
      %7100 = vmatpush2.bf16.msra.mxu0 0
      %7101 = vmatprep.subr.bf16.mxu0 0
      %7102 = vmatpush2.bf16.msra.mxu0 0
      %7103 = vmatprep.subr.bf16.mxu0 0
      %7104 = vmatpush2.bf16.msra.mxu0 0
      %7105 = vmatprep.mubr.bf16.mxu0 0
      %7106 = vmatmul.mubr.bf16.gmra.mxu0 %v6924
      %v7107 = vpop.f32.mrf.mxu0
      %v7108 = vadd.f32 0.0, %v7107
      %v7109 = vpop.f32.mrf.mxu0
      %v7110 = vadd.f32 0.0, %v7109
      %v7111 = vpop.f32.mrf.mxu0
      %v7112 = vpop.f32.mrf.mxu0
      %7113 = vdwg.mxu0
      %v7114 = vadd.f32 %v6873, %v6985
      %v7115 = vadd.f32 %v6874, %v6987
      %v7116 = vadd.f32 %v6875, %v7026
      %v7117 = vadd.f32 %v6876, %v7028
      %v7118 = vadd.f32 %v6877, %v7067
      %v7119 = vadd.f32 %v6878, %v7069
      %v7120 = vadd.f32 %v6879, %v7108
      %v7121 = vadd.f32 %v6880, %v7110
      %7122 = vrot.lane.b32.xlu0 %v5717, 97
      %v7123 = vpop.permute.xlu0 %7122
      %7124 = vrot.lane.b32.xlu0 %v5718, 97
      %v7125 = vpop.permute.xlu0 %7124
      %7126 = vrot.lane.b32.xlu0 %v5719, 97
      %v7127 = vpop.permute.xlu0 %7126
      %7128 = vrot.lane.b32.xlu0 %v5720, 97
      %v7129 = vpop.permute.xlu0 %7128
      %7130 = vrot.lane.b32.xlu0 %v5721, 97
      %v7131 = vpop.permute.xlu0 %7130
      %7132 = vrot.lane.b32.xlu0 %v5722, 97
      %v7133 = vpop.permute.xlu0 %7132
      %7134 = vrot.lane.b32.xlu0 %v5723, 97
      %v7135 = vpop.permute.xlu0 %7134
      %7136 = vrot.lane.b32.xlu0 %v5724, 97
      %v7137 = vpop.permute.xlu0 %7136
      %v7138 = vsel %vm2706, %v7135, %v7137
      %v7139 = vsel %vm2706, %v7133, %v7135
      %v7140 = vsel %vm2706, %v7131, %v7133
      %v7141 = vsel %vm2706, %v7129, %v7131
      %v7142 = vsel %vm2706, %v7127, %v7129
      %v7143 = vsel %vm2706, %v7125, %v7127
      %v7144 = vsel %vm2706, %v7123, %v7125
      %v7145 = vsel %vm2706, %v7137, %v7123
      %v7146 = vmul.f32 %v7144, %v2723
      %v7147 = vmul.f32 %v7143, %v2727
      %v7148 = vmul.f32 %v7142, %v2731
      %v7149 = vmul.f32 %v7141, %v2735
      %v7150 = vmul.f32 %v7140, %v2739
      %v7151 = vmul.f32 %v7139, %v2743
      %v7152 = vmul.f32 %v7138, %v2747
      %v7153 = vmul.f32 %v7145, %v2751
      %s7154 = scalar_lea.vmem %s8, 12
      %v7155 = vld [vmem:[%s7154] sm:$0x3]
      %v7156 = vpack.c.bf16 %v7146, %v7146
      %v7157 = vpack.c.bf16 %v7147, %v7147
      %v7158 = vpack.c.bf16 %v7148, %v7148
      %v7159 = vpack.c.bf16 %v7149, %v7149
      %v7160 = vpack.c.bf16 %v7150, %v7150
      %v7161 = vpack.c.bf16 %v7151, %v7151
      %v7162 = vpack.c.bf16 %v7152, %v7152
      %v7163 = vpack.c.bf16 %v7153, %v7153
      %v7165 = vsel %vm1236, %v7155, 0
      %v7168 = vsel %vm1240, %v7156, 0
      %v7171 = vsel %vm1240, %v7157, 0
      %v7174 = vsel %vm1240, %v7158, 0
      %v7177 = vsel %vm1240, %v7159, 0
      %v7180 = vsel %vm1240, %v7160, 0
      %v7183 = vsel %vm1240, %v7161, 0
      %v7186 = vsel %vm1240, %v7162, 0
      %v7189 = vsel %vm1240, %v7163, 0
      %7191 = vmatprep.subr.bf16.mxu0 0
      %7192 = vmatpush1.bf16.msra.mxu0 0
      %7193 = vmatprep.subr.bf16.mxu0 0
      %7194 = vmatpush1.bf16.msra.mxu0 0
      %7195 = vmatprep.subr.bf16.mxu0 0
      %7196 = vmatpush1.bf16.msra.mxu0 0
      %7197 = vmatprep.subr.bf16.mxu0 0
      %7198 = vmatpush1.bf16.msra.mxu0 0
      %7199 = vmatprep.subr.bf16.mxu0 0
      %7200 = vmatpush1.bf16.msra.mxu0 0
      %7201 = vmatprep.subr.bf16.mxu0 0
      %7202 = vmatpush1.bf16.msra.mxu0 0
      %7203 = vmatprep.subr.bf16.mxu0 0
      %7204 = vmatpush1.bf16.msra.mxu0 0
      %7205 = vmatprep.subr.bf16.mxu0 %v7171
      %7206 = vmatpush1.bf16.msra.mxu0 %v7168
      %7207 = vmatprep.subr.bf16.mxu0 0
      %7208 = vmatpush2.bf16.msra.mxu0 0
      %7209 = vmatprep.subr.bf16.mxu0 0
      %7210 = vmatpush2.bf16.msra.mxu0 0
      %7211 = vmatprep.subr.bf16.mxu0 0
      %7212 = vmatpush2.bf16.msra.mxu0 0
      %7213 = vmatprep.subr.bf16.mxu0 0
      %7214 = vmatpush2.bf16.msra.mxu0 0
      %7215 = vmatprep.subr.bf16.mxu0 0
      %7216 = vmatpush2.bf16.msra.mxu0 0
      %7217 = vmatprep.subr.bf16.mxu0 0
      %7218 = vmatpush2.bf16.msra.mxu0 0
      %7219 = vmatprep.subr.bf16.mxu0 0
      %7220 = vmatpush2.bf16.msra.mxu0 0
      %7221 = vmatprep.subr.bf16.mxu0 0
      %7222 = vmatpush2.bf16.msra.mxu0 0
      %7223 = vmatprep.mubr.bf16.mxu0 0
      %7224 = vmatmul.mubr.bf16.gmra.mxu0 %v7165
      %v7225 = vpop.f32.mrf.mxu0
      %v7226 = vadd.f32 0.0, %v7225
      %v7227 = vpop.f32.mrf.mxu0
      %v7228 = vadd.f32 0.0, %v7227
      %v7229 = vpop.f32.mrf.mxu0
      %v7230 = vpop.f32.mrf.mxu0
      %7231 = vdwg.mxu0
      %7232 = vmatprep.subr.bf16.mxu0 0
      %7233 = vmatpush1.bf16.msra.mxu0 0
      %7234 = vmatprep.subr.bf16.mxu0 0
      %7235 = vmatpush1.bf16.msra.mxu0 0
      %7236 = vmatprep.subr.bf16.mxu0 0
      %7237 = vmatpush1.bf16.msra.mxu0 0
      %7238 = vmatprep.subr.bf16.mxu0 0
      %7239 = vmatpush1.bf16.msra.mxu0 0
      %7240 = vmatprep.subr.bf16.mxu0 0
      %7241 = vmatpush1.bf16.msra.mxu0 0
      %7242 = vmatprep.subr.bf16.mxu0 0
      %7243 = vmatpush1.bf16.msra.mxu0 0
      %7244 = vmatprep.subr.bf16.mxu0 0
      %7245 = vmatpush1.bf16.msra.mxu0 0
      %7246 = vmatprep.subr.bf16.mxu0 %v7177
      %7247 = vmatpush1.bf16.msra.mxu0 %v7174
      %7248 = vmatprep.subr.bf16.mxu0 0
      %7249 = vmatpush2.bf16.msra.mxu0 0
      %7250 = vmatprep.subr.bf16.mxu0 0
      %7251 = vmatpush2.bf16.msra.mxu0 0
      %7252 = vmatprep.subr.bf16.mxu0 0
      %7253 = vmatpush2.bf16.msra.mxu0 0
      %7254 = vmatprep.subr.bf16.mxu0 0
      %7255 = vmatpush2.bf16.msra.mxu0 0
      %7256 = vmatprep.subr.bf16.mxu0 0
      %7257 = vmatpush2.bf16.msra.mxu0 0
      %7258 = vmatprep.subr.bf16.mxu0 0
      %7259 = vmatpush2.bf16.msra.mxu0 0
      %7260 = vmatprep.subr.bf16.mxu0 0
      %7261 = vmatpush2.bf16.msra.mxu0 0
      %7262 = vmatprep.subr.bf16.mxu0 0
      %7263 = vmatpush2.bf16.msra.mxu0 0
      %7264 = vmatprep.mubr.bf16.mxu0 0
      %7265 = vmatmul.mubr.bf16.gmra.mxu0 %v7165
      %v7266 = vpop.f32.mrf.mxu0
      %v7267 = vadd.f32 0.0, %v7266
      %v7268 = vpop.f32.mrf.mxu0
      %v7269 = vadd.f32 0.0, %v7268
      %v7270 = vpop.f32.mrf.mxu0
      %v7271 = vpop.f32.mrf.mxu0
      %7272 = vdwg.mxu0
      %7273 = vmatprep.subr.bf16.mxu0 0
      %7274 = vmatpush1.bf16.msra.mxu0 0
      %7275 = vmatprep.subr.bf16.mxu0 0
      %7276 = vmatpush1.bf16.msra.mxu0 0
      %7277 = vmatprep.subr.bf16.mxu0 0
      %7278 = vmatpush1.bf16.msra.mxu0 0
      %7279 = vmatprep.subr.bf16.mxu0 0
      %7280 = vmatpush1.bf16.msra.mxu0 0
      %7281 = vmatprep.subr.bf16.mxu0 0
      %7282 = vmatpush1.bf16.msra.mxu0 0
      %7283 = vmatprep.subr.bf16.mxu0 0
      %7284 = vmatpush1.bf16.msra.mxu0 0
      %7285 = vmatprep.subr.bf16.mxu0 0
      %7286 = vmatpush1.bf16.msra.mxu0 0
      %7287 = vmatprep.subr.bf16.mxu0 %v7183
      %7288 = vmatpush1.bf16.msra.mxu0 %v7180
      %7289 = vmatprep.subr.bf16.mxu0 0
      %7290 = vmatpush2.bf16.msra.mxu0 0
      %7291 = vmatprep.subr.bf16.mxu0 0
      %7292 = vmatpush2.bf16.msra.mxu0 0
      %7293 = vmatprep.subr.bf16.mxu0 0
      %7294 = vmatpush2.bf16.msra.mxu0 0
      %7295 = vmatprep.subr.bf16.mxu0 0
      %7296 = vmatpush2.bf16.msra.mxu0 0
      %7297 = vmatprep.subr.bf16.mxu0 0
      %7298 = vmatpush2.bf16.msra.mxu0 0
      %7299 = vmatprep.subr.bf16.mxu0 0
      %7300 = vmatpush2.bf16.msra.mxu0 0
      %7301 = vmatprep.subr.bf16.mxu0 0
      %7302 = vmatpush2.bf16.msra.mxu0 0
      %7303 = vmatprep.subr.bf16.mxu0 0
      %7304 = vmatpush2.bf16.msra.mxu0 0
      %7305 = vmatprep.mubr.bf16.mxu0 0
      %7306 = vmatmul.mubr.bf16.gmra.mxu0 %v7165
      %v7307 = vpop.f32.mrf.mxu0
      %v7308 = vadd.f32 0.0, %v7307
      %v7309 = vpop.f32.mrf.mxu0
      %v7310 = vadd.f32 0.0, %v7309
      %v7311 = vpop.f32.mrf.mxu0
      %v7312 = vpop.f32.mrf.mxu0
      %7313 = vdwg.mxu0
      %7314 = vmatprep.subr.bf16.mxu0 0
      %7315 = vmatpush1.bf16.msra.mxu0 0
      %7316 = vmatprep.subr.bf16.mxu0 0
      %7317 = vmatpush1.bf16.msra.mxu0 0
      %7318 = vmatprep.subr.bf16.mxu0 0
      %7319 = vmatpush1.bf16.msra.mxu0 0
      %7320 = vmatprep.subr.bf16.mxu0 0
      %7321 = vmatpush1.bf16.msra.mxu0 0
      %7322 = vmatprep.subr.bf16.mxu0 0
      %7323 = vmatpush1.bf16.msra.mxu0 0
      %7324 = vmatprep.subr.bf16.mxu0 0
      %7325 = vmatpush1.bf16.msra.mxu0 0
      %7326 = vmatprep.subr.bf16.mxu0 0
      %7327 = vmatpush1.bf16.msra.mxu0 0
      %7328 = vmatprep.subr.bf16.mxu0 %v7189
      %7329 = vmatpush1.bf16.msra.mxu0 %v7186
      %7330 = vmatprep.subr.bf16.mxu0 0
      %7331 = vmatpush2.bf16.msra.mxu0 0
      %7332 = vmatprep.subr.bf16.mxu0 0
      %7333 = vmatpush2.bf16.msra.mxu0 0
      %7334 = vmatprep.subr.bf16.mxu0 0
      %7335 = vmatpush2.bf16.msra.mxu0 0
      %7336 = vmatprep.subr.bf16.mxu0 0
      %7337 = vmatpush2.bf16.msra.mxu0 0
      %7338 = vmatprep.subr.bf16.mxu0 0
      %7339 = vmatpush2.bf16.msra.mxu0 0
      %7340 = vmatprep.subr.bf16.mxu0 0
      %7341 = vmatpush2.bf16.msra.mxu0 0
      %7342 = vmatprep.subr.bf16.mxu0 0
      %7343 = vmatpush2.bf16.msra.mxu0 0
      %7344 = vmatprep.subr.bf16.mxu0 0
      %7345 = vmatpush2.bf16.msra.mxu0 0
      %7346 = vmatprep.mubr.bf16.mxu0 0
      %7347 = vmatmul.mubr.bf16.gmra.mxu0 %v7165
      %v7348 = vpop.f32.mrf.mxu0
      %v7349 = vadd.f32 0.0, %v7348
      %v7350 = vpop.f32.mrf.mxu0
      %v7351 = vadd.f32 0.0, %v7350
      %v7352 = vpop.f32.mrf.mxu0
      %v7353 = vpop.f32.mrf.mxu0
      %7354 = vdwg.mxu0
      %v7355 = vadd.f32 %v7114, %v7226
      %v7356 = vadd.f32 %v7115, %v7228
      %v7357 = vadd.f32 %v7116, %v7267
      %v7358 = vadd.f32 %v7117, %v7269
      %v7359 = vadd.f32 %v7118, %v7308
      %v7360 = vadd.f32 %v7119, %v7310
      %v7361 = vadd.f32 %v7120, %v7349
      %v7362 = vadd.f32 %v7121, %v7351
      %7363 = vrot.lane.b32.xlu0 %v5717, 96
      %v7364 = vpop.permute.xlu0 %7363
      %7365 = vrot.lane.b32.xlu0 %v5718, 96
      %v7366 = vpop.permute.xlu0 %7365
      %7367 = vrot.lane.b32.xlu0 %v5719, 96
      %v7368 = vpop.permute.xlu0 %7367
      %7369 = vrot.lane.b32.xlu0 %v5720, 96
      %v7370 = vpop.permute.xlu0 %7369
      %7371 = vrot.lane.b32.xlu0 %v5721, 96
      %v7372 = vpop.permute.xlu0 %7371
      %7373 = vrot.lane.b32.xlu0 %v5722, 96
      %v7374 = vpop.permute.xlu0 %7373
      %7375 = vrot.lane.b32.xlu0 %v5723, 96
      %v7376 = vpop.permute.xlu0 %7375
      %7377 = vrot.lane.b32.xlu0 %v5724, 96
      %v7378 = vpop.permute.xlu0 %7377
      %v7379 = vsel %vm2993, %v7376, %v7378
      %v7380 = vsel %vm2993, %v7374, %v7376
      %v7381 = vsel %vm2993, %v7372, %v7374
      %v7382 = vsel %vm2993, %v7370, %v7372
      %v7383 = vsel %vm2993, %v7368, %v7370
      %v7384 = vsel %vm2993, %v7366, %v7368
      %v7385 = vsel %vm2993, %v7364, %v7366
      %v7386 = vsel %vm2993, %v7378, %v7364
      %v7387 = vmul.f32 %v7385, %v3010
      %v7388 = vmul.f32 %v7384, %v3014
      %v7389 = vmul.f32 %v7383, %v3018
      %v7390 = vmul.f32 %v7382, %v3022
      %v7391 = vmul.f32 %v7381, %v3026
      %v7392 = vmul.f32 %v7380, %v3030
      %v7393 = vmul.f32 %v7379, %v3034
      %v7394 = vmul.f32 %v7386, %v3038
      %s7395 = scalar_lea.vmem %s8, 14
      %v7396 = vld [vmem:[%s7395] sm:$0x3]
      %v7397 = vpack.c.bf16 %v7387, %v7387
      %v7398 = vpack.c.bf16 %v7388, %v7388
      %v7399 = vpack.c.bf16 %v7389, %v7389
      %v7400 = vpack.c.bf16 %v7390, %v7390
      %v7401 = vpack.c.bf16 %v7391, %v7391
      %v7402 = vpack.c.bf16 %v7392, %v7392
      %v7403 = vpack.c.bf16 %v7393, %v7393
      %v7404 = vpack.c.bf16 %v7394, %v7394
      %v7406 = vsel %vm1236, %v7396, 0
      %v7409 = vsel %vm1240, %v7397, 0
      %v7412 = vsel %vm1240, %v7398, 0
      %v7415 = vsel %vm1240, %v7399, 0
      %v7418 = vsel %vm1240, %v7400, 0
      %v7421 = vsel %vm1240, %v7401, 0
      %v7424 = vsel %vm1240, %v7402, 0
      %v7427 = vsel %vm1240, %v7403, 0
      %v7430 = vsel %vm1240, %v7404, 0
      %7432 = vmatprep.subr.bf16.mxu0 0
      %7433 = vmatpush1.bf16.msra.mxu0 0
      %7434 = vmatprep.subr.bf16.mxu0 0
      %7435 = vmatpush1.bf16.msra.mxu0 0
      %7436 = vmatprep.subr.bf16.mxu0 0
      %7437 = vmatpush1.bf16.msra.mxu0 0
      %7438 = vmatprep.subr.bf16.mxu0 0
      %7439 = vmatpush1.bf16.msra.mxu0 0
      %7440 = vmatprep.subr.bf16.mxu0 0
      %7441 = vmatpush1.bf16.msra.mxu0 0
      %7442 = vmatprep.subr.bf16.mxu0 0
      %7443 = vmatpush1.bf16.msra.mxu0 0
      %7444 = vmatprep.subr.bf16.mxu0 0
      %7445 = vmatpush1.bf16.msra.mxu0 0
      %7446 = vmatprep.subr.bf16.mxu0 %v7412
      %7447 = vmatpush1.bf16.msra.mxu0 %v7409
      %7448 = vmatprep.subr.bf16.mxu0 0
      %7449 = vmatpush2.bf16.msra.mxu0 0
      %7450 = vmatprep.subr.bf16.mxu0 0
      %7451 = vmatpush2.bf16.msra.mxu0 0
      %7452 = vmatprep.subr.bf16.mxu0 0
      %7453 = vmatpush2.bf16.msra.mxu0 0
      %7454 = vmatprep.subr.bf16.mxu0 0
      %7455 = vmatpush2.bf16.msra.mxu0 0
      %7456 = vmatprep.subr.bf16.mxu0 0
      %7457 = vmatpush2.bf16.msra.mxu0 0
      %7458 = vmatprep.subr.bf16.mxu0 0
      %7459 = vmatpush2.bf16.msra.mxu0 0
      %7460 = vmatprep.subr.bf16.mxu0 0
      %7461 = vmatpush2.bf16.msra.mxu0 0
      %7462 = vmatprep.subr.bf16.mxu0 0
      %7463 = vmatpush2.bf16.msra.mxu0 0
      %7464 = vmatprep.mubr.bf16.mxu0 0
      %7465 = vmatmul.mubr.bf16.gmra.mxu0 %v7406
      %v7466 = vpop.f32.mrf.mxu0
      %v7467 = vadd.f32 0.0, %v7466
      %v7468 = vpop.f32.mrf.mxu0
      %v7469 = vadd.f32 0.0, %v7468
      %v7470 = vpop.f32.mrf.mxu0
      %v7471 = vpop.f32.mrf.mxu0
      %7472 = vdwg.mxu0
      %7473 = vmatprep.subr.bf16.mxu0 0
      %7474 = vmatpush1.bf16.msra.mxu0 0
      %7475 = vmatprep.subr.bf16.mxu0 0
      %7476 = vmatpush1.bf16.msra.mxu0 0
      %7477 = vmatprep.subr.bf16.mxu0 0
      %7478 = vmatpush1.bf16.msra.mxu0 0
      %7479 = vmatprep.subr.bf16.mxu0 0
      %7480 = vmatpush1.bf16.msra.mxu0 0
      %7481 = vmatprep.subr.bf16.mxu0 0
      %7482 = vmatpush1.bf16.msra.mxu0 0
      %7483 = vmatprep.subr.bf16.mxu0 0
      %7484 = vmatpush1.bf16.msra.mxu0 0
      %7485 = vmatprep.subr.bf16.mxu0 0
      %7486 = vmatpush1.bf16.msra.mxu0 0
      %7487 = vmatprep.subr.bf16.mxu0 %v7418
      %7488 = vmatpush1.bf16.msra.mxu0 %v7415
      %7489 = vmatprep.subr.bf16.mxu0 0
      %7490 = vmatpush2.bf16.msra.mxu0 0
      %7491 = vmatprep.subr.bf16.mxu0 0
      %7492 = vmatpush2.bf16.msra.mxu0 0
      %7493 = vmatprep.subr.bf16.mxu0 0
      %7494 = vmatpush2.bf16.msra.mxu0 0
      %7495 = vmatprep.subr.bf16.mxu0 0
      %7496 = vmatpush2.bf16.msra.mxu0 0
      %7497 = vmatprep.subr.bf16.mxu0 0
      %7498 = vmatpush2.bf16.msra.mxu0 0
      %7499 = vmatprep.subr.bf16.mxu0 0
      %7500 = vmatpush2.bf16.msra.mxu0 0
      %7501 = vmatprep.subr.bf16.mxu0 0
      %7502 = vmatpush2.bf16.msra.mxu0 0
      %7503 = vmatprep.subr.bf16.mxu0 0
      %7504 = vmatpush2.bf16.msra.mxu0 0
      %7505 = vmatprep.mubr.bf16.mxu0 0
      %7506 = vmatmul.mubr.bf16.gmra.mxu0 %v7406
      %v7507 = vpop.f32.mrf.mxu0
      %v7508 = vadd.f32 0.0, %v7507
      %v7509 = vpop.f32.mrf.mxu0
      %v7510 = vadd.f32 0.0, %v7509
      %v7511 = vpop.f32.mrf.mxu0
      %v7512 = vpop.f32.mrf.mxu0
      %7513 = vdwg.mxu0
      %7514 = vmatprep.subr.bf16.mxu0 0
      %7515 = vmatpush1.bf16.msra.mxu0 0
      %7516 = vmatprep.subr.bf16.mxu0 0
      %7517 = vmatpush1.bf16.msra.mxu0 0
      %7518 = vmatprep.subr.bf16.mxu0 0
      %7519 = vmatpush1.bf16.msra.mxu0 0
      %7520 = vmatprep.subr.bf16.mxu0 0
      %7521 = vmatpush1.bf16.msra.mxu0 0
      %7522 = vmatprep.subr.bf16.mxu0 0
      %7523 = vmatpush1.bf16.msra.mxu0 0
      %7524 = vmatprep.subr.bf16.mxu0 0
      %7525 = vmatpush1.bf16.msra.mxu0 0
      %7526 = vmatprep.subr.bf16.mxu0 0
      %7527 = vmatpush1.bf16.msra.mxu0 0
      %7528 = vmatprep.subr.bf16.mxu0 %v7424
      %7529 = vmatpush1.bf16.msra.mxu0 %v7421
      %7530 = vmatprep.subr.bf16.mxu0 0
      %7531 = vmatpush2.bf16.msra.mxu0 0
      %7532 = vmatprep.subr.bf16.mxu0 0
      %7533 = vmatpush2.bf16.msra.mxu0 0
      %7534 = vmatprep.subr.bf16.mxu0 0
      %7535 = vmatpush2.bf16.msra.mxu0 0
      %7536 = vmatprep.subr.bf16.mxu0 0
      %7537 = vmatpush2.bf16.msra.mxu0 0
      %7538 = vmatprep.subr.bf16.mxu0 0
      %7539 = vmatpush2.bf16.msra.mxu0 0
      %7540 = vmatprep.subr.bf16.mxu0 0
      %7541 = vmatpush2.bf16.msra.mxu0 0
      %7542 = vmatprep.subr.bf16.mxu0 0
      %7543 = vmatpush2.bf16.msra.mxu0 0
      %7544 = vmatprep.subr.bf16.mxu0 0
      %7545 = vmatpush2.bf16.msra.mxu0 0
      %7546 = vmatprep.mubr.bf16.mxu0 0
      %7547 = vmatmul.mubr.bf16.gmra.mxu0 %v7406
      %v7548 = vpop.f32.mrf.mxu0
      %v7549 = vadd.f32 0.0, %v7548
      %v7550 = vpop.f32.mrf.mxu0
      %v7551 = vadd.f32 0.0, %v7550
      %v7552 = vpop.f32.mrf.mxu0
      %v7553 = vpop.f32.mrf.mxu0
      %7554 = vdwg.mxu0
      %7555 = vmatprep.subr.bf16.mxu0 0
      %7556 = vmatpush1.bf16.msra.mxu0 0
      %7557 = vmatprep.subr.bf16.mxu0 0
      %7558 = vmatpush1.bf16.msra.mxu0 0
      %7559 = vmatprep.subr.bf16.mxu0 0
      %7560 = vmatpush1.bf16.msra.mxu0 0
      %7561 = vmatprep.subr.bf16.mxu0 0
      %7562 = vmatpush1.bf16.msra.mxu0 0
      %7563 = vmatprep.subr.bf16.mxu0 0
      %7564 = vmatpush1.bf16.msra.mxu0 0
      %7565 = vmatprep.subr.bf16.mxu0 0
      %7566 = vmatpush1.bf16.msra.mxu0 0
      %7567 = vmatprep.subr.bf16.mxu0 0
      %7568 = vmatpush1.bf16.msra.mxu0 0
      %7569 = vmatprep.subr.bf16.mxu0 %v7430
      %7570 = vmatpush1.bf16.msra.mxu0 %v7427
      %7571 = vmatprep.subr.bf16.mxu0 0
      %7572 = vmatpush2.bf16.msra.mxu0 0
      %7573 = vmatprep.subr.bf16.mxu0 0
      %7574 = vmatpush2.bf16.msra.mxu0 0
      %7575 = vmatprep.subr.bf16.mxu0 0
      %7576 = vmatpush2.bf16.msra.mxu0 0
      %7577 = vmatprep.subr.bf16.mxu0 0
      %7578 = vmatpush2.bf16.msra.mxu0 0
      %7579 = vmatprep.subr.bf16.mxu0 0
      %7580 = vmatpush2.bf16.msra.mxu0 0
      %7581 = vmatprep.subr.bf16.mxu0 0
      %7582 = vmatpush2.bf16.msra.mxu0 0
      %7583 = vmatprep.subr.bf16.mxu0 0
      %7584 = vmatpush2.bf16.msra.mxu0 0
      %7585 = vmatprep.subr.bf16.mxu0 0
      %7586 = vmatpush2.bf16.msra.mxu0 0
      %7587 = vmatprep.mubr.bf16.mxu0 0
      %7588 = vmatmul.mubr.bf16.gmra.mxu0 %v7406
      %v7589 = vpop.f32.mrf.mxu0
      %v7590 = vadd.f32 0.0, %v7589
      %v7591 = vpop.f32.mrf.mxu0
      %v7592 = vadd.f32 0.0, %v7591
      %v7593 = vpop.f32.mrf.mxu0
      %v7594 = vpop.f32.mrf.mxu0
      %7595 = vdwg.mxu0
      %v7596 = vadd.f32 %v7355, %v7467
      %v7597 = vadd.f32 %v7356, %v7469
      %v7598 = vadd.f32 %v7357, %v7508
      %v7599 = vadd.f32 %v7358, %v7510
      %v7600 = vadd.f32 %v7359, %v7549
      %v7601 = vadd.f32 %v7360, %v7551
      %v7602 = vadd.f32 %v7361, %v7590
      %v7603 = vadd.f32 %v7362, %v7592
      %7604 = vrot.lane.b32.xlu0 %v5717, 95
      %v7605 = vpop.permute.xlu0 %7604
      %7606 = vrot.lane.b32.xlu0 %v5718, 95
      %v7607 = vpop.permute.xlu0 %7606
      %7608 = vrot.lane.b32.xlu0 %v5719, 95
      %v7609 = vpop.permute.xlu0 %7608
      %7610 = vrot.lane.b32.xlu0 %v5720, 95
      %v7611 = vpop.permute.xlu0 %7610
      %7612 = vrot.lane.b32.xlu0 %v5721, 95
      %v7613 = vpop.permute.xlu0 %7612
      %7614 = vrot.lane.b32.xlu0 %v5722, 95
      %v7615 = vpop.permute.xlu0 %7614
      %7616 = vrot.lane.b32.xlu0 %v5723, 95
      %v7617 = vpop.permute.xlu0 %7616
      %7618 = vrot.lane.b32.xlu0 %v5724, 95
      %v7619 = vpop.permute.xlu0 %7618
      %v7620 = vsel %vm3280, %v7617, %v7619
      %v7621 = vsel %vm3280, %v7615, %v7617
      %v7622 = vsel %vm3280, %v7613, %v7615
      %v7623 = vsel %vm3280, %v7611, %v7613
      %v7624 = vsel %vm3280, %v7609, %v7611
      %v7625 = vsel %vm3280, %v7607, %v7609
      %v7626 = vsel %vm3280, %v7605, %v7607
      %v7627 = vsel %vm3280, %v7619, %v7605
      %v7628 = vmul.f32 %v7626, %v3297
      %v7629 = vmul.f32 %v7625, %v3301
      %v7630 = vmul.f32 %v7624, %v3305
      %v7631 = vmul.f32 %v7623, %v3309
      %v7632 = vmul.f32 %v7622, %v3313
      %v7633 = vmul.f32 %v7621, %v3317
      %v7634 = vmul.f32 %v7620, %v3321
      %v7635 = vmul.f32 %v7627, %v3325
      %s7636 = scalar_lea.vmem %s8, 16
      %v7637 = vld [vmem:[%s7636] sm:$0x3]
      %v7638 = vpack.c.bf16 %v7628, %v7628
      %v7639 = vpack.c.bf16 %v7629, %v7629
      %v7640 = vpack.c.bf16 %v7630, %v7630
      %v7641 = vpack.c.bf16 %v7631, %v7631
      %v7642 = vpack.c.bf16 %v7632, %v7632
      %v7643 = vpack.c.bf16 %v7633, %v7633
      %v7644 = vpack.c.bf16 %v7634, %v7634
      %v7645 = vpack.c.bf16 %v7635, %v7635
      %v7647 = vsel %vm1236, %v7637, 0
      %v7650 = vsel %vm1240, %v7638, 0
      %v7653 = vsel %vm1240, %v7639, 0
      %v7656 = vsel %vm1240, %v7640, 0
      %v7659 = vsel %vm1240, %v7641, 0
      %v7662 = vsel %vm1240, %v7642, 0
      %v7665 = vsel %vm1240, %v7643, 0
      %v7668 = vsel %vm1240, %v7644, 0
      %v7671 = vsel %vm1240, %v7645, 0
      %7673 = vmatprep.subr.bf16.mxu0 0
      %7674 = vmatpush1.bf16.msra.mxu0 0
      %7675 = vmatprep.subr.bf16.mxu0 0
      %7676 = vmatpush1.bf16.msra.mxu0 0
      %7677 = vmatprep.subr.bf16.mxu0 0
      %7678 = vmatpush1.bf16.msra.mxu0 0
      %7679 = vmatprep.subr.bf16.mxu0 0
      %7680 = vmatpush1.bf16.msra.mxu0 0
      %7681 = vmatprep.subr.bf16.mxu0 0
      %7682 = vmatpush1.bf16.msra.mxu0 0
      %7683 = vmatprep.subr.bf16.mxu0 0
      %7684 = vmatpush1.bf16.msra.mxu0 0
      %7685 = vmatprep.subr.bf16.mxu0 0
      %7686 = vmatpush1.bf16.msra.mxu0 0
      %7687 = vmatprep.subr.bf16.mxu0 %v7653
      %7688 = vmatpush1.bf16.msra.mxu0 %v7650
      %7689 = vmatprep.subr.bf16.mxu0 0
      %7690 = vmatpush2.bf16.msra.mxu0 0
      %7691 = vmatprep.subr.bf16.mxu0 0
      %7692 = vmatpush2.bf16.msra.mxu0 0
      %7693 = vmatprep.subr.bf16.mxu0 0
      %7694 = vmatpush2.bf16.msra.mxu0 0
      %7695 = vmatprep.subr.bf16.mxu0 0
      %7696 = vmatpush2.bf16.msra.mxu0 0
      %7697 = vmatprep.subr.bf16.mxu0 0
      %7698 = vmatpush2.bf16.msra.mxu0 0
      %7699 = vmatprep.subr.bf16.mxu0 0
      %7700 = vmatpush2.bf16.msra.mxu0 0
      %7701 = vmatprep.subr.bf16.mxu0 0
      %7702 = vmatpush2.bf16.msra.mxu0 0
      %7703 = vmatprep.subr.bf16.mxu0 0
      %7704 = vmatpush2.bf16.msra.mxu0 0
      %7705 = vmatprep.mubr.bf16.mxu0 0
      %7706 = vmatmul.mubr.bf16.gmra.mxu0 %v7647
      %v7707 = vpop.f32.mrf.mxu0
      %v7708 = vadd.f32 0.0, %v7707
      %v7709 = vpop.f32.mrf.mxu0
      %v7710 = vadd.f32 0.0, %v7709
      %v7711 = vpop.f32.mrf.mxu0
      %v7712 = vpop.f32.mrf.mxu0
      %7713 = vdwg.mxu0
      %7714 = vmatprep.subr.bf16.mxu0 0
      %7715 = vmatpush1.bf16.msra.mxu0 0
      %7716 = vmatprep.subr.bf16.mxu0 0
      %7717 = vmatpush1.bf16.msra.mxu0 0
      %7718 = vmatprep.subr.bf16.mxu0 0
      %7719 = vmatpush1.bf16.msra.mxu0 0
      %7720 = vmatprep.subr.bf16.mxu0 0
      %7721 = vmatpush1.bf16.msra.mxu0 0
      %7722 = vmatprep.subr.bf16.mxu0 0
      %7723 = vmatpush1.bf16.msra.mxu0 0
      %7724 = vmatprep.subr.bf16.mxu0 0
      %7725 = vmatpush1.bf16.msra.mxu0 0
      %7726 = vmatprep.subr.bf16.mxu0 0
      %7727 = vmatpush1.bf16.msra.mxu0 0
      %7728 = vmatprep.subr.bf16.mxu0 %v7659
      %7729 = vmatpush1.bf16.msra.mxu0 %v7656
      %7730 = vmatprep.subr.bf16.mxu0 0
      %7731 = vmatpush2.bf16.msra.mxu0 0
      %7732 = vmatprep.subr.bf16.mxu0 0
      %7733 = vmatpush2.bf16.msra.mxu0 0
      %7734 = vmatprep.subr.bf16.mxu0 0
      %7735 = vmatpush2.bf16.msra.mxu0 0
      %7736 = vmatprep.subr.bf16.mxu0 0
      %7737 = vmatpush2.bf16.msra.mxu0 0
      %7738 = vmatprep.subr.bf16.mxu0 0
      %7739 = vmatpush2.bf16.msra.mxu0 0
      %7740 = vmatprep.subr.bf16.mxu0 0
      %7741 = vmatpush2.bf16.msra.mxu0 0
      %7742 = vmatprep.subr.bf16.mxu0 0
      %7743 = vmatpush2.bf16.msra.mxu0 0
      %7744 = vmatprep.subr.bf16.mxu0 0
      %7745 = vmatpush2.bf16.msra.mxu0 0
      %7746 = vmatprep.mubr.bf16.mxu0 0
      %7747 = vmatmul.mubr.bf16.gmra.mxu0 %v7647
      %v7748 = vpop.f32.mrf.mxu0
      %v7749 = vadd.f32 0.0, %v7748
      %v7750 = vpop.f32.mrf.mxu0
      %v7751 = vadd.f32 0.0, %v7750
      %v7752 = vpop.f32.mrf.mxu0
      %v7753 = vpop.f32.mrf.mxu0
      %7754 = vdwg.mxu0
      %7755 = vmatprep.subr.bf16.mxu0 0
      %7756 = vmatpush1.bf16.msra.mxu0 0
      %7757 = vmatprep.subr.bf16.mxu0 0
      %7758 = vmatpush1.bf16.msra.mxu0 0
      %7759 = vmatprep.subr.bf16.mxu0 0
      %7760 = vmatpush1.bf16.msra.mxu0 0
      %7761 = vmatprep.subr.bf16.mxu0 0
      %7762 = vmatpush1.bf16.msra.mxu0 0
      %7763 = vmatprep.subr.bf16.mxu0 0
      %7764 = vmatpush1.bf16.msra.mxu0 0
      %7765 = vmatprep.subr.bf16.mxu0 0
      %7766 = vmatpush1.bf16.msra.mxu0 0
      %7767 = vmatprep.subr.bf16.mxu0 0
      %7768 = vmatpush1.bf16.msra.mxu0 0
      %7769 = vmatprep.subr.bf16.mxu0 %v7665
      %7770 = vmatpush1.bf16.msra.mxu0 %v7662
      %7771 = vmatprep.subr.bf16.mxu0 0
      %7772 = vmatpush2.bf16.msra.mxu0 0
      %7773 = vmatprep.subr.bf16.mxu0 0
      %7774 = vmatpush2.bf16.msra.mxu0 0
      %7775 = vmatprep.subr.bf16.mxu0 0
      %7776 = vmatpush2.bf16.msra.mxu0 0
      %7777 = vmatprep.subr.bf16.mxu0 0
      %7778 = vmatpush2.bf16.msra.mxu0 0
      %7779 = vmatprep.subr.bf16.mxu0 0
      %7780 = vmatpush2.bf16.msra.mxu0 0
      %7781 = vmatprep.subr.bf16.mxu0 0
      %7782 = vmatpush2.bf16.msra.mxu0 0
      %7783 = vmatprep.subr.bf16.mxu0 0
      %7784 = vmatpush2.bf16.msra.mxu0 0
      %7785 = vmatprep.subr.bf16.mxu0 0
      %7786 = vmatpush2.bf16.msra.mxu0 0
      %7787 = vmatprep.mubr.bf16.mxu0 0
      %7788 = vmatmul.mubr.bf16.gmra.mxu0 %v7647
      %v7789 = vpop.f32.mrf.mxu0
      %v7790 = vadd.f32 0.0, %v7789
      %v7791 = vpop.f32.mrf.mxu0
      %v7792 = vadd.f32 0.0, %v7791
      %v7793 = vpop.f32.mrf.mxu0
      %v7794 = vpop.f32.mrf.mxu0
      %7795 = vdwg.mxu0
      %7796 = vmatprep.subr.bf16.mxu0 0
      %7797 = vmatpush1.bf16.msra.mxu0 0
      %7798 = vmatprep.subr.bf16.mxu0 0
      %7799 = vmatpush1.bf16.msra.mxu0 0
      %7800 = vmatprep.subr.bf16.mxu0 0
      %7801 = vmatpush1.bf16.msra.mxu0 0
      %7802 = vmatprep.subr.bf16.mxu0 0
      %7803 = vmatpush1.bf16.msra.mxu0 0
      %7804 = vmatprep.subr.bf16.mxu0 0
      %7805 = vmatpush1.bf16.msra.mxu0 0
      %7806 = vmatprep.subr.bf16.mxu0 0
      %7807 = vmatpush1.bf16.msra.mxu0 0
      %7808 = vmatprep.subr.bf16.mxu0 0
      %7809 = vmatpush1.bf16.msra.mxu0 0
      %7810 = vmatprep.subr.bf16.mxu0 %v7671
      %7811 = vmatpush1.bf16.msra.mxu0 %v7668
      %7812 = vmatprep.subr.bf16.mxu0 0
      %7813 = vmatpush2.bf16.msra.mxu0 0
      %7814 = vmatprep.subr.bf16.mxu0 0
      %7815 = vmatpush2.bf16.msra.mxu0 0
      %7816 = vmatprep.subr.bf16.mxu0 0
      %7817 = vmatpush2.bf16.msra.mxu0 0
      %7818 = vmatprep.subr.bf16.mxu0 0
      %7819 = vmatpush2.bf16.msra.mxu0 0
      %7820 = vmatprep.subr.bf16.mxu0 0
      %7821 = vmatpush2.bf16.msra.mxu0 0
      %7822 = vmatprep.subr.bf16.mxu0 0
      %7823 = vmatpush2.bf16.msra.mxu0 0
      %7824 = vmatprep.subr.bf16.mxu0 0
      %7825 = vmatpush2.bf16.msra.mxu0 0
      %7826 = vmatprep.subr.bf16.mxu0 0
      %7827 = vmatpush2.bf16.msra.mxu0 0
      %7828 = vmatprep.mubr.bf16.mxu0 0
      %7829 = vmatmul.mubr.bf16.gmra.mxu0 %v7647
      %v7830 = vpop.f32.mrf.mxu0
      %v7831 = vadd.f32 0.0, %v7830
      %v7832 = vpop.f32.mrf.mxu0
      %v7833 = vadd.f32 0.0, %v7832
      %v7834 = vpop.f32.mrf.mxu0
      %v7835 = vpop.f32.mrf.mxu0
      %7836 = vdwg.mxu0
      %v7837 = vadd.f32 %v7596, %v7708
      %v7838 = vadd.f32 %v7597, %v7710
      %v7839 = vadd.f32 %v7598, %v7749
      %v7840 = vadd.f32 %v7599, %v7751
      %v7841 = vadd.f32 %v7600, %v7790
      %v7842 = vadd.f32 %v7601, %v7792
      %v7843 = vadd.f32 %v7602, %v7831
      %v7844 = vadd.f32 %v7603, %v7833
      %v7845 = vld [vmem:[%s9] sm:$0xf]
      %7847 = vset.pattern.permute.xlu0 0
      %7848 = vperm.xlu0 %7847, %v7845
      %v7849 = vpop.permute.xlu0 %7848
      %v7851 = vadd.f32 %v7837, %v7849
      %v7852 = vadd.f32 %v7838, %v7849
      %v7853 = vadd.f32 %v7839, %v7849
      %v7854 = vadd.f32 %v7840, %v7849
      %v7855 = vadd.f32 %v7841, %v7849
      %v7856 = vadd.f32 %v7842, %v7849
      %v7857 = vadd.f32 %v7843, %v7849
      %v7858 = vadd.f32 %v7844, %v7849
      %v7859 = vmax.f32 %v7851, 0.0
      %v7860 = vmax.f32 %v7852, 0.0
      %v7861 = vmax.f32 %v7853, 0.0
      %v7862 = vmax.f32 %v7854, 0.0
      %v7863 = vmax.f32 %v7855, 0.0
      %v7864 = vmax.f32 %v7856, 0.0
      %v7865 = vmax.f32 %v7857, 0.0
      %v7866 = vmax.f32 %v7858, 0.0
      %v7875 = vcombine.low %v7859, %v7860
      %v7876 = vcombine.low %v7861, %v7862
      %v7877 = vcombine.low %v7863, %v7864
      %v7878 = vcombine.low %v7865, %v7866
      %7883 = vst [vmem:[%s379] sm:$0xff] %v7875
      %7884 = vst [vmem:[%s379 + $0x8] sm:$0xff] %v7876
      %7885 = vst [vmem:[%s379 + $0x10] sm:$0xff] %v7877
      %7886 = vst [vmem:[%s379 + $0x18] sm:$0xff] %v7878
      %p7887 = scmp.lt.s32.totalorder %s21, 1
      %s7888 = scalar_select %p7887, %s21, 1
      %s7889 = smul.addr %s7888, 8
      %s7890 = smul.addr %s7889, 4
      %s7891 = scalar_lea.vmem %s10, %s7890
      // Predicated region
      $region61: #{up_step.1} parent=59 // pred_check
        %p7892 = pneg %p259
      $region62: #{up_step.1} parent=59 // pred_check_branch
        %7894 = sbr.rel (%p7892) target = $region64
      $region63: #{up_step.1} parent=59 // pred_region
        _
      $region64: #{up_step.1} parent=59 // pred_fallthru
        _
    $region60: #{up_step.1} parent=5 // pred_fallthru
      _
    %p7895 = scmp.le.s32.totalorder 2, %s16
    // Predicated region
    $region65: #{up_step.1} parent=5 // pred_check
      %p7896 = pneg %p7895
    $region66: #{up_step.1} parent=5 // pred_check_branch
      %7898 = sbr.rel (%p7896) target = $region68
    $region67: #{up_step.1} parent=5 // pred_region
      %s7899 = ssub.s32 %s16, 2
      // Predicated region
      $region69: #{up_step.1} parent=67 // pred_check
        %p7900 = pneg %p265
      $region70: #{up_step.1} parent=67 // pred_check_branch
        %7902 = sbr.rel (%p7900) target = $region72
      $region71: #{up_step.1} parent=67 // pred_region
        %p7903 = scmp.lt.s32.totalorder %s22, 1
        %s7904 = scalar_select %p7903, %s22, 1
        %s7905 = smul.addr %s7904, 8
        %s7906 = smul.addr %s7905, 4
        %s7907 = scalar_lea.vmem %s10, %s7906
      $region72: #{up_step.1} parent=67 // pred_fallthru
        _
    $region68: #{up_step.1} parent=5 // pred_fallthru
      _
  $region6: #{up_step.1} parent=0 // loop_footer
    %s20 = sadd.s32 1, %s16
  $region7: #{up_step.1} parent=0 // loop_footer_branch
    %15 = sbr.rel target = $region3
  $region8: #{up_step.1} parent=0 // loop_exit
    _

</llo_original>
